<compile_context>
chip_gen: v6e
topology: v6e:2x2x1
jax: 0.10.0
libtpu: 0.0.40
codegen_flags: <defaults>
</compile_context>

<pallas_src>
import functools

import jax
import jax.numpy as jnp
from jax.experimental import pallas as pl
from jax.experimental.pallas import tpu as pltpu

BIN_THRESH = 0.3          # doctr DBNet postprocessor default bin_thresh
LANE = 128
NEG_INF = -1e30
VMEM_LIMIT = 32 * 1024 * 1024   # fits every generation (v7x phys = 64 MiB)
DET_MAX_TILE_ROWS = 512         # 512x128 f32 rows ~ 85% of HBM roofline


def _round_up(x, m):
    return ((x + m - 1) // m) * m


def _det_compute_dtype():
    """bf16 VALU exists on v6e/v7x; keep f32 on v5e/older (no packed bf16 VPU)."""
    try:
        kind = jax.devices()[0].device_kind.lower()
    except Exception:
        return jnp.float32
    if ("v6" in kind) or ("v7" in kind) or ("7x" in kind):
        return jnp.bfloat16
    return jnp.float32


DET_COMPUTE_DTYPE = _det_compute_dtype()


def _det_tile_rows(n_rows, n_ch, max_rows=DET_MAX_TILE_ROWS,
                   max_block_bytes=4 << 20):
    """Pick the detection HW tile (rows of 128 lanes).

    Returns (tile_rows, padded_n_rows). tile_rows is a multiple of 32 (uint8
    seg tiling), capped by max_rows and a per-block byte budget. Prefers an
    exact divisor of n_rows; otherwise pads n_rows (pad rows are masked
    in-kernel) instead of falling back to a full-page block.
    """
    bytes_per_row = n_ch * LANE * 4
    cap = max(32, min(max_rows, (max_block_bytes // bytes_per_row) // 32 * 32))
    start = (min(cap, n_rows) // 32) * 32
    for r in range(start, 0, -32):
        if n_rows % r == 0:
            return r, n_rows
    r = min(cap, _round_up(n_rows, 32))
    return r, _round_up(n_rows, r)


# -----------------------------------------------------------------------------
# Detection kernel: VPU channel-mix head + sigmoid + threshold + objectness.
# Grid = (B, HW_tiles), both axes "parallel"; HW rides the (sublane, lane) axes
# so every load/store is lane-dense.
# -----------------------------------------------------------------------------
def det_kernel(x_ref, w1_ref, b1_ref, w2t_ref, b2_ref,
               prob_ref, seg_ref, obj_ref, *, compute_dtype, n_valid_rows):
    x = x_ref[0].astype(compute_dtype)               # (C, R, 128)
    n_c, rows, lane = x.shape
    n_hd = w1_ref.shape[1]

    def wvec(ref, i, j):
        # SMEM f32 scalar -> f32 lane splat -> compute dtype (no bf16 scalars).
        return jnp.broadcast_to(ref[i, j], (1, lane)).astype(compute_dtype)

    # Tiny 2-layer MLP, fully unrolled on the VPU (the MXU would be <3%
    # utilized at K=4 / N=1). MACs run in `compute_dtype`; logits stay f32.
    logits = jnp.zeros((rows, lane), jnp.float32)
    for hd in range(n_hd):
        acc = x[0] * wvec(w1_ref, 0, hd) + wvec(b1_ref, 0, hd)
        for c in range(1, n_c):
            acc = acc + x[c] * wvec(w1_ref, c, hd)
        h = jnp.maximum(acc, 0)
        logits = logits + (h * wvec(w2t_ref, 0, hd)).astype(jnp.float32)
    prob = jax.nn.sigmoid(logits + b2_ref[0, 0])      # (R, 128) f32 == out_map

    prob_ref[0] = prob
    # seg_map = np.where(out_map > bin_thresh, 255, 0).astype(uint8), in-kernel
    seg_ref[0] = jnp.where(prob > BIN_THRESH, 255, 0).astype(jnp.uint8)

    # Per-tile objectness partial sums, lane-dense (8,128) slab; the HW mean is
    # finished in XLA so the HW grid axis stays "parallel" (v7x 2-TC sharding).
    p = prob
    if n_valid_rows is not None:                      # static: padding present
        row = (pl.program_id(1) * rows
               + jax.lax.broadcasted_iota(jnp.int32, (rows, lane), 0))
        p = jnp.where(row < n_valid_rows, prob, 0.0)
    part = p[0:8]
    for a in range(1, rows // 8):                     # vreg-aligned slices
        part = part + p[a * 8:(a + 1) * 8]
    obj_ref[0, 0] = part


def detection_forward(x4, w1, b1, w2t, b2, max_tile_rows=DET_MAX_TILE_ROWS):
    """x4: (B, C, HW/128, 128) f32 (pure reshape of NCHW pages)."""
    B, C, n_rows, lane = x4.shape
    r, n_rows_pad = _det_tile_rows(n_rows, C, max_rows=max_tile_rows)
    if n_rows_pad != n_rows:
        x4 = jnp.pad(x4, ((0, 0), (0, 0), (0, n_rows_pad - n_rows), (0, 0)))
    n_tiles = n_rows_pad // r

    kernel = functools.partial(
        det_kernel,
        compute_dtype=DET_COMPUTE_DTYPE,
        n_valid_rows=(n_rows if n_rows_pad != n_rows else None))
    smem = pl.BlockSpec(memory_space=pltpu.MemorySpace.SMEM)
    return pl.pallas_call(
        kernel,
        out_shape=(
            jax.ShapeDtypeStruct((B, n_rows_pad, lane), jnp.float32),  # out_maps
            jax.ShapeDtypeStruct((B, n_rows_pad, lane), jnp.uint8),    # seg_maps
            jax.ShapeDtypeStruct((B, n_tiles, 8, lane), jnp.float32),  # obj parts
        ),
        grid=(B, n_tiles),
        in_specs=[
            pl.BlockSpec((1, C, r, lane), lambda b, t: (b, 0, t, 0)),
            smem, smem, smem, smem,
        ],
        out_specs=(
            pl.BlockSpec((1, r, lane), lambda b, t: (b, t, 0)),
            pl.BlockSpec((1, r, lane), lambda b, t: (b, t, 0)),
            pl.BlockSpec((1, 1, 8, lane), lambda b, t: (b, t, 0, 0)),
        ),
        compiler_params=pltpu.CompilerParams(
            dimension_semantics=("parallel", "parallel"),
            vmem_limit_bytes=VMEM_LIMIT),
    )(x4, w1, b1, w2t, b2)


# -----------------------------------------------------------------------------
# Recognition kernel: linear classifier + fused argmax / max-softmax.
# Feature-major layout: crops^T (F, N) in, logits (Vp, tn), so both the input
# DMA and the id/conf outputs are lane-dense (no width-1 masked stores).
# -----------------------------------------------------------------------------
def reco_kernel(xt_ref, wt_ref, b_ref, ids_ref, conf_ref):
    # xt: (F, TN) bf16, wt: (Vp, F) bf16, b: (Vp, 1) f32
    logits = jnp.dot(wt_ref[...], xt_ref[...],
                     preferred_element_type=jnp.float32)
    logits = logits + b_ref[...]                               # (Vp, TN) f32

    m = jnp.max(logits, axis=0, keepdims=True)                 # (1, TN)
    # argmax(softmax) == argmax(logits): first index achieving the column max.
    vidx = jax.lax.broadcasted_iota(jnp.int32, logits.shape, 0)
    cand = jnp.where(logits == m, vidx, logits.shape[0])
    ids_ref[...] = jnp.min(cand, axis=0, keepdims=True).astype(jnp.int32)

    # confidence = max softmax prob = 1 / sum(exp(logits - m))
    e = jnp.exp(logits - m)
    denom = jnp.sum(e, axis=0, keepdims=True)
    conf_ref[...] = pl.reciprocal(denom, approx=True)


def recognition_forward(crops_t, w, b, tile_n=1024):
    """crops_t: (F, N) bf16 feature-major crops; w: (F, V) f32; b: (1, V) f32."""
    F, N = crops_t.shape
    V = w.shape[1]
    vp = _round_up(V, LANE)

    w_t = w.T                                          # (V, F)
    b_col = b.reshape(V, 1)
    if vp != V:                                        # pad vocab to 128 lanes
        w_t = jnp.pad(w_t, ((0, vp - V), (0, 0)))
        b_col = jnp.pad(b_col, ((0, vp - V), (0, 0)), constant_values=NEG_INF)
    w_t = w_t.astype(jnp.bfloat16)                     # MXU-native operands

    tn = min(tile_n, _round_up(N, LANE))
    n_pad = _round_up(N, tn)
    if n_pad != N:                                     # ragged tail: pad crops
        crops_t = jnp.pad(crops_t, ((0, 0), (0, n_pad - N)))

    ids, conf = pl.pallas_call(
        reco_kernel,
        out_shape=(
            jax.ShapeDtypeStruct((1, n_pad), jnp.int32),
            jax.ShapeDtypeStruct((1, n_pad), jnp.float32),
        ),
        grid=(n_pad // tn,),
        in_specs=[
            pl.BlockSpec((F, tn), lambda i: (0, i)),
            pl.BlockSpec((vp, F), lambda i: (0, 0)),
            pl.BlockSpec((vp, 1), lambda i: (0, 0)),
        ],
        out_specs=(
            pl.BlockSpec((1, tn), lambda i: (0, i)),
            pl.BlockSpec((1, tn), lambda i: (0, i)),
        ),
        compiler_params=pltpu.CompilerParams(
            dimension_semantics=("parallel",),
            vmem_limit_bytes=VMEM_LIMIT),
    )(crops_t, w_t, b_col)
    return ids[0, :N], conf[0, :N]


# -----------------------------------------------------------------------------
# Wrapper ("OCRPredictor.forward")
# -----------------------------------------------------------------------------
@functools.partial(jax.jit, static_argnums=(2, 3))
def ocr_predictor_forward(pages, params, patch_h=4, patch_w=4):
    """pages: (B, C, H, W) float32, NCHW (PyTorch convention)."""
    B, C, H, W = pages.shape
    origin_page_shapes = (H, W)
    hw = H * W
    assert hw % LANE == 0, "detection map H*W must be a multiple of 128"
    n_rows = hw // LANE

    # ---- detection branch (Pallas) ----
    # NCHW stays put: reshape (free) to (B, C, HW/128, 128); no transpose.
    x4 = pages.reshape(B, C, n_rows, LANE)
    w2t = params["det_w2"].reshape(1, -1)
    out_maps_p, seg_maps_p, obj_part = detection_forward(
        x4, params["det_w1"], params["det_b1"], w2t, params["det_b2"])
    out_maps = out_maps_p[:, :n_rows].reshape(B, H, W)
    seg_maps = seg_maps_p[:, :n_rows].reshape(B, H, W)   # uint8 from the kernel
    objectness_scores = obj_part.sum(axis=(1, 2, 3)) / hw

    # ---- crop preparation ----
    # TODO(synk): real boxes -> crop extraction is data-dependent geometry
    # (perspective crops from detected polygons); replaced with a fixed
    # non-overlapping patch tiling of each page.
    # Feature-major (F, N) layout gives the reco kernel lane-dense inputs and
    # outputs; the bf16 cast is fused into this transpose (halves its write).
    # TODO(synk): this transpose is still one extra HBM pass over `pages`; it
    # could be eliminated by tiling pages in (C, patch_h, W) row-bands inside
    # the recognition kernel.
    nh, nw = H // patch_h, W // patch_w
    crops_t = jnp.transpose(
        pages.reshape(B, C, nh, patch_h, nw, patch_w),
        (1, 3, 5, 0, 2, 4)).reshape(C * patch_h * patch_w, B * nh * nw)
    crops_t = crops_t.astype(jnp.bfloat16)

    # ---- recognition branch (Pallas, fused argmax / confidence) ----
    char_ids, char_conf = recognition_forward(
        crops_t, params["reco_w"], params["reco_b"])

    # ---- "document builder" glue ----
    # TODO(synk): DocumentBuilder / page orientation / language detection are
    # non-tensor ops with no Pallas equivalent.
    boxes = jnp.stack(
        [jnp.tile(jnp.arange(nh * nw) % nw, B).astype(jnp.float32) / nw,
         jnp.tile(jnp.arange(nh * nw) // nw, B).astype(jnp.float32) / nh],
        axis=-1)
    return {
        "out_maps": out_maps,
        "seg_maps": seg_maps,
        "objectness_scores": objectness_scores,
        "boxes": boxes,
        "text_preds": char_ids.reshape(B, nh * nw),
        "text_confidences": char_conf.reshape(B, nh * nw),
        "crop_orientations": jnp.zeros((B, nh * nw), jnp.int32),
        "origin_page_shapes": origin_page_shapes,
    }


def init_params(key, c_in=4, det_hidden=32, patch_h=4, patch_w=4, vocab=40):
    k1, k2, k3, k4 = jax.random.split(key, 4)
    feat = c_in * patch_h * patch_w
    return {
        "det_w1": 0.2 * jax.random.normal(k1, (c_in, det_hidden), jnp.float32),
        "det_b1": jnp.zeros((1, det_hidden), jnp.float32),
        "det_w2": 0.2 * jax.random.normal(k2, (det_hidden, 1), jnp.float32),
        "det_b2": jnp.zeros((1, 1), jnp.float32),
        "reco_w": 0.1 * jax.random.normal(k3, (feat, vocab), jnp.float32),
        "reco_b": 0.05 * jax.random.normal(k4, (1, vocab), jnp.float32),
    }


if __name__ == "__main__":
    key = jax.random.PRNGKey(0)
    k_pages, k_params = jax.random.split(key)

    # 96x96 pages: H*W/128 = 72 rows -> exercises the padded detection tile
    # (96-row block, 24 masked pad rows) and the padded multi-tile recognition
    # grid (1152 crops -> 2 tiles of 1024).
    B, C, H, W = 2, 4, 96, 96
    pages = jax.random.uniform(k_pages, (B, C, H, W), jnp.float32)
    params = init_params(k_params, c_in=C)

    out = ocr_predictor_forward(pages, params)
    jax.block_until_ready(out)

    # ---- shape / dtype checks ----
    nh, nw = H // 4, W // 4
    assert out["out_maps"].shape == (B, H, W)
    assert out["seg_maps"].dtype == jnp.uint8
    assert out["objectness_scores"].shape == (B,)
    assert out["text_preds"].shape == (B, nh * nw)

    # ---- detection check against a pure-JAX f32 reference ----
    x_ref = jnp.transpose(pages, (0, 2, 3, 1)).reshape(B, H * W, C)
    h_ref = jnp.maximum(x_ref @ params["det_w1"] + params["det_b1"], 0.0)
    prob_ref = jax.nn.sigmoid(h_ref @ params["det_w2"] + params["det_b2"])
    prob_ref = prob_ref.reshape(B, H, W)
    if DET_COMPUTE_DTYPE == jnp.bfloat16:   # bf16 MACs (v6e/v7x): looser tol
        det_tol = dict(rtol=2e-2, atol=1.5e-2)
        obj_tol = dict(rtol=1e-2, atol=5e-3)
    else:                                    # f32 path (v5e / others)
        det_tol = dict(rtol=1e-4, atol=1e-4)
        obj_tol = dict(rtol=1e-4, atol=1e-4)
    assert bool(jnp.allclose(out["out_maps"], prob_ref, **det_tol))
    assert bool(jnp.allclose(out["objectness_scores"],
                             prob_ref.mean(axis=(1, 2)), **obj_tol))
    seg_ref = jnp.where(out["out_maps"] > BIN_THRESH, 255, 0).astype(jnp.uint8)
    assert bool(jnp.array_equal(out["seg_maps"], seg_ref))

    # ---- recognition check ----
    crops_ref = pages.reshape(B, C, nh, 4, nw, 4)
    crops_ref = jnp.transpose(crops_ref, (0, 2, 4, 1, 3, 5)).reshape(B * nh * nw, -1)
    # Kernel runs the matmul with bf16 operands (f32 accumulation); compare ids
    # against a reference built from identically-rounded operands.
    crops_q = crops_ref.astype(jnp.bfloat16).astype(jnp.float32)
    w_q = params["reco_w"].astype(jnp.bfloat16).astype(jnp.float32)
    logits_q = crops_q @ w_q + params["reco_b"]
    ids_q = jnp.argmax(logits_q, axis=-1)
    conf_q = jnp.max(jax.nn.softmax(logits_q, axis=-1), axis=-1)

    ids_out = out["text_preds"].reshape(-1)
    conf_out = out["text_confidences"].reshape(-1)
    # Exact argmax ties can only flip on f32 accumulation-order noise (~1e-7).
    assert float(jnp.mean((ids_out == ids_q).astype(jnp.float32))) >= 0.999
    assert bool(jnp.allclose(conf_out, conf_q, rtol=5e-3, atol=2e-3))
    # Loose semantic check against the full-f32 recognition head.
    logits_f = crops_ref @ params["reco_w"] + params["reco_b"]
    conf_f = jnp.max(jax.nn.softmax(logits_f, axis=-1), axis=-1)
    assert bool(jnp.allclose(conf_out, conf_f, rtol=5e-2, atol=5e-3))

    print("KERNEL_OK")
</pallas_src>

<mosaic_0001>
module attributes {stable_mosaic.version = 11 : i64} {
  func.func @det_kernel(%arg0: i32, %arg1: i32, %arg2: memref<1x4x96x128xf32, #tpu.memory_space<vmem>>, %arg3: memref<4x32xf32, #tpu.memory_space<smem>>, %arg4: memref<1x32xf32, #tpu.memory_space<smem>>, %arg5: memref<1x32xf32, #tpu.memory_space<smem>>, %arg6: memref<1x1xf32, #tpu.memory_space<smem>>, %arg7: memref<1x96x128xf32, #tpu.memory_space<vmem>>, %arg8: memref<1x96x128xi8, #tpu.memory_space<vmem>>, %arg9: memref<1x1x8x128xf32, #tpu.memory_space<vmem>>) attributes {dimension_semantics = [#tpu.dimension_semantics<parallel>, #tpu.dimension_semantics<parallel>], iteration_bounds = array<i64: 2, 1>, scalar_prefetch = 0 : i64, scratch_operands = 0 : i64, tpu.core_type = #tpu.core_type<tc>, window_params = [{transform_indices = @transform_0, window_bounds = array<i64: 1, 4, 96, 128>}, {transform_indices = @transform_1, window_bounds = array<i64: 4, 32>}, {transform_indices = @transform_2, window_bounds = array<i64: 1, 32>}, {transform_indices = @transform_3, window_bounds = array<i64: 1, 32>}, {transform_indices = @transform_4, window_bounds = array<i64: 1, 1>}, {transform_indices = @transform_5, window_bounds = array<i64: 1, 96, 128>}, {transform_indices = @transform_6, window_bounds = array<i64: 1, 96, 128>}, {transform_indices = @transform_7, window_bounds = array<i64: 1, 1, 8, 128>}]} {
    %c0 = arith.constant 0 : index
    %c0_0 = arith.constant 0 : index
    %c0_1 = arith.constant 0 : index
    %c0_2 = arith.constant 0 : index
    %0 = vector.load %arg2[%c0, %c0_0, %c0_1, %c0_2] : memref<1x4x96x128xf32, #tpu.memory_space<vmem>>, vector<1x4x96x128xf32>
    %1 = vector.shape_cast %0 : vector<1x4x96x128xf32> to vector<4x96x128xf32>
    %cst = arith.constant 0.000000e+00 : f32
    %2 = vector.broadcast %cst : f32 to vector<96x128xf32>
    %3 = vector.extract_strided_slice %1 {offsets = [0, 0, 0], sizes = [1, 96, 128], strides = [1, 1, 1]} : vector<4x96x128xf32> to vector<1x96x128xf32>
    %4 = vector.shape_cast %3 : vector<1x96x128xf32> to vector<96x128xf32>
    %c0_3 = arith.constant 0 : index
    %c0_4 = arith.constant 0 : index
    %5 = memref.load %arg3[%c0_3, %c0_4] : memref<4x32xf32, #tpu.memory_space<smem>>
    %6 = vector.broadcast %5 : f32 to vector<1x128xf32>
    %7 = vector.broadcast %6 : vector<1x128xf32> to vector<96x128xf32>
    %8 = arith.mulf %4, %7 : vector<96x128xf32>
    %c0_5 = arith.constant 0 : index
    %c0_6 = arith.constant 0 : index
    %9 = memref.load %arg4[%c0_5, %c0_6] : memref<1x32xf32, #tpu.memory_space<smem>>
    %10 = vector.broadcast %9 : f32 to vector<1x128xf32>
    %11 = vector.broadcast %10 : vector<1x128xf32> to vector<96x128xf32>
    %12 = arith.addf %8, %11 : vector<96x128xf32>
    %13 = vector.extract_strided_slice %1 {offsets = [1, 0, 0], sizes = [1, 96, 128], strides = [1, 1, 1]} : vector<4x96x128xf32> to vector<1x96x128xf32>
    %14 = vector.shape_cast %13 : vector<1x96x128xf32> to vector<96x128xf32>
    %c1 = arith.constant 1 : index
    %c0_7 = arith.constant 0 : index
    %15 = memref.load %arg3[%c1, %c0_7] : memref<4x32xf32, #tpu.memory_space<smem>>
    %16 = vector.broadcast %15 : f32 to vector<1x128xf32>
    %17 = vector.broadcast %16 : vector<1x128xf32> to vector<96x128xf32>
    %18 = arith.mulf %14, %17 : vector<96x128xf32>
    %19 = arith.addf %12, %18 : vector<96x128xf32>
    %20 = vector.extract_strided_slice %1 {offsets = [2, 0, 0], sizes = [1, 96, 128], strides = [1, 1, 1]} : vector<4x96x128xf32> to vector<1x96x128xf32>
    %21 = vector.shape_cast %20 : vector<1x96x128xf32> to vector<96x128xf32>
    %c2 = arith.constant 2 : index
    %c0_8 = arith.constant 0 : index
    %22 = memref.load %arg3[%c2, %c0_8] : memref<4x32xf32, #tpu.memory_space<smem>>
    %23 = vector.broadcast %22 : f32 to vector<1x128xf32>
    %24 = vector.broadcast %23 : vector<1x128xf32> to vector<96x128xf32>
    %25 = arith.mulf %21, %24 : vector<96x128xf32>
    %26 = arith.addf %19, %25 : vector<96x128xf32>
    %27 = vector.extract_strided_slice %1 {offsets = [3, 0, 0], sizes = [1, 96, 128], strides = [1, 1, 1]} : vector<4x96x128xf32> to vector<1x96x128xf32>
    %28 = vector.shape_cast %27 : vector<1x96x128xf32> to vector<96x128xf32>
    %c3 = arith.constant 3 : index
    %c0_9 = arith.constant 0 : index
    %29 = memref.load %arg3[%c3, %c0_9] : memref<4x32xf32, #tpu.memory_space<smem>>
    %30 = vector.broadcast %29 : f32 to vector<1x128xf32>
    %31 = vector.broadcast %30 : vector<1x128xf32> to vector<96x128xf32>
    %32 = arith.mulf %28, %31 : vector<96x128xf32>
    %33 = arith.addf %26, %32 : vector<96x128xf32>
    %cst_10 = arith.constant 0.000000e+00 : f32
    %34 = vector.broadcast %cst_10 : f32 to vector<96x128xf32>
    %35 = arith.maximumf %33, %34 : vector<96x128xf32>
    %c0_11 = arith.constant 0 : index
    %c0_12 = arith.constant 0 : index
    %36 = memref.load %arg5[%c0_11, %c0_12] : memref<1x32xf32, #tpu.memory_space<smem>>
    %37 = vector.broadcast %36 : f32 to vector<1x128xf32>
    %38 = vector.broadcast %37 : vector<1x128xf32> to vector<96x128xf32>
    %39 = arith.mulf %35, %38 : vector<96x128xf32>
    %40 = arith.addf %2, %39 : vector<96x128xf32>
    %41 = vector.extract_strided_slice %1 {offsets = [0, 0, 0], sizes = [1, 96, 128], strides = [1, 1, 1]} : vector<4x96x128xf32> to vector<1x96x128xf32>
    %42 = vector.shape_cast %41 : vector<1x96x128xf32> to vector<96x128xf32>
    %c0_13 = arith.constant 0 : index
    %c1_14 = arith.constant 1 : index
    %43 = memref.load %arg3[%c0_13, %c1_14] : memref<4x32xf32, #tpu.memory_space<smem>>
    %44 = vector.broadcast %43 : f32 to vector<1x128xf32>
    %45 = vector.broadcast %44 : vector<1x128xf32> to vector<96x128xf32>
    %46 = arith.mulf %42, %45 : vector<96x128xf32>
    %c0_15 = arith.constant 0 : index
    %c1_16 = arith.constant 1 : index
    %47 = memref.load %arg4[%c0_15, %c1_16] : memref<1x32xf32, #tpu.memory_space<smem>>
    %48 = vector.broadcast %47 : f32 to vector<1x128xf32>
    %49 = vector.broadcast %48 : vector<1x128xf32> to vector<96x128xf32>
    %50 = arith.addf %46, %49 : vector<96x128xf32>
    %51 = vector.extract_strided_slice %1 {offsets = [1, 0, 0], sizes = [1, 96, 128], strides = [1, 1, 1]} : vector<4x96x128xf32> to vector<1x96x128xf32>
    %52 = vector.shape_cast %51 : vector<1x96x128xf32> to vector<96x128xf32>
    %c1_17 = arith.constant 1 : index
    %c1_18 = arith.constant 1 : index
    %53 = memref.load %arg3[%c1_17, %c1_18] : memref<4x32xf32, #tpu.memory_space<smem>>
    %54 = vector.broadcast %53 : f32 to vector<1x128xf32>
    %55 = vector.broadcast %54 : vector<1x128xf32> to vector<96x128xf32>
    %56 = arith.mulf %52, %55 : vector<96x128xf32>
    %57 = arith.addf %50, %56 : vector<96x128xf32>
    %58 = vector.extract_strided_slice %1 {offsets = [2, 0, 0], sizes = [1, 96, 128], strides = [1, 1, 1]} : vector<4x96x128xf32> to vector<1x96x128xf32>
    %59 = vector.shape_cast %58 : vector<1x96x128xf32> to vector<96x128xf32>
    %c2_19 = arith.constant 2 : index
    %c1_20 = arith.constant 1 : index
    %60 = memref.load %arg3[%c2_19, %c1_20] : memref<4x32xf32, #tpu.memory_space<smem>>
    %61 = vector.broadcast %60 : f32 to vector<1x128xf32>
    %62 = vector.broadcast %61 : vector<1x128xf32> to vector<96x128xf32>
    %63 = arith.mulf %59, %62 : vector<96x128xf32>
    %64 = arith.addf %57, %63 : vector<96x128xf32>
    %65 = vector.extract_strided_slice %1 {offsets = [3, 0, 0], sizes = [1, 96, 128], strides = [1, 1, 1]} : vector<4x96x128xf32> to vector<1x96x128xf32>
    %66 = vector.shape_cast %65 : vector<1x96x128xf32> to vector<96x128xf32>
    %c3_21 = arith.constant 3 : index
    %c1_22 = arith.constant 1 : index
    %67 = memref.load %arg3[%c3_21, %c1_22] : memref<4x32xf32, #tpu.memory_space<smem>>
    %68 = vector.broadcast %67 : f32 to vector<1x128xf32>
    %69 = vector.broadcast %68 : vector<1x128xf32> to vector<96x128xf32>
    %70 = arith.mulf %66, %69 : vector<96x128xf32>
    %71 = arith.addf %64, %70 : vector<96x128xf32>
    %cst_23 = arith.constant 0.000000e+00 : f32
    %72 = vector.broadcast %cst_23 : f32 to vector<96x128xf32>
    %73 = arith.maximumf %71, %72 : vector<96x128xf32>
    %c0_24 = arith.constant 0 : index
    %c1_25 = arith.constant 1 : index
    %74 = memref.load %arg5[%c0_24, %c1_25] : memref<1x32xf32, #tpu.memory_space<smem>>
    %75 = vector.broadcast %74 : f32 to vector<1x128xf32>
    %76 = vector.broadcast %75 : vector<1x128xf32> to vector<96x128xf32>
    %77 = arith.mulf %73, %76 : vector<96x128xf32>
    %78 = arith.addf %40, %77 : vector<96x128xf32>
    %79 = vector.extract_strided_slice %1 {offsets = [0, 0, 0], sizes = [1, 96, 128], strides = [1, 1, 1]} : vector<4x96x128xf32> to vector<1x96x128xf32>
    %80 = vector.shape_cast %79 : vector<1x96x128xf32> to vector<96x128xf32>
    %c0_26 = arith.constant 0 : index
    %c2_27 = arith.constant 2 : index
    %81 = memref.load %arg3[%c0_26, %c2_27] : memref<4x32xf32, #tpu.memory_space<smem>>
    %82 = vector.broadcast %81 : f32 to vector<1x128xf32>
    %83 = vector.broadcast %82 : vector<1x128xf32> to vector<96x128xf32>
    %84 = arith.mulf %80, %83 : vector<96x128xf32>
    %c0_28 = arith.constant 0 : index
    %c2_29 = arith.constant 2 : index
    %85 = memref.load %arg4[%c0_28, %c2_29] : memref<1x32xf32, #tpu.memory_space<smem>>
    %86 = vector.broadcast %85 : f32 to vector<1x128xf32>
    %87 = vector.broadcast %86 : vector<1x128xf32> to vector<96x128xf32>
    %88 = arith.addf %84, %87 : vector<96x128xf32>
    %89 = vector.extract_strided_slice %1 {offsets = [1, 0, 0], sizes = [1, 96, 128], strides = [1, 1, 1]} : vector<4x96x128xf32> to vector<1x96x128xf32>
    %90 = vector.shape_cast %89 : vector<1x96x128xf32> to vector<96x128xf32>
    %c1_30 = arith.constant 1 : index
    %c2_31 = arith.constant 2 : index
    %91 = memref.load %arg3[%c1_30, %c2_31] : memref<4x32xf32, #tpu.memory_space<smem>>
    %92 = vector.broadcast %91 : f32 to vector<1x128xf32>
    %93 = vector.broadcast %92 : vector<1x128xf32> to vector<96x128xf32>
    %94 = arith.mulf %90, %93 : vector<96x128xf32>
    %95 = arith.addf %88, %94 : vector<96x128xf32>
    %96 = vector.extract_strided_slice %1 {offsets = [2, 0, 0], sizes = [1, 96, 128], strides = [1, 1, 1]} : vector<4x96x128xf32> to vector<1x96x128xf32>
    %97 = vector.shape_cast %96 : vector<1x96x128xf32> to vector<96x128xf32>
    %c2_32 = arith.constant 2 : index
    %c2_33 = arith.constant 2 : index
    %98 = memref.load %arg3[%c2_32, %c2_33] : memref<4x32xf32, #tpu.memory_space<smem>>
    %99 = vector.broadcast %98 : f32 to vector<1x128xf32>
    %100 = vector.broadcast %99 : vector<1x128xf32> to vector<96x128xf32>
    %101 = arith.mulf %97, %100 : vector<96x128xf32>
    %102 = arith.addf %95, %101 : vector<96x128xf32>
    %103 = vector.extract_strided_slice %1 {offsets = [3, 0, 0], sizes = [1, 96, 128], strides = [1, 1, 1]} : vector<4x96x128xf32> to vector<1x96x128xf32>
    %104 = vector.shape_cast %103 : vector<1x96x128xf32> to vector<96x128xf32>
    %c3_34 = arith.constant 3 : index
    %c2_35 = arith.constant 2 : index
    %105 = memref.load %arg3[%c3_34, %c2_35] : memref<4x32xf32, #tpu.memory_space<smem>>
    %106 = vector.broadcast %105 : f32 to vector<1x128xf32>
    %107 = vector.broadcast %106 : vector<1x128xf32> to vector<96x128xf32>
    %108 = arith.mulf %104, %107 : vector<96x128xf32>
    %109 = arith.addf %102, %108 : vector<96x128xf32>
    %cst_36 = arith.constant 0.000000e+00 : f32
    %110 = vector.broadcast %cst_36 : f32 to vector<96x128xf32>
    %111 = arith.maximumf %109, %110 : vector<96x128xf32>
    %c0_37 = arith.constant 0 : index
    %c2_38 = arith.constant 2 : index
    %112 = memref.load %arg5[%c0_37, %c2_38] : memref<1x32xf32, #tpu.memory_space<smem>>
    %113 = vector.broadcast %112 : f32 to vector<1x128xf32>
    %114 = vector.broadcast %113 : vector<1x128xf32> to vector<96x128xf32>
    %115 = arith.mulf %111, %114 : vector<96x128xf32>
    %116 = arith.addf %78, %115 : vector<96x128xf32>
    %117 = vector.extract_strided_slice %1 {offsets = [0, 0, 0], sizes = [1, 96, 128], strides = [1, 1, 1]} : vector<4x96x128xf32> to vector<1x96x128xf32>
    %118 = vector.shape_cast %117 : vector<1x96x128xf32> to vector<96x128xf32>
    %c0_39 = arith.constant 0 : index
    %c3_40 = arith.constant 3 : index
    %119 = memref.load %arg3[%c0_39, %c3_40] : memref<4x32xf32, #tpu.memory_space<smem>>
    %120 = vector.broadcast %119 : f32 to vector<1x128xf32>
    %121 = vector.broadcast %120 : vector<1x128xf32> to vector<96x128xf32>
    %122 = arith.mulf %118, %121 : vector<96x128xf32>
    %c0_41 = arith.constant 0 : index
    %c3_42 = arith.constant 3 : index
    %123 = memref.load %arg4[%c0_41, %c3_42] : memref<1x32xf32, #tpu.memory_space<smem>>
    %124 = vector.broadcast %123 : f32 to vector<1x128xf32>
    %125 = vector.broadcast %124 : vector<1x128xf32> to vector<96x128xf32>
    %126 = arith.addf %122, %125 : vector<96x128xf32>
    %127 = vector.extract_strided_slice %1 {offsets = [1, 0, 0], sizes = [1, 96, 128], strides = [1, 1, 1]} : vector<4x96x128xf32> to vector<1x96x128xf32>
    %128 = vector.shape_cast %127 : vector<1x96x128xf32> to vector<96x128xf32>
    %c1_43 = arith.constant 1 : index
    %c3_44 = arith.constant 3 : index
    %129 = memref.load %arg3[%c1_43, %c3_44] : memref<4x32xf32, #tpu.memory_space<smem>>
    %130 = vector.broadcast %129 : f32 to vector<1x128xf32>
    %131 = vector.broadcast %130 : vector<1x128xf32> to vector<96x128xf32>
    %132 = arith.mulf %128, %131 : vector<96x128xf32>
    %133 = arith.addf %126, %132 : vector<96x128xf32>
    %134 = vector.extract_strided_slice %1 {offsets = [2, 0, 0], sizes = [1, 96, 128], strides = [1, 1, 1]} : vector<4x96x128xf32> to vector<1x96x128xf32>
    %135 = vector.shape_cast %134 : vector<1x96x128xf32> to vector<96x128xf32>
    %c2_45 = arith.constant 2 : index
    %c3_46 = arith.constant 3 : index
    %136 = memref.load %arg3[%c2_45, %c3_46] : memref<4x32xf32, #tpu.memory_space<smem>>
    %137 = vector.broadcast %136 : f32 to vector<1x128xf32>
    %138 = vector.broadcast %137 : vector<1x128xf32> to vector<96x128xf32>
    %139 = arith.mulf %135, %138 : vector<96x128xf32>
    %140 = arith.addf %133, %139 : vector<96x128xf32>
    %141 = vector.extract_strided_slice %1 {offsets = [3, 0, 0], sizes = [1, 96, 128], strides = [1, 1, 1]} : vector<4x96x128xf32> to vector<1x96x128xf32>
    %142 = vector.shape_cast %141 : vector<1x96x128xf32> to vector<96x128xf32>
    %c3_47 = arith.constant 3 : index
    %c3_48 = arith.constant 3 : index
    %143 = memref.load %arg3[%c3_47, %c3_48] : memref<4x32xf32, #tpu.memory_space<smem>>
    %144 = vector.broadcast %143 : f32 to vector<1x128xf32>
    %145 = vector.broadcast %144 : vector<1x128xf32> to vector<96x128xf32>
    %146 = arith.mulf %142, %145 : vector<96x128xf32>
    %147 = arith.addf %140, %146 : vector<96x128xf32>
    %cst_49 = arith.constant 0.000000e+00 : f32
    %148 = vector.broadcast %cst_49 : f32 to vector<96x128xf32>
    %149 = arith.maximumf %147, %148 : vector<96x128xf32>
    %c0_50 = arith.constant 0 : index
    %c3_51 = arith.constant 3 : index
    %150 = memref.load %arg5[%c0_50, %c3_51] : memref<1x32xf32, #tpu.memory_space<smem>>
    %151 = vector.broadcast %150 : f32 to vector<1x128xf32>
    %152 = vector.broadcast %151 : vector<1x128xf32> to vector<96x128xf32>
    %153 = arith.mulf %149, %152 : vector<96x128xf32>
    %154 = arith.addf %116, %153 : vector<96x128xf32>
    %155 = vector.extract_strided_slice %1 {offsets = [0, 0, 0], sizes = [1, 96, 128], strides = [1, 1, 1]} : vector<4x96x128xf32> to vector<1x96x128xf32>
    %156 = vector.shape_cast %155 : vector<1x96x128xf32> to vector<96x128xf32>
    %c0_52 = arith.constant 0 : index
    %c4 = arith.constant 4 : index
    %157 = memref.load %arg3[%c0_52, %c4] : memref<4x32xf32, #tpu.memory_space<smem>>
    %158 = vector.broadcast %157 : f32 to vector<1x128xf32>
    %159 = vector.broadcast %158 : vector<1x128xf32> to vector<96x128xf32>
    %160 = arith.mulf %156, %159 : vector<96x128xf32>
    %c0_53 = arith.constant 0 : index
    %c4_54 = arith.constant 4 : index
    %161 = memref.load %arg4[%c0_53, %c4_54] : memref<1x32xf32, #tpu.memory_space<smem>>
    %162 = vector.broadcast %161 : f32 to vector<1x128xf32>
    %163 = vector.broadcast %162 : vector<1x128xf32> to vector<96x128xf32>
    %164 = arith.addf %160, %163 : vector<96x128xf32>
    %165 = vector.extract_strided_slice %1 {offsets = [1, 0, 0], sizes = [1, 96, 128], strides = [1, 1, 1]} : vector<4x96x128xf32> to vector<1x96x128xf32>
    %166 = vector.shape_cast %165 : vector<1x96x128xf32> to vector<96x128xf32>
    %c1_55 = arith.constant 1 : index
    %c4_56 = arith.constant 4 : index
    %167 = memref.load %arg3[%c1_55, %c4_56] : memref<4x32xf32, #tpu.memory_space<smem>>
    %168 = vector.broadcast %167 : f32 to vector<1x128xf32>
    %169 = vector.broadcast %168 : vector<1x128xf32> to vector<96x128xf32>
    %170 = arith.mulf %166, %169 : vector<96x128xf32>
    %171 = arith.addf %164, %170 : vector<96x128xf32>
    %172 = vector.extract_strided_slice %1 {offsets = [2, 0, 0], sizes = [1, 96, 128], strides = [1, 1, 1]} : vector<4x96x128xf32> to vector<1x96x128xf32>
    %173 = vector.shape_cast %172 : vector<1x96x128xf32> to vector<96x128xf32>
    %c2_57 = arith.constant 2 : index
    %c4_58 = arith.constant 4 : index
    %174 = memref.load %arg3[%c2_57, %c4_58] : memref<4x32xf32, #tpu.memory_space<smem>>
    %175 = vector.broadcast %174 : f32 to vector<1x128xf32>
    %176 = vector.broadcast %175 : vector<1x128xf32> to vector<96x128xf32>
    %177 = arith.mulf %173, %176 : vector<96x128xf32>
    %178 = arith.addf %171, %177 : vector<96x128xf32>
    %179 = vector.extract_strided_slice %1 {offsets = [3, 0, 0], sizes = [1, 96, 128], strides = [1, 1, 1]} : vector<4x96x128xf32> to vector<1x96x128xf32>
    %180 = vector.shape_cast %179 : vector<1x96x128xf32> to vector<96x128xf32>
    %c3_59 = arith.constant 3 : index
    %c4_60 = arith.constant 4 : index
    %181 = memref.load %arg3[%c3_59, %c4_60] : memref<4x32xf32, #tpu.memory_space<smem>>
    %182 = vector.broadcast %181 : f32 to vector<1x128xf32>
    %183 = vector.broadcast %182 : vector<1x128xf32> to vector<96x128xf32>
    %184 = arith.mulf %180, %183 : vector<96x128xf32>
    %185 = arith.addf %178, %184 : vector<96x128xf32>
    %cst_61 = arith.constant 0.000000e+00 : f32
    %186 = vector.broadcast %cst_61 : f32 to vector<96x128xf32>
    %187 = arith.maximumf %185, %186 : vector<96x128xf32>
    %c0_62 = arith.constant 0 : index
    %c4_63 = arith.constant 4 : index
    %188 = memref.load %arg5[%c0_62, %c4_63] : memref<1x32xf32, #tpu.memory_space<smem>>
    %189 = vector.broadcast %188 : f32 to vector<1x128xf32>
    %190 = vector.broadcast %189 : vector<1x128xf32> to vector<96x128xf32>
    %191 = arith.mulf %187, %190 : vector<96x128xf32>
    %192 = arith.addf %154, %191 : vector<96x128xf32>
    %193 = vector.extract_strided_slice %1 {offsets = [0, 0, 0], sizes = [1, 96, 128], strides = [1, 1, 1]} : vector<4x96x128xf32> to vector<1x96x128xf32>
    %194 = vector.shape_cast %193 : vector<1x96x128xf32> to vector<96x128xf32>
    %c0_64 = arith.constant 0 : index
    %c5 = arith.constant 5 : index
    %195 = memref.load %arg3[%c0_64, %c5] : memref<4x32xf32, #tpu.memory_space<smem>>
    %196 = vector.broadcast %195 : f32 to vector<1x128xf32>
    %197 = vector.broadcast %196 : vector<1x128xf32> to vector<96x128xf32>
    %198 = arith.mulf %194, %197 : vector<96x128xf32>
    %c0_65 = arith.constant 0 : index
    %c5_66 = arith.constant 5 : index
    %199 = memref.load %arg4[%c0_65, %c5_66] : memref<1x32xf32, #tpu.memory_space<smem>>
    %200 = vector.broadcast %199 : f32 to vector<1x128xf32>
    %201 = vector.broadcast %200 : vector<1x128xf32> to vector<96x128xf32>
    %202 = arith.addf %198, %201 : vector<96x128xf32>
    %203 = vector.extract_strided_slice %1 {offsets = [1, 0, 0], sizes = [1, 96, 128], strides = [1, 1, 1]} : vector<4x96x128xf32> to vector<1x96x128xf32>
    %204 = vector.shape_cast %203 : vector<1x96x128xf32> to vector<96x128xf32>
    %c1_67 = arith.constant 1 : index
    %c5_68 = arith.constant 5 : index
    %205 = memref.load %arg3[%c1_67, %c5_68] : memref<4x32xf32, #tpu.memory_space<smem>>
    %206 = vector.broadcast %205 : f32 to vector<1x128xf32>
    %207 = vector.broadcast %206 : vector<1x128xf32> to vector<96x128xf32>
    %208 = arith.mulf %204, %207 : vector<96x128xf32>
    %209 = arith.addf %202, %208 : vector<96x128xf32>
    %210 = vector.extract_strided_slice %1 {offsets = [2, 0, 0], sizes = [1, 96, 128], strides = [1, 1, 1]} : vector<4x96x128xf32> to vector<1x96x128xf32>
    %211 = vector.shape_cast %210 : vector<1x96x128xf32> to vector<96x128xf32>
    %c2_69 = arith.constant 2 : index
    %c5_70 = arith.constant 5 : index
    %212 = memref.load %arg3[%c2_69, %c5_70] : memref<4x32xf32, #tpu.memory_space<smem>>
    %213 = vector.broadcast %212 : f32 to vector<1x128xf32>
    %214 = vector.broadcast %213 : vector<1x128xf32> to vector<96x128xf32>
    %215 = arith.mulf %211, %214 : vector<96x128xf32>
    %216 = arith.addf %209, %215 : vector<96x128xf32>
    %217 = vector.extract_strided_slice %1 {offsets = [3, 0, 0], sizes = [1, 96, 128], strides = [1, 1, 1]} : vector<4x96x128xf32> to vector<1x96x128xf32>
    %218 = vector.shape_cast %217 : vector<1x96x128xf32> to vector<96x128xf32>
    %c3_71 = arith.constant 3 : index
    %c5_72 = arith.constant 5 : index
    %219 = memref.load %arg3[%c3_71, %c5_72] : memref<4x32xf32, #tpu.memory_space<smem>>
    %220 = vector.broadcast %219 : f32 to vector<1x128xf32>
    %221 = vector.broadcast %220 : vector<1x128xf32> to vector<96x128xf32>
    %222 = arith.mulf %218, %221 : vector<96x128xf32>
    %223 = arith.addf %216, %222 : vector<96x128xf32>
    %cst_73 = arith.constant 0.000000e+00 : f32
    %224 = vector.broadcast %cst_73 : f32 to vector<96x128xf32>
    %225 = arith.maximumf %223, %224 : vector<96x128xf32>
    %c0_74 = arith.constant 0 : index
    %c5_75 = arith.constant 5 : index
    %226 = memref.load %arg5[%c0_74, %c5_75] : memref<1x32xf32, #tpu.memory_space<smem>>
    %227 = vector.broadcast %226 : f32 to vector<1x128xf32>
    %228 = vector.broadcast %227 : vector<1x128xf32> to vector<96x128xf32>
    %229 = arith.mulf %225, %228 : vector<96x128xf32>
    %230 = arith.addf %192, %229 : vector<96x128xf32>
    %231 = vector.extract_strided_slice %1 {offsets = [0, 0, 0], sizes = [1, 96, 128], strides = [1, 1, 1]} : vector<4x96x128xf32> to vector<1x96x128xf32>
    %232 = vector.shape_cast %231 : vector<1x96x128xf32> to vector<96x128xf32>
    %c0_76 = arith.constant 0 : index
    %c6 = arith.constant 6 : index
    %233 = memref.load %arg3[%c0_76, %c6] : memref<4x32xf32, #tpu.memory_space<smem>>
    %234 = vector.broadcast %233 : f32 to vector<1x128xf32>
    %235 = vector.broadcast %234 : vector<1x128xf32> to vector<96x128xf32>
    %236 = arith.mulf %232, %235 : vector<96x128xf32>
    %c0_77 = arith.constant 0 : index
    %c6_78 = arith.constant 6 : index
    %237 = memref.load %arg4[%c0_77, %c6_78] : memref<1x32xf32, #tpu.memory_space<smem>>
    %238 = vector.broadcast %237 : f32 to vector<1x128xf32>
    %239 = vector.broadcast %238 : vector<1x128xf32> to vector<96x128xf32>
    %240 = arith.addf %236, %239 : vector<96x128xf32>
    %241 = vector.extract_strided_slice %1 {offsets = [1, 0, 0], sizes = [1, 96, 128], strides = [1, 1, 1]} : vector<4x96x128xf32> to vector<1x96x128xf32>
    %242 = vector.shape_cast %241 : vector<1x96x128xf32> to vector<96x128xf32>
    %c1_79 = arith.constant 1 : index
    %c6_80 = arith.constant 6 : index
    %243 = memref.load %arg3[%c1_79, %c6_80] : memref<4x32xf32, #tpu.memory_space<smem>>
    %244 = vector.broadcast %243 : f32 to vector<1x128xf32>
    %245 = vector.broadcast %244 : vector<1x128xf32> to vector<96x128xf32>
    %246 = arith.mulf %242, %245 : vector<96x128xf32>
    %247 = arith.addf %240, %246 : vector<96x128xf32>
    %248 = vector.extract_strided_slice %1 {offsets = [2, 0, 0], sizes = [1, 96, 128], strides = [1, 1, 1]} : vector<4x96x128xf32> to vector<1x96x128xf32>
    %249 = vector.shape_cast %248 : vector<1x96x128xf32> to vector<96x128xf32>
    %c2_81 = arith.constant 2 : index
    %c6_82 = arith.constant 6 : index
    %250 = memref.load %arg3[%c2_81, %c6_82] : memref<4x32xf32, #tpu.memory_space<smem>>
    %251 = vector.broadcast %250 : f32 to vector<1x128xf32>
    %252 = vector.broadcast %251 : vector<1x128xf32> to vector<96x128xf32>
    %253 = arith.mulf %249, %252 : vector<96x128xf32>
    %254 = arith.addf %247, %253 : vector<96x128xf32>
    %255 = vector.extract_strided_slice %1 {offsets = [3, 0, 0], sizes = [1, 96, 128], strides = [1, 1, 1]} : vector<4x96x128xf32> to vector<1x96x128xf32>
    %256 = vector.shape_cast %255 : vector<1x96x128xf32> to vector<96x128xf32>
    %c3_83 = arith.constant 3 : index
    %c6_84 = arith.constant 6 : index
    %257 = memref.load %arg3[%c3_83, %c6_84] : memref<4x32xf32, #tpu.memory_space<smem>>
    %258 = vector.broadcast %257 : f32 to vector<1x128xf32>
    %259 = vector.broadcast %258 : vector<1x128xf32> to vector<96x128xf32>
    %260 = arith.mulf %256, %259 : vector<96x128xf32>
    %261 = arith.addf %254, %260 : vector<96x128xf32>
    %cst_85 = arith.constant 0.000000e+00 : f32
    %262 = vector.broadcast %cst_85 : f32 to vector<96x128xf32>
    %263 = arith.maximumf %261, %262 : vector<96x128xf32>
    %c0_86 = arith.constant 0 : index
    %c6_87 = arith.constant 6 : index
    %264 = memref.load %arg5[%c0_86, %c6_87] : memref<1x32xf32, #tpu.memory_space<smem>>
    %265 = vector.broadcast %264 : f32 to vector<1x128xf32>
    %266 = vector.broadcast %265 : vector<1x128xf32> to vector<96x128xf32>
    %267 = arith.mulf %263, %266 : vector<96x128xf32>
    %268 = arith.addf %230, %267 : vector<96x128xf32>
    %269 = vector.extract_strided_slice %1 {offsets = [0, 0, 0], sizes = [1, 96, 128], strides = [1, 1, 1]} : vector<4x96x128xf32> to vector<1x96x128xf32>
    %270 = vector.shape_cast %269 : vector<1x96x128xf32> to vector<96x128xf32>
    %c0_88 = arith.constant 0 : index
    %c7 = arith.constant 7 : index
    %271 = memref.load %arg3[%c0_88, %c7] : memref<4x32xf32, #tpu.memory_space<smem>>
    %272 = vector.broadcast %271 : f32 to vector<1x128xf32>
    %273 = vector.broadcast %272 : vector<1x128xf32> to vector<96x128xf32>
    %274 = arith.mulf %270, %273 : vector<96x128xf32>
    %c0_89 = arith.constant 0 : index
    %c7_90 = arith.constant 7 : index
    %275 = memref.load %arg4[%c0_89, %c7_90] : memref<1x32xf32, #tpu.memory_space<smem>>
    %276 = vector.broadcast %275 : f32 to vector<1x128xf32>
    %277 = vector.broadcast %276 : vector<1x128xf32> to vector<96x128xf32>
    %278 = arith.addf %274, %277 : vector<96x128xf32>
    %279 = vector.extract_strided_slice %1 {offsets = [1, 0, 0], sizes = [1, 96, 128], strides = [1, 1, 1]} : vector<4x96x128xf32> to vector<1x96x128xf32>
    %280 = vector.shape_cast %279 : vector<1x96x128xf32> to vector<96x128xf32>
    %c1_91 = arith.constant 1 : index
    %c7_92 = arith.constant 7 : index
    %281 = memref.load %arg3[%c1_91, %c7_92] : memref<4x32xf32, #tpu.memory_space<smem>>
    %282 = vector.broadcast %281 : f32 to vector<1x128xf32>
    %283 = vector.broadcast %282 : vector<1x128xf32> to vector<96x128xf32>
    %284 = arith.mulf %280, %283 : vector<96x128xf32>
    %285 = arith.addf %278, %284 : vector<96x128xf32>
    %286 = vector.extract_strided_slice %1 {offsets = [2, 0, 0], sizes = [1, 96, 128], strides = [1, 1, 1]} : vector<4x96x128xf32> to vector<1x96x128xf32>
    %287 = vector.shape_cast %286 : vector<1x96x128xf32> to vector<96x128xf32>
    %c2_93 = arith.constant 2 : index
    %c7_94 = arith.constant 7 : index
    %288 = memref.load %arg3[%c2_93, %c7_94] : memref<4x32xf32, #tpu.memory_space<smem>>
    %289 = vector.broadcast %288 : f32 to vector<1x128xf32>
    %290 = vector.broadcast %289 : vector<1x128xf32> to vector<96x128xf32>
    %291 = arith.mulf %287, %290 : vector<96x128xf32>
    %292 = arith.addf %285, %291 : vector<96x128xf32>
    %293 = vector.extract_strided_slice %1 {offsets = [3, 0, 0], sizes = [1, 96, 128], strides = [1, 1, 1]} : vector<4x96x128xf32> to vector<1x96x128xf32>
    %294 = vector.shape_cast %293 : vector<1x96x128xf32> to vector<96x128xf32>
    %c3_95 = arith.constant 3 : index
    %c7_96 = arith.constant 7 : index
    %295 = memref.load %arg3[%c3_95, %c7_96] : memref<4x32xf32, #tpu.memory_space<smem>>
    %296 = vector.broadcast %295 : f32 to vector<1x128xf32>
    %297 = vector.broadcast %296 : vector<1x128xf32> to vector<96x128xf32>
    %298 = arith.mulf %294, %297 : vector<96x128xf32>
    %299 = arith.addf %292, %298 : vector<96x128xf32>
    %cst_97 = arith.constant 0.000000e+00 : f32
    %300 = vector.broadcast %cst_97 : f32 to vector<96x128xf32>
    %301 = arith.maximumf %299, %300 : vector<96x128xf32>
    %c0_98 = arith.constant 0 : index
    %c7_99 = arith.constant 7 : index
    %302 = memref.load %arg5[%c0_98, %c7_99] : memref<1x32xf32, #tpu.memory_space<smem>>
    %303 = vector.broadcast %302 : f32 to vector<1x128xf32>
    %304 = vector.broadcast %303 : vector<1x128xf32> to vector<96x128xf32>
    %305 = arith.mulf %301, %304 : vector<96x128xf32>
    %306 = arith.addf %268, %305 : vector<96x128xf32>
    %307 = vector.extract_strided_slice %1 {offsets = [0, 0, 0], sizes = [1, 96, 128], strides = [1, 1, 1]} : vector<4x96x128xf32> to vector<1x96x128xf32>
    %308 = vector.shape_cast %307 : vector<1x96x128xf32> to vector<96x128xf32>
    %c0_100 = arith.constant 0 : index
    %c8 = arith.constant 8 : index
    %309 = memref.load %arg3[%c0_100, %c8] : memref<4x32xf32, #tpu.memory_space<smem>>
    %310 = vector.broadcast %309 : f32 to vector<1x128xf32>
    %311 = vector.broadcast %310 : vector<1x128xf32> to vector<96x128xf32>
    %312 = arith.mulf %308, %311 : vector<96x128xf32>
    %c0_101 = arith.constant 0 : index
    %c8_102 = arith.constant 8 : index
    %313 = memref.load %arg4[%c0_101, %c8_102] : memref<1x32xf32, #tpu.memory_space<smem>>
    %314 = vector.broadcast %313 : f32 to vector<1x128xf32>
    %315 = vector.broadcast %314 : vector<1x128xf32> to vector<96x128xf32>
    %316 = arith.addf %312, %315 : vector<96x128xf32>
    %317 = vector.extract_strided_slice %1 {offsets = [1, 0, 0], sizes = [1, 96, 128], strides = [1, 1, 1]} : vector<4x96x128xf32> to vector<1x96x128xf32>
    %318 = vector.shape_cast %317 : vector<1x96x128xf32> to vector<96x128xf32>
    %c1_103 = arith.constant 1 : index
    %c8_104 = arith.constant 8 : index
    %319 = memref.load %arg3[%c1_103, %c8_104] : memref<4x32xf32, #tpu.memory_space<smem>>
    %320 = vector.broadcast %319 : f32 to vector<1x128xf32>
    %321 = vector.broadcast %320 : vector<1x128xf32> to vector<96x128xf32>
    %322 = arith.mulf %318, %321 : vector<96x128xf32>
    %323 = arith.addf %316, %322 : vector<96x128xf32>
    %324 = vector.extract_strided_slice %1 {offsets = [2, 0, 0], sizes = [1, 96, 128], strides = [1, 1, 1]} : vector<4x96x128xf32> to vector<1x96x128xf32>
    %325 = vector.shape_cast %324 : vector<1x96x128xf32> to vector<96x128xf32>
    %c2_105 = arith.constant 2 : index
    %c8_106 = arith.constant 8 : index
    %326 = memref.load %arg3[%c2_105, %c8_106] : memref<4x32xf32, #tpu.memory_space<smem>>
    %327 = vector.broadcast %326 : f32 to vector<1x128xf32>
    %328 = vector.broadcast %327 : vector<1x128xf32> to vector<96x128xf32>
    %329 = arith.mulf %325, %328 : vector<96x128xf32>
    %330 = arith.addf %323, %329 : vector<96x128xf32>
    %331 = vector.extract_strided_slice %1 {offsets = [3, 0, 0], sizes = [1, 96, 128], strides = [1, 1, 1]} : vector<4x96x128xf32> to vector<1x96x128xf32>
    %332 = vector.shape_cast %331 : vector<1x96x128xf32> to vector<96x128xf32>
    %c3_107 = arith.constant 3 : index
    %c8_108 = arith.constant 8 : index
    %333 = memref.load %arg3[%c3_107, %c8_108] : memref<4x32xf32, #tpu.memory_space<smem>>
    %334 = vector.broadcast %333 : f32 to vector<1x128xf32>
    %335 = vector.broadcast %334 : vector<1x128xf32> to vector<96x128xf32>
    %336 = arith.mulf %332, %335 : vector<96x128xf32>
    %337 = arith.addf %330, %336 : vector<96x128xf32>
    %cst_109 = arith.constant 0.000000e+00 : f32
    %338 = vector.broadcast %cst_109 : f32 to vector<96x128xf32>
    %339 = arith.maximumf %337, %338 : vector<96x128xf32>
    %c0_110 = arith.constant 0 : index
    %c8_111 = arith.constant 8 : index
    %340 = memref.load %arg5[%c0_110, %c8_111] : memref<1x32xf32, #tpu.memory_space<smem>>
    %341 = vector.broadcast %340 : f32 to vector<1x128xf32>
    %342 = vector.broadcast %341 : vector<1x128xf32> to vector<96x128xf32>
    %343 = arith.mulf %339, %342 : vector<96x128xf32>
    %344 = arith.addf %306, %343 : vector<96x128xf32>
    %345 = vector.extract_strided_slice %1 {offsets = [0, 0, 0], sizes = [1, 96, 128], strides = [1, 1, 1]} : vector<4x96x128xf32> to vector<1x96x128xf32>
    %346 = vector.shape_cast %345 : vector<1x96x128xf32> to vector<96x128xf32>
    %c0_112 = arith.constant 0 : index
    %c9 = arith.constant 9 : index
    %347 = memref.load %arg3[%c0_112, %c9] : memref<4x32xf32, #tpu.memory_space<smem>>
    %348 = vector.broadcast %347 : f32 to vector<1x128xf32>
    %349 = vector.broadcast %348 : vector<1x128xf32> to vector<96x128xf32>
    %350 = arith.mulf %346, %349 : vector<96x128xf32>
    %c0_113 = arith.constant 0 : index
    %c9_114 = arith.constant 9 : index
    %351 = memref.load %arg4[%c0_113, %c9_114] : memref<1x32xf32, #tpu.memory_space<smem>>
    %352 = vector.broadcast %351 : f32 to vector<1x128xf32>
    %353 = vector.broadcast %352 : vector<1x128xf32> to vector<96x128xf32>
    %354 = arith.addf %350, %353 : vector<96x128xf32>
    %355 = vector.extract_strided_slice %1 {offsets = [1, 0, 0], sizes = [1, 96, 128], strides = [1, 1, 1]} : vector<4x96x128xf32> to vector<1x96x128xf32>
    %356 = vector.shape_cast %355 : vector<1x96x128xf32> to vector<96x128xf32>
    %c1_115 = arith.constant 1 : index
    %c9_116 = arith.constant 9 : index
    %357 = memref.load %arg3[%c1_115, %c9_116] : memref<4x32xf32, #tpu.memory_space<smem>>
    %358 = vector.broadcast %357 : f32 to vector<1x128xf32>
    %359 = vector.broadcast %358 : vector<1x128xf32> to vector<96x128xf32>
    %360 = arith.mulf %356, %359 : vector<96x128xf32>
    %361 = arith.addf %354, %360 : vector<96x128xf32>
    %362 = vector.extract_strided_slice %1 {offsets = [2, 0, 0], sizes = [1, 96, 128], strides = [1, 1, 1]} : vector<4x96x128xf32> to vector<1x96x128xf32>
    %363 = vector.shape_cast %362 : vector<1x96x128xf32> to vector<96x128xf32>
    %c2_117 = arith.constant 2 : index
    %c9_118 = arith.constant 9 : index
    %364 = memref.load %arg3[%c2_117, %c9_118] : memref<4x32xf32, #tpu.memory_space<smem>>
    %365 = vector.broadcast %364 : f32 to vector<1x128xf32>
    %366 = vector.broadcast %365 : vector<1x128xf32> to vector<96x128xf32>
    %367 = arith.mulf %363, %366 : vector<96x128xf32>
    %368 = arith.addf %361, %367 : vector<96x128xf32>
    %369 = vector.extract_strided_slice %1 {offsets = [3, 0, 0], sizes = [1, 96, 128], strides = [1, 1, 1]} : vector<4x96x128xf32> to vector<1x96x128xf32>
    %370 = vector.shape_cast %369 : vector<1x96x128xf32> to vector<96x128xf32>
    %c3_119 = arith.constant 3 : index
    %c9_120 = arith.constant 9 : index
    %371 = memref.load %arg3[%c3_119, %c9_120] : memref<4x32xf32, #tpu.memory_space<smem>>
    %372 = vector.broadcast %371 : f32 to vector<1x128xf32>
    %373 = vector.broadcast %372 : vector<1x128xf32> to vector<96x128xf32>
    %374 = arith.mulf %370, %373 : vector<96x128xf32>
    %375 = arith.addf %368, %374 : vector<96x128xf32>
    %cst_121 = arith.constant 0.000000e+00 : f32
    %376 = vector.broadcast %cst_121 : f32 to vector<96x128xf32>
    %377 = arith.maximumf %375, %376 : vector<96x128xf32>
    %c0_122 = arith.constant 0 : index
    %c9_123 = arith.constant 9 : index
    %378 = memref.load %arg5[%c0_122, %c9_123] : memref<1x32xf32, #tpu.memory_space<smem>>
    %379 = vector.broadcast %378 : f32 to vector<1x128xf32>
    %380 = vector.broadcast %379 : vector<1x128xf32> to vector<96x128xf32>
    %381 = arith.mulf %377, %380 : vector<96x128xf32>
    %382 = arith.addf %344, %381 : vector<96x128xf32>
    %383 = vector.extract_strided_slice %1 {offsets = [0, 0, 0], sizes = [1, 96, 128], strides = [1, 1, 1]} : vector<4x96x128xf32> to vector<1x96x128xf32>
    %384 = vector.shape_cast %383 : vector<1x96x128xf32> to vector<96x128xf32>
    %c0_124 = arith.constant 0 : index
    %c10 = arith.constant 10 : index
    %385 = memref.load %arg3[%c0_124, %c10] : memref<4x32xf32, #tpu.memory_space<smem>>
    %386 = vector.broadcast %385 : f32 to vector<1x128xf32>
    %387 = vector.broadcast %386 : vector<1x128xf32> to vector<96x128xf32>
    %388 = arith.mulf %384, %387 : vector<96x128xf32>
    %c0_125 = arith.constant 0 : index
    %c10_126 = arith.constant 10 : index
    %389 = memref.load %arg4[%c0_125, %c10_126] : memref<1x32xf32, #tpu.memory_space<smem>>
    %390 = vector.broadcast %389 : f32 to vector<1x128xf32>
    %391 = vector.broadcast %390 : vector<1x128xf32> to vector<96x128xf32>
    %392 = arith.addf %388, %391 : vector<96x128xf32>
    %393 = vector.extract_strided_slice %1 {offsets = [1, 0, 0], sizes = [1, 96, 128], strides = [1, 1, 1]} : vector<4x96x128xf32> to vector<1x96x128xf32>
    %394 = vector.shape_cast %393 : vector<1x96x128xf32> to vector<96x128xf32>
    %c1_127 = arith.constant 1 : index
    %c10_128 = arith.constant 10 : index
    %395 = memref.load %arg3[%c1_127, %c10_128] : memref<4x32xf32, #tpu.memory_space<smem>>
    %396 = vector.broadcast %395 : f32 to vector<1x128xf32>
    %397 = vector.broadcast %396 : vector<1x128xf32> to vector<96x128xf32>
    %398 = arith.mulf %394, %397 : vector<96x128xf32>
    %399 = arith.addf %392, %398 : vector<96x128xf32>
    %400 = vector.extract_strided_slice %1 {offsets = [2, 0, 0], sizes = [1, 96, 128], strides = [1, 1, 1]} : vector<4x96x128xf32> to vector<1x96x128xf32>
    %401 = vector.shape_cast %400 : vector<1x96x128xf32> to vector<96x128xf32>
    %c2_129 = arith.constant 2 : index
    %c10_130 = arith.constant 10 : index
    %402 = memref.load %arg3[%c2_129, %c10_130] : memref<4x32xf32, #tpu.memory_space<smem>>
    %403 = vector.broadcast %402 : f32 to vector<1x128xf32>
    %404 = vector.broadcast %403 : vector<1x128xf32> to vector<96x128xf32>
    %405 = arith.mulf %401, %404 : vector<96x128xf32>
    %406 = arith.addf %399, %405 : vector<96x128xf32>
    %407 = vector.extract_strided_slice %1 {offsets = [3, 0, 0], sizes = [1, 96, 128], strides = [1, 1, 1]} : vector<4x96x128xf32> to vector<1x96x128xf32>
    %408 = vector.shape_cast %407 : vector<1x96x128xf32> to vector<96x128xf32>
    %c3_131 = arith.constant 3 : index
    %c10_132 = arith.constant 10 : index
    %409 = memref.load %arg3[%c3_131, %c10_132] : memref<4x32xf32, #tpu.memory_space<smem>>
    %410 = vector.broadcast %409 : f32 to vector<1x128xf32>
    %411 = vector.broadcast %410 : vector<1x128xf32> to vector<96x128xf32>
    %412 = arith.mulf %408, %411 : vector<96x128xf32>
    %413 = arith.addf %406, %412 : vector<96x128xf32>
    %cst_133 = arith.constant 0.000000e+00 : f32
    %414 = vector.broadcast %cst_133 : f32 to vector<96x128xf32>
    %415 = arith.maximumf %413, %414 : vector<96x128xf32>
    %c0_134 = arith.constant 0 : index
    %c10_135 = arith.constant 10 : index
    %416 = memref.load %arg5[%c0_134, %c10_135] : memref<1x32xf32, #tpu.memory_space<smem>>
    %417 = vector.broadcast %416 : f32 to vector<1x128xf32>
    %418 = vector.broadcast %417 : vector<1x128xf32> to vector<96x128xf32>
    %419 = arith.mulf %415, %418 : vector<96x128xf32>
    %420 = arith.addf %382, %419 : vector<96x128xf32>
    %421 = vector.extract_strided_slice %1 {offsets = [0, 0, 0], sizes = [1, 96, 128], strides = [1, 1, 1]} : vector<4x96x128xf32> to vector<1x96x128xf32>
    %422 = vector.shape_cast %421 : vector<1x96x128xf32> to vector<96x128xf32>
    %c0_136 = arith.constant 0 : index
    %c11 = arith.constant 11 : index
    %423 = memref.load %arg3[%c0_136, %c11] : memref<4x32xf32, #tpu.memory_space<smem>>
    %424 = vector.broadcast %423 : f32 to vector<1x128xf32>
    %425 = vector.broadcast %424 : vector<1x128xf32> to vector<96x128xf32>
    %426 = arith.mulf %422, %425 : vector<96x128xf32>
    %c0_137 = arith.constant 0 : index
    %c11_138 = arith.constant 11 : index
    %427 = memref.load %arg4[%c0_137, %c11_138] : memref<1x32xf32, #tpu.memory_space<smem>>
    %428 = vector.broadcast %427 : f32 to vector<1x128xf32>
    %429 = vector.broadcast %428 : vector<1x128xf32> to vector<96x128xf32>
    %430 = arith.addf %426, %429 : vector<96x128xf32>
    %431 = vector.extract_strided_slice %1 {offsets = [1, 0, 0], sizes = [1, 96, 128], strides = [1, 1, 1]} : vector<4x96x128xf32> to vector<1x96x128xf32>
    %432 = vector.shape_cast %431 : vector<1x96x128xf32> to vector<96x128xf32>
    %c1_139 = arith.constant 1 : index
    %c11_140 = arith.constant 11 : index
    %433 = memref.load %arg3[%c1_139, %c11_140] : memref<4x32xf32, #tpu.memory_space<smem>>
    %434 = vector.broadcast %433 : f32 to vector<1x128xf32>
    %435 = vector.broadcast %434 : vector<1x128xf32> to vector<96x128xf32>
    %436 = arith.mulf %432, %435 : vector<96x128xf32>
    %437 = arith.addf %430, %436 : vector<96x128xf32>
    %438 = vector.extract_strided_slice %1 {offsets = [2, 0, 0], sizes = [1, 96, 128], strides = [1, 1, 1]} : vector<4x96x128xf32> to vector<1x96x128xf32>
    %439 = vector.shape_cast %438 : vector<1x96x128xf32> to vector<96x128xf32>
    %c2_141 = arith.constant 2 : index
    %c11_142 = arith.constant 11 : index
    %440 = memref.load %arg3[%c2_141, %c11_142] : memref<4x32xf32, #tpu.memory_space<smem>>
    %441 = vector.broadcast %440 : f32 to vector<1x128xf32>
    %442 = vector.broadcast %441 : vector<1x128xf32> to vector<96x128xf32>
    %443 = arith.mulf %439, %442 : vector<96x128xf32>
    %444 = arith.addf %437, %443 : vector<96x128xf32>
    %445 = vector.extract_strided_slice %1 {offsets = [3, 0, 0], sizes = [1, 96, 128], strides = [1, 1, 1]} : vector<4x96x128xf32> to vector<1x96x128xf32>
    %446 = vector.shape_cast %445 : vector<1x96x128xf32> to vector<96x128xf32>
    %c3_143 = arith.constant 3 : index
    %c11_144 = arith.constant 11 : index
    %447 = memref.load %arg3[%c3_143, %c11_144] : memref<4x32xf32, #tpu.memory_space<smem>>
    %448 = vector.broadcast %447 : f32 to vector<1x128xf32>
    %449 = vector.broadcast %448 : vector<1x128xf32> to vector<96x128xf32>
    %450 = arith.mulf %446, %449 : vector<96x128xf32>
    %451 = arith.addf %444, %450 : vector<96x128xf32>
    %cst_145 = arith.constant 0.000000e+00 : f32
    %452 = vector.broadcast %cst_145 : f32 to vector<96x128xf32>
    %453 = arith.maximumf %451, %452 : vector<96x128xf32>
    %c0_146 = arith.constant 0 : index
    %c11_147 = arith.constant 11 : index
    %454 = memref.load %arg5[%c0_146, %c11_147] : memref<1x32xf32, #tpu.memory_space<smem>>
    %455 = vector.broadcast %454 : f32 to vector<1x128xf32>
    %456 = vector.broadcast %455 : vector<1x128xf32> to vector<96x128xf32>
    %457 = arith.mulf %453, %456 : vector<96x128xf32>
    %458 = arith.addf %420, %457 : vector<96x128xf32>
    %459 = vector.extract_strided_slice %1 {offsets = [0, 0, 0], sizes = [1, 96, 128], strides = [1, 1, 1]} : vector<4x96x128xf32> to vector<1x96x128xf32>
    %460 = vector.shape_cast %459 : vector<1x96x128xf32> to vector<96x128xf32>
    %c0_148 = arith.constant 0 : index
    %c12 = arith.constant 12 : index
    %461 = memref.load %arg3[%c0_148, %c12] : memref<4x32xf32, #tpu.memory_space<smem>>
    %462 = vector.broadcast %461 : f32 to vector<1x128xf32>
    %463 = vector.broadcast %462 : vector<1x128xf32> to vector<96x128xf32>
    %464 = arith.mulf %460, %463 : vector<96x128xf32>
    %c0_149 = arith.constant 0 : index
    %c12_150 = arith.constant 12 : index
    %465 = memref.load %arg4[%c0_149, %c12_150] : memref<1x32xf32, #tpu.memory_space<smem>>
    %466 = vector.broadcast %465 : f32 to vector<1x128xf32>
    %467 = vector.broadcast %466 : vector<1x128xf32> to vector<96x128xf32>
    %468 = arith.addf %464, %467 : vector<96x128xf32>
    %469 = vector.extract_strided_slice %1 {offsets = [1, 0, 0], sizes = [1, 96, 128], strides = [1, 1, 1]} : vector<4x96x128xf32> to vector<1x96x128xf32>
    %470 = vector.shape_cast %469 : vector<1x96x128xf32> to vector<96x128xf32>
    %c1_151 = arith.constant 1 : index
    %c12_152 = arith.constant 12 : index
    %471 = memref.load %arg3[%c1_151, %c12_152] : memref<4x32xf32, #tpu.memory_space<smem>>
    %472 = vector.broadcast %471 : f32 to vector<1x128xf32>
    %473 = vector.broadcast %472 : vector<1x128xf32> to vector<96x128xf32>
    %474 = arith.mulf %470, %473 : vector<96x128xf32>
    %475 = arith.addf %468, %474 : vector<96x128xf32>
    %476 = vector.extract_strided_slice %1 {offsets = [2, 0, 0], sizes = [1, 96, 128], strides = [1, 1, 1]} : vector<4x96x128xf32> to vector<1x96x128xf32>
    %477 = vector.shape_cast %476 : vector<1x96x128xf32> to vector<96x128xf32>
    %c2_153 = arith.constant 2 : index
    %c12_154 = arith.constant 12 : index
    %478 = memref.load %arg3[%c2_153, %c12_154] : memref<4x32xf32, #tpu.memory_space<smem>>
    %479 = vector.broadcast %478 : f32 to vector<1x128xf32>
    %480 = vector.broadcast %479 : vector<1x128xf32> to vector<96x128xf32>
    %481 = arith.mulf %477, %480 : vector<96x128xf32>
    %482 = arith.addf %475, %481 : vector<96x128xf32>
    %483 = vector.extract_strided_slice %1 {offsets = [3, 0, 0], sizes = [1, 96, 128], strides = [1, 1, 1]} : vector<4x96x128xf32> to vector<1x96x128xf32>
    %484 = vector.shape_cast %483 : vector<1x96x128xf32> to vector<96x128xf32>
    %c3_155 = arith.constant 3 : index
    %c12_156 = arith.constant 12 : index
    %485 = memref.load %arg3[%c3_155, %c12_156] : memref<4x32xf32, #tpu.memory_space<smem>>
    %486 = vector.broadcast %485 : f32 to vector<1x128xf32>
    %487 = vector.broadcast %486 : vector<1x128xf32> to vector<96x128xf32>
    %488 = arith.mulf %484, %487 : vector<96x128xf32>
    %489 = arith.addf %482, %488 : vector<96x128xf32>
    %cst_157 = arith.constant 0.000000e+00 : f32
    %490 = vector.broadcast %cst_157 : f32 to vector<96x128xf32>
    %491 = arith.maximumf %489, %490 : vector<96x128xf32>
    %c0_158 = arith.constant 0 : index
    %c12_159 = arith.constant 12 : index
    %492 = memref.load %arg5[%c0_158, %c12_159] : memref<1x32xf32, #tpu.memory_space<smem>>
    %493 = vector.broadcast %492 : f32 to vector<1x128xf32>
    %494 = vector.broadcast %493 : vector<1x128xf32> to vector<96x128xf32>
    %495 = arith.mulf %491, %494 : vector<96x128xf32>
    %496 = arith.addf %458, %495 : vector<96x128xf32>
    %497 = vector.extract_strided_slice %1 {offsets = [0, 0, 0], sizes = [1, 96, 128], strides = [1, 1, 1]} : vector<4x96x128xf32> to vector<1x96x128xf32>
    %498 = vector.shape_cast %497 : vector<1x96x128xf32> to vector<96x128xf32>
    %c0_160 = arith.constant 0 : index
    %c13 = arith.constant 13 : index
    %499 = memref.load %arg3[%c0_160, %c13] : memref<4x32xf32, #tpu.memory_space<smem>>
    %500 = vector.broadcast %499 : f32 to vector<1x128xf32>
    %501 = vector.broadcast %500 : vector<1x128xf32> to vector<96x128xf32>
    %502 = arith.mulf %498, %501 : vector<96x128xf32>
    %c0_161 = arith.constant 0 : index
    %c13_162 = arith.constant 13 : index
    %503 = memref.load %arg4[%c0_161, %c13_162] : memref<1x32xf32, #tpu.memory_space<smem>>
    %504 = vector.broadcast %503 : f32 to vector<1x128xf32>
    %505 = vector.broadcast %504 : vector<1x128xf32> to vector<96x128xf32>
    %506 = arith.addf %502, %505 : vector<96x128xf32>
    %507 = vector.extract_strided_slice %1 {offsets = [1, 0, 0], sizes = [1, 96, 128], strides = [1, 1, 1]} : vector<4x96x128xf32> to vector<1x96x128xf32>
    %508 = vector.shape_cast %507 : vector<1x96x128xf32> to vector<96x128xf32>
    %c1_163 = arith.constant 1 : index
    %c13_164 = arith.constant 13 : index
    %509 = memref.load %arg3[%c1_163, %c13_164] : memref<4x32xf32, #tpu.memory_space<smem>>
    %510 = vector.broadcast %509 : f32 to vector<1x128xf32>
    %511 = vector.broadcast %510 : vector<1x128xf32> to vector<96x128xf32>
    %512 = arith.mulf %508, %511 : vector<96x128xf32>
    %513 = arith.addf %506, %512 : vector<96x128xf32>
    %514 = vector.extract_strided_slice %1 {offsets = [2, 0, 0], sizes = [1, 96, 128], strides = [1, 1, 1]} : vector<4x96x128xf32> to vector<1x96x128xf32>
    %515 = vector.shape_cast %514 : vector<1x96x128xf32> to vector<96x128xf32>
    %c2_165 = arith.constant 2 : index
    %c13_166 = arith.constant 13 : index
    %516 = memref.load %arg3[%c2_165, %c13_166] : memref<4x32xf32, #tpu.memory_space<smem>>
    %517 = vector.broadcast %516 : f32 to vector<1x128xf32>
    %518 = vector.broadcast %517 : vector<1x128xf32> to vector<96x128xf32>
    %519 = arith.mulf %515, %518 : vector<96x128xf32>
    %520 = arith.addf %513, %519 : vector<96x128xf32>
    %521 = vector.extract_strided_slice %1 {offsets = [3, 0, 0], sizes = [1, 96, 128], strides = [1, 1, 1]} : vector<4x96x128xf32> to vector<1x96x128xf32>
    %522 = vector.shape_cast %521 : vector<1x96x128xf32> to vector<96x128xf32>
    %c3_167 = arith.constant 3 : index
    %c13_168 = arith.constant 13 : index
    %523 = memref.load %arg3[%c3_167, %c13_168] : memref<4x32xf32, #tpu.memory_space<smem>>
    %524 = vector.broadcast %523 : f32 to vector<1x128xf32>
    %525 = vector.broadcast %524 : vector<1x128xf32> to vector<96x128xf32>
    %526 = arith.mulf %522, %525 : vector<96x128xf32>
    %527 = arith.addf %520, %526 : vector<96x128xf32>
    %cst_169 = arith.constant 0.000000e+00 : f32
    %528 = vector.broadcast %cst_169 : f32 to vector<96x128xf32>
    %529 = arith.maximumf %527, %528 : vector<96x128xf32>
    %c0_170 = arith.constant 0 : index
    %c13_171 = arith.constant 13 : index
    %530 = memref.load %arg5[%c0_170, %c13_171] : memref<1x32xf32, #tpu.memory_space<smem>>
    %531 = vector.broadcast %530 : f32 to vector<1x128xf32>
    %532 = vector.broadcast %531 : vector<1x128xf32> to vector<96x128xf32>
    %533 = arith.mulf %529, %532 : vector<96x128xf32>
    %534 = arith.addf %496, %533 : vector<96x128xf32>
    %535 = vector.extract_strided_slice %1 {offsets = [0, 0, 0], sizes = [1, 96, 128], strides = [1, 1, 1]} : vector<4x96x128xf32> to vector<1x96x128xf32>
    %536 = vector.shape_cast %535 : vector<1x96x128xf32> to vector<96x128xf32>
    %c0_172 = arith.constant 0 : index
    %c14 = arith.constant 14 : index
    %537 = memref.load %arg3[%c0_172, %c14] : memref<4x32xf32, #tpu.memory_space<smem>>
    %538 = vector.broadcast %537 : f32 to vector<1x128xf32>
    %539 = vector.broadcast %538 : vector<1x128xf32> to vector<96x128xf32>
    %540 = arith.mulf %536, %539 : vector<96x128xf32>
    %c0_173 = arith.constant 0 : index
    %c14_174 = arith.constant 14 : index
    %541 = memref.load %arg4[%c0_173, %c14_174] : memref<1x32xf32, #tpu.memory_space<smem>>
    %542 = vector.broadcast %541 : f32 to vector<1x128xf32>
    %543 = vector.broadcast %542 : vector<1x128xf32> to vector<96x128xf32>
    %544 = arith.addf %540, %543 : vector<96x128xf32>
    %545 = vector.extract_strided_slice %1 {offsets = [1, 0, 0], sizes = [1, 96, 128], strides = [1, 1, 1]} : vector<4x96x128xf32> to vector<1x96x128xf32>
    %546 = vector.shape_cast %545 : vector<1x96x128xf32> to vector<96x128xf32>
    %c1_175 = arith.constant 1 : index
    %c14_176 = arith.constant 14 : index
    %547 = memref.load %arg3[%c1_175, %c14_176] : memref<4x32xf32, #tpu.memory_space<smem>>
    %548 = vector.broadcast %547 : f32 to vector<1x128xf32>
    %549 = vector.broadcast %548 : vector<1x128xf32> to vector<96x128xf32>
    %550 = arith.mulf %546, %549 : vector<96x128xf32>
    %551 = arith.addf %544, %550 : vector<96x128xf32>
    %552 = vector.extract_strided_slice %1 {offsets = [2, 0, 0], sizes = [1, 96, 128], strides = [1, 1, 1]} : vector<4x96x128xf32> to vector<1x96x128xf32>
    %553 = vector.shape_cast %552 : vector<1x96x128xf32> to vector<96x128xf32>
    %c2_177 = arith.constant 2 : index
    %c14_178 = arith.constant 14 : index
    %554 = memref.load %arg3[%c2_177, %c14_178] : memref<4x32xf32, #tpu.memory_space<smem>>
    %555 = vector.broadcast %554 : f32 to vector<1x128xf32>
    %556 = vector.broadcast %555 : vector<1x128xf32> to vector<96x128xf32>
    %557 = arith.mulf %553, %556 : vector<96x128xf32>
    %558 = arith.addf %551, %557 : vector<96x128xf32>
    %559 = vector.extract_strided_slice %1 {offsets = [3, 0, 0], sizes = [1, 96, 128], strides = [1, 1, 1]} : vector<4x96x128xf32> to vector<1x96x128xf32>
    %560 = vector.shape_cast %559 : vector<1x96x128xf32> to vector<96x128xf32>
    %c3_179 = arith.constant 3 : index
    %c14_180 = arith.constant 14 : index
    %561 = memref.load %arg3[%c3_179, %c14_180] : memref<4x32xf32, #tpu.memory_space<smem>>
    %562 = vector.broadcast %561 : f32 to vector<1x128xf32>
    %563 = vector.broadcast %562 : vector<1x128xf32> to vector<96x128xf32>
    %564 = arith.mulf %560, %563 : vector<96x128xf32>
    %565 = arith.addf %558, %564 : vector<96x128xf32>
    %cst_181 = arith.constant 0.000000e+00 : f32
    %566 = vector.broadcast %cst_181 : f32 to vector<96x128xf32>
    %567 = arith.maximumf %565, %566 : vector<96x128xf32>
    %c0_182 = arith.constant 0 : index
    %c14_183 = arith.constant 14 : index
    %568 = memref.load %arg5[%c0_182, %c14_183] : memref<1x32xf32, #tpu.memory_space<smem>>
    %569 = vector.broadcast %568 : f32 to vector<1x128xf32>
    %570 = vector.broadcast %569 : vector<1x128xf32> to vector<96x128xf32>
    %571 = arith.mulf %567, %570 : vector<96x128xf32>
    %572 = arith.addf %534, %571 : vector<96x128xf32>
    %573 = vector.extract_strided_slice %1 {offsets = [0, 0, 0], sizes = [1, 96, 128], strides = [1, 1, 1]} : vector<4x96x128xf32> to vector<1x96x128xf32>
    %574 = vector.shape_cast %573 : vector<1x96x128xf32> to vector<96x128xf32>
    %c0_184 = arith.constant 0 : index
    %c15 = arith.constant 15 : index
    %575 = memref.load %arg3[%c0_184, %c15] : memref<4x32xf32, #tpu.memory_space<smem>>
    %576 = vector.broadcast %575 : f32 to vector<1x128xf32>
    %577 = vector.broadcast %576 : vector<1x128xf32> to vector<96x128xf32>
    %578 = arith.mulf %574, %577 : vector<96x128xf32>
    %c0_185 = arith.constant 0 : index
    %c15_186 = arith.constant 15 : index
    %579 = memref.load %arg4[%c0_185, %c15_186] : memref<1x32xf32, #tpu.memory_space<smem>>
    %580 = vector.broadcast %579 : f32 to vector<1x128xf32>
    %581 = vector.broadcast %580 : vector<1x128xf32> to vector<96x128xf32>
    %582 = arith.addf %578, %581 : vector<96x128xf32>
    %583 = vector.extract_strided_slice %1 {offsets = [1, 0, 0], sizes = [1, 96, 128], strides = [1, 1, 1]} : vector<4x96x128xf32> to vector<1x96x128xf32>
    %584 = vector.shape_cast %583 : vector<1x96x128xf32> to vector<96x128xf32>
    %c1_187 = arith.constant 1 : index
    %c15_188 = arith.constant 15 : index
    %585 = memref.load %arg3[%c1_187, %c15_188] : memref<4x32xf32, #tpu.memory_space<smem>>
    %586 = vector.broadcast %585 : f32 to vector<1x128xf32>
    %587 = vector.broadcast %586 : vector<1x128xf32> to vector<96x128xf32>
    %588 = arith.mulf %584, %587 : vector<96x128xf32>
    %589 = arith.addf %582, %588 : vector<96x128xf32>
    %590 = vector.extract_strided_slice %1 {offsets = [2, 0, 0], sizes = [1, 96, 128], strides = [1, 1, 1]} : vector<4x96x128xf32> to vector<1x96x128xf32>
    %591 = vector.shape_cast %590 : vector<1x96x128xf32> to vector<96x128xf32>
    %c2_189 = arith.constant 2 : index
    %c15_190 = arith.constant 15 : index
    %592 = memref.load %arg3[%c2_189, %c15_190] : memref<4x32xf32, #tpu.memory_space<smem>>
    %593 = vector.broadcast %592 : f32 to vector<1x128xf32>
    %594 = vector.broadcast %593 : vector<1x128xf32> to vector<96x128xf32>
    %595 = arith.mulf %591, %594 : vector<96x128xf32>
    %596 = arith.addf %589, %595 : vector<96x128xf32>
    %597 = vector.extract_strided_slice %1 {offsets = [3, 0, 0], sizes = [1, 96, 128], strides = [1, 1, 1]} : vector<4x96x128xf32> to vector<1x96x128xf32>
    %598 = vector.shape_cast %597 : vector<1x96x128xf32> to vector<96x128xf32>
    %c3_191 = arith.constant 3 : index
    %c15_192 = arith.constant 15 : index
    %599 = memref.load %arg3[%c3_191, %c15_192] : memref<4x32xf32, #tpu.memory_space<smem>>
    %600 = vector.broadcast %599 : f32 to vector<1x128xf32>
    %601 = vector.broadcast %600 : vector<1x128xf32> to vector<96x128xf32>
    %602 = arith.mulf %598, %601 : vector<96x128xf32>
    %603 = arith.addf %596, %602 : vector<96x128xf32>
    %cst_193 = arith.constant 0.000000e+00 : f32
    %604 = vector.broadcast %cst_193 : f32 to vector<96x128xf32>
    %605 = arith.maximumf %603, %604 : vector<96x128xf32>
    %c0_194 = arith.constant 0 : index
    %c15_195 = arith.constant 15 : index
    %606 = memref.load %arg5[%c0_194, %c15_195] : memref<1x32xf32, #tpu.memory_space<smem>>
    %607 = vector.broadcast %606 : f32 to vector<1x128xf32>
    %608 = vector.broadcast %607 : vector<1x128xf32> to vector<96x128xf32>
    %609 = arith.mulf %605, %608 : vector<96x128xf32>
    %610 = arith.addf %572, %609 : vector<96x128xf32>
    %611 = vector.extract_strided_slice %1 {offsets = [0, 0, 0], sizes = [1, 96, 128], strides = [1, 1, 1]} : vector<4x96x128xf32> to vector<1x96x128xf32>
    %612 = vector.shape_cast %611 : vector<1x96x128xf32> to vector<96x128xf32>
    %c0_196 = arith.constant 0 : index
    %c16 = arith.constant 16 : index
    %613 = memref.load %arg3[%c0_196, %c16] : memref<4x32xf32, #tpu.memory_space<smem>>
    %614 = vector.broadcast %613 : f32 to vector<1x128xf32>
    %615 = vector.broadcast %614 : vector<1x128xf32> to vector<96x128xf32>
    %616 = arith.mulf %612, %615 : vector<96x128xf32>
    %c0_197 = arith.constant 0 : index
    %c16_198 = arith.constant 16 : index
    %617 = memref.load %arg4[%c0_197, %c16_198] : memref<1x32xf32, #tpu.memory_space<smem>>
    %618 = vector.broadcast %617 : f32 to vector<1x128xf32>
    %619 = vector.broadcast %618 : vector<1x128xf32> to vector<96x128xf32>
    %620 = arith.addf %616, %619 : vector<96x128xf32>
    %621 = vector.extract_strided_slice %1 {offsets = [1, 0, 0], sizes = [1, 96, 128], strides = [1, 1, 1]} : vector<4x96x128xf32> to vector<1x96x128xf32>
    %622 = vector.shape_cast %621 : vector<1x96x128xf32> to vector<96x128xf32>
    %c1_199 = arith.constant 1 : index
    %c16_200 = arith.constant 16 : index
    %623 = memref.load %arg3[%c1_199, %c16_200] : memref<4x32xf32, #tpu.memory_space<smem>>
    %624 = vector.broadcast %623 : f32 to vector<1x128xf32>
    %625 = vector.broadcast %624 : vector<1x128xf32> to vector<96x128xf32>
    %626 = arith.mulf %622, %625 : vector<96x128xf32>
    %627 = arith.addf %620, %626 : vector<96x128xf32>
    %628 = vector.extract_strided_slice %1 {offsets = [2, 0, 0], sizes = [1, 96, 128], strides = [1, 1, 1]} : vector<4x96x128xf32> to vector<1x96x128xf32>
    %629 = vector.shape_cast %628 : vector<1x96x128xf32> to vector<96x128xf32>
    %c2_201 = arith.constant 2 : index
    %c16_202 = arith.constant 16 : index
    %630 = memref.load %arg3[%c2_201, %c16_202] : memref<4x32xf32, #tpu.memory_space<smem>>
    %631 = vector.broadcast %630 : f32 to vector<1x128xf32>
    %632 = vector.broadcast %631 : vector<1x128xf32> to vector<96x128xf32>
    %633 = arith.mulf %629, %632 : vector<96x128xf32>
    %634 = arith.addf %627, %633 : vector<96x128xf32>
    %635 = vector.extract_strided_slice %1 {offsets = [3, 0, 0], sizes = [1, 96, 128], strides = [1, 1, 1]} : vector<4x96x128xf32> to vector<1x96x128xf32>
    %636 = vector.shape_cast %635 : vector<1x96x128xf32> to vector<96x128xf32>
    %c3_203 = arith.constant 3 : index
    %c16_204 = arith.constant 16 : index
    %637 = memref.load %arg3[%c3_203, %c16_204] : memref<4x32xf32, #tpu.memory_space<smem>>
    %638 = vector.broadcast %637 : f32 to vector<1x128xf32>
    %639 = vector.broadcast %638 : vector<1x128xf32> to vector<96x128xf32>
    %640 = arith.mulf %636, %639 : vector<96x128xf32>
    %641 = arith.addf %634, %640 : vector<96x128xf32>
    %cst_205 = arith.constant 0.000000e+00 : f32
    %642 = vector.broadcast %cst_205 : f32 to vector<96x128xf32>
    %643 = arith.maximumf %641, %642 : vector<96x128xf32>
    %c0_206 = arith.constant 0 : index
    %c16_207 = arith.constant 16 : index
    %644 = memref.load %arg5[%c0_206, %c16_207] : memref<1x32xf32, #tpu.memory_space<smem>>
    %645 = vector.broadcast %644 : f32 to vector<1x128xf32>
    %646 = vector.broadcast %645 : vector<1x128xf32> to vector<96x128xf32>
    %647 = arith.mulf %643, %646 : vector<96x128xf32>
    %648 = arith.addf %610, %647 : vector<96x128xf32>
    %649 = vector.extract_strided_slice %1 {offsets = [0, 0, 0], sizes = [1, 96, 128], strides = [1, 1, 1]} : vector<4x96x128xf32> to vector<1x96x128xf32>
    %650 = vector.shape_cast %649 : vector<1x96x128xf32> to vector<96x128xf32>
    %c0_208 = arith.constant 0 : index
    %c17 = arith.constant 17 : index
    %651 = memref.load %arg3[%c0_208, %c17] : memref<4x32xf32, #tpu.memory_space<smem>>
    %652 = vector.broadcast %651 : f32 to vector<1x128xf32>
    %653 = vector.broadcast %652 : vector<1x128xf32> to vector<96x128xf32>
    %654 = arith.mulf %650, %653 : vector<96x128xf32>
    %c0_209 = arith.constant 0 : index
    %c17_210 = arith.constant 17 : index
    %655 = memref.load %arg4[%c0_209, %c17_210] : memref<1x32xf32, #tpu.memory_space<smem>>
    %656 = vector.broadcast %655 : f32 to vector<1x128xf32>
    %657 = vector.broadcast %656 : vector<1x128xf32> to vector<96x128xf32>
    %658 = arith.addf %654, %657 : vector<96x128xf32>
    %659 = vector.extract_strided_slice %1 {offsets = [1, 0, 0], sizes = [1, 96, 128], strides = [1, 1, 1]} : vector<4x96x128xf32> to vector<1x96x128xf32>
    %660 = vector.shape_cast %659 : vector<1x96x128xf32> to vector<96x128xf32>
    %c1_211 = arith.constant 1 : index
    %c17_212 = arith.constant 17 : index
    %661 = memref.load %arg3[%c1_211, %c17_212] : memref<4x32xf32, #tpu.memory_space<smem>>
    %662 = vector.broadcast %661 : f32 to vector<1x128xf32>
    %663 = vector.broadcast %662 : vector<1x128xf32> to vector<96x128xf32>
    %664 = arith.mulf %660, %663 : vector<96x128xf32>
    %665 = arith.addf %658, %664 : vector<96x128xf32>
    %666 = vector.extract_strided_slice %1 {offsets = [2, 0, 0], sizes = [1, 96, 128], strides = [1, 1, 1]} : vector<4x96x128xf32> to vector<1x96x128xf32>
    %667 = vector.shape_cast %666 : vector<1x96x128xf32> to vector<96x128xf32>
    %c2_213 = arith.constant 2 : index
    %c17_214 = arith.constant 17 : index
    %668 = memref.load %arg3[%c2_213, %c17_214] : memref<4x32xf32, #tpu.memory_space<smem>>
    %669 = vector.broadcast %668 : f32 to vector<1x128xf32>
    %670 = vector.broadcast %669 : vector<1x128xf32> to vector<96x128xf32>
    %671 = arith.mulf %667, %670 : vector<96x128xf32>
    %672 = arith.addf %665, %671 : vector<96x128xf32>
    %673 = vector.extract_strided_slice %1 {offsets = [3, 0, 0], sizes = [1, 96, 128], strides = [1, 1, 1]} : vector<4x96x128xf32> to vector<1x96x128xf32>
    %674 = vector.shape_cast %673 : vector<1x96x128xf32> to vector<96x128xf32>
    %c3_215 = arith.constant 3 : index
    %c17_216 = arith.constant 17 : index
    %675 = memref.load %arg3[%c3_215, %c17_216] : memref<4x32xf32, #tpu.memory_space<smem>>
    %676 = vector.broadcast %675 : f32 to vector<1x128xf32>
    %677 = vector.broadcast %676 : vector<1x128xf32> to vector<96x128xf32>
    %678 = arith.mulf %674, %677 : vector<96x128xf32>
    %679 = arith.addf %672, %678 : vector<96x128xf32>
    %cst_217 = arith.constant 0.000000e+00 : f32
    %680 = vector.broadcast %cst_217 : f32 to vector<96x128xf32>
    %681 = arith.maximumf %679, %680 : vector<96x128xf32>
    %c0_218 = arith.constant 0 : index
    %c17_219 = arith.constant 17 : index
    %682 = memref.load %arg5[%c0_218, %c17_219] : memref<1x32xf32, #tpu.memory_space<smem>>
    %683 = vector.broadcast %682 : f32 to vector<1x128xf32>
    %684 = vector.broadcast %683 : vector<1x128xf32> to vector<96x128xf32>
    %685 = arith.mulf %681, %684 : vector<96x128xf32>
    %686 = arith.addf %648, %685 : vector<96x128xf32>
    %687 = vector.extract_strided_slice %1 {offsets = [0, 0, 0], sizes = [1, 96, 128], strides = [1, 1, 1]} : vector<4x96x128xf32> to vector<1x96x128xf32>
    %688 = vector.shape_cast %687 : vector<1x96x128xf32> to vector<96x128xf32>
    %c0_220 = arith.constant 0 : index
    %c18 = arith.constant 18 : index
    %689 = memref.load %arg3[%c0_220, %c18] : memref<4x32xf32, #tpu.memory_space<smem>>
    %690 = vector.broadcast %689 : f32 to vector<1x128xf32>
    %691 = vector.broadcast %690 : vector<1x128xf32> to vector<96x128xf32>
    %692 = arith.mulf %688, %691 : vector<96x128xf32>
    %c0_221 = arith.constant 0 : index
    %c18_222 = arith.constant 18 : index
    %693 = memref.load %arg4[%c0_221, %c18_222] : memref<1x32xf32, #tpu.memory_space<smem>>
    %694 = vector.broadcast %693 : f32 to vector<1x128xf32>
    %695 = vector.broadcast %694 : vector<1x128xf32> to vector<96x128xf32>
    %696 = arith.addf %692, %695 : vector<96x128xf32>
    %697 = vector.extract_strided_slice %1 {offsets = [1, 0, 0], sizes = [1, 96, 128], strides = [1, 1, 1]} : vector<4x96x128xf32> to vector<1x96x128xf32>
    %698 = vector.shape_cast %697 : vector<1x96x128xf32> to vector<96x128xf32>
    %c1_223 = arith.constant 1 : index
    %c18_224 = arith.constant 18 : index
    %699 = memref.load %arg3[%c1_223, %c18_224] : memref<4x32xf32, #tpu.memory_space<smem>>
    %700 = vector.broadcast %699 : f32 to vector<1x128xf32>
    %701 = vector.broadcast %700 : vector<1x128xf32> to vector<96x128xf32>
    %702 = arith.mulf %698, %701 : vector<96x128xf32>
    %703 = arith.addf %696, %702 : vector<96x128xf32>
    %704 = vector.extract_strided_slice %1 {offsets = [2, 0, 0], sizes = [1, 96, 128], strides = [1, 1, 1]} : vector<4x96x128xf32> to vector<1x96x128xf32>
    %705 = vector.shape_cast %704 : vector<1x96x128xf32> to vector<96x128xf32>
    %c2_225 = arith.constant 2 : index
    %c18_226 = arith.constant 18 : index
    %706 = memref.load %arg3[%c2_225, %c18_226] : memref<4x32xf32, #tpu.memory_space<smem>>
    %707 = vector.broadcast %706 : f32 to vector<1x128xf32>
    %708 = vector.broadcast %707 : vector<1x128xf32> to vector<96x128xf32>
    %709 = arith.mulf %705, %708 : vector<96x128xf32>
    %710 = arith.addf %703, %709 : vector<96x128xf32>
    %711 = vector.extract_strided_slice %1 {offsets = [3, 0, 0], sizes = [1, 96, 128], strides = [1, 1, 1]} : vector<4x96x128xf32> to vector<1x96x128xf32>
    %712 = vector.shape_cast %711 : vector<1x96x128xf32> to vector<96x128xf32>
    %c3_227 = arith.constant 3 : index
    %c18_228 = arith.constant 18 : index
    %713 = memref.load %arg3[%c3_227, %c18_228] : memref<4x32xf32, #tpu.memory_space<smem>>
    %714 = vector.broadcast %713 : f32 to vector<1x128xf32>
    %715 = vector.broadcast %714 : vector<1x128xf32> to vector<96x128xf32>
    %716 = arith.mulf %712, %715 : vector<96x128xf32>
    %717 = arith.addf %710, %716 : vector<96x128xf32>
    %cst_229 = arith.constant 0.000000e+00 : f32
    %718 = vector.broadcast %cst_229 : f32 to vector<96x128xf32>
    %719 = arith.maximumf %717, %718 : vector<96x128xf32>
    %c0_230 = arith.constant 0 : index
    %c18_231 = arith.constant 18 : index
    %720 = memref.load %arg5[%c0_230, %c18_231] : memref<1x32xf32, #tpu.memory_space<smem>>
    %721 = vector.broadcast %720 : f32 to vector<1x128xf32>
    %722 = vector.broadcast %721 : vector<1x128xf32> to vector<96x128xf32>
    %723 = arith.mulf %719, %722 : vector<96x128xf32>
    %724 = arith.addf %686, %723 : vector<96x128xf32>
    %725 = vector.extract_strided_slice %1 {offsets = [0, 0, 0], sizes = [1, 96, 128], strides = [1, 1, 1]} : vector<4x96x128xf32> to vector<1x96x128xf32>
    %726 = vector.shape_cast %725 : vector<1x96x128xf32> to vector<96x128xf32>
    %c0_232 = arith.constant 0 : index
    %c19 = arith.constant 19 : index
    %727 = memref.load %arg3[%c0_232, %c19] : memref<4x32xf32, #tpu.memory_space<smem>>
    %728 = vector.broadcast %727 : f32 to vector<1x128xf32>
    %729 = vector.broadcast %728 : vector<1x128xf32> to vector<96x128xf32>
    %730 = arith.mulf %726, %729 : vector<96x128xf32>
    %c0_233 = arith.constant 0 : index
    %c19_234 = arith.constant 19 : index
    %731 = memref.load %arg4[%c0_233, %c19_234] : memref<1x32xf32, #tpu.memory_space<smem>>
    %732 = vector.broadcast %731 : f32 to vector<1x128xf32>
    %733 = vector.broadcast %732 : vector<1x128xf32> to vector<96x128xf32>
    %734 = arith.addf %730, %733 : vector<96x128xf32>
    %735 = vector.extract_strided_slice %1 {offsets = [1, 0, 0], sizes = [1, 96, 128], strides = [1, 1, 1]} : vector<4x96x128xf32> to vector<1x96x128xf32>
    %736 = vector.shape_cast %735 : vector<1x96x128xf32> to vector<96x128xf32>
    %c1_235 = arith.constant 1 : index
    %c19_236 = arith.constant 19 : index
    %737 = memref.load %arg3[%c1_235, %c19_236] : memref<4x32xf32, #tpu.memory_space<smem>>
    %738 = vector.broadcast %737 : f32 to vector<1x128xf32>
    %739 = vector.broadcast %738 : vector<1x128xf32> to vector<96x128xf32>
    %740 = arith.mulf %736, %739 : vector<96x128xf32>
    %741 = arith.addf %734, %740 : vector<96x128xf32>
    %742 = vector.extract_strided_slice %1 {offsets = [2, 0, 0], sizes = [1, 96, 128], strides = [1, 1, 1]} : vector<4x96x128xf32> to vector<1x96x128xf32>
    %743 = vector.shape_cast %742 : vector<1x96x128xf32> to vector<96x128xf32>
    %c2_237 = arith.constant 2 : index
    %c19_238 = arith.constant 19 : index
    %744 = memref.load %arg3[%c2_237, %c19_238] : memref<4x32xf32, #tpu.memory_space<smem>>
    %745 = vector.broadcast %744 : f32 to vector<1x128xf32>
    %746 = vector.broadcast %745 : vector<1x128xf32> to vector<96x128xf32>
    %747 = arith.mulf %743, %746 : vector<96x128xf32>
    %748 = arith.addf %741, %747 : vector<96x128xf32>
    %749 = vector.extract_strided_slice %1 {offsets = [3, 0, 0], sizes = [1, 96, 128], strides = [1, 1, 1]} : vector<4x96x128xf32> to vector<1x96x128xf32>
    %750 = vector.shape_cast %749 : vector<1x96x128xf32> to vector<96x128xf32>
    %c3_239 = arith.constant 3 : index
    %c19_240 = arith.constant 19 : index
    %751 = memref.load %arg3[%c3_239, %c19_240] : memref<4x32xf32, #tpu.memory_space<smem>>
    %752 = vector.broadcast %751 : f32 to vector<1x128xf32>
    %753 = vector.broadcast %752 : vector<1x128xf32> to vector<96x128xf32>
    %754 = arith.mulf %750, %753 : vector<96x128xf32>
    %755 = arith.addf %748, %754 : vector<96x128xf32>
    %cst_241 = arith.constant 0.000000e+00 : f32
    %756 = vector.broadcast %cst_241 : f32 to vector<96x128xf32>
    %757 = arith.maximumf %755, %756 : vector<96x128xf32>
    %c0_242 = arith.constant 0 : index
    %c19_243 = arith.constant 19 : index
    %758 = memref.load %arg5[%c0_242, %c19_243] : memref<1x32xf32, #tpu.memory_space<smem>>
    %759 = vector.broadcast %758 : f32 to vector<1x128xf32>
    %760 = vector.broadcast %759 : vector<1x128xf32> to vector<96x128xf32>
    %761 = arith.mulf %757, %760 : vector<96x128xf32>
    %762 = arith.addf %724, %761 : vector<96x128xf32>
    %763 = vector.extract_strided_slice %1 {offsets = [0, 0, 0], sizes = [1, 96, 128], strides = [1, 1, 1]} : vector<4x96x128xf32> to vector<1x96x128xf32>
    %764 = vector.shape_cast %763 : vector<1x96x128xf32> to vector<96x128xf32>
    %c0_244 = arith.constant 0 : index
    %c20 = arith.constant 20 : index
    %765 = memref.load %arg3[%c0_244, %c20] : memref<4x32xf32, #tpu.memory_space<smem>>
    %766 = vector.broadcast %765 : f32 to vector<1x128xf32>
    %767 = vector.broadcast %766 : vector<1x128xf32> to vector<96x128xf32>
    %768 = arith.mulf %764, %767 : vector<96x128xf32>
    %c0_245 = arith.constant 0 : index
    %c20_246 = arith.constant 20 : index
    %769 = memref.load %arg4[%c0_245, %c20_246] : memref<1x32xf32, #tpu.memory_space<smem>>
    %770 = vector.broadcast %769 : f32 to vector<1x128xf32>
    %771 = vector.broadcast %770 : vector<1x128xf32> to vector<96x128xf32>
    %772 = arith.addf %768, %771 : vector<96x128xf32>
    %773 = vector.extract_strided_slice %1 {offsets = [1, 0, 0], sizes = [1, 96, 128], strides = [1, 1, 1]} : vector<4x96x128xf32> to vector<1x96x128xf32>
    %774 = vector.shape_cast %773 : vector<1x96x128xf32> to vector<96x128xf32>
    %c1_247 = arith.constant 1 : index
    %c20_248 = arith.constant 20 : index
    %775 = memref.load %arg3[%c1_247, %c20_248] : memref<4x32xf32, #tpu.memory_space<smem>>
    %776 = vector.broadcast %775 : f32 to vector<1x128xf32>
    %777 = vector.broadcast %776 : vector<1x128xf32> to vector<96x128xf32>
    %778 = arith.mulf %774, %777 : vector<96x128xf32>
    %779 = arith.addf %772, %778 : vector<96x128xf32>
    %780 = vector.extract_strided_slice %1 {offsets = [2, 0, 0], sizes = [1, 96, 128], strides = [1, 1, 1]} : vector<4x96x128xf32> to vector<1x96x128xf32>
    %781 = vector.shape_cast %780 : vector<1x96x128xf32> to vector<96x128xf32>
    %c2_249 = arith.constant 2 : index
    %c20_250 = arith.constant 20 : index
    %782 = memref.load %arg3[%c2_249, %c20_250] : memref<4x32xf32, #tpu.memory_space<smem>>
    %783 = vector.broadcast %782 : f32 to vector<1x128xf32>
    %784 = vector.broadcast %783 : vector<1x128xf32> to vector<96x128xf32>
    %785 = arith.mulf %781, %784 : vector<96x128xf32>
    %786 = arith.addf %779, %785 : vector<96x128xf32>
    %787 = vector.extract_strided_slice %1 {offsets = [3, 0, 0], sizes = [1, 96, 128], strides = [1, 1, 1]} : vector<4x96x128xf32> to vector<1x96x128xf32>
    %788 = vector.shape_cast %787 : vector<1x96x128xf32> to vector<96x128xf32>
    %c3_251 = arith.constant 3 : index
    %c20_252 = arith.constant 20 : index
    %789 = memref.load %arg3[%c3_251, %c20_252] : memref<4x32xf32, #tpu.memory_space<smem>>
    %790 = vector.broadcast %789 : f32 to vector<1x128xf32>
    %791 = vector.broadcast %790 : vector<1x128xf32> to vector<96x128xf32>
    %792 = arith.mulf %788, %791 : vector<96x128xf32>
    %793 = arith.addf %786, %792 : vector<96x128xf32>
    %cst_253 = arith.constant 0.000000e+00 : f32
    %794 = vector.broadcast %cst_253 : f32 to vector<96x128xf32>
    %795 = arith.maximumf %793, %794 : vector<96x128xf32>
    %c0_254 = arith.constant 0 : index
    %c20_255 = arith.constant 20 : index
    %796 = memref.load %arg5[%c0_254, %c20_255] : memref<1x32xf32, #tpu.memory_space<smem>>
    %797 = vector.broadcast %796 : f32 to vector<1x128xf32>
    %798 = vector.broadcast %797 : vector<1x128xf32> to vector<96x128xf32>
    %799 = arith.mulf %795, %798 : vector<96x128xf32>
    %800 = arith.addf %762, %799 : vector<96x128xf32>
    %801 = vector.extract_strided_slice %1 {offsets = [0, 0, 0], sizes = [1, 96, 128], strides = [1, 1, 1]} : vector<4x96x128xf32> to vector<1x96x128xf32>
    %802 = vector.shape_cast %801 : vector<1x96x128xf32> to vector<96x128xf32>
    %c0_256 = arith.constant 0 : index
    %c21 = arith.constant 21 : index
    %803 = memref.load %arg3[%c0_256, %c21] : memref<4x32xf32, #tpu.memory_space<smem>>
    %804 = vector.broadcast %803 : f32 to vector<1x128xf32>
    %805 = vector.broadcast %804 : vector<1x128xf32> to vector<96x128xf32>
    %806 = arith.mulf %802, %805 : vector<96x128xf32>
    %c0_257 = arith.constant 0 : index
    %c21_258 = arith.constant 21 : index
    %807 = memref.load %arg4[%c0_257, %c21_258] : memref<1x32xf32, #tpu.memory_space<smem>>
    %808 = vector.broadcast %807 : f32 to vector<1x128xf32>
    %809 = vector.broadcast %808 : vector<1x128xf32> to vector<96x128xf32>
    %810 = arith.addf %806, %809 : vector<96x128xf32>
    %811 = vector.extract_strided_slice %1 {offsets = [1, 0, 0], sizes = [1, 96, 128], strides = [1, 1, 1]} : vector<4x96x128xf32> to vector<1x96x128xf32>
    %812 = vector.shape_cast %811 : vector<1x96x128xf32> to vector<96x128xf32>
    %c1_259 = arith.constant 1 : index
    %c21_260 = arith.constant 21 : index
    %813 = memref.load %arg3[%c1_259, %c21_260] : memref<4x32xf32, #tpu.memory_space<smem>>
    %814 = vector.broadcast %813 : f32 to vector<1x128xf32>
    %815 = vector.broadcast %814 : vector<1x128xf32> to vector<96x128xf32>
    %816 = arith.mulf %812, %815 : vector<96x128xf32>
    %817 = arith.addf %810, %816 : vector<96x128xf32>
    %818 = vector.extract_strided_slice %1 {offsets = [2, 0, 0], sizes = [1, 96, 128], strides = [1, 1, 1]} : vector<4x96x128xf32> to vector<1x96x128xf32>
    %819 = vector.shape_cast %818 : vector<1x96x128xf32> to vector<96x128xf32>
    %c2_261 = arith.constant 2 : index
    %c21_262 = arith.constant 21 : index
    %820 = memref.load %arg3[%c2_261, %c21_262] : memref<4x32xf32, #tpu.memory_space<smem>>
    %821 = vector.broadcast %820 : f32 to vector<1x128xf32>
    %822 = vector.broadcast %821 : vector<1x128xf32> to vector<96x128xf32>
    %823 = arith.mulf %819, %822 : vector<96x128xf32>
    %824 = arith.addf %817, %823 : vector<96x128xf32>
    %825 = vector.extract_strided_slice %1 {offsets = [3, 0, 0], sizes = [1, 96, 128], strides = [1, 1, 1]} : vector<4x96x128xf32> to vector<1x96x128xf32>
    %826 = vector.shape_cast %825 : vector<1x96x128xf32> to vector<96x128xf32>
    %c3_263 = arith.constant 3 : index
    %c21_264 = arith.constant 21 : index
    %827 = memref.load %arg3[%c3_263, %c21_264] : memref<4x32xf32, #tpu.memory_space<smem>>
    %828 = vector.broadcast %827 : f32 to vector<1x128xf32>
    %829 = vector.broadcast %828 : vector<1x128xf32> to vector<96x128xf32>
    %830 = arith.mulf %826, %829 : vector<96x128xf32>
    %831 = arith.addf %824, %830 : vector<96x128xf32>
    %cst_265 = arith.constant 0.000000e+00 : f32
    %832 = vector.broadcast %cst_265 : f32 to vector<96x128xf32>
    %833 = arith.maximumf %831, %832 : vector<96x128xf32>
    %c0_266 = arith.constant 0 : index
    %c21_267 = arith.constant 21 : index
    %834 = memref.load %arg5[%c0_266, %c21_267] : memref<1x32xf32, #tpu.memory_space<smem>>
    %835 = vector.broadcast %834 : f32 to vector<1x128xf32>
    %836 = vector.broadcast %835 : vector<1x128xf32> to vector<96x128xf32>
    %837 = arith.mulf %833, %836 : vector<96x128xf32>
    %838 = arith.addf %800, %837 : vector<96x128xf32>
    %839 = vector.extract_strided_slice %1 {offsets = [0, 0, 0], sizes = [1, 96, 128], strides = [1, 1, 1]} : vector<4x96x128xf32> to vector<1x96x128xf32>
    %840 = vector.shape_cast %839 : vector<1x96x128xf32> to vector<96x128xf32>
    %c0_268 = arith.constant 0 : index
    %c22 = arith.constant 22 : index
    %841 = memref.load %arg3[%c0_268, %c22] : memref<4x32xf32, #tpu.memory_space<smem>>
    %842 = vector.broadcast %841 : f32 to vector<1x128xf32>
    %843 = vector.broadcast %842 : vector<1x128xf32> to vector<96x128xf32>
    %844 = arith.mulf %840, %843 : vector<96x128xf32>
    %c0_269 = arith.constant 0 : index
    %c22_270 = arith.constant 22 : index
    %845 = memref.load %arg4[%c0_269, %c22_270] : memref<1x32xf32, #tpu.memory_space<smem>>
    %846 = vector.broadcast %845 : f32 to vector<1x128xf32>
    %847 = vector.broadcast %846 : vector<1x128xf32> to vector<96x128xf32>
    %848 = arith.addf %844, %847 : vector<96x128xf32>
    %849 = vector.extract_strided_slice %1 {offsets = [1, 0, 0], sizes = [1, 96, 128], strides = [1, 1, 1]} : vector<4x96x128xf32> to vector<1x96x128xf32>
    %850 = vector.shape_cast %849 : vector<1x96x128xf32> to vector<96x128xf32>
    %c1_271 = arith.constant 1 : index
    %c22_272 = arith.constant 22 : index
    %851 = memref.load %arg3[%c1_271, %c22_272] : memref<4x32xf32, #tpu.memory_space<smem>>
    %852 = vector.broadcast %851 : f32 to vector<1x128xf32>
    %853 = vector.broadcast %852 : vector<1x128xf32> to vector<96x128xf32>
    %854 = arith.mulf %850, %853 : vector<96x128xf32>
    %855 = arith.addf %848, %854 : vector<96x128xf32>
    %856 = vector.extract_strided_slice %1 {offsets = [2, 0, 0], sizes = [1, 96, 128], strides = [1, 1, 1]} : vector<4x96x128xf32> to vector<1x96x128xf32>
    %857 = vector.shape_cast %856 : vector<1x96x128xf32> to vector<96x128xf32>
    %c2_273 = arith.constant 2 : index
    %c22_274 = arith.constant 22 : index
    %858 = memref.load %arg3[%c2_273, %c22_274] : memref<4x32xf32, #tpu.memory_space<smem>>
    %859 = vector.broadcast %858 : f32 to vector<1x128xf32>
    %860 = vector.broadcast %859 : vector<1x128xf32> to vector<96x128xf32>
    %861 = arith.mulf %857, %860 : vector<96x128xf32>
    %862 = arith.addf %855, %861 : vector<96x128xf32>
    %863 = vector.extract_strided_slice %1 {offsets = [3, 0, 0], sizes = [1, 96, 128], strides = [1, 1, 1]} : vector<4x96x128xf32> to vector<1x96x128xf32>
    %864 = vector.shape_cast %863 : vector<1x96x128xf32> to vector<96x128xf32>
    %c3_275 = arith.constant 3 : index
    %c22_276 = arith.constant 22 : index
    %865 = memref.load %arg3[%c3_275, %c22_276] : memref<4x32xf32, #tpu.memory_space<smem>>
    %866 = vector.broadcast %865 : f32 to vector<1x128xf32>
    %867 = vector.broadcast %866 : vector<1x128xf32> to vector<96x128xf32>
    %868 = arith.mulf %864, %867 : vector<96x128xf32>
    %869 = arith.addf %862, %868 : vector<96x128xf32>
    %cst_277 = arith.constant 0.000000e+00 : f32
    %870 = vector.broadcast %cst_277 : f32 to vector<96x128xf32>
    %871 = arith.maximumf %869, %870 : vector<96x128xf32>
    %c0_278 = arith.constant 0 : index
    %c22_279 = arith.constant 22 : index
    %872 = memref.load %arg5[%c0_278, %c22_279] : memref<1x32xf32, #tpu.memory_space<smem>>
    %873 = vector.broadcast %872 : f32 to vector<1x128xf32>
    %874 = vector.broadcast %873 : vector<1x128xf32> to vector<96x128xf32>
    %875 = arith.mulf %871, %874 : vector<96x128xf32>
    %876 = arith.addf %838, %875 : vector<96x128xf32>
    %877 = vector.extract_strided_slice %1 {offsets = [0, 0, 0], sizes = [1, 96, 128], strides = [1, 1, 1]} : vector<4x96x128xf32> to vector<1x96x128xf32>
    %878 = vector.shape_cast %877 : vector<1x96x128xf32> to vector<96x128xf32>
    %c0_280 = arith.constant 0 : index
    %c23 = arith.constant 23 : index
    %879 = memref.load %arg3[%c0_280, %c23] : memref<4x32xf32, #tpu.memory_space<smem>>
    %880 = vector.broadcast %879 : f32 to vector<1x128xf32>
    %881 = vector.broadcast %880 : vector<1x128xf32> to vector<96x128xf32>
    %882 = arith.mulf %878, %881 : vector<96x128xf32>
    %c0_281 = arith.constant 0 : index
    %c23_282 = arith.constant 23 : index
    %883 = memref.load %arg4[%c0_281, %c23_282] : memref<1x32xf32, #tpu.memory_space<smem>>
    %884 = vector.broadcast %883 : f32 to vector<1x128xf32>
    %885 = vector.broadcast %884 : vector<1x128xf32> to vector<96x128xf32>
    %886 = arith.addf %882, %885 : vector<96x128xf32>
    %887 = vector.extract_strided_slice %1 {offsets = [1, 0, 0], sizes = [1, 96, 128], strides = [1, 1, 1]} : vector<4x96x128xf32> to vector<1x96x128xf32>
    %888 = vector.shape_cast %887 : vector<1x96x128xf32> to vector<96x128xf32>
    %c1_283 = arith.constant 1 : index
    %c23_284 = arith.constant 23 : index
    %889 = memref.load %arg3[%c1_283, %c23_284] : memref<4x32xf32, #tpu.memory_space<smem>>
    %890 = vector.broadcast %889 : f32 to vector<1x128xf32>
    %891 = vector.broadcast %890 : vector<1x128xf32> to vector<96x128xf32>
    %892 = arith.mulf %888, %891 : vector<96x128xf32>
    %893 = arith.addf %886, %892 : vector<96x128xf32>
    %894 = vector.extract_strided_slice %1 {offsets = [2, 0, 0], sizes = [1, 96, 128], strides = [1, 1, 1]} : vector<4x96x128xf32> to vector<1x96x128xf32>
    %895 = vector.shape_cast %894 : vector<1x96x128xf32> to vector<96x128xf32>
    %c2_285 = arith.constant 2 : index
    %c23_286 = arith.constant 23 : index
    %896 = memref.load %arg3[%c2_285, %c23_286] : memref<4x32xf32, #tpu.memory_space<smem>>
    %897 = vector.broadcast %896 : f32 to vector<1x128xf32>
    %898 = vector.broadcast %897 : vector<1x128xf32> to vector<96x128xf32>
    %899 = arith.mulf %895, %898 : vector<96x128xf32>
    %900 = arith.addf %893, %899 : vector<96x128xf32>
    %901 = vector.extract_strided_slice %1 {offsets = [3, 0, 0], sizes = [1, 96, 128], strides = [1, 1, 1]} : vector<4x96x128xf32> to vector<1x96x128xf32>
    %902 = vector.shape_cast %901 : vector<1x96x128xf32> to vector<96x128xf32>
    %c3_287 = arith.constant 3 : index
    %c23_288 = arith.constant 23 : index
    %903 = memref.load %arg3[%c3_287, %c23_288] : memref<4x32xf32, #tpu.memory_space<smem>>
    %904 = vector.broadcast %903 : f32 to vector<1x128xf32>
    %905 = vector.broadcast %904 : vector<1x128xf32> to vector<96x128xf32>
    %906 = arith.mulf %902, %905 : vector<96x128xf32>
    %907 = arith.addf %900, %906 : vector<96x128xf32>
    %cst_289 = arith.constant 0.000000e+00 : f32
    %908 = vector.broadcast %cst_289 : f32 to vector<96x128xf32>
    %909 = arith.maximumf %907, %908 : vector<96x128xf32>
    %c0_290 = arith.constant 0 : index
    %c23_291 = arith.constant 23 : index
    %910 = memref.load %arg5[%c0_290, %c23_291] : memref<1x32xf32, #tpu.memory_space<smem>>
    %911 = vector.broadcast %910 : f32 to vector<1x128xf32>
    %912 = vector.broadcast %911 : vector<1x128xf32> to vector<96x128xf32>
    %913 = arith.mulf %909, %912 : vector<96x128xf32>
    %914 = arith.addf %876, %913 : vector<96x128xf32>
    %915 = vector.extract_strided_slice %1 {offsets = [0, 0, 0], sizes = [1, 96, 128], strides = [1, 1, 1]} : vector<4x96x128xf32> to vector<1x96x128xf32>
    %916 = vector.shape_cast %915 : vector<1x96x128xf32> to vector<96x128xf32>
    %c0_292 = arith.constant 0 : index
    %c24 = arith.constant 24 : index
    %917 = memref.load %arg3[%c0_292, %c24] : memref<4x32xf32, #tpu.memory_space<smem>>
    %918 = vector.broadcast %917 : f32 to vector<1x128xf32>
    %919 = vector.broadcast %918 : vector<1x128xf32> to vector<96x128xf32>
    %920 = arith.mulf %916, %919 : vector<96x128xf32>
    %c0_293 = arith.constant 0 : index
    %c24_294 = arith.constant 24 : index
    %921 = memref.load %arg4[%c0_293, %c24_294] : memref<1x32xf32, #tpu.memory_space<smem>>
    %922 = vector.broadcast %921 : f32 to vector<1x128xf32>
    %923 = vector.broadcast %922 : vector<1x128xf32> to vector<96x128xf32>
    %924 = arith.addf %920, %923 : vector<96x128xf32>
    %925 = vector.extract_strided_slice %1 {offsets = [1, 0, 0], sizes = [1, 96, 128], strides = [1, 1, 1]} : vector<4x96x128xf32> to vector<1x96x128xf32>
    %926 = vector.shape_cast %925 : vector<1x96x128xf32> to vector<96x128xf32>
    %c1_295 = arith.constant 1 : index
    %c24_296 = arith.constant 24 : index
    %927 = memref.load %arg3[%c1_295, %c24_296] : memref<4x32xf32, #tpu.memory_space<smem>>
    %928 = vector.broadcast %927 : f32 to vector<1x128xf32>
    %929 = vector.broadcast %928 : vector<1x128xf32> to vector<96x128xf32>
    %930 = arith.mulf %926, %929 : vector<96x128xf32>
    %931 = arith.addf %924, %930 : vector<96x128xf32>
    %932 = vector.extract_strided_slice %1 {offsets = [2, 0, 0], sizes = [1, 96, 128], strides = [1, 1, 1]} : vector<4x96x128xf32> to vector<1x96x128xf32>
    %933 = vector.shape_cast %932 : vector<1x96x128xf32> to vector<96x128xf32>
    %c2_297 = arith.constant 2 : index
    %c24_298 = arith.constant 24 : index
    %934 = memref.load %arg3[%c2_297, %c24_298] : memref<4x32xf32, #tpu.memory_space<smem>>
    %935 = vector.broadcast %934 : f32 to vector<1x128xf32>
    %936 = vector.broadcast %935 : vector<1x128xf32> to vector<96x128xf32>
    %937 = arith.mulf %933, %936 : vector<96x128xf32>
    %938 = arith.addf %931, %937 : vector<96x128xf32>
    %939 = vector.extract_strided_slice %1 {offsets = [3, 0, 0], sizes = [1, 96, 128], strides = [1, 1, 1]} : vector<4x96x128xf32> to vector<1x96x128xf32>
    %940 = vector.shape_cast %939 : vector<1x96x128xf32> to vector<96x128xf32>
    %c3_299 = arith.constant 3 : index
    %c24_300 = arith.constant 24 : index
    %941 = memref.load %arg3[%c3_299, %c24_300] : memref<4x32xf32, #tpu.memory_space<smem>>
    %942 = vector.broadcast %941 : f32 to vector<1x128xf32>
    %943 = vector.broadcast %942 : vector<1x128xf32> to vector<96x128xf32>
    %944 = arith.mulf %940, %943 : vector<96x128xf32>
    %945 = arith.addf %938, %944 : vector<96x128xf32>
    %cst_301 = arith.constant 0.000000e+00 : f32
    %946 = vector.broadcast %cst_301 : f32 to vector<96x128xf32>
    %947 = arith.maximumf %945, %946 : vector<96x128xf32>
    %c0_302 = arith.constant 0 : index
    %c24_303 = arith.constant 24 : index
    %948 = memref.load %arg5[%c0_302, %c24_303] : memref<1x32xf32, #tpu.memory_space<smem>>
    %949 = vector.broadcast %948 : f32 to vector<1x128xf32>
    %950 = vector.broadcast %949 : vector<1x128xf32> to vector<96x128xf32>
    %951 = arith.mulf %947, %950 : vector<96x128xf32>
    %952 = arith.addf %914, %951 : vector<96x128xf32>
    %953 = vector.extract_strided_slice %1 {offsets = [0, 0, 0], sizes = [1, 96, 128], strides = [1, 1, 1]} : vector<4x96x128xf32> to vector<1x96x128xf32>
    %954 = vector.shape_cast %953 : vector<1x96x128xf32> to vector<96x128xf32>
    %c0_304 = arith.constant 0 : index
    %c25 = arith.constant 25 : index
    %955 = memref.load %arg3[%c0_304, %c25] : memref<4x32xf32, #tpu.memory_space<smem>>
    %956 = vector.broadcast %955 : f32 to vector<1x128xf32>
    %957 = vector.broadcast %956 : vector<1x128xf32> to vector<96x128xf32>
    %958 = arith.mulf %954, %957 : vector<96x128xf32>
    %c0_305 = arith.constant 0 : index
    %c25_306 = arith.constant 25 : index
    %959 = memref.load %arg4[%c0_305, %c25_306] : memref<1x32xf32, #tpu.memory_space<smem>>
    %960 = vector.broadcast %959 : f32 to vector<1x128xf32>
    %961 = vector.broadcast %960 : vector<1x128xf32> to vector<96x128xf32>
    %962 = arith.addf %958, %961 : vector<96x128xf32>
    %963 = vector.extract_strided_slice %1 {offsets = [1, 0, 0], sizes = [1, 96, 128], strides = [1, 1, 1]} : vector<4x96x128xf32> to vector<1x96x128xf32>
    %964 = vector.shape_cast %963 : vector<1x96x128xf32> to vector<96x128xf32>
    %c1_307 = arith.constant 1 : index
    %c25_308 = arith.constant 25 : index
    %965 = memref.load %arg3[%c1_307, %c25_308] : memref<4x32xf32, #tpu.memory_space<smem>>
    %966 = vector.broadcast %965 : f32 to vector<1x128xf32>
    %967 = vector.broadcast %966 : vector<1x128xf32> to vector<96x128xf32>
    %968 = arith.mulf %964, %967 : vector<96x128xf32>
    %969 = arith.addf %962, %968 : vector<96x128xf32>
    %970 = vector.extract_strided_slice %1 {offsets = [2, 0, 0], sizes = [1, 96, 128], strides = [1, 1, 1]} : vector<4x96x128xf32> to vector<1x96x128xf32>
    %971 = vector.shape_cast %970 : vector<1x96x128xf32> to vector<96x128xf32>
    %c2_309 = arith.constant 2 : index
    %c25_310 = arith.constant 25 : index
    %972 = memref.load %arg3[%c2_309, %c25_310] : memref<4x32xf32, #tpu.memory_space<smem>>
    %973 = vector.broadcast %972 : f32 to vector<1x128xf32>
    %974 = vector.broadcast %973 : vector<1x128xf32> to vector<96x128xf32>
    %975 = arith.mulf %971, %974 : vector<96x128xf32>
    %976 = arith.addf %969, %975 : vector<96x128xf32>
    %977 = vector.extract_strided_slice %1 {offsets = [3, 0, 0], sizes = [1, 96, 128], strides = [1, 1, 1]} : vector<4x96x128xf32> to vector<1x96x128xf32>
    %978 = vector.shape_cast %977 : vector<1x96x128xf32> to vector<96x128xf32>
    %c3_311 = arith.constant 3 : index
    %c25_312 = arith.constant 25 : index
    %979 = memref.load %arg3[%c3_311, %c25_312] : memref<4x32xf32, #tpu.memory_space<smem>>
    %980 = vector.broadcast %979 : f32 to vector<1x128xf32>
    %981 = vector.broadcast %980 : vector<1x128xf32> to vector<96x128xf32>
    %982 = arith.mulf %978, %981 : vector<96x128xf32>
    %983 = arith.addf %976, %982 : vector<96x128xf32>
    %cst_313 = arith.constant 0.000000e+00 : f32
    %984 = vector.broadcast %cst_313 : f32 to vector<96x128xf32>
    %985 = arith.maximumf %983, %984 : vector<96x128xf32>
    %c0_314 = arith.constant 0 : index
    %c25_315 = arith.constant 25 : index
    %986 = memref.load %arg5[%c0_314, %c25_315] : memref<1x32xf32, #tpu.memory_space<smem>>
    %987 = vector.broadcast %986 : f32 to vector<1x128xf32>
    %988 = vector.broadcast %987 : vector<1x128xf32> to vector<96x128xf32>
    %989 = arith.mulf %985, %988 : vector<96x128xf32>
    %990 = arith.addf %952, %989 : vector<96x128xf32>
    %991 = vector.extract_strided_slice %1 {offsets = [0, 0, 0], sizes = [1, 96, 128], strides = [1, 1, 1]} : vector<4x96x128xf32> to vector<1x96x128xf32>
    %992 = vector.shape_cast %991 : vector<1x96x128xf32> to vector<96x128xf32>
    %c0_316 = arith.constant 0 : index
    %c26 = arith.constant 26 : index
    %993 = memref.load %arg3[%c0_316, %c26] : memref<4x32xf32, #tpu.memory_space<smem>>
    %994 = vector.broadcast %993 : f32 to vector<1x128xf32>
    %995 = vector.broadcast %994 : vector<1x128xf32> to vector<96x128xf32>
    %996 = arith.mulf %992, %995 : vector<96x128xf32>
    %c0_317 = arith.constant 0 : index
    %c26_318 = arith.constant 26 : index
    %997 = memref.load %arg4[%c0_317, %c26_318] : memref<1x32xf32, #tpu.memory_space<smem>>
    %998 = vector.broadcast %997 : f32 to vector<1x128xf32>
    %999 = vector.broadcast %998 : vector<1x128xf32> to vector<96x128xf32>
    %1000 = arith.addf %996, %999 : vector<96x128xf32>
    %1001 = vector.extract_strided_slice %1 {offsets = [1, 0, 0], sizes = [1, 96, 128], strides = [1, 1, 1]} : vector<4x96x128xf32> to vector<1x96x128xf32>
    %1002 = vector.shape_cast %1001 : vector<1x96x128xf32> to vector<96x128xf32>
    %c1_319 = arith.constant 1 : index
    %c26_320 = arith.constant 26 : index
    %1003 = memref.load %arg3[%c1_319, %c26_320] : memref<4x32xf32, #tpu.memory_space<smem>>
    %1004 = vector.broadcast %1003 : f32 to vector<1x128xf32>
    %1005 = vector.broadcast %1004 : vector<1x128xf32> to vector<96x128xf32>
    %1006 = arith.mulf %1002, %1005 : vector<96x128xf32>
    %1007 = arith.addf %1000, %1006 : vector<96x128xf32>
    %1008 = vector.extract_strided_slice %1 {offsets = [2, 0, 0], sizes = [1, 96, 128], strides = [1, 1, 1]} : vector<4x96x128xf32> to vector<1x96x128xf32>
    %1009 = vector.shape_cast %1008 : vector<1x96x128xf32> to vector<96x128xf32>
    %c2_321 = arith.constant 2 : index
    %c26_322 = arith.constant 26 : index
    %1010 = memref.load %arg3[%c2_321, %c26_322] : memref<4x32xf32, #tpu.memory_space<smem>>
    %1011 = vector.broadcast %1010 : f32 to vector<1x128xf32>
    %1012 = vector.broadcast %1011 : vector<1x128xf32> to vector<96x128xf32>
    %1013 = arith.mulf %1009, %1012 : vector<96x128xf32>
    %1014 = arith.addf %1007, %1013 : vector<96x128xf32>
    %1015 = vector.extract_strided_slice %1 {offsets = [3, 0, 0], sizes = [1, 96, 128], strides = [1, 1, 1]} : vector<4x96x128xf32> to vector<1x96x128xf32>
    %1016 = vector.shape_cast %1015 : vector<1x96x128xf32> to vector<96x128xf32>
    %c3_323 = arith.constant 3 : index
    %c26_324 = arith.constant 26 : index
    %1017 = memref.load %arg3[%c3_323, %c26_324] : memref<4x32xf32, #tpu.memory_space<smem>>
    %1018 = vector.broadcast %1017 : f32 to vector<1x128xf32>
    %1019 = vector.broadcast %1018 : vector<1x128xf32> to vector<96x128xf32>
    %1020 = arith.mulf %1016, %1019 : vector<96x128xf32>
    %1021 = arith.addf %1014, %1020 : vector<96x128xf32>
    %cst_325 = arith.constant 0.000000e+00 : f32
    %1022 = vector.broadcast %cst_325 : f32 to vector<96x128xf32>
    %1023 = arith.maximumf %1021, %1022 : vector<96x128xf32>
    %c0_326 = arith.constant 0 : index
    %c26_327 = arith.constant 26 : index
    %1024 = memref.load %arg5[%c0_326, %c26_327] : memref<1x32xf32, #tpu.memory_space<smem>>
    %1025 = vector.broadcast %1024 : f32 to vector<1x128xf32>
    %1026 = vector.broadcast %1025 : vector<1x128xf32> to vector<96x128xf32>
    %1027 = arith.mulf %1023, %1026 : vector<96x128xf32>
    %1028 = arith.addf %990, %1027 : vector<96x128xf32>
    %1029 = vector.extract_strided_slice %1 {offsets = [0, 0, 0], sizes = [1, 96, 128], strides = [1, 1, 1]} : vector<4x96x128xf32> to vector<1x96x128xf32>
    %1030 = vector.shape_cast %1029 : vector<1x96x128xf32> to vector<96x128xf32>
    %c0_328 = arith.constant 0 : index
    %c27 = arith.constant 27 : index
    %1031 = memref.load %arg3[%c0_328, %c27] : memref<4x32xf32, #tpu.memory_space<smem>>
    %1032 = vector.broadcast %1031 : f32 to vector<1x128xf32>
    %1033 = vector.broadcast %1032 : vector<1x128xf32> to vector<96x128xf32>
    %1034 = arith.mulf %1030, %1033 : vector<96x128xf32>
    %c0_329 = arith.constant 0 : index
    %c27_330 = arith.constant 27 : index
    %1035 = memref.load %arg4[%c0_329, %c27_330] : memref<1x32xf32, #tpu.memory_space<smem>>
    %1036 = vector.broadcast %1035 : f32 to vector<1x128xf32>
    %1037 = vector.broadcast %1036 : vector<1x128xf32> to vector<96x128xf32>
    %1038 = arith.addf %1034, %1037 : vector<96x128xf32>
    %1039 = vector.extract_strided_slice %1 {offsets = [1, 0, 0], sizes = [1, 96, 128], strides = [1, 1, 1]} : vector<4x96x128xf32> to vector<1x96x128xf32>
    %1040 = vector.shape_cast %1039 : vector<1x96x128xf32> to vector<96x128xf32>
    %c1_331 = arith.constant 1 : index
    %c27_332 = arith.constant 27 : index
    %1041 = memref.load %arg3[%c1_331, %c27_332] : memref<4x32xf32, #tpu.memory_space<smem>>
    %1042 = vector.broadcast %1041 : f32 to vector<1x128xf32>
    %1043 = vector.broadcast %1042 : vector<1x128xf32> to vector<96x128xf32>
    %1044 = arith.mulf %1040, %1043 : vector<96x128xf32>
    %1045 = arith.addf %1038, %1044 : vector<96x128xf32>
    %1046 = vector.extract_strided_slice %1 {offsets = [2, 0, 0], sizes = [1, 96, 128], strides = [1, 1, 1]} : vector<4x96x128xf32> to vector<1x96x128xf32>
    %1047 = vector.shape_cast %1046 : vector<1x96x128xf32> to vector<96x128xf32>
    %c2_333 = arith.constant 2 : index
    %c27_334 = arith.constant 27 : index
    %1048 = memref.load %arg3[%c2_333, %c27_334] : memref<4x32xf32, #tpu.memory_space<smem>>
    %1049 = vector.broadcast %1048 : f32 to vector<1x128xf32>
    %1050 = vector.broadcast %1049 : vector<1x128xf32> to vector<96x128xf32>
    %1051 = arith.mulf %1047, %1050 : vector<96x128xf32>
    %1052 = arith.addf %1045, %1051 : vector<96x128xf32>
    %1053 = vector.extract_strided_slice %1 {offsets = [3, 0, 0], sizes = [1, 96, 128], strides = [1, 1, 1]} : vector<4x96x128xf32> to vector<1x96x128xf32>
    %1054 = vector.shape_cast %1053 : vector<1x96x128xf32> to vector<96x128xf32>
    %c3_335 = arith.constant 3 : index
    %c27_336 = arith.constant 27 : index
    %1055 = memref.load %arg3[%c3_335, %c27_336] : memref<4x32xf32, #tpu.memory_space<smem>>
    %1056 = vector.broadcast %1055 : f32 to vector<1x128xf32>
    %1057 = vector.broadcast %1056 : vector<1x128xf32> to vector<96x128xf32>
    %1058 = arith.mulf %1054, %1057 : vector<96x128xf32>
    %1059 = arith.addf %1052, %1058 : vector<96x128xf32>
    %cst_337 = arith.constant 0.000000e+00 : f32
    %1060 = vector.broadcast %cst_337 : f32 to vector<96x128xf32>
    %1061 = arith.maximumf %1059, %1060 : vector<96x128xf32>
    %c0_338 = arith.constant 0 : index
    %c27_339 = arith.constant 27 : index
    %1062 = memref.load %arg5[%c0_338, %c27_339] : memref<1x32xf32, #tpu.memory_space<smem>>
    %1063 = vector.broadcast %1062 : f32 to vector<1x128xf32>
    %1064 = vector.broadcast %1063 : vector<1x128xf32> to vector<96x128xf32>
    %1065 = arith.mulf %1061, %1064 : vector<96x128xf32>
    %1066 = arith.addf %1028, %1065 : vector<96x128xf32>
    %1067 = vector.extract_strided_slice %1 {offsets = [0, 0, 0], sizes = [1, 96, 128], strides = [1, 1, 1]} : vector<4x96x128xf32> to vector<1x96x128xf32>
    %1068 = vector.shape_cast %1067 : vector<1x96x128xf32> to vector<96x128xf32>
    %c0_340 = arith.constant 0 : index
    %c28 = arith.constant 28 : index
    %1069 = memref.load %arg3[%c0_340, %c28] : memref<4x32xf32, #tpu.memory_space<smem>>
    %1070 = vector.broadcast %1069 : f32 to vector<1x128xf32>
    %1071 = vector.broadcast %1070 : vector<1x128xf32> to vector<96x128xf32>
    %1072 = arith.mulf %1068, %1071 : vector<96x128xf32>
    %c0_341 = arith.constant 0 : index
    %c28_342 = arith.constant 28 : index
    %1073 = memref.load %arg4[%c0_341, %c28_342] : memref<1x32xf32, #tpu.memory_space<smem>>
    %1074 = vector.broadcast %1073 : f32 to vector<1x128xf32>
    %1075 = vector.broadcast %1074 : vector<1x128xf32> to vector<96x128xf32>
    %1076 = arith.addf %1072, %1075 : vector<96x128xf32>
    %1077 = vector.extract_strided_slice %1 {offsets = [1, 0, 0], sizes = [1, 96, 128], strides = [1, 1, 1]} : vector<4x96x128xf32> to vector<1x96x128xf32>
    %1078 = vector.shape_cast %1077 : vector<1x96x128xf32> to vector<96x128xf32>
    %c1_343 = arith.constant 1 : index
    %c28_344 = arith.constant 28 : index
    %1079 = memref.load %arg3[%c1_343, %c28_344] : memref<4x32xf32, #tpu.memory_space<smem>>
    %1080 = vector.broadcast %1079 : f32 to vector<1x128xf32>
    %1081 = vector.broadcast %1080 : vector<1x128xf32> to vector<96x128xf32>
    %1082 = arith.mulf %1078, %1081 : vector<96x128xf32>
    %1083 = arith.addf %1076, %1082 : vector<96x128xf32>
    %1084 = vector.extract_strided_slice %1 {offsets = [2, 0, 0], sizes = [1, 96, 128], strides = [1, 1, 1]} : vector<4x96x128xf32> to vector<1x96x128xf32>
    %1085 = vector.shape_cast %1084 : vector<1x96x128xf32> to vector<96x128xf32>
    %c2_345 = arith.constant 2 : index
    %c28_346 = arith.constant 28 : index
    %1086 = memref.load %arg3[%c2_345, %c28_346] : memref<4x32xf32, #tpu.memory_space<smem>>
    %1087 = vector.broadcast %1086 : f32 to vector<1x128xf32>
    %1088 = vector.broadcast %1087 : vector<1x128xf32> to vector<96x128xf32>
    %1089 = arith.mulf %1085, %1088 : vector<96x128xf32>
    %1090 = arith.addf %1083, %1089 : vector<96x128xf32>
    %1091 = vector.extract_strided_slice %1 {offsets = [3, 0, 0], sizes = [1, 96, 128], strides = [1, 1, 1]} : vector<4x96x128xf32> to vector<1x96x128xf32>
    %1092 = vector.shape_cast %1091 : vector<1x96x128xf32> to vector<96x128xf32>
    %c3_347 = arith.constant 3 : index
    %c28_348 = arith.constant 28 : index
    %1093 = memref.load %arg3[%c3_347, %c28_348] : memref<4x32xf32, #tpu.memory_space<smem>>
    %1094 = vector.broadcast %1093 : f32 to vector<1x128xf32>
    %1095 = vector.broadcast %1094 : vector<1x128xf32> to vector<96x128xf32>
    %1096 = arith.mulf %1092, %1095 : vector<96x128xf32>
    %1097 = arith.addf %1090, %1096 : vector<96x128xf32>
    %cst_349 = arith.constant 0.000000e+00 : f32
    %1098 = vector.broadcast %cst_349 : f32 to vector<96x128xf32>
    %1099 = arith.maximumf %1097, %1098 : vector<96x128xf32>
    %c0_350 = arith.constant 0 : index
    %c28_351 = arith.constant 28 : index
    %1100 = memref.load %arg5[%c0_350, %c28_351] : memref<1x32xf32, #tpu.memory_space<smem>>
    %1101 = vector.broadcast %1100 : f32 to vector<1x128xf32>
    %1102 = vector.broadcast %1101 : vector<1x128xf32> to vector<96x128xf32>
    %1103 = arith.mulf %1099, %1102 : vector<96x128xf32>
    %1104 = arith.addf %1066, %1103 : vector<96x128xf32>
    %1105 = vector.extract_strided_slice %1 {offsets = [0, 0, 0], sizes = [1, 96, 128], strides = [1, 1, 1]} : vector<4x96x128xf32> to vector<1x96x128xf32>
    %1106 = vector.shape_cast %1105 : vector<1x96x128xf32> to vector<96x128xf32>
    %c0_352 = arith.constant 0 : index
    %c29 = arith.constant 29 : index
    %1107 = memref.load %arg3[%c0_352, %c29] : memref<4x32xf32, #tpu.memory_space<smem>>
    %1108 = vector.broadcast %1107 : f32 to vector<1x128xf32>
    %1109 = vector.broadcast %1108 : vector<1x128xf32> to vector<96x128xf32>
    %1110 = arith.mulf %1106, %1109 : vector<96x128xf32>
    %c0_353 = arith.constant 0 : index
    %c29_354 = arith.constant 29 : index
    %1111 = memref.load %arg4[%c0_353, %c29_354] : memref<1x32xf32, #tpu.memory_space<smem>>
    %1112 = vector.broadcast %1111 : f32 to vector<1x128xf32>
    %1113 = vector.broadcast %1112 : vector<1x128xf32> to vector<96x128xf32>
    %1114 = arith.addf %1110, %1113 : vector<96x128xf32>
    %1115 = vector.extract_strided_slice %1 {offsets = [1, 0, 0], sizes = [1, 96, 128], strides = [1, 1, 1]} : vector<4x96x128xf32> to vector<1x96x128xf32>
    %1116 = vector.shape_cast %1115 : vector<1x96x128xf32> to vector<96x128xf32>
    %c1_355 = arith.constant 1 : index
    %c29_356 = arith.constant 29 : index
    %1117 = memref.load %arg3[%c1_355, %c29_356] : memref<4x32xf32, #tpu.memory_space<smem>>
    %1118 = vector.broadcast %1117 : f32 to vector<1x128xf32>
    %1119 = vector.broadcast %1118 : vector<1x128xf32> to vector<96x128xf32>
    %1120 = arith.mulf %1116, %1119 : vector<96x128xf32>
    %1121 = arith.addf %1114, %1120 : vector<96x128xf32>
    %1122 = vector.extract_strided_slice %1 {offsets = [2, 0, 0], sizes = [1, 96, 128], strides = [1, 1, 1]} : vector<4x96x128xf32> to vector<1x96x128xf32>
    %1123 = vector.shape_cast %1122 : vector<1x96x128xf32> to vector<96x128xf32>
    %c2_357 = arith.constant 2 : index
    %c29_358 = arith.constant 29 : index
    %1124 = memref.load %arg3[%c2_357, %c29_358] : memref<4x32xf32, #tpu.memory_space<smem>>
    %1125 = vector.broadcast %1124 : f32 to vector<1x128xf32>
    %1126 = vector.broadcast %1125 : vector<1x128xf32> to vector<96x128xf32>
    %1127 = arith.mulf %1123, %1126 : vector<96x128xf32>
    %1128 = arith.addf %1121, %1127 : vector<96x128xf32>
    %1129 = vector.extract_strided_slice %1 {offsets = [3, 0, 0], sizes = [1, 96, 128], strides = [1, 1, 1]} : vector<4x96x128xf32> to vector<1x96x128xf32>
    %1130 = vector.shape_cast %1129 : vector<1x96x128xf32> to vector<96x128xf32>
    %c3_359 = arith.constant 3 : index
    %c29_360 = arith.constant 29 : index
    %1131 = memref.load %arg3[%c3_359, %c29_360] : memref<4x32xf32, #tpu.memory_space<smem>>
    %1132 = vector.broadcast %1131 : f32 to vector<1x128xf32>
    %1133 = vector.broadcast %1132 : vector<1x128xf32> to vector<96x128xf32>
    %1134 = arith.mulf %1130, %1133 : vector<96x128xf32>
    %1135 = arith.addf %1128, %1134 : vector<96x128xf32>
    %cst_361 = arith.constant 0.000000e+00 : f32
    %1136 = vector.broadcast %cst_361 : f32 to vector<96x128xf32>
    %1137 = arith.maximumf %1135, %1136 : vector<96x128xf32>
    %c0_362 = arith.constant 0 : index
    %c29_363 = arith.constant 29 : index
    %1138 = memref.load %arg5[%c0_362, %c29_363] : memref<1x32xf32, #tpu.memory_space<smem>>
    %1139 = vector.broadcast %1138 : f32 to vector<1x128xf32>
    %1140 = vector.broadcast %1139 : vector<1x128xf32> to vector<96x128xf32>
    %1141 = arith.mulf %1137, %1140 : vector<96x128xf32>
    %1142 = arith.addf %1104, %1141 : vector<96x128xf32>
    %1143 = vector.extract_strided_slice %1 {offsets = [0, 0, 0], sizes = [1, 96, 128], strides = [1, 1, 1]} : vector<4x96x128xf32> to vector<1x96x128xf32>
    %1144 = vector.shape_cast %1143 : vector<1x96x128xf32> to vector<96x128xf32>
    %c0_364 = arith.constant 0 : index
    %c30 = arith.constant 30 : index
    %1145 = memref.load %arg3[%c0_364, %c30] : memref<4x32xf32, #tpu.memory_space<smem>>
    %1146 = vector.broadcast %1145 : f32 to vector<1x128xf32>
    %1147 = vector.broadcast %1146 : vector<1x128xf32> to vector<96x128xf32>
    %1148 = arith.mulf %1144, %1147 : vector<96x128xf32>
    %c0_365 = arith.constant 0 : index
    %c30_366 = arith.constant 30 : index
    %1149 = memref.load %arg4[%c0_365, %c30_366] : memref<1x32xf32, #tpu.memory_space<smem>>
    %1150 = vector.broadcast %1149 : f32 to vector<1x128xf32>
    %1151 = vector.broadcast %1150 : vector<1x128xf32> to vector<96x128xf32>
    %1152 = arith.addf %1148, %1151 : vector<96x128xf32>
    %1153 = vector.extract_strided_slice %1 {offsets = [1, 0, 0], sizes = [1, 96, 128], strides = [1, 1, 1]} : vector<4x96x128xf32> to vector<1x96x128xf32>
    %1154 = vector.shape_cast %1153 : vector<1x96x128xf32> to vector<96x128xf32>
    %c1_367 = arith.constant 1 : index
    %c30_368 = arith.constant 30 : index
    %1155 = memref.load %arg3[%c1_367, %c30_368] : memref<4x32xf32, #tpu.memory_space<smem>>
    %1156 = vector.broadcast %1155 : f32 to vector<1x128xf32>
    %1157 = vector.broadcast %1156 : vector<1x128xf32> to vector<96x128xf32>
    %1158 = arith.mulf %1154, %1157 : vector<96x128xf32>
    %1159 = arith.addf %1152, %1158 : vector<96x128xf32>
    %1160 = vector.extract_strided_slice %1 {offsets = [2, 0, 0], sizes = [1, 96, 128], strides = [1, 1, 1]} : vector<4x96x128xf32> to vector<1x96x128xf32>
    %1161 = vector.shape_cast %1160 : vector<1x96x128xf32> to vector<96x128xf32>
    %c2_369 = arith.constant 2 : index
    %c30_370 = arith.constant 30 : index
    %1162 = memref.load %arg3[%c2_369, %c30_370] : memref<4x32xf32, #tpu.memory_space<smem>>
    %1163 = vector.broadcast %1162 : f32 to vector<1x128xf32>
    %1164 = vector.broadcast %1163 : vector<1x128xf32> to vector<96x128xf32>
    %1165 = arith.mulf %1161, %1164 : vector<96x128xf32>
    %1166 = arith.addf %1159, %1165 : vector<96x128xf32>
    %1167 = vector.extract_strided_slice %1 {offsets = [3, 0, 0], sizes = [1, 96, 128], strides = [1, 1, 1]} : vector<4x96x128xf32> to vector<1x96x128xf32>
    %1168 = vector.shape_cast %1167 : vector<1x96x128xf32> to vector<96x128xf32>
    %c3_371 = arith.constant 3 : index
    %c30_372 = arith.constant 30 : index
    %1169 = memref.load %arg3[%c3_371, %c30_372] : memref<4x32xf32, #tpu.memory_space<smem>>
    %1170 = vector.broadcast %1169 : f32 to vector<1x128xf32>
    %1171 = vector.broadcast %1170 : vector<1x128xf32> to vector<96x128xf32>
    %1172 = arith.mulf %1168, %1171 : vector<96x128xf32>
    %1173 = arith.addf %1166, %1172 : vector<96x128xf32>
    %cst_373 = arith.constant 0.000000e+00 : f32
    %1174 = vector.broadcast %cst_373 : f32 to vector<96x128xf32>
    %1175 = arith.maximumf %1173, %1174 : vector<96x128xf32>
    %c0_374 = arith.constant 0 : index
    %c30_375 = arith.constant 30 : index
    %1176 = memref.load %arg5[%c0_374, %c30_375] : memref<1x32xf32, #tpu.memory_space<smem>>
    %1177 = vector.broadcast %1176 : f32 to vector<1x128xf32>
    %1178 = vector.broadcast %1177 : vector<1x128xf32> to vector<96x128xf32>
    %1179 = arith.mulf %1175, %1178 : vector<96x128xf32>
    %1180 = arith.addf %1142, %1179 : vector<96x128xf32>
    %1181 = vector.extract_strided_slice %1 {offsets = [0, 0, 0], sizes = [1, 96, 128], strides = [1, 1, 1]} : vector<4x96x128xf32> to vector<1x96x128xf32>
    %1182 = vector.shape_cast %1181 : vector<1x96x128xf32> to vector<96x128xf32>
    %c0_376 = arith.constant 0 : index
    %c31 = arith.constant 31 : index
    %1183 = memref.load %arg3[%c0_376, %c31] : memref<4x32xf32, #tpu.memory_space<smem>>
    %1184 = vector.broadcast %1183 : f32 to vector<1x128xf32>
    %1185 = vector.broadcast %1184 : vector<1x128xf32> to vector<96x128xf32>
    %1186 = arith.mulf %1182, %1185 : vector<96x128xf32>
    %c0_377 = arith.constant 0 : index
    %c31_378 = arith.constant 31 : index
    %1187 = memref.load %arg4[%c0_377, %c31_378] : memref<1x32xf32, #tpu.memory_space<smem>>
    %1188 = vector.broadcast %1187 : f32 to vector<1x128xf32>
    %1189 = vector.broadcast %1188 : vector<1x128xf32> to vector<96x128xf32>
    %1190 = arith.addf %1186, %1189 : vector<96x128xf32>
    %1191 = vector.extract_strided_slice %1 {offsets = [1, 0, 0], sizes = [1, 96, 128], strides = [1, 1, 1]} : vector<4x96x128xf32> to vector<1x96x128xf32>
    %1192 = vector.shape_cast %1191 : vector<1x96x128xf32> to vector<96x128xf32>
    %c1_379 = arith.constant 1 : index
    %c31_380 = arith.constant 31 : index
    %1193 = memref.load %arg3[%c1_379, %c31_380] : memref<4x32xf32, #tpu.memory_space<smem>>
    %1194 = vector.broadcast %1193 : f32 to vector<1x128xf32>
    %1195 = vector.broadcast %1194 : vector<1x128xf32> to vector<96x128xf32>
    %1196 = arith.mulf %1192, %1195 : vector<96x128xf32>
    %1197 = arith.addf %1190, %1196 : vector<96x128xf32>
    %1198 = vector.extract_strided_slice %1 {offsets = [2, 0, 0], sizes = [1, 96, 128], strides = [1, 1, 1]} : vector<4x96x128xf32> to vector<1x96x128xf32>
    %1199 = vector.shape_cast %1198 : vector<1x96x128xf32> to vector<96x128xf32>
    %c2_381 = arith.constant 2 : index
    %c31_382 = arith.constant 31 : index
    %1200 = memref.load %arg3[%c2_381, %c31_382] : memref<4x32xf32, #tpu.memory_space<smem>>
    %1201 = vector.broadcast %1200 : f32 to vector<1x128xf32>
    %1202 = vector.broadcast %1201 : vector<1x128xf32> to vector<96x128xf32>
    %1203 = arith.mulf %1199, %1202 : vector<96x128xf32>
    %1204 = arith.addf %1197, %1203 : vector<96x128xf32>
    %1205 = vector.extract_strided_slice %1 {offsets = [3, 0, 0], sizes = [1, 96, 128], strides = [1, 1, 1]} : vector<4x96x128xf32> to vector<1x96x128xf32>
    %1206 = vector.shape_cast %1205 : vector<1x96x128xf32> to vector<96x128xf32>
    %c3_383 = arith.constant 3 : index
    %c31_384 = arith.constant 31 : index
    %1207 = memref.load %arg3[%c3_383, %c31_384] : memref<4x32xf32, #tpu.memory_space<smem>>
    %1208 = vector.broadcast %1207 : f32 to vector<1x128xf32>
    %1209 = vector.broadcast %1208 : vector<1x128xf32> to vector<96x128xf32>
    %1210 = arith.mulf %1206, %1209 : vector<96x128xf32>
    %1211 = arith.addf %1204, %1210 : vector<96x128xf32>
    %cst_385 = arith.constant 0.000000e+00 : f32
    %1212 = vector.broadcast %cst_385 : f32 to vector<96x128xf32>
    %1213 = arith.maximumf %1211, %1212 : vector<96x128xf32>
    %c0_386 = arith.constant 0 : index
    %c31_387 = arith.constant 31 : index
    %1214 = memref.load %arg5[%c0_386, %c31_387] : memref<1x32xf32, #tpu.memory_space<smem>>
    %1215 = vector.broadcast %1214 : f32 to vector<1x128xf32>
    %1216 = vector.broadcast %1215 : vector<1x128xf32> to vector<96x128xf32>
    %1217 = arith.mulf %1213, %1216 : vector<96x128xf32>
    %1218 = arith.addf %1180, %1217 : vector<96x128xf32>
    %c0_388 = arith.constant 0 : index
    %c0_389 = arith.constant 0 : index
    %1219 = memref.load %arg6[%c0_388, %c0_389] : memref<1x1xf32, #tpu.memory_space<smem>>
    %1220 = vector.broadcast %1219 : f32 to vector<96x128xf32>
    %1221 = arith.addf %1218, %1220 : vector<96x128xf32>
    %1222 = arith.negf %1221 : vector<96x128xf32>
    %1223 = math.exp %1222 : vector<96x128xf32>
    %cst_390 = arith.constant 1.000000e+00 : f32
    %1224 = vector.broadcast %cst_390 : f32 to vector<96x128xf32>
    %1225 = arith.addf %1224, %1223 : vector<96x128xf32>
    %1226 = arith.divf %1224, %1225 : vector<96x128xf32>
    %c0_391 = arith.constant 0 : index
    %c0_392 = arith.constant 0 : index
    %c0_393 = arith.constant 0 : index
    %1227 = vector.load %arg7[%c0_391, %c0_392, %c0_393] : memref<1x96x128xf32, #tpu.memory_space<vmem>>, vector<1x96x128xf32>
    %1228 = vector.shape_cast %1227 : vector<1x96x128xf32> to vector<96x128xf32>
    %1229 = vector.shape_cast %1226 : vector<96x128xf32> to vector<1x96x128xf32>
    tpu.vector_store %arg7[%c0_391, %c0_392, %c0_393], %1229 {strides = array<i32>} : memref<1x96x128xf32, #tpu.memory_space<vmem>>, vector<1x96x128xf32>,
    %cst_394 = arith.constant 3.000000e-01 : f32
    %1230 = vector.broadcast %cst_394 : f32 to vector<96x128xf32>
    %1231 = arith.cmpf ogt, %1226, %1230 : vector<96x128xf32>
    %c255_i32 = arith.constant 255 : i32
    %c0_i32 = arith.constant 0 : i32
    %1232 = vector.broadcast %c255_i32 : i32 to vector<96x128xi32>
    %1233 = vector.broadcast %c0_i32 : i32 to vector<96x128xi32>
    %1234 = arith.select %1231, %1232, %1233 : vector<96x128xi1>, vector<96x128xi32>
    %1235 = arith.trunci %1234 : vector<96x128xi32> to vector<96x128xi8>
    %c0_395 = arith.constant 0 : index
    %c0_396 = arith.constant 0 : index
    %c0_397 = arith.constant 0 : index
    %1236 = vector.load %arg8[%c0_395, %c0_396, %c0_397] : memref<1x96x128xi8, #tpu.memory_space<vmem>>, vector<1x96x128xi8>
    %1237 = vector.shape_cast %1236 : vector<1x96x128xi8> to vector<96x128xi8>
    %1238 = vector.shape_cast %1235 : vector<96x128xi8> to vector<1x96x128xi8>
    tpu.vector_store %arg8[%c0_395, %c0_396, %c0_397], %1238 {strides = array<i32>} : memref<1x96x128xi8, #tpu.memory_space<vmem>>, vector<1x96x128xi8>,
    %c96_i32 = arith.constant 96 : i32
    %1239 = arith.muli %arg1, %c96_i32 : i32
    %1240 = tpu.iota {dimensions = array<i32: 0>} : vector<96x128xi32>
    %1241 = vector.broadcast %1239 : i32 to vector<96x128xi32>
    %1242 = arith.addi %1241, %1240 : vector<96x128xi32>
    %c72_i32 = arith.constant 72 : i32
    %1243 = vector.broadcast %c72_i32 : i32 to vector<96x128xi32>
    %1244 = arith.cmpi slt, %1242, %1243 : vector<96x128xi32>
    %cst_398 = arith.constant 0.000000e+00 : f32
    %1245 = vector.broadcast %cst_398 : f32 to vector<96x128xf32>
    %1246 = arith.select %1244, %1226, %1245 : vector<96x128xi1>, vector<96x128xf32>
    %1247 = vector.extract_strided_slice %1246 {offsets = [0, 0], sizes = [8, 128], strides = [1, 1]} : vector<96x128xf32> to vector<8x128xf32>
    %1248 = vector.extract_strided_slice %1246 {offsets = [8, 0], sizes = [8, 128], strides = [1, 1]} : vector<96x128xf32> to vector<8x128xf32>
    %1249 = arith.addf %1247, %1248 : vector<8x128xf32>
    %1250 = vector.extract_strided_slice %1246 {offsets = [16, 0], sizes = [8, 128], strides = [1, 1]} : vector<96x128xf32> to vector<8x128xf32>
    %1251 = arith.addf %1249, %1250 : vector<8x128xf32>
    %1252 = vector.extract_strided_slice %1246 {offsets = [24, 0], sizes = [8, 128], strides = [1, 1]} : vector<96x128xf32> to vector<8x128xf32>
    %1253 = arith.addf %1251, %1252 : vector<8x128xf32>
    %1254 = vector.extract_strided_slice %1246 {offsets = [32, 0], sizes = [8, 128], strides = [1, 1]} : vector<96x128xf32> to vector<8x128xf32>
    %1255 = arith.addf %1253, %1254 : vector<8x128xf32>
    %1256 = vector.extract_strided_slice %1246 {offsets = [40, 0], sizes = [8, 128], strides = [1, 1]} : vector<96x128xf32> to vector<8x128xf32>
    %1257 = arith.addf %1255, %1256 : vector<8x128xf32>
    %1258 = vector.extract_strided_slice %1246 {offsets = [48, 0], sizes = [8, 128], strides = [1, 1]} : vector<96x128xf32> to vector<8x128xf32>
    %1259 = arith.addf %1257, %1258 : vector<8x128xf32>
    %1260 = vector.extract_strided_slice %1246 {offsets = [56, 0], sizes = [8, 128], strides = [1, 1]} : vector<96x128xf32> to vector<8x128xf32>
    %1261 = arith.addf %1259, %1260 : vector<8x128xf32>
    %1262 = vector.extract_strided_slice %1246 {offsets = [64, 0], sizes = [8, 128], strides = [1, 1]} : vector<96x128xf32> to vector<8x128xf32>
    %1263 = arith.addf %1261, %1262 : vector<8x128xf32>
    %1264 = vector.extract_strided_slice %1246 {offsets = [72, 0], sizes = [8, 128], strides = [1, 1]} : vector<96x128xf32> to vector<8x128xf32>
    %1265 = arith.addf %1263, %1264 : vector<8x128xf32>
    %1266 = vector.extract_strided_slice %1246 {offsets = [80, 0], sizes = [8, 128], strides = [1, 1]} : vector<96x128xf32> to vector<8x128xf32>
    %1267 = arith.addf %1265, %1266 : vector<8x128xf32>
    %1268 = vector.extract_strided_slice %1246 {offsets = [88, 0], sizes = [8, 128], strides = [1, 1]} : vector<96x128xf32> to vector<8x128xf32>
    %1269 = arith.addf %1267, %1268 : vector<8x128xf32>
    %c0_399 = arith.constant 0 : index
    %c0_400 = arith.constant 0 : index
    %c0_401 = arith.constant 0 : index
    %c0_402 = arith.constant 0 : index
    %1270 = vector.load %arg9[%c0_399, %c0_400, %c0_401, %c0_402] : memref<1x1x8x128xf32, #tpu.memory_space<vmem>>, vector<1x1x8x128xf32>
    %1271 = vector.shape_cast %1270 : vector<1x1x8x128xf32> to vector<8x128xf32>
    %1272 = vector.shape_cast %1269 : vector<8x128xf32> to vector<1x1x8x128xf32>
    tpu.vector_store %arg9[%c0_399, %c0_400, %c0_401, %c0_402], %1272 {strides = array<i32>} : memref<1x1x8x128xf32, #tpu.memory_space<vmem>>, vector<1x1x8x128xf32>,
    return
  }
  func.func @transform_0(%arg0: i32, %arg1: i32) -> (i32, i32, i32, i32) {
    %c0_i32 = arith.constant 0 : i32
    %c0_i32_0 = arith.constant 0 : i32
    %c0_i32_1 = arith.constant 0 : i32
    return %arg0, %c0_i32, %arg1, %c0_i32_0 : i32, i32, i32, i32
  }
  func.func @transform_1(%arg0: i32, %arg1: i32) -> (i32, i32) {
    %c0_i32 = arith.constant 0 : i32
    %c0_i32_0 = arith.constant 0 : i32
    %c0_i32_1 = arith.constant 0 : i32
    return %c0_i32, %c0_i32_0 : i32, i32
  }
  func.func @transform_2(%arg0: i32, %arg1: i32) -> (i32, i32) {
    %c0_i32 = arith.constant 0 : i32
    %c0_i32_0 = arith.constant 0 : i32
    %c0_i32_1 = arith.constant 0 : i32
    return %c0_i32, %c0_i32_0 : i32, i32
  }
  func.func @transform_3(%arg0: i32, %arg1: i32) -> (i32, i32) {
    %c0_i32 = arith.constant 0 : i32
    %c0_i32_0 = arith.constant 0 : i32
    %c0_i32_1 = arith.constant 0 : i32
    return %c0_i32, %c0_i32_0 : i32, i32
  }
  func.func @transform_4(%arg0: i32, %arg1: i32) -> (i32, i32) {
    %c0_i32 = arith.constant 0 : i32
    %c0_i32_0 = arith.constant 0 : i32
    %c0_i32_1 = arith.constant 0 : i32
    return %c0_i32, %c0_i32_0 : i32, i32
  }
  func.func @transform_5(%arg0: i32, %arg1: i32) -> (i32, i32, i32) {
    %c0_i32 = arith.constant 0 : i32
    %c0_i32_0 = arith.constant 0 : i32
    return %arg0, %arg1, %c0_i32 : i32, i32, i32
  }
  func.func @transform_6(%arg0: i32, %arg1: i32) -> (i32, i32, i32) {
    %c0_i32 = arith.constant 0 : i32
    %c0_i32_0 = arith.constant 0 : i32
    return %arg0, %arg1, %c0_i32 : i32, i32, i32
  }
  func.func @transform_7(%arg0: i32, %arg1: i32) -> (i32, i32, i32, i32) {
    %c0_i32 = arith.constant 0 : i32
    %c0_i32_0 = arith.constant 0 : i32
    %c0_i32_1 = arith.constant 0 : i32
    return %arg0, %arg1, %c0_i32, %c0_i32_0 : i32, i32, i32, i32
  }
}

module attributes {stable_mosaic.version = 11 : i64} {
  func.func @reco_kernel(%arg0: i32, %arg1: memref<64x1024xbf16, #tpu.memory_space<vmem>>, %arg2: memref<128x64xbf16, #tpu.memory_space<vmem>>, %arg3: memref<128x1xf32, #tpu.memory_space<vmem>>, %arg4: memref<1x1024xi32, #tpu.memory_space<vmem>>, %arg5: memref<1x1024xf32, #tpu.memory_space<vmem>>) attributes {dimension_semantics = [#tpu.dimension_semantics<parallel>], iteration_bounds = array<i64: 2>, scalar_prefetch = 0 : i64, scratch_operands = 0 : i64, tpu.core_type = #tpu.core_type<tc>, window_params = [{transform_indices = @transform_0, window_bounds = array<i64: 64, 1024>}, {pipeline_mode = #tpu.pipeline_mode<synchronous>, transform_indices = @transform_1, window_bounds = array<i64: 128, 64>}, {pipeline_mode = #tpu.pipeline_mode<synchronous>, transform_indices = @transform_2, window_bounds = array<i64: 128, 1>}, {transform_indices = @transform_3, window_bounds = array<i64: 1, 1024>}, {transform_indices = @transform_4, window_bounds = array<i64: 1, 1024>}]} {
    %c0 = arith.constant 0 : index
    %c0_0 = arith.constant 0 : index
    %0 = vector.load %arg2[%c0, %c0_0] : memref<128x64xbf16, #tpu.memory_space<vmem>>, vector<128x64xbf16>
    %c0_1 = arith.constant 0 : index
    %c0_2 = arith.constant 0 : index
    %1 = vector.load %arg1[%c0_1, %c0_2] : memref<64x1024xbf16, #tpu.memory_space<vmem>>, vector<64x1024xbf16>
    %cst = arith.constant dense<0.000000e+00> : vector<128x1024xf32>
    %2 = tpu.matmul %0, %1, %cst {dimension_numbers = #tpu.dot_dimension_numbers<[1], [0], [0], [1], [0, 0, 1, 1], [], []>} : vector<128x64xbf16>, vector<64x1024xbf16>, vector<128x1024xf32> -> vector<128x1024xf32>
    %c0_3 = arith.constant 0 : index
    %c0_4 = arith.constant 0 : index
    %3 = vector.load %arg3[%c0_3, %c0_4] : memref<128x1xf32, #tpu.memory_space<vmem>>, vector<128x1xf32>
    %4 = vector.broadcast %3 : vector<128x1xf32> to vector<128x1024xf32>
    %5 = arith.addf %2, %4 : vector<128x1024xf32>
    %cst_5 = arith.constant dense<0xFF800000> : vector<1024xf32>
    %6 = vector.multi_reduction <maximumf>, %5, %cst_5 [0] : vector<128x1024xf32> to vector<1024xf32>
    %7 = vector.shape_cast %6 : vector<1024xf32> to vector<1x1024xf32>
    %8 = tpu.iota {dimensions = array<i32: 0>} : vector<128x1024xi32>
    %9 = vector.broadcast %7 : vector<1x1024xf32> to vector<128x1024xf32>
    %10 = arith.cmpf oeq, %5, %9 : vector<128x1024xf32>
    %c128_i32 = arith.constant 128 : i32
    %11 = vector.broadcast %c128_i32 : i32 to vector<128x1024xi32>
    %12 = arith.select %10, %8, %11 : vector<128x1024xi1>, vector<128x1024xi32>
    %cst_6 = arith.constant dense<2147483647> : vector<1024xi32>
    %13 = vector.multi_reduction <minsi>, %12, %cst_6 [0] : vector<128x1024xi32> to vector<1024xi32>
    %14 = vector.shape_cast %13 : vector<1024xi32> to vector<1x1024xi32>
    %c0_7 = arith.constant 0 : index
    %c0_8 = arith.constant 0 : index
    %15 = vector.load %arg4[%c0_7, %c0_8] : memref<1x1024xi32, #tpu.memory_space<vmem>>, vector<1x1024xi32>
    tpu.vector_store %arg4[%c0_7, %c0_8], %14 {strides = array<i32>} : memref<1x1024xi32, #tpu.memory_space<vmem>>, vector<1x1024xi32>,
    %16 = vector.broadcast %7 : vector<1x1024xf32> to vector<128x1024xf32>
    %17 = arith.subf %5, %16 : vector<128x1024xf32>
    %18 = math.exp %17 : vector<128x1024xf32>
    %cst_9 = arith.constant dense<0.000000e+00> : vector<1024xf32>
    %19 = vector.multi_reduction <add>, %18, %cst_9 [0] : vector<128x1024xf32> to vector<1024xf32>
    %20 = vector.shape_cast %19 : vector<1024xf32> to vector<1x1024xf32>
    %21 = tpu.reciprocal %20 {approx = true} : vector<1x1024xf32> -> vector<1x1024xf32>
    %c0_10 = arith.constant 0 : index
    %c0_11 = arith.constant 0 : index
    %22 = vector.load %arg5[%c0_10, %c0_11] : memref<1x1024xf32, #tpu.memory_space<vmem>>, vector<1x1024xf32>
    tpu.vector_store %arg5[%c0_10, %c0_11], %21 {strides = array<i32>} : memref<1x1024xf32, #tpu.memory_space<vmem>>, vector<1x1024xf32>,
    return
  }
  func.func @transform_0(%arg0: i32) -> (i32, i32) {
    %c0_i32 = arith.constant 0 : i32
    %c0_i32_0 = arith.constant 0 : i32
    return %c0_i32, %arg0 : i32, i32
  }
  func.func @transform_1(%arg0: i32) -> (i32, i32) {
    %c0_i32 = arith.constant 0 : i32
    %c0_i32_0 = arith.constant 0 : i32
    %c0_i32_1 = arith.constant 0 : i32
    return %c0_i32, %c0_i32_0 : i32, i32
  }
  func.func @transform_2(%arg0: i32) -> (i32, i32) {
    %c0_i32 = arith.constant 0 : i32
    %c0_i32_0 = arith.constant 0 : i32
    %c0_i32_1 = arith.constant 0 : i32
    return %c0_i32, %c0_i32_0 : i32, i32
  }
  func.func @transform_3(%arg0: i32) -> (i32, i32) {
    %c0_i32 = arith.constant 0 : i32
    %c0_i32_0 = arith.constant 0 : i32
    return %c0_i32, %arg0 : i32, i32
  }
  func.func @transform_4(%arg0: i32) -> (i32, i32) {
    %c0_i32 = arith.constant 0 : i32
    %c0_i32_0 = arith.constant 0 : i32
    return %c0_i32, %arg0 : i32, i32
  }
}

</mosaic_0001>

<llo_original>
// kernel: ocr_predictor_forward.2
$region0: #{ocr_predictor_forward.2}
  #allocation0 [shape = 'u32[]', space=smem, size = 0x4, offset = 0x4, fixed_abs, tag = 'smem constant byte address 0x4 - core index']
  #allocation1 [shape = 'u32[144,128]{1,0:T(1,128)}', space=vmem, size = 0x12000, scoped, tag = 'internal scratch']
  #allocation2 [shape = 'f32[1,1]{1,0:T(1,128)S(6)}', space=smem, size = 0x200, scoped, tag = 'scoped memory for ocr_predictor_forward.2']
  %s0 = inlined_call_operand.vmem [shape: f32[2,4,96,128], index: 0, kind: input, shape index: {}]
  %s1 = inlined_call_operand.hbm [shape: f32[4,32], index: 1, kind: input, shape index: {}]
  %s2 = inlined_call_operand.hbm [shape: f32[1,32], index: 2, kind: input, shape index: {}]
  %s3 = inlined_call_operand.hbm [shape: f32[1,32], index: 3, kind: input, shape index: {}]
  %s4 = inlined_call_operand.<no memory space> [shape: f32[1,1], index: 4, kind: input, shape index: {}]
  %s5 = inlined_call_operand.vmem [shape: f32[2,96,128], index: 5, kind: output, shape index: {0}]
  %s6 = inlined_call_operand.vmem [shape: u8[2,96,128], index: 6, kind: output, shape index: {1}]
  %s7 = inlined_call_operand.vmem [shape: f32[2,1,8,128], index: 7, kind: output, shape index: {2}]
  %8 = xla_tuple %s5, %s6, %s7
  %s9 = sld [smem:[#allocation0]]
  $region81: #{ocr_predictor_forward.2} parent=0
    _
  %s11 = ssub.s32 1, %s9
  %s12 = scalar_select 0, %s11, %s9
  %13 = sst [smem:[#allocation2]] %s4
  $region1: #{ocr_predictor_forward.2} parent=0
    #allocation3 [shape = 'u8[2048]{0}', space=smem, size = 0x800, scoped, tag = 'input window, operand 1, single buffered']
    #allocation4 [shape = 's32[2]{0}', space=sflag, size = 0x8, scoped, tag = 'scoped memory for ocr_predictor_forward.2']
    #allocation5 [shape = 'u8[512]{0}', space=smem, size = 0x200, scoped, tag = 'input window, operand 2, single buffered']
    #allocation6 [shape = 's32[1]{0}', space=sflag, size = 0x4, scoped, tag = 'scoped memory for ocr_predictor_forward.2']
    #allocation7 [shape = 'u8[512]{0}', space=smem, size = 0x200, scoped, tag = 'input window, operand 3, single buffered']
    %14 = vsyncpa [#allocation4], 0
    %15 = vsyncpa [#allocation6], 0
    loop: start=0, step=1, limit=4
    $region2: #{ocr_predictor_forward.2} parent=1 // loop_pre_header
      _
    $region3: #{ocr_predictor_forward.2} parent=1 // loop_header
      %s17 = sphi 0, %s21
      %p18 = scmp.ge.s32.totalorder %s17, 4
      %s24 = sphi 0, %s36
      %s25 = sphi 0, %s32
      %s26 = sphi 0, %s24
      %s27 = sphi 0, %s25
      %s28 = sphi 0, %s26
      %s29 = sphi 0, %s27
      %s41 = sphi 0, %s43
      %s44 = sphi 0, %s41
      %s45 = sphi 0, %s44
      %s61 = sphi 0, %s45
      %s65 = sphi 0, %s65
      %s67 = sphi 0, %s65
      %s68 = sphi 0, %s67
      %s82 = sphi 0, %s68
      %s86 = sphi 0, %s86
      %s88 = sphi 0, %s86
      %s89 = sphi 0, %s88
      %s103 = sphi 0, %s89
      %s107 = sphi 0, %s107
      %s109 = sphi 0, %s107
      %s110 = sphi 0, %s109
      %s124 = sphi 0, %s110
      %s128 = sphi 0, %s128
      %s130 = sphi 0, %s128
      %s131 = sphi 0, %s130
      %s145 = sphi 0, %s131
      %s153 = sphi 0, %s155
      %s156 = sphi 0, %s153
      %s157 = sphi 0, %s156
      %s173 = sphi 0, %s157
      %s181 = sphi 0, %s183
      %s184 = sphi 0, %s181
      %s185 = sphi 0, %s184
      %s201 = sphi 0, %s185
      %s209 = sphi 0, %s211
      %s212 = sphi 0, %s209
      %s213 = sphi 0, %s212
      %s229 = sphi 0, %s213
    $region4: #{ocr_predictor_forward.2} parent=1 // loop_header_branch
      %20 = sbr.rel (%p18) target = $region8
    $region5: #{ocr_predictor_forward.2} parent=1 // loop_body
      %s22 = ssub.s32 %s17, 1
      %s23 = ssub.s32 %s17, 2
      %s30 = sadd.s32 1, %s25
      %p31 = scmp.ge.s32.totalorder %s30, 1
      %s32 = scalar_select %p31, 0, %s30
      %s33 = sadd.s32 1, %s24
      %s34 = scalar_select %p31, %s33, %s24
      %p35 = scmp.ge.s32.totalorder %s34, 2
      %s36 = scalar_select %p35, 0, %s34
      %s37 = ssub.s32 %s24, %s36
      %s38 = ssub.s32 %s25, %s32
      %s39 = sor.u32 %s37, %s38
      %p40 = scmp.eq.s32.totalorder %s39, 0
      %s42 = sadd.s32 %s41, 1
      %s43 = scalar_select %p40, %s41, %s42
      %p46 = pneg %p40
      %p47 = scmp.eq.s32.totalorder %s17, 1
      %p48 = por %p46, %p47
      %p49 = scmp.ne.s32.totalorder %s41, %s44
      %p50 = scmp.eq.s32.totalorder %s17, 0
      %p51 = por %p49, %p50
      %p52 = scmp.ne.s32.totalorder %s41, %s44
      %p53 = scmp.eq.s32.totalorder %s22, 1
      %p54 = por %p52, %p53
      %p55 = scmp.ne.s32.totalorder %s44, %s45
      %p56 = scmp.eq.s32.totalorder %s22, 0
      %p57 = por %p55, %p56
      %p58 = scmp.ne.s32.totalorder %s44, %s45
      %p59 = scmp.eq.s32.totalorder %s23, 1
      %p60 = por %p58, %p59
      %p62 = scmp.ne.s32.totalorder %s45, %s61
      %p63 = scmp.eq.s32.totalorder %s23, 0
      %p64 = por %p62, %p63
      %s66 = sadd.s32 %s65, 1
      %p69 = scmp.eq.s32.totalorder %s17, 1
      %p70 = scmp.ne.s32.totalorder %s65, %s67
      %p71 = scmp.eq.s32.totalorder %s17, 0
      %p72 = por %p70, %p71
      %p73 = scmp.ne.s32.totalorder %s65, %s67
      %p74 = scmp.eq.s32.totalorder %s22, 1
      %p75 = por %p73, %p74
      %p76 = scmp.ne.s32.totalorder %s67, %s68
      %p77 = scmp.eq.s32.totalorder %s22, 0
      %p78 = por %p76, %p77
      %p79 = scmp.ne.s32.totalorder %s67, %s68
      %p80 = scmp.eq.s32.totalorder %s23, 1
      %p81 = por %p79, %p80
      %p83 = scmp.ne.s32.totalorder %s68, %s82
      %p84 = scmp.eq.s32.totalorder %s23, 0
      %p85 = por %p83, %p84
      %s87 = sadd.s32 %s86, 1
      %p90 = scmp.eq.s32.totalorder %s17, 1
      %p91 = scmp.ne.s32.totalorder %s86, %s88
      %p92 = scmp.eq.s32.totalorder %s17, 0
      %p93 = por %p91, %p92
      %p94 = scmp.ne.s32.totalorder %s86, %s88
      %p95 = scmp.eq.s32.totalorder %s22, 1
      %p96 = por %p94, %p95
      %p97 = scmp.ne.s32.totalorder %s88, %s89
      %p98 = scmp.eq.s32.totalorder %s22, 0
      %p99 = por %p97, %p98
      %p100 = scmp.ne.s32.totalorder %s88, %s89
      %p101 = scmp.eq.s32.totalorder %s23, 1
      %p102 = por %p100, %p101
      %p104 = scmp.ne.s32.totalorder %s89, %s103
      %p105 = scmp.eq.s32.totalorder %s23, 0
      %p106 = por %p104, %p105
      %s108 = sadd.s32 %s107, 1
      %p111 = scmp.eq.s32.totalorder %s17, 1
      %p112 = scmp.ne.s32.totalorder %s107, %s109
      %p113 = scmp.eq.s32.totalorder %s17, 0
      %p114 = por %p112, %p113
      %p115 = scmp.ne.s32.totalorder %s107, %s109
      %p116 = scmp.eq.s32.totalorder %s22, 1
      %p117 = por %p115, %p116
      %p118 = scmp.ne.s32.totalorder %s109, %s110
      %p119 = scmp.eq.s32.totalorder %s22, 0
      %p120 = por %p118, %p119
      %p121 = scmp.ne.s32.totalorder %s109, %s110
      %p122 = scmp.eq.s32.totalorder %s23, 1
      %p123 = por %p121, %p122
      %p125 = scmp.ne.s32.totalorder %s110, %s124
      %p126 = scmp.eq.s32.totalorder %s23, 0
      %p127 = por %p125, %p126
      %s129 = sadd.s32 %s128, 1
      %p132 = scmp.eq.s32.totalorder %s17, 1
      %p133 = scmp.ne.s32.totalorder %s128, %s130
      %p134 = scmp.eq.s32.totalorder %s17, 0
      %p135 = por %p133, %p134
      %p136 = scmp.ne.s32.totalorder %s128, %s130
      %p137 = scmp.eq.s32.totalorder %s22, 1
      %p138 = por %p136, %p137
      %p139 = scmp.ne.s32.totalorder %s130, %s131
      %p140 = scmp.eq.s32.totalorder %s22, 0
      %p141 = por %p139, %p140
      %p142 = scmp.ne.s32.totalorder %s130, %s131
      %p143 = scmp.eq.s32.totalorder %s23, 1
      %p144 = por %p142, %p143
      %p146 = scmp.ne.s32.totalorder %s131, %s145
      %p147 = scmp.eq.s32.totalorder %s23, 0
      %p148 = por %p146, %p147
      %s149 = ssub.s32 %s24, %s36
      %s150 = ssub.s32 %s25, %s32
      %s151 = sor.u32 %s149, %s150
      %p152 = scmp.eq.s32.totalorder %s151, 0
      %s154 = sadd.s32 %s153, 1
      %s155 = scalar_select %p152, %s153, %s154
      %p158 = pneg %p152
      %p159 = scmp.eq.s32.totalorder %s17, 1
      %p160 = por %p158, %p159
      %p161 = scmp.ne.s32.totalorder %s153, %s156
      %p162 = scmp.eq.s32.totalorder %s17, 0
      %p163 = por %p161, %p162
      %p164 = scmp.ne.s32.totalorder %s153, %s156
      %p165 = scmp.eq.s32.totalorder %s22, 1
      %p166 = por %p164, %p165
      %p167 = scmp.ne.s32.totalorder %s156, %s157
      %p168 = scmp.eq.s32.totalorder %s22, 0
      %p169 = por %p167, %p168
      %p170 = scmp.ne.s32.totalorder %s156, %s157
      %p171 = scmp.eq.s32.totalorder %s23, 1
      %p172 = por %p170, %p171
      %p174 = scmp.ne.s32.totalorder %s157, %s173
      %p175 = scmp.eq.s32.totalorder %s23, 0
      %p176 = por %p174, %p175
      %s177 = ssub.s32 %s24, %s36
      %s178 = ssub.s32 %s25, %s32
      %s179 = sor.u32 %s177, %s178
      %p180 = scmp.eq.s32.totalorder %s179, 0
      %s182 = sadd.s32 %s181, 1
      %s183 = scalar_select %p180, %s181, %s182
      %p186 = pneg %p180
      %p187 = scmp.eq.s32.totalorder %s17, 1
      %p188 = por %p186, %p187
      %p189 = scmp.ne.s32.totalorder %s181, %s184
      %p190 = scmp.eq.s32.totalorder %s17, 0
      %p191 = por %p189, %p190
      %p192 = scmp.ne.s32.totalorder %s181, %s184
      %p193 = scmp.eq.s32.totalorder %s22, 1
      %p194 = por %p192, %p193
      %p195 = scmp.ne.s32.totalorder %s184, %s185
      %p196 = scmp.eq.s32.totalorder %s22, 0
      %p197 = por %p195, %p196
      %p198 = scmp.ne.s32.totalorder %s184, %s185
      %p199 = scmp.eq.s32.totalorder %s23, 1
      %p200 = por %p198, %p199
      %p202 = scmp.ne.s32.totalorder %s185, %s201
      %p203 = scmp.eq.s32.totalorder %s23, 0
      %p204 = por %p202, %p203
      %s205 = ssub.s32 %s24, %s36
      %s206 = ssub.s32 %s25, %s32
      %s207 = sor.u32 %s205, %s206
      %p208 = scmp.eq.s32.totalorder %s207, 0
      %s210 = sadd.s32 %s209, 1
      %s211 = scalar_select %p208, %s209, %s210
      %p214 = pneg %p208
      %p215 = scmp.eq.s32.totalorder %s17, 1
      %p216 = por %p214, %p215
      %p217 = scmp.ne.s32.totalorder %s209, %s212
      %p218 = scmp.eq.s32.totalorder %s17, 0
      %p219 = por %p217, %p218
      %p220 = scmp.ne.s32.totalorder %s209, %s212
      %p221 = scmp.eq.s32.totalorder %s22, 1
      %p222 = por %p220, %p221
      %p223 = scmp.ne.s32.totalorder %s212, %s213
      %p224 = scmp.eq.s32.totalorder %s22, 0
      %p225 = por %p223, %p224
      %p226 = scmp.ne.s32.totalorder %s212, %s213
      %p227 = scmp.eq.s32.totalorder %s23, 1
      %p228 = por %p226, %p227
      %p230 = scmp.ne.s32.totalorder %s213, %s229
      %p231 = scmp.eq.s32.totalorder %s23, 0
      %p232 = por %p230, %p231
      %p233 = scmp.le.s32.totalorder 1, %s17
      %p234 = scmp.lt.s32.totalorder %s17, 3
      %p235 = pnand %p233, %p234
      %p236 = pneg %p235
      // Predicated region
      $region9: #{ocr_predictor_forward.2} parent=5 // pred_check
        _
      $region10: #{ocr_predictor_forward.2} parent=5 // pred_check_branch
        %238 = sbr.rel (%p235) target = $region12
      $region11: #{ocr_predictor_forward.2} parent=5 // pred_region
        %s239 = ssub.s32 %s17, 1
        // Predicated region
        $region13: #{ocr_predictor_forward.2} parent=11 // pred_check
          %p240 = pneg %p78
        $region14: #{ocr_predictor_forward.2} parent=11 // pred_check_branch
          %242 = sbr.rel (%p240) target = $region16
        $region15: #{ocr_predictor_forward.2} parent=11 // pred_region
          %s244 = ssub.s32 64, 64
          %245 = vsyncadd [#allocation4], %s244
          %248 = dma.hbm_to_smem %s1, 64, [#allocation3], [#allocation4]
        $region16: #{ocr_predictor_forward.2} parent=11 // pred_fallthru
          _
        // Predicated region
        $region17: #{ocr_predictor_forward.2} parent=11 // pred_check
          %p249 = pneg %p99
        $region18: #{ocr_predictor_forward.2} parent=11 // pred_check_branch
          %251 = sbr.rel (%p249) target = $region20
        $region19: #{ocr_predictor_forward.2} parent=11 // pred_region
          %s253 = ssub.s32 16, 16
          %254 = vsyncadd [#allocation6], %s253
          %257 = dma.hbm_to_smem %s2, 16, [#allocation5], [#allocation6]
        $region20: #{ocr_predictor_forward.2} parent=11 // pred_fallthru
          _
        // Predicated region
        $region21: #{ocr_predictor_forward.2} parent=11 // pred_check
          %p258 = pneg %p120
        $region22: #{ocr_predictor_forward.2} parent=11 // pred_check_branch
          %260 = sbr.rel (%p258) target = $region24
        $region23: #{ocr_predictor_forward.2} parent=11 // pred_region
          %s262 = ssub.s32 16, 16
          %263 = vsyncadd [#allocation6], %s262
          %266 = dma.hbm_to_smem %s3, 16, [#allocation7], [#allocation6]
        $region24: #{ocr_predictor_forward.2} parent=11 // pred_fallthru
          _
        // Predicated region
        $region25: #{ocr_predictor_forward.2} parent=11 // pred_check
          %p267 = pneg %p141
        $region26: #{ocr_predictor_forward.2} parent=11 // pred_check_branch
          %269 = sbr.rel (%p267) target = $region28
        $region27: #{ocr_predictor_forward.2} parent=11 // pred_region
          _
        $region28: #{ocr_predictor_forward.2} parent=11 // pred_fallthru
          _
      $region12: #{ocr_predictor_forward.2} parent=5 // pred_fallthru
        _
      %p270 = scmp.lt.s32.totalorder %s17, 2
      // Predicated region
      $region29: #{ocr_predictor_forward.2} parent=5 // pred_check
        %p271 = pneg %p270
      $region30: #{ocr_predictor_forward.2} parent=5 // pred_check_branch
        %273 = sbr.rel (%p271) target = $region32
      $region31: #{ocr_predictor_forward.2} parent=5 // pred_region
        // Predicated region
        $region33: #{ocr_predictor_forward.2} parent=31 // pred_check
          %p274 = pneg %p51
        $region34: #{ocr_predictor_forward.2} parent=31 // pred_check_branch
          %276 = sbr.rel (%p274) target = $region36
        $region35: #{ocr_predictor_forward.2} parent=31 // pred_region
          %s277 = smul.u32 12, %s25
          %p278 = scmp.lt.s32.totalorder %s24, 1
          %s279 = scalar_select %p278, %s24, 1
          %p280 = scmp.lt.s32.totalorder %s277, 11
          %s281 = scalar_select %p280, %s277, 11
          %s282 = smul.addr %s279, 48
          %s283 = sadd.s32 %s281, %s282
          %s284 = smul.addr %s283, 8
          %s285 = scalar_lea.vmem %s0, %s284
          %s286 = smul.u32 12, %s25
        $region36: #{ocr_predictor_forward.2} parent=31 // pred_fallthru
          _
      $region32: #{ocr_predictor_forward.2} parent=5 // pred_fallthru
        _
      %p287 = scmp.le.s32.totalorder 1, %s17
      %p288 = scmp.lt.s32.totalorder %s17, 3
      %p289 = pnand %p287, %p288
      %p290 = pneg %p289
      // Predicated region
      $region37: #{ocr_predictor_forward.2} parent=5 // pred_check
        _
      $region38: #{ocr_predictor_forward.2} parent=5 // pred_check_branch
        %292 = sbr.rel (%p289) target = $region40
      $region39: #{ocr_predictor_forward.2} parent=5 // pred_region
        %s293 = ssub.s32 %s17, 1
        // Predicated region
        $region41: #{ocr_predictor_forward.2} parent=39 // pred_check
          %p294 = pneg %p78
        $region42: #{ocr_predictor_forward.2} parent=39 // pred_check_branch
          %296 = sbr.rel (%p294) target = $region44
        $region43: #{ocr_predictor_forward.2} parent=39 // pred_region
          %297 = dma.done [#allocation4], 64
        $region44: #{ocr_predictor_forward.2} parent=39 // pred_fallthru
          _
        // Predicated region
        $region45: #{ocr_predictor_forward.2} parent=39 // pred_check
          %p298 = pneg %p99
        $region46: #{ocr_predictor_forward.2} parent=39 // pred_check_branch
          %300 = sbr.rel (%p298) target = $region48
        $region47: #{ocr_predictor_forward.2} parent=39 // pred_region
          %301 = dma.done [#allocation6], 16
        $region48: #{ocr_predictor_forward.2} parent=39 // pred_fallthru
          _
        // Predicated region
        $region49: #{ocr_predictor_forward.2} parent=39 // pred_check
          %p302 = pneg %p120
        $region50: #{ocr_predictor_forward.2} parent=39 // pred_check_branch
          %304 = sbr.rel (%p302) target = $region52
        $region51: #{ocr_predictor_forward.2} parent=39 // pred_region
          %305 = dma.done [#allocation6], 16
        $region52: #{ocr_predictor_forward.2} parent=39 // pred_fallthru
          _
        %306 = sfence
        %s307 = smul.u32 12, %s27
        %p308 = scmp.lt.s32.totalorder %s26, 1
        %s309 = scalar_select %p308, %s26, 1
        %p310 = scmp.lt.s32.totalorder %s307, 11
        %s311 = scalar_select %p310, %s307, 11
        %s312 = smul.addr %s309, 48
        %s313 = sadd.s32 %s311, %s312
        %s314 = smul.addr %s313, 8
        %s315 = scalar_lea.vmem %s0, %s314
        %p316 = pneg %p57
        %p317 = pneg %p54
        %p318 = pneg %p78
        %p319 = pneg %p75
        %p320 = pneg %p99
        %p321 = pneg %p96
        %p322 = pneg %p120
        %p323 = pneg %p117
        %p324 = pneg %p141
        %p325 = pneg %p138
        %p326 = pneg %p169
        %p327 = pneg %p166
        %s328 = smul.u32 12, %s27
        %p329 = scmp.lt.s32.totalorder %s26, 1
        %s330 = scalar_select %p329, %s26, 1
        %p331 = scmp.lt.s32.totalorder %s328, 11
        %s332 = scalar_select %p331, %s328, 11
        %s333 = smul.addr %s330, 12
        %s334 = sadd.s32 %s332, %s333
        %s335 = smul.addr %s334, 8
        %s336 = scalar_lea.vmem %s5, %s335
        %p337 = pneg %p197
        %p338 = pneg %p194
        %s339 = smul.u32 12, %s27
        %p340 = scmp.lt.s32.totalorder %s26, 1
        %s341 = scalar_select %p340, %s26, 1
        %p342 = scmp.lt.s32.totalorder %s339, 11
        %s343 = scalar_select %p342, %s339, 11
        %s344 = smul.addr %s341, 12
        %s345 = sadd.s32 %s343, %s344
        %s346 = smul.addr %s345, 2
        %s347 = scalar_lea.vmem %s6, %s346
        %p348 = pneg %p225
        %p349 = pneg %p222
        %p350 = scmp.lt.s32.totalorder %s26, 1
        %s351 = scalar_select %p350, %s26, 1
        %p352 = scmp.lt.s32.totalorder %s27, 0
        %s353 = scalar_select %p352, %s27, 0
        %s354 = sadd.s32 %s353, %s351
        %s355 = smul.addr %s354, 8
        %s356 = scalar_lea.vmem %s7, %s355
        %s357 = smul.u32 12, %s27
        %p358 = scmp.lt.s32.totalorder %s26, 1
        %s359 = scalar_select %p358, %s26, 1
        %p360 = scmp.lt.s32.totalorder %s357, 11
        %s361 = scalar_select %p360, %s357, 11
        %s362 = smul.addr %s359, 48
        %s363 = sadd.s32 %s361, %s362
        %s364 = smul.addr %s363, 8
        %s365 = scalar_lea.vmem %s0, %s364
        %s366 = smul.u32 12, %s27
        %s367 = smul.u32 12, %s27
        %p368 = scmp.lt.s32.totalorder %s26, 1
        %s369 = scalar_select %p368, %s26, 1
        %p370 = scmp.lt.s32.totalorder %s367, 11
        %s371 = scalar_select %p370, %s367, 11
        %s372 = smul.addr %s369, 12
        %s373 = sadd.s32 %s371, %s372
        %s374 = smul.addr %s373, 8
        %s375 = scalar_lea.vmem %s5, %s374
        %s376 = smul.u32 12, %s27
        %s377 = smul.u32 12, %s27
        %p378 = scmp.lt.s32.totalorder %s26, 1
        %s379 = scalar_select %p378, %s26, 1
        %p380 = scmp.lt.s32.totalorder %s377, 11
        %s381 = scalar_select %p380, %s377, 11
        %s382 = smul.addr %s379, 12
        %s383 = sadd.s32 %s381, %s382
        %s384 = smul.addr %s383, 2
        %s385 = scalar_lea.vmem %s6, %s384
        %s386 = smul.u32 12, %s27
        %p387 = scmp.lt.s32.totalorder %s26, 1
        %s388 = scalar_select %p387, %s26, 1
        %p389 = scmp.lt.s32.totalorder %s27, 0
        %s390 = scalar_select %p389, %s27, 0
        %s391 = sadd.s32 %s390, %s388
        %s392 = smul.addr %s391, 8
        %s393 = scalar_lea.vmem %s7, %s392
        %v394 = vld [vmem:[%s365] sm:$0xff]
        %v395 = vld [vmem:[%s365 + $0x8] sm:$0xff]
        %v396 = vld [vmem:[%s365 + $0x10] sm:$0xff]
        %v397 = vld [vmem:[%s365 + $0x18] sm:$0xff]
        %v398 = vld [vmem:[%s365 + $0x20] sm:$0xff]
        %v399 = vld [vmem:[%s365 + $0x28] sm:$0xff]
        %v400 = vld [vmem:[%s365 + $0x30] sm:$0xff]
        %v401 = vld [vmem:[%s365 + $0x38] sm:$0xff]
        %v402 = vld [vmem:[%s365 + $0x40] sm:$0xff]
        %v403 = vld [vmem:[%s365 + $0x48] sm:$0xff]
        %v404 = vld [vmem:[%s365 + $0x50] sm:$0xff]
        %v405 = vld [vmem:[%s365 + $0x58] sm:$0xff]
        %v406 = vld [vmem:[%s365 + $0x60] sm:$0xff]
        %v407 = vld [vmem:[%s365 + $0x68] sm:$0xff]
        %v408 = vld [vmem:[%s365 + $0x70] sm:$0xff]
        %v409 = vld [vmem:[%s365 + $0x78] sm:$0xff]
        %v410 = vld [vmem:[%s365 + $0x80] sm:$0xff]
        %v411 = vld [vmem:[%s365 + $0x88] sm:$0xff]
        %v412 = vld [vmem:[%s365 + $0x90] sm:$0xff]
        %v413 = vld [vmem:[%s365 + $0x98] sm:$0xff]
        %v414 = vld [vmem:[%s365 + $0xa0] sm:$0xff]
        %v415 = vld [vmem:[%s365 + $0xa8] sm:$0xff]
        %v416 = vld [vmem:[%s365 + $0xb0] sm:$0xff]
        %v417 = vld [vmem:[%s365 + $0xb8] sm:$0xff]
        %v418 = vld [vmem:[%s365 + $0xc0] sm:$0xff]
        %v419 = vld [vmem:[%s365 + $0xc8] sm:$0xff]
        %v420 = vld [vmem:[%s365 + $0xd0] sm:$0xff]
        %v421 = vld [vmem:[%s365 + $0xd8] sm:$0xff]
        %v422 = vld [vmem:[%s365 + $0xe0] sm:$0xff]
        %v423 = vld [vmem:[%s365 + $0xe8] sm:$0xff]
        %v424 = vld [vmem:[%s365 + $0xf0] sm:$0xff]
        %v425 = vld [vmem:[%s365 + $0xf8] sm:$0xff]
        %v426 = vld [vmem:[%s365 + $0x100] sm:$0xff]
        %v427 = vld [vmem:[%s365 + $0x108] sm:$0xff]
        %v428 = vld [vmem:[%s365 + $0x110] sm:$0xff]
        %v429 = vld [vmem:[%s365 + $0x118] sm:$0xff]
        %v430 = vld [vmem:[%s365 + $0x120] sm:$0xff]
        %v431 = vld [vmem:[%s365 + $0x128] sm:$0xff]
        %v432 = vld [vmem:[%s365 + $0x130] sm:$0xff]
        %v433 = vld [vmem:[%s365 + $0x138] sm:$0xff]
        %v434 = vld [vmem:[%s365 + $0x140] sm:$0xff]
        %v435 = vld [vmem:[%s365 + $0x148] sm:$0xff]
        %v436 = vld [vmem:[%s365 + $0x150] sm:$0xff]
        %v437 = vld [vmem:[%s365 + $0x158] sm:$0xff]
        %v438 = vld [vmem:[%s365 + $0x160] sm:$0xff]
        %v439 = vld [vmem:[%s365 + $0x168] sm:$0xff]
        %v440 = vld [vmem:[%s365 + $0x170] sm:$0xff]
        %v441 = vld [vmem:[%s365 + $0x178] sm:$0xff]
        %s442 = sld [smem:[#allocation3]]
        %v443 = vstv %s442
        %v444 = vmul.f32 %v394, %v443
        %v445 = vmul.f32 %v395, %v443
        %v446 = vmul.f32 %v396, %v443
        %v447 = vmul.f32 %v397, %v443
        %v448 = vmul.f32 %v398, %v443
        %v449 = vmul.f32 %v399, %v443
        %v450 = vmul.f32 %v400, %v443
        %v451 = vmul.f32 %v401, %v443
        %v452 = vmul.f32 %v402, %v443
        %v453 = vmul.f32 %v403, %v443
        %v454 = vmul.f32 %v404, %v443
        %v455 = vmul.f32 %v405, %v443
        %s456 = sld [smem:[#allocation5]]
        %v457 = vstv %s456
        %v458 = vadd.f32 %v444, %v457
        %v459 = vadd.f32 %v445, %v457
        %v460 = vadd.f32 %v446, %v457
        %v461 = vadd.f32 %v447, %v457
        %v462 = vadd.f32 %v448, %v457
        %v463 = vadd.f32 %v449, %v457
        %v464 = vadd.f32 %v450, %v457
        %v465 = vadd.f32 %v451, %v457
        %v466 = vadd.f32 %v452, %v457
        %v467 = vadd.f32 %v453, %v457
        %v468 = vadd.f32 %v454, %v457
        %v469 = vadd.f32 %v455, %v457
        %s470 = sld [smem:[#allocation3 + $0x80]]
        %v471 = vstv %s470
        %v472 = vmul.f32 %v406, %v471
        %v473 = vmul.f32 %v407, %v471
        %v474 = vmul.f32 %v408, %v471
        %v475 = vmul.f32 %v409, %v471
        %v476 = vmul.f32 %v410, %v471
        %v477 = vmul.f32 %v411, %v471
        %v478 = vmul.f32 %v412, %v471
        %v479 = vmul.f32 %v413, %v471
        %v480 = vmul.f32 %v414, %v471
        %v481 = vmul.f32 %v415, %v471
        %v482 = vmul.f32 %v416, %v471
        %v483 = vmul.f32 %v417, %v471
        %v484 = vadd.f32 %v458, %v472
        %v485 = vadd.f32 %v459, %v473
        %v486 = vadd.f32 %v460, %v474
        %v487 = vadd.f32 %v461, %v475
        %v488 = vadd.f32 %v462, %v476
        %v489 = vadd.f32 %v463, %v477
        %v490 = vadd.f32 %v464, %v478
        %v491 = vadd.f32 %v465, %v479
        %v492 = vadd.f32 %v466, %v480
        %v493 = vadd.f32 %v467, %v481
        %v494 = vadd.f32 %v468, %v482
        %v495 = vadd.f32 %v469, %v483
        %s496 = sld [smem:[#allocation3 + $0x100]]
        %v497 = vstv %s496
        %v498 = vmul.f32 %v418, %v497
        %v499 = vmul.f32 %v419, %v497
        %v500 = vmul.f32 %v420, %v497
        %v501 = vmul.f32 %v421, %v497
        %v502 = vmul.f32 %v422, %v497
        %v503 = vmul.f32 %v423, %v497
        %v504 = vmul.f32 %v424, %v497
        %v505 = vmul.f32 %v425, %v497
        %v506 = vmul.f32 %v426, %v497
        %v507 = vmul.f32 %v427, %v497
        %v508 = vmul.f32 %v428, %v497
        %v509 = vmul.f32 %v429, %v497
        %v510 = vadd.f32 %v484, %v498
        %v511 = vadd.f32 %v485, %v499
        %v512 = vadd.f32 %v486, %v500
        %v513 = vadd.f32 %v487, %v501
        %v514 = vadd.f32 %v488, %v502
        %v515 = vadd.f32 %v489, %v503
        %v516 = vadd.f32 %v490, %v504
        %v517 = vadd.f32 %v491, %v505
        %v518 = vadd.f32 %v492, %v506
        %v519 = vadd.f32 %v493, %v507
        %v520 = vadd.f32 %v494, %v508
        %v521 = vadd.f32 %v495, %v509
        %s522 = sld [smem:[#allocation3 + $0x180]]
        %v523 = vstv %s522
        %v524 = vmul.f32 %v430, %v523
        %v525 = vmul.f32 %v431, %v523
        %v526 = vmul.f32 %v432, %v523
        %v527 = vmul.f32 %v433, %v523
        %v528 = vmul.f32 %v434, %v523
        %v529 = vmul.f32 %v435, %v523
        %v530 = vmul.f32 %v436, %v523
        %v531 = vmul.f32 %v437, %v523
        %v532 = vmul.f32 %v438, %v523
        %v533 = vmul.f32 %v439, %v523
        %v534 = vmul.f32 %v440, %v523
        %v535 = vmul.f32 %v441, %v523
        %v536 = vadd.f32 %v510, %v524
        %v537 = vadd.f32 %v511, %v525
        %v538 = vadd.f32 %v512, %v526
        %v539 = vadd.f32 %v513, %v527
        %v540 = vadd.f32 %v514, %v528
        %v541 = vadd.f32 %v515, %v529
        %v542 = vadd.f32 %v516, %v530
        %v543 = vadd.f32 %v517, %v531
        %v544 = vadd.f32 %v518, %v532
        %v545 = vadd.f32 %v519, %v533
        %v546 = vadd.f32 %v520, %v534
        %v547 = vadd.f32 %v521, %v535
        %v548 = vmax.f32 %v536, 0.0
        %v549 = vmax.f32 %v537, 0.0
        %v550 = vmax.f32 %v538, 0.0
        %v551 = vmax.f32 %v539, 0.0
        %v552 = vmax.f32 %v540, 0.0
        %v553 = vmax.f32 %v541, 0.0
        %v554 = vmax.f32 %v542, 0.0
        %v555 = vmax.f32 %v543, 0.0
        %v556 = vmax.f32 %v544, 0.0
        %v557 = vmax.f32 %v545, 0.0
        %v558 = vmax.f32 %v546, 0.0
        %v559 = vmax.f32 %v547, 0.0
        %s560 = sld [smem:[#allocation7]]
        %v561 = vstv %s560
        %v562 = vmul.f32 %v548, %v561
        %v563 = vmul.f32 %v549, %v561
        %v564 = vmul.f32 %v550, %v561
        %v565 = vmul.f32 %v551, %v561
        %v566 = vmul.f32 %v552, %v561
        %v567 = vmul.f32 %v553, %v561
        %v568 = vmul.f32 %v554, %v561
        %v569 = vmul.f32 %v555, %v561
        %v570 = vmul.f32 %v556, %v561
        %v571 = vmul.f32 %v557, %v561
        %v572 = vmul.f32 %v558, %v561
        %v573 = vmul.f32 %v559, %v561
        %v574 = vadd.f32 %v562, 0.0
        %v575 = vadd.f32 %v563, 0.0
        %v576 = vadd.f32 %v564, 0.0
        %v577 = vadd.f32 %v565, 0.0
        %v578 = vadd.f32 %v566, 0.0
        %v579 = vadd.f32 %v567, 0.0
        %v580 = vadd.f32 %v568, 0.0
        %v581 = vadd.f32 %v569, 0.0
        %v582 = vadd.f32 %v570, 0.0
        %v583 = vadd.f32 %v571, 0.0
        %v584 = vadd.f32 %v572, 0.0
        %v585 = vadd.f32 %v573, 0.0
        %s586 = sld [smem:[#allocation3 + $0x1]]
        %v587 = vstv %s586
        %v588 = vmul.f32 %v394, %v587
        %v589 = vmul.f32 %v395, %v587
        %v590 = vmul.f32 %v396, %v587
        %v591 = vmul.f32 %v397, %v587
        %v592 = vmul.f32 %v398, %v587
        %v593 = vmul.f32 %v399, %v587
        %v594 = vmul.f32 %v400, %v587
        %v595 = vmul.f32 %v401, %v587
        %v596 = vmul.f32 %v402, %v587
        %v597 = vmul.f32 %v403, %v587
        %v598 = vmul.f32 %v404, %v587
        %v599 = vmul.f32 %v405, %v587
        %s600 = sld [smem:[#allocation5 + $0x1]]
        %v601 = vstv %s600
        %v602 = vadd.f32 %v588, %v601
        %v603 = vadd.f32 %v589, %v601
        %v604 = vadd.f32 %v590, %v601
        %v605 = vadd.f32 %v591, %v601
        %v606 = vadd.f32 %v592, %v601
        %v607 = vadd.f32 %v593, %v601
        %v608 = vadd.f32 %v594, %v601
        %v609 = vadd.f32 %v595, %v601
        %v610 = vadd.f32 %v596, %v601
        %v611 = vadd.f32 %v597, %v601
        %v612 = vadd.f32 %v598, %v601
        %v613 = vadd.f32 %v599, %v601
        %s614 = sld [smem:[#allocation3 + $0x81]]
        %v615 = vstv %s614
        %v616 = vmul.f32 %v406, %v615
        %v617 = vmul.f32 %v407, %v615
        %v618 = vmul.f32 %v408, %v615
        %v619 = vmul.f32 %v409, %v615
        %v620 = vmul.f32 %v410, %v615
        %v621 = vmul.f32 %v411, %v615
        %v622 = vmul.f32 %v412, %v615
        %v623 = vmul.f32 %v413, %v615
        %v624 = vmul.f32 %v414, %v615
        %v625 = vmul.f32 %v415, %v615
        %v626 = vmul.f32 %v416, %v615
        %v627 = vmul.f32 %v417, %v615
        %v628 = vadd.f32 %v602, %v616
        %v629 = vadd.f32 %v603, %v617
        %v630 = vadd.f32 %v604, %v618
        %v631 = vadd.f32 %v605, %v619
        %v632 = vadd.f32 %v606, %v620
        %v633 = vadd.f32 %v607, %v621
        %v634 = vadd.f32 %v608, %v622
        %v635 = vadd.f32 %v609, %v623
        %v636 = vadd.f32 %v610, %v624
        %v637 = vadd.f32 %v611, %v625
        %v638 = vadd.f32 %v612, %v626
        %v639 = vadd.f32 %v613, %v627
        %s640 = sld [smem:[#allocation3 + $0x101]]
        %v641 = vstv %s640
        %v642 = vmul.f32 %v418, %v641
        %v643 = vmul.f32 %v419, %v641
        %v644 = vmul.f32 %v420, %v641
        %v645 = vmul.f32 %v421, %v641
        %v646 = vmul.f32 %v422, %v641
        %v647 = vmul.f32 %v423, %v641
        %v648 = vmul.f32 %v424, %v641
        %v649 = vmul.f32 %v425, %v641
        %v650 = vmul.f32 %v426, %v641
        %v651 = vmul.f32 %v427, %v641
        %v652 = vmul.f32 %v428, %v641
        %v653 = vmul.f32 %v429, %v641
        %v654 = vadd.f32 %v628, %v642
        %v655 = vadd.f32 %v629, %v643
        %v656 = vadd.f32 %v630, %v644
        %v657 = vadd.f32 %v631, %v645
        %v658 = vadd.f32 %v632, %v646
        %v659 = vadd.f32 %v633, %v647
        %v660 = vadd.f32 %v634, %v648
        %v661 = vadd.f32 %v635, %v649
        %v662 = vadd.f32 %v636, %v650
        %v663 = vadd.f32 %v637, %v651
        %v664 = vadd.f32 %v638, %v652
        %v665 = vadd.f32 %v639, %v653
        %s666 = sld [smem:[#allocation3 + $0x181]]
        %v667 = vstv %s666
        %v668 = vmul.f32 %v430, %v667
        %v669 = vmul.f32 %v431, %v667
        %v670 = vmul.f32 %v432, %v667
        %v671 = vmul.f32 %v433, %v667
        %v672 = vmul.f32 %v434, %v667
        %v673 = vmul.f32 %v435, %v667
        %v674 = vmul.f32 %v436, %v667
        %v675 = vmul.f32 %v437, %v667
        %v676 = vmul.f32 %v438, %v667
        %v677 = vmul.f32 %v439, %v667
        %v678 = vmul.f32 %v440, %v667
        %v679 = vmul.f32 %v441, %v667
        %v680 = vadd.f32 %v654, %v668
        %v681 = vadd.f32 %v655, %v669
        %v682 = vadd.f32 %v656, %v670
        %v683 = vadd.f32 %v657, %v671
        %v684 = vadd.f32 %v658, %v672
        %v685 = vadd.f32 %v659, %v673
        %v686 = vadd.f32 %v660, %v674
        %v687 = vadd.f32 %v661, %v675
        %v688 = vadd.f32 %v662, %v676
        %v689 = vadd.f32 %v663, %v677
        %v690 = vadd.f32 %v664, %v678
        %v691 = vadd.f32 %v665, %v679
        %v692 = vmax.f32 %v680, 0.0
        %v693 = vmax.f32 %v681, 0.0
        %v694 = vmax.f32 %v682, 0.0
        %v695 = vmax.f32 %v683, 0.0
        %v696 = vmax.f32 %v684, 0.0
        %v697 = vmax.f32 %v685, 0.0
        %v698 = vmax.f32 %v686, 0.0
        %v699 = vmax.f32 %v687, 0.0
        %v700 = vmax.f32 %v688, 0.0
        %v701 = vmax.f32 %v689, 0.0
        %v702 = vmax.f32 %v690, 0.0
        %v703 = vmax.f32 %v691, 0.0
        %s704 = sld [smem:[#allocation7 + $0x1]]
        %v705 = vstv %s704
        %v706 = vmul.f32 %v692, %v705
        %v707 = vmul.f32 %v693, %v705
        %v708 = vmul.f32 %v694, %v705
        %v709 = vmul.f32 %v695, %v705
        %v710 = vmul.f32 %v696, %v705
        %v711 = vmul.f32 %v697, %v705
        %v712 = vmul.f32 %v698, %v705
        %v713 = vmul.f32 %v699, %v705
        %v714 = vmul.f32 %v700, %v705
        %v715 = vmul.f32 %v701, %v705
        %v716 = vmul.f32 %v702, %v705
        %v717 = vmul.f32 %v703, %v705
        %v718 = vadd.f32 %v574, %v706
        %v719 = vadd.f32 %v575, %v707
        %v720 = vadd.f32 %v576, %v708
        %v721 = vadd.f32 %v577, %v709
        %v722 = vadd.f32 %v578, %v710
        %v723 = vadd.f32 %v579, %v711
        %v724 = vadd.f32 %v580, %v712
        %v725 = vadd.f32 %v581, %v713
        %v726 = vadd.f32 %v582, %v714
        %v727 = vadd.f32 %v583, %v715
        %v728 = vadd.f32 %v584, %v716
        %v729 = vadd.f32 %v585, %v717
        %s730 = sld [smem:[#allocation3 + $0x2]]
        %v731 = vstv %s730
        %v732 = vmul.f32 %v394, %v731
        %v733 = vmul.f32 %v395, %v731
        %v734 = vmul.f32 %v396, %v731
        %v735 = vmul.f32 %v397, %v731
        %v736 = vmul.f32 %v398, %v731
        %v737 = vmul.f32 %v399, %v731
        %v738 = vmul.f32 %v400, %v731
        %v739 = vmul.f32 %v401, %v731
        %v740 = vmul.f32 %v402, %v731
        %v741 = vmul.f32 %v403, %v731
        %v742 = vmul.f32 %v404, %v731
        %v743 = vmul.f32 %v405, %v731
        %s744 = sld [smem:[#allocation5 + $0x2]]
        %v745 = vstv %s744
        %v746 = vadd.f32 %v732, %v745
        %v747 = vadd.f32 %v733, %v745
        %v748 = vadd.f32 %v734, %v745
        %v749 = vadd.f32 %v735, %v745
        %v750 = vadd.f32 %v736, %v745
        %v751 = vadd.f32 %v737, %v745
        %v752 = vadd.f32 %v738, %v745
        %v753 = vadd.f32 %v739, %v745
        %v754 = vadd.f32 %v740, %v745
        %v755 = vadd.f32 %v741, %v745
        %v756 = vadd.f32 %v742, %v745
        %v757 = vadd.f32 %v743, %v745
        %s758 = sld [smem:[#allocation3 + $0x82]]
        %v759 = vstv %s758
        %v760 = vmul.f32 %v406, %v759
        %v761 = vmul.f32 %v407, %v759
        %v762 = vmul.f32 %v408, %v759
        %v763 = vmul.f32 %v409, %v759
        %v764 = vmul.f32 %v410, %v759
        %v765 = vmul.f32 %v411, %v759
        %v766 = vmul.f32 %v412, %v759
        %v767 = vmul.f32 %v413, %v759
        %v768 = vmul.f32 %v414, %v759
        %v769 = vmul.f32 %v415, %v759
        %v770 = vmul.f32 %v416, %v759
        %v771 = vmul.f32 %v417, %v759
        %v772 = vadd.f32 %v746, %v760
        %v773 = vadd.f32 %v747, %v761
        %v774 = vadd.f32 %v748, %v762
        %v775 = vadd.f32 %v749, %v763
        %v776 = vadd.f32 %v750, %v764
        %v777 = vadd.f32 %v751, %v765
        %v778 = vadd.f32 %v752, %v766
        %v779 = vadd.f32 %v753, %v767
        %v780 = vadd.f32 %v754, %v768
        %v781 = vadd.f32 %v755, %v769
        %v782 = vadd.f32 %v756, %v770
        %v783 = vadd.f32 %v757, %v771
        %s784 = sld [smem:[#allocation3 + $0x102]]
        %v785 = vstv %s784
        %v786 = vmul.f32 %v418, %v785
        %v787 = vmul.f32 %v419, %v785
        %v788 = vmul.f32 %v420, %v785
        %v789 = vmul.f32 %v421, %v785
        %v790 = vmul.f32 %v422, %v785
        %v791 = vmul.f32 %v423, %v785
        %v792 = vmul.f32 %v424, %v785
        %v793 = vmul.f32 %v425, %v785
        %v794 = vmul.f32 %v426, %v785
        %v795 = vmul.f32 %v427, %v785
        %v796 = vmul.f32 %v428, %v785
        %v797 = vmul.f32 %v429, %v785
        %v798 = vadd.f32 %v772, %v786
        %v799 = vadd.f32 %v773, %v787
        %v800 = vadd.f32 %v774, %v788
        %v801 = vadd.f32 %v775, %v789
        %v802 = vadd.f32 %v776, %v790
        %v803 = vadd.f32 %v777, %v791
        %v804 = vadd.f32 %v778, %v792
        %v805 = vadd.f32 %v779, %v793
        %v806 = vadd.f32 %v780, %v794
        %v807 = vadd.f32 %v781, %v795
        %v808 = vadd.f32 %v782, %v796
        %v809 = vadd.f32 %v783, %v797
        %s810 = sld [smem:[#allocation3 + $0x182]]
        %v811 = vstv %s810
        %v812 = vmul.f32 %v430, %v811
        %v813 = vmul.f32 %v431, %v811
        %v814 = vmul.f32 %v432, %v811
        %v815 = vmul.f32 %v433, %v811
        %v816 = vmul.f32 %v434, %v811
        %v817 = vmul.f32 %v435, %v811
        %v818 = vmul.f32 %v436, %v811
        %v819 = vmul.f32 %v437, %v811
        %v820 = vmul.f32 %v438, %v811
        %v821 = vmul.f32 %v439, %v811
        %v822 = vmul.f32 %v440, %v811
        %v823 = vmul.f32 %v441, %v811
        %v824 = vadd.f32 %v798, %v812
        %v825 = vadd.f32 %v799, %v813
        %v826 = vadd.f32 %v800, %v814
        %v827 = vadd.f32 %v801, %v815
        %v828 = vadd.f32 %v802, %v816
        %v829 = vadd.f32 %v803, %v817
        %v830 = vadd.f32 %v804, %v818
        %v831 = vadd.f32 %v805, %v819
        %v832 = vadd.f32 %v806, %v820
        %v833 = vadd.f32 %v807, %v821
        %v834 = vadd.f32 %v808, %v822
        %v835 = vadd.f32 %v809, %v823
        %v836 = vmax.f32 %v824, 0.0
        %v837 = vmax.f32 %v825, 0.0
        %v838 = vmax.f32 %v826, 0.0
        %v839 = vmax.f32 %v827, 0.0
        %v840 = vmax.f32 %v828, 0.0
        %v841 = vmax.f32 %v829, 0.0
        %v842 = vmax.f32 %v830, 0.0
        %v843 = vmax.f32 %v831, 0.0
        %v844 = vmax.f32 %v832, 0.0
        %v845 = vmax.f32 %v833, 0.0
        %v846 = vmax.f32 %v834, 0.0
        %v847 = vmax.f32 %v835, 0.0
        %s848 = sld [smem:[#allocation7 + $0x2]]
        %v849 = vstv %s848
        %v850 = vmul.f32 %v836, %v849
        %v851 = vmul.f32 %v837, %v849
        %v852 = vmul.f32 %v838, %v849
        %v853 = vmul.f32 %v839, %v849
        %v854 = vmul.f32 %v840, %v849
        %v855 = vmul.f32 %v841, %v849
        %v856 = vmul.f32 %v842, %v849
        %v857 = vmul.f32 %v843, %v849
        %v858 = vmul.f32 %v844, %v849
        %v859 = vmul.f32 %v845, %v849
        %v860 = vmul.f32 %v846, %v849
        %v861 = vmul.f32 %v847, %v849
        %v862 = vadd.f32 %v718, %v850
        %v863 = vadd.f32 %v719, %v851
        %v864 = vadd.f32 %v720, %v852
        %v865 = vadd.f32 %v721, %v853
        %v866 = vadd.f32 %v722, %v854
        %v867 = vadd.f32 %v723, %v855
        %v868 = vadd.f32 %v724, %v856
        %v869 = vadd.f32 %v725, %v857
        %v870 = vadd.f32 %v726, %v858
        %v871 = vadd.f32 %v727, %v859
        %v872 = vadd.f32 %v728, %v860
        %v873 = vadd.f32 %v729, %v861
        %s874 = sld [smem:[#allocation3 + $0x3]]
        %v875 = vstv %s874
        %v876 = vmul.f32 %v394, %v875
        %v877 = vmul.f32 %v395, %v875
        %v878 = vmul.f32 %v396, %v875
        %v879 = vmul.f32 %v397, %v875
        %v880 = vmul.f32 %v398, %v875
        %v881 = vmul.f32 %v399, %v875
        %v882 = vmul.f32 %v400, %v875
        %v883 = vmul.f32 %v401, %v875
        %v884 = vmul.f32 %v402, %v875
        %v885 = vmul.f32 %v403, %v875
        %v886 = vmul.f32 %v404, %v875
        %v887 = vmul.f32 %v405, %v875
        %s888 = sld [smem:[#allocation5 + $0x3]]
        %v889 = vstv %s888
        %v890 = vadd.f32 %v876, %v889
        %v891 = vadd.f32 %v877, %v889
        %v892 = vadd.f32 %v878, %v889
        %v893 = vadd.f32 %v879, %v889
        %v894 = vadd.f32 %v880, %v889
        %v895 = vadd.f32 %v881, %v889
        %v896 = vadd.f32 %v882, %v889
        %v897 = vadd.f32 %v883, %v889
        %v898 = vadd.f32 %v884, %v889
        %v899 = vadd.f32 %v885, %v889
        %v900 = vadd.f32 %v886, %v889
        %v901 = vadd.f32 %v887, %v889
        %s902 = sld [smem:[#allocation3 + $0x83]]
        %v903 = vstv %s902
        %v904 = vmul.f32 %v406, %v903
        %v905 = vmul.f32 %v407, %v903
        %v906 = vmul.f32 %v408, %v903
        %v907 = vmul.f32 %v409, %v903
        %v908 = vmul.f32 %v410, %v903
        %v909 = vmul.f32 %v411, %v903
        %v910 = vmul.f32 %v412, %v903
        %v911 = vmul.f32 %v413, %v903
        %v912 = vmul.f32 %v414, %v903
        %v913 = vmul.f32 %v415, %v903
        %v914 = vmul.f32 %v416, %v903
        %v915 = vmul.f32 %v417, %v903
        %v916 = vadd.f32 %v890, %v904
        %v917 = vadd.f32 %v891, %v905
        %v918 = vadd.f32 %v892, %v906
        %v919 = vadd.f32 %v893, %v907
        %v920 = vadd.f32 %v894, %v908
        %v921 = vadd.f32 %v895, %v909
        %v922 = vadd.f32 %v896, %v910
        %v923 = vadd.f32 %v897, %v911
        %v924 = vadd.f32 %v898, %v912
        %v925 = vadd.f32 %v899, %v913
        %v926 = vadd.f32 %v900, %v914
        %v927 = vadd.f32 %v901, %v915
        %s928 = sld [smem:[#allocation3 + $0x103]]
        %v929 = vstv %s928
        %v930 = vmul.f32 %v418, %v929
        %v931 = vmul.f32 %v419, %v929
        %v932 = vmul.f32 %v420, %v929
        %v933 = vmul.f32 %v421, %v929
        %v934 = vmul.f32 %v422, %v929
        %v935 = vmul.f32 %v423, %v929
        %v936 = vmul.f32 %v424, %v929
        %v937 = vmul.f32 %v425, %v929
        %v938 = vmul.f32 %v426, %v929
        %v939 = vmul.f32 %v427, %v929
        %v940 = vmul.f32 %v428, %v929
        %v941 = vmul.f32 %v429, %v929
        %v942 = vadd.f32 %v916, %v930
        %v943 = vadd.f32 %v917, %v931
        %v944 = vadd.f32 %v918, %v932
        %v945 = vadd.f32 %v919, %v933
        %v946 = vadd.f32 %v920, %v934
        %v947 = vadd.f32 %v921, %v935
        %v948 = vadd.f32 %v922, %v936
        %v949 = vadd.f32 %v923, %v937
        %v950 = vadd.f32 %v924, %v938
        %v951 = vadd.f32 %v925, %v939
        %v952 = vadd.f32 %v926, %v940
        %v953 = vadd.f32 %v927, %v941
        %s954 = sld [smem:[#allocation3 + $0x183]]
        %v955 = vstv %s954
        %v956 = vmul.f32 %v430, %v955
        %v957 = vmul.f32 %v431, %v955
        %v958 = vmul.f32 %v432, %v955
        %v959 = vmul.f32 %v433, %v955
        %v960 = vmul.f32 %v434, %v955
        %v961 = vmul.f32 %v435, %v955
        %v962 = vmul.f32 %v436, %v955
        %v963 = vmul.f32 %v437, %v955
        %v964 = vmul.f32 %v438, %v955
        %v965 = vmul.f32 %v439, %v955
        %v966 = vmul.f32 %v440, %v955
        %v967 = vmul.f32 %v441, %v955
        %v968 = vadd.f32 %v942, %v956
        %v969 = vadd.f32 %v943, %v957
        %v970 = vadd.f32 %v944, %v958
        %v971 = vadd.f32 %v945, %v959
        %v972 = vadd.f32 %v946, %v960
        %v973 = vadd.f32 %v947, %v961
        %v974 = vadd.f32 %v948, %v962
        %v975 = vadd.f32 %v949, %v963
        %v976 = vadd.f32 %v950, %v964
        %v977 = vadd.f32 %v951, %v965
        %v978 = vadd.f32 %v952, %v966
        %v979 = vadd.f32 %v953, %v967
        %v980 = vmax.f32 %v968, 0.0
        %v981 = vmax.f32 %v969, 0.0
        %v982 = vmax.f32 %v970, 0.0
        %v983 = vmax.f32 %v971, 0.0
        %v984 = vmax.f32 %v972, 0.0
        %v985 = vmax.f32 %v973, 0.0
        %v986 = vmax.f32 %v974, 0.0
        %v987 = vmax.f32 %v975, 0.0
        %v988 = vmax.f32 %v976, 0.0
        %v989 = vmax.f32 %v977, 0.0
        %v990 = vmax.f32 %v978, 0.0
        %v991 = vmax.f32 %v979, 0.0
        %s992 = sld [smem:[#allocation7 + $0x3]]
        %v993 = vstv %s992
        %v994 = vmul.f32 %v980, %v993
        %v995 = vmul.f32 %v981, %v993
        %v996 = vmul.f32 %v982, %v993
        %v997 = vmul.f32 %v983, %v993
        %v998 = vmul.f32 %v984, %v993
        %v999 = vmul.f32 %v985, %v993
        %v1000 = vmul.f32 %v986, %v993
        %v1001 = vmul.f32 %v987, %v993
        %v1002 = vmul.f32 %v988, %v993
        %v1003 = vmul.f32 %v989, %v993
        %v1004 = vmul.f32 %v990, %v993
        %v1005 = vmul.f32 %v991, %v993
        %v1006 = vadd.f32 %v862, %v994
        %v1007 = vadd.f32 %v863, %v995
        %v1008 = vadd.f32 %v864, %v996
        %v1009 = vadd.f32 %v865, %v997
        %v1010 = vadd.f32 %v866, %v998
        %v1011 = vadd.f32 %v867, %v999
        %v1012 = vadd.f32 %v868, %v1000
        %v1013 = vadd.f32 %v869, %v1001
        %v1014 = vadd.f32 %v870, %v1002
        %v1015 = vadd.f32 %v871, %v1003
        %v1016 = vadd.f32 %v872, %v1004
        %v1017 = vadd.f32 %v873, %v1005
        %s1018 = sld [smem:[#allocation3 + $0x4]]
        %v1019 = vstv %s1018
        %v1020 = vmul.f32 %v394, %v1019
        %v1021 = vmul.f32 %v395, %v1019
        %v1022 = vmul.f32 %v396, %v1019
        %v1023 = vmul.f32 %v397, %v1019
        %v1024 = vmul.f32 %v398, %v1019
        %v1025 = vmul.f32 %v399, %v1019
        %v1026 = vmul.f32 %v400, %v1019
        %v1027 = vmul.f32 %v401, %v1019
        %v1028 = vmul.f32 %v402, %v1019
        %v1029 = vmul.f32 %v403, %v1019
        %v1030 = vmul.f32 %v404, %v1019
        %v1031 = vmul.f32 %v405, %v1019
        %s1032 = sld [smem:[#allocation5 + $0x4]]
        %v1033 = vstv %s1032
        %v1034 = vadd.f32 %v1020, %v1033
        %v1035 = vadd.f32 %v1021, %v1033
        %v1036 = vadd.f32 %v1022, %v1033
        %v1037 = vadd.f32 %v1023, %v1033
        %v1038 = vadd.f32 %v1024, %v1033
        %v1039 = vadd.f32 %v1025, %v1033
        %v1040 = vadd.f32 %v1026, %v1033
        %v1041 = vadd.f32 %v1027, %v1033
        %v1042 = vadd.f32 %v1028, %v1033
        %v1043 = vadd.f32 %v1029, %v1033
        %v1044 = vadd.f32 %v1030, %v1033
        %v1045 = vadd.f32 %v1031, %v1033
        %s1046 = sld [smem:[#allocation3 + $0x84]]
        %v1047 = vstv %s1046
        %v1048 = vmul.f32 %v406, %v1047
        %v1049 = vmul.f32 %v407, %v1047
        %v1050 = vmul.f32 %v408, %v1047
        %v1051 = vmul.f32 %v409, %v1047
        %v1052 = vmul.f32 %v410, %v1047
        %v1053 = vmul.f32 %v411, %v1047
        %v1054 = vmul.f32 %v412, %v1047
        %v1055 = vmul.f32 %v413, %v1047
        %v1056 = vmul.f32 %v414, %v1047
        %v1057 = vmul.f32 %v415, %v1047
        %v1058 = vmul.f32 %v416, %v1047
        %v1059 = vmul.f32 %v417, %v1047
        %v1060 = vadd.f32 %v1034, %v1048
        %v1061 = vadd.f32 %v1035, %v1049
        %v1062 = vadd.f32 %v1036, %v1050
        %v1063 = vadd.f32 %v1037, %v1051
        %v1064 = vadd.f32 %v1038, %v1052
        %v1065 = vadd.f32 %v1039, %v1053
        %v1066 = vadd.f32 %v1040, %v1054
        %v1067 = vadd.f32 %v1041, %v1055
        %v1068 = vadd.f32 %v1042, %v1056
        %v1069 = vadd.f32 %v1043, %v1057
        %v1070 = vadd.f32 %v1044, %v1058
        %v1071 = vadd.f32 %v1045, %v1059
        %s1072 = sld [smem:[#allocation3 + $0x104]]
        %v1073 = vstv %s1072
        %v1074 = vmul.f32 %v418, %v1073
        %v1075 = vmul.f32 %v419, %v1073
        %v1076 = vmul.f32 %v420, %v1073
        %v1077 = vmul.f32 %v421, %v1073
        %v1078 = vmul.f32 %v422, %v1073
        %v1079 = vmul.f32 %v423, %v1073
        %v1080 = vmul.f32 %v424, %v1073
        %v1081 = vmul.f32 %v425, %v1073
        %v1082 = vmul.f32 %v426, %v1073
        %v1083 = vmul.f32 %v427, %v1073
        %v1084 = vmul.f32 %v428, %v1073
        %v1085 = vmul.f32 %v429, %v1073
        %v1086 = vadd.f32 %v1060, %v1074
        %v1087 = vadd.f32 %v1061, %v1075
        %v1088 = vadd.f32 %v1062, %v1076
        %v1089 = vadd.f32 %v1063, %v1077
        %v1090 = vadd.f32 %v1064, %v1078
        %v1091 = vadd.f32 %v1065, %v1079
        %v1092 = vadd.f32 %v1066, %v1080
        %v1093 = vadd.f32 %v1067, %v1081
        %v1094 = vadd.f32 %v1068, %v1082
        %v1095 = vadd.f32 %v1069, %v1083
        %v1096 = vadd.f32 %v1070, %v1084
        %v1097 = vadd.f32 %v1071, %v1085
        %s1098 = sld [smem:[#allocation3 + $0x184]]
        %v1099 = vstv %s1098
        %v1100 = vmul.f32 %v430, %v1099
        %v1101 = vmul.f32 %v431, %v1099
        %v1102 = vmul.f32 %v432, %v1099
        %v1103 = vmul.f32 %v433, %v1099
        %v1104 = vmul.f32 %v434, %v1099
        %v1105 = vmul.f32 %v435, %v1099
        %v1106 = vmul.f32 %v436, %v1099
        %v1107 = vmul.f32 %v437, %v1099
        %v1108 = vmul.f32 %v438, %v1099
        %v1109 = vmul.f32 %v439, %v1099
        %v1110 = vmul.f32 %v440, %v1099
        %v1111 = vmul.f32 %v441, %v1099
        %v1112 = vadd.f32 %v1086, %v1100
        %v1113 = vadd.f32 %v1087, %v1101
        %v1114 = vadd.f32 %v1088, %v1102
        %v1115 = vadd.f32 %v1089, %v1103
        %v1116 = vadd.f32 %v1090, %v1104
        %v1117 = vadd.f32 %v1091, %v1105
        %v1118 = vadd.f32 %v1092, %v1106
        %v1119 = vadd.f32 %v1093, %v1107
        %v1120 = vadd.f32 %v1094, %v1108
        %v1121 = vadd.f32 %v1095, %v1109
        %v1122 = vadd.f32 %v1096, %v1110
        %v1123 = vadd.f32 %v1097, %v1111
        %v1124 = vmax.f32 %v1112, 0.0
        %v1125 = vmax.f32 %v1113, 0.0
        %v1126 = vmax.f32 %v1114, 0.0
        %v1127 = vmax.f32 %v1115, 0.0
        %v1128 = vmax.f32 %v1116, 0.0
        %v1129 = vmax.f32 %v1117, 0.0
        %v1130 = vmax.f32 %v1118, 0.0
        %v1131 = vmax.f32 %v1119, 0.0
        %v1132 = vmax.f32 %v1120, 0.0
        %v1133 = vmax.f32 %v1121, 0.0
        %v1134 = vmax.f32 %v1122, 0.0
        %v1135 = vmax.f32 %v1123, 0.0
        %s1136 = sld [smem:[#allocation7 + $0x4]]
        %v1137 = vstv %s1136
        %v1138 = vmul.f32 %v1124, %v1137
        %v1139 = vmul.f32 %v1125, %v1137
        %v1140 = vmul.f32 %v1126, %v1137
        %v1141 = vmul.f32 %v1127, %v1137
        %v1142 = vmul.f32 %v1128, %v1137
        %v1143 = vmul.f32 %v1129, %v1137
        %v1144 = vmul.f32 %v1130, %v1137
        %v1145 = vmul.f32 %v1131, %v1137
        %v1146 = vmul.f32 %v1132, %v1137
        %v1147 = vmul.f32 %v1133, %v1137
        %v1148 = vmul.f32 %v1134, %v1137
        %v1149 = vmul.f32 %v1135, %v1137
        %v1150 = vadd.f32 %v1006, %v1138
        %v1151 = vadd.f32 %v1007, %v1139
        %v1152 = vadd.f32 %v1008, %v1140
        %v1153 = vadd.f32 %v1009, %v1141
        %v1154 = vadd.f32 %v1010, %v1142
        %v1155 = vadd.f32 %v1011, %v1143
        %v1156 = vadd.f32 %v1012, %v1144
        %v1157 = vadd.f32 %v1013, %v1145
        %v1158 = vadd.f32 %v1014, %v1146
        %v1159 = vadd.f32 %v1015, %v1147
        %v1160 = vadd.f32 %v1016, %v1148
        %v1161 = vadd.f32 %v1017, %v1149
        %s1162 = sld [smem:[#allocation3 + $0x5]]
        %v1163 = vstv %s1162
        %v1164 = vmul.f32 %v394, %v1163
        %v1165 = vmul.f32 %v395, %v1163
        %v1166 = vmul.f32 %v396, %v1163
        %v1167 = vmul.f32 %v397, %v1163
        %v1168 = vmul.f32 %v398, %v1163
        %v1169 = vmul.f32 %v399, %v1163
        %v1170 = vmul.f32 %v400, %v1163
        %v1171 = vmul.f32 %v401, %v1163
        %v1172 = vmul.f32 %v402, %v1163
        %v1173 = vmul.f32 %v403, %v1163
        %v1174 = vmul.f32 %v404, %v1163
        %v1175 = vmul.f32 %v405, %v1163
        %s1176 = sld [smem:[#allocation5 + $0x5]]
        %v1177 = vstv %s1176
        %v1178 = vadd.f32 %v1164, %v1177
        %v1179 = vadd.f32 %v1165, %v1177
        %v1180 = vadd.f32 %v1166, %v1177
        %v1181 = vadd.f32 %v1167, %v1177
        %v1182 = vadd.f32 %v1168, %v1177
        %v1183 = vadd.f32 %v1169, %v1177
        %v1184 = vadd.f32 %v1170, %v1177
        %v1185 = vadd.f32 %v1171, %v1177
        %v1186 = vadd.f32 %v1172, %v1177
        %v1187 = vadd.f32 %v1173, %v1177
        %v1188 = vadd.f32 %v1174, %v1177
        %v1189 = vadd.f32 %v1175, %v1177
        %s1190 = sld [smem:[#allocation3 + $0x85]]
        %v1191 = vstv %s1190
        %v1192 = vmul.f32 %v406, %v1191
        %v1193 = vmul.f32 %v407, %v1191
        %v1194 = vmul.f32 %v408, %v1191
        %v1195 = vmul.f32 %v409, %v1191
        %v1196 = vmul.f32 %v410, %v1191
        %v1197 = vmul.f32 %v411, %v1191
        %v1198 = vmul.f32 %v412, %v1191
        %v1199 = vmul.f32 %v413, %v1191
        %v1200 = vmul.f32 %v414, %v1191
        %v1201 = vmul.f32 %v415, %v1191
        %v1202 = vmul.f32 %v416, %v1191
        %v1203 = vmul.f32 %v417, %v1191
        %v1204 = vadd.f32 %v1178, %v1192
        %v1205 = vadd.f32 %v1179, %v1193
        %v1206 = vadd.f32 %v1180, %v1194
        %v1207 = vadd.f32 %v1181, %v1195
        %v1208 = vadd.f32 %v1182, %v1196
        %v1209 = vadd.f32 %v1183, %v1197
        %v1210 = vadd.f32 %v1184, %v1198
        %v1211 = vadd.f32 %v1185, %v1199
        %v1212 = vadd.f32 %v1186, %v1200
        %v1213 = vadd.f32 %v1187, %v1201
        %v1214 = vadd.f32 %v1188, %v1202
        %v1215 = vadd.f32 %v1189, %v1203
        %s1216 = sld [smem:[#allocation3 + $0x105]]
        %v1217 = vstv %s1216
        %v1218 = vmul.f32 %v418, %v1217
        %v1219 = vmul.f32 %v419, %v1217
        %v1220 = vmul.f32 %v420, %v1217
        %v1221 = vmul.f32 %v421, %v1217
        %v1222 = vmul.f32 %v422, %v1217
        %v1223 = vmul.f32 %v423, %v1217
        %v1224 = vmul.f32 %v424, %v1217
        %v1225 = vmul.f32 %v425, %v1217
        %v1226 = vmul.f32 %v426, %v1217
        %v1227 = vmul.f32 %v427, %v1217
        %v1228 = vmul.f32 %v428, %v1217
        %v1229 = vmul.f32 %v429, %v1217
        %v1230 = vadd.f32 %v1204, %v1218
        %v1231 = vadd.f32 %v1205, %v1219
        %v1232 = vadd.f32 %v1206, %v1220
        %v1233 = vadd.f32 %v1207, %v1221
        %v1234 = vadd.f32 %v1208, %v1222
        %v1235 = vadd.f32 %v1209, %v1223
        %v1236 = vadd.f32 %v1210, %v1224
        %v1237 = vadd.f32 %v1211, %v1225
        %v1238 = vadd.f32 %v1212, %v1226
        %v1239 = vadd.f32 %v1213, %v1227
        %v1240 = vadd.f32 %v1214, %v1228
        %v1241 = vadd.f32 %v1215, %v1229
        %s1242 = sld [smem:[#allocation3 + $0x185]]
        %v1243 = vstv %s1242
        %v1244 = vmul.f32 %v430, %v1243
        %v1245 = vmul.f32 %v431, %v1243
        %v1246 = vmul.f32 %v432, %v1243
        %v1247 = vmul.f32 %v433, %v1243
        %v1248 = vmul.f32 %v434, %v1243
        %v1249 = vmul.f32 %v435, %v1243
        %v1250 = vmul.f32 %v436, %v1243
        %v1251 = vmul.f32 %v437, %v1243
        %v1252 = vmul.f32 %v438, %v1243
        %v1253 = vmul.f32 %v439, %v1243
        %v1254 = vmul.f32 %v440, %v1243
        %v1255 = vmul.f32 %v441, %v1243
        %v1256 = vadd.f32 %v1230, %v1244
        %v1257 = vadd.f32 %v1231, %v1245
        %v1258 = vadd.f32 %v1232, %v1246
        %v1259 = vadd.f32 %v1233, %v1247
        %v1260 = vadd.f32 %v1234, %v1248
        %v1261 = vadd.f32 %v1235, %v1249
        %v1262 = vadd.f32 %v1236, %v1250
        %v1263 = vadd.f32 %v1237, %v1251
        %v1264 = vadd.f32 %v1238, %v1252
        %v1265 = vadd.f32 %v1239, %v1253
        %v1266 = vadd.f32 %v1240, %v1254
        %v1267 = vadd.f32 %v1241, %v1255
        %v1268 = vmax.f32 %v1256, 0.0
        %v1269 = vmax.f32 %v1257, 0.0
        %v1270 = vmax.f32 %v1258, 0.0
        %v1271 = vmax.f32 %v1259, 0.0
        %v1272 = vmax.f32 %v1260, 0.0
        %v1273 = vmax.f32 %v1261, 0.0
        %v1274 = vmax.f32 %v1262, 0.0
        %v1275 = vmax.f32 %v1263, 0.0
        %v1276 = vmax.f32 %v1264, 0.0
        %v1277 = vmax.f32 %v1265, 0.0
        %v1278 = vmax.f32 %v1266, 0.0
        %v1279 = vmax.f32 %v1267, 0.0
        %s1280 = sld [smem:[#allocation7 + $0x5]]
        %v1281 = vstv %s1280
        %v1282 = vmul.f32 %v1268, %v1281
        %v1283 = vmul.f32 %v1269, %v1281
        %v1284 = vmul.f32 %v1270, %v1281
        %v1285 = vmul.f32 %v1271, %v1281
        %v1286 = vmul.f32 %v1272, %v1281
        %v1287 = vmul.f32 %v1273, %v1281
        %v1288 = vmul.f32 %v1274, %v1281
        %v1289 = vmul.f32 %v1275, %v1281
        %v1290 = vmul.f32 %v1276, %v1281
        %v1291 = vmul.f32 %v1277, %v1281
        %v1292 = vmul.f32 %v1278, %v1281
        %v1293 = vmul.f32 %v1279, %v1281
        %v1294 = vadd.f32 %v1150, %v1282
        %v1295 = vadd.f32 %v1151, %v1283
        %v1296 = vadd.f32 %v1152, %v1284
        %v1297 = vadd.f32 %v1153, %v1285
        %v1298 = vadd.f32 %v1154, %v1286
        %v1299 = vadd.f32 %v1155, %v1287
        %v1300 = vadd.f32 %v1156, %v1288
        %v1301 = vadd.f32 %v1157, %v1289
        %v1302 = vadd.f32 %v1158, %v1290
        %v1303 = vadd.f32 %v1159, %v1291
        %v1304 = vadd.f32 %v1160, %v1292
        %v1305 = vadd.f32 %v1161, %v1293
        %s1306 = sld [smem:[#allocation3 + $0x6]]
        %v1307 = vstv %s1306
        %v1308 = vmul.f32 %v394, %v1307
        %v1309 = vmul.f32 %v395, %v1307
        %v1310 = vmul.f32 %v396, %v1307
        %v1311 = vmul.f32 %v397, %v1307
        %v1312 = vmul.f32 %v398, %v1307
        %v1313 = vmul.f32 %v399, %v1307
        %v1314 = vmul.f32 %v400, %v1307
        %v1315 = vmul.f32 %v401, %v1307
        %v1316 = vmul.f32 %v402, %v1307
        %v1317 = vmul.f32 %v403, %v1307
        %v1318 = vmul.f32 %v404, %v1307
        %v1319 = vmul.f32 %v405, %v1307
        %s1320 = sld [smem:[#allocation5 + $0x6]]
        %v1321 = vstv %s1320
        %v1322 = vadd.f32 %v1308, %v1321
        %v1323 = vadd.f32 %v1309, %v1321
        %v1324 = vadd.f32 %v1310, %v1321
        %v1325 = vadd.f32 %v1311, %v1321
        %v1326 = vadd.f32 %v1312, %v1321
        %v1327 = vadd.f32 %v1313, %v1321
        %v1328 = vadd.f32 %v1314, %v1321
        %v1329 = vadd.f32 %v1315, %v1321
        %v1330 = vadd.f32 %v1316, %v1321
        %v1331 = vadd.f32 %v1317, %v1321
        %v1332 = vadd.f32 %v1318, %v1321
        %v1333 = vadd.f32 %v1319, %v1321
        %s1334 = sld [smem:[#allocation3 + $0x86]]
        %v1335 = vstv %s1334
        %v1336 = vmul.f32 %v406, %v1335
        %v1337 = vmul.f32 %v407, %v1335
        %v1338 = vmul.f32 %v408, %v1335
        %v1339 = vmul.f32 %v409, %v1335
        %v1340 = vmul.f32 %v410, %v1335
        %v1341 = vmul.f32 %v411, %v1335
        %v1342 = vmul.f32 %v412, %v1335
        %v1343 = vmul.f32 %v413, %v1335
        %v1344 = vmul.f32 %v414, %v1335
        %v1345 = vmul.f32 %v415, %v1335
        %v1346 = vmul.f32 %v416, %v1335
        %v1347 = vmul.f32 %v417, %v1335
        %v1348 = vadd.f32 %v1322, %v1336
        %v1349 = vadd.f32 %v1323, %v1337
        %v1350 = vadd.f32 %v1324, %v1338
        %v1351 = vadd.f32 %v1325, %v1339
        %v1352 = vadd.f32 %v1326, %v1340
        %v1353 = vadd.f32 %v1327, %v1341
        %v1354 = vadd.f32 %v1328, %v1342
        %v1355 = vadd.f32 %v1329, %v1343
        %v1356 = vadd.f32 %v1330, %v1344
        %v1357 = vadd.f32 %v1331, %v1345
        %v1358 = vadd.f32 %v1332, %v1346
        %v1359 = vadd.f32 %v1333, %v1347
        %s1360 = sld [smem:[#allocation3 + $0x106]]
        %v1361 = vstv %s1360
        %v1362 = vmul.f32 %v418, %v1361
        %v1363 = vmul.f32 %v419, %v1361
        %v1364 = vmul.f32 %v420, %v1361
        %v1365 = vmul.f32 %v421, %v1361
        %v1366 = vmul.f32 %v422, %v1361
        %v1367 = vmul.f32 %v423, %v1361
        %v1368 = vmul.f32 %v424, %v1361
        %v1369 = vmul.f32 %v425, %v1361
        %v1370 = vmul.f32 %v426, %v1361
        %v1371 = vmul.f32 %v427, %v1361
        %v1372 = vmul.f32 %v428, %v1361
        %v1373 = vmul.f32 %v429, %v1361
        %v1374 = vadd.f32 %v1348, %v1362
        %v1375 = vadd.f32 %v1349, %v1363
        %v1376 = vadd.f32 %v1350, %v1364
        %v1377 = vadd.f32 %v1351, %v1365
        %v1378 = vadd.f32 %v1352, %v1366
        %v1379 = vadd.f32 %v1353, %v1367
        %v1380 = vadd.f32 %v1354, %v1368
        %v1381 = vadd.f32 %v1355, %v1369
        %v1382 = vadd.f32 %v1356, %v1370
        %v1383 = vadd.f32 %v1357, %v1371
        %v1384 = vadd.f32 %v1358, %v1372
        %v1385 = vadd.f32 %v1359, %v1373
        %s1386 = sld [smem:[#allocation3 + $0x186]]
        %v1387 = vstv %s1386
        %v1388 = vmul.f32 %v430, %v1387
        %v1389 = vmul.f32 %v431, %v1387
        %v1390 = vmul.f32 %v432, %v1387
        %v1391 = vmul.f32 %v433, %v1387
        %v1392 = vmul.f32 %v434, %v1387
        %v1393 = vmul.f32 %v435, %v1387
        %v1394 = vmul.f32 %v436, %v1387
        %v1395 = vmul.f32 %v437, %v1387
        %v1396 = vmul.f32 %v438, %v1387
        %v1397 = vmul.f32 %v439, %v1387
        %v1398 = vmul.f32 %v440, %v1387
        %v1399 = vmul.f32 %v441, %v1387
        %v1400 = vadd.f32 %v1374, %v1388
        %v1401 = vadd.f32 %v1375, %v1389
        %v1402 = vadd.f32 %v1376, %v1390
        %v1403 = vadd.f32 %v1377, %v1391
        %v1404 = vadd.f32 %v1378, %v1392
        %v1405 = vadd.f32 %v1379, %v1393
        %v1406 = vadd.f32 %v1380, %v1394
        %v1407 = vadd.f32 %v1381, %v1395
        %v1408 = vadd.f32 %v1382, %v1396
        %v1409 = vadd.f32 %v1383, %v1397
        %v1410 = vadd.f32 %v1384, %v1398
        %v1411 = vadd.f32 %v1385, %v1399
        %v1412 = vmax.f32 %v1400, 0.0
        %v1413 = vmax.f32 %v1401, 0.0
        %v1414 = vmax.f32 %v1402, 0.0
        %v1415 = vmax.f32 %v1403, 0.0
        %v1416 = vmax.f32 %v1404, 0.0
        %v1417 = vmax.f32 %v1405, 0.0
        %v1418 = vmax.f32 %v1406, 0.0
        %v1419 = vmax.f32 %v1407, 0.0
        %v1420 = vmax.f32 %v1408, 0.0
        %v1421 = vmax.f32 %v1409, 0.0
        %v1422 = vmax.f32 %v1410, 0.0
        %v1423 = vmax.f32 %v1411, 0.0
        %s1424 = sld [smem:[#allocation7 + $0x6]]
        %v1425 = vstv %s1424
        %v1426 = vmul.f32 %v1412, %v1425
        %v1427 = vmul.f32 %v1413, %v1425
        %v1428 = vmul.f32 %v1414, %v1425
        %v1429 = vmul.f32 %v1415, %v1425
        %v1430 = vmul.f32 %v1416, %v1425
        %v1431 = vmul.f32 %v1417, %v1425
        %v1432 = vmul.f32 %v1418, %v1425
        %v1433 = vmul.f32 %v1419, %v1425
        %v1434 = vmul.f32 %v1420, %v1425
        %v1435 = vmul.f32 %v1421, %v1425
        %v1436 = vmul.f32 %v1422, %v1425
        %v1437 = vmul.f32 %v1423, %v1425
        %v1438 = vadd.f32 %v1294, %v1426
        %v1439 = vadd.f32 %v1295, %v1427
        %v1440 = vadd.f32 %v1296, %v1428
        %v1441 = vadd.f32 %v1297, %v1429
        %v1442 = vadd.f32 %v1298, %v1430
        %v1443 = vadd.f32 %v1299, %v1431
        %v1444 = vadd.f32 %v1300, %v1432
        %v1445 = vadd.f32 %v1301, %v1433
        %v1446 = vadd.f32 %v1302, %v1434
        %v1447 = vadd.f32 %v1303, %v1435
        %v1448 = vadd.f32 %v1304, %v1436
        %v1449 = vadd.f32 %v1305, %v1437
        %s1450 = sld [smem:[#allocation3 + $0x7]]
        %v1451 = vstv %s1450
        %v1452 = vmul.f32 %v394, %v1451
        %v1453 = vmul.f32 %v395, %v1451
        %v1454 = vmul.f32 %v396, %v1451
        %v1455 = vmul.f32 %v397, %v1451
        %v1456 = vmul.f32 %v398, %v1451
        %v1457 = vmul.f32 %v399, %v1451
        %v1458 = vmul.f32 %v400, %v1451
        %v1459 = vmul.f32 %v401, %v1451
        %v1460 = vmul.f32 %v402, %v1451
        %v1461 = vmul.f32 %v403, %v1451
        %v1462 = vmul.f32 %v404, %v1451
        %v1463 = vmul.f32 %v405, %v1451
        %s1464 = sld [smem:[#allocation5 + $0x7]]
        %v1465 = vstv %s1464
        %v1466 = vadd.f32 %v1452, %v1465
        %v1467 = vadd.f32 %v1453, %v1465
        %v1468 = vadd.f32 %v1454, %v1465
        %v1469 = vadd.f32 %v1455, %v1465
        %v1470 = vadd.f32 %v1456, %v1465
        %v1471 = vadd.f32 %v1457, %v1465
        %v1472 = vadd.f32 %v1458, %v1465
        %v1473 = vadd.f32 %v1459, %v1465
        %v1474 = vadd.f32 %v1460, %v1465
        %v1475 = vadd.f32 %v1461, %v1465
        %v1476 = vadd.f32 %v1462, %v1465
        %v1477 = vadd.f32 %v1463, %v1465
        %s1478 = sld [smem:[#allocation3 + $0x87]]
        %v1479 = vstv %s1478
        %v1480 = vmul.f32 %v406, %v1479
        %v1481 = vmul.f32 %v407, %v1479
        %v1482 = vmul.f32 %v408, %v1479
        %v1483 = vmul.f32 %v409, %v1479
        %v1484 = vmul.f32 %v410, %v1479
        %v1485 = vmul.f32 %v411, %v1479
        %v1486 = vmul.f32 %v412, %v1479
        %v1487 = vmul.f32 %v413, %v1479
        %v1488 = vmul.f32 %v414, %v1479
        %v1489 = vmul.f32 %v415, %v1479
        %v1490 = vmul.f32 %v416, %v1479
        %v1491 = vmul.f32 %v417, %v1479
        %v1492 = vadd.f32 %v1466, %v1480
        %v1493 = vadd.f32 %v1467, %v1481
        %v1494 = vadd.f32 %v1468, %v1482
        %v1495 = vadd.f32 %v1469, %v1483
        %v1496 = vadd.f32 %v1470, %v1484
        %v1497 = vadd.f32 %v1471, %v1485
        %v1498 = vadd.f32 %v1472, %v1486
        %v1499 = vadd.f32 %v1473, %v1487
        %v1500 = vadd.f32 %v1474, %v1488
        %v1501 = vadd.f32 %v1475, %v1489
        %v1502 = vadd.f32 %v1476, %v1490
        %v1503 = vadd.f32 %v1477, %v1491
        %s1504 = sld [smem:[#allocation3 + $0x107]]
        %v1505 = vstv %s1504
        %v1506 = vmul.f32 %v418, %v1505
        %v1507 = vmul.f32 %v419, %v1505
        %v1508 = vmul.f32 %v420, %v1505
        %v1509 = vmul.f32 %v421, %v1505
        %v1510 = vmul.f32 %v422, %v1505
        %v1511 = vmul.f32 %v423, %v1505
        %v1512 = vmul.f32 %v424, %v1505
        %v1513 = vmul.f32 %v425, %v1505
        %v1514 = vmul.f32 %v426, %v1505
        %v1515 = vmul.f32 %v427, %v1505
        %v1516 = vmul.f32 %v428, %v1505
        %v1517 = vmul.f32 %v429, %v1505
        %v1518 = vadd.f32 %v1492, %v1506
        %v1519 = vadd.f32 %v1493, %v1507
        %v1520 = vadd.f32 %v1494, %v1508
        %v1521 = vadd.f32 %v1495, %v1509
        %v1522 = vadd.f32 %v1496, %v1510
        %v1523 = vadd.f32 %v1497, %v1511
        %v1524 = vadd.f32 %v1498, %v1512
        %v1525 = vadd.f32 %v1499, %v1513
        %v1526 = vadd.f32 %v1500, %v1514
        %v1527 = vadd.f32 %v1501, %v1515
        %v1528 = vadd.f32 %v1502, %v1516
        %v1529 = vadd.f32 %v1503, %v1517
        %s1530 = sld [smem:[#allocation3 + $0x187]]
        %v1531 = vstv %s1530
        %v1532 = vmul.f32 %v430, %v1531
        %v1533 = vmul.f32 %v431, %v1531
        %v1534 = vmul.f32 %v432, %v1531
        %v1535 = vmul.f32 %v433, %v1531
        %v1536 = vmul.f32 %v434, %v1531
        %v1537 = vmul.f32 %v435, %v1531
        %v1538 = vmul.f32 %v436, %v1531
        %v1539 = vmul.f32 %v437, %v1531
        %v1540 = vmul.f32 %v438, %v1531
        %v1541 = vmul.f32 %v439, %v1531
        %v1542 = vmul.f32 %v440, %v1531
        %v1543 = vmul.f32 %v441, %v1531
        %v1544 = vadd.f32 %v1518, %v1532
        %v1545 = vadd.f32 %v1519, %v1533
        %v1546 = vadd.f32 %v1520, %v1534
        %v1547 = vadd.f32 %v1521, %v1535
        %v1548 = vadd.f32 %v1522, %v1536
        %v1549 = vadd.f32 %v1523, %v1537
        %v1550 = vadd.f32 %v1524, %v1538
        %v1551 = vadd.f32 %v1525, %v1539
        %v1552 = vadd.f32 %v1526, %v1540
        %v1553 = vadd.f32 %v1527, %v1541
        %v1554 = vadd.f32 %v1528, %v1542
        %v1555 = vadd.f32 %v1529, %v1543
        %v1556 = vmax.f32 %v1544, 0.0
        %v1557 = vmax.f32 %v1545, 0.0
        %v1558 = vmax.f32 %v1546, 0.0
        %v1559 = vmax.f32 %v1547, 0.0
        %v1560 = vmax.f32 %v1548, 0.0
        %v1561 = vmax.f32 %v1549, 0.0
        %v1562 = vmax.f32 %v1550, 0.0
        %v1563 = vmax.f32 %v1551, 0.0
        %v1564 = vmax.f32 %v1552, 0.0
        %v1565 = vmax.f32 %v1553, 0.0
        %v1566 = vmax.f32 %v1554, 0.0
        %v1567 = vmax.f32 %v1555, 0.0
        %s1568 = sld [smem:[#allocation7 + $0x7]]
        %v1569 = vstv %s1568
        %v1570 = vmul.f32 %v1556, %v1569
        %v1571 = vmul.f32 %v1557, %v1569
        %v1572 = vmul.f32 %v1558, %v1569
        %v1573 = vmul.f32 %v1559, %v1569
        %v1574 = vmul.f32 %v1560, %v1569
        %v1575 = vmul.f32 %v1561, %v1569
        %v1576 = vmul.f32 %v1562, %v1569
        %v1577 = vmul.f32 %v1563, %v1569
        %v1578 = vmul.f32 %v1564, %v1569
        %v1579 = vmul.f32 %v1565, %v1569
        %v1580 = vmul.f32 %v1566, %v1569
        %v1581 = vmul.f32 %v1567, %v1569
        %v1582 = vadd.f32 %v1438, %v1570
        %v1583 = vadd.f32 %v1439, %v1571
        %v1584 = vadd.f32 %v1440, %v1572
        %v1585 = vadd.f32 %v1441, %v1573
        %v1586 = vadd.f32 %v1442, %v1574
        %v1587 = vadd.f32 %v1443, %v1575
        %v1588 = vadd.f32 %v1444, %v1576
        %v1589 = vadd.f32 %v1445, %v1577
        %v1590 = vadd.f32 %v1446, %v1578
        %v1591 = vadd.f32 %v1447, %v1579
        %v1592 = vadd.f32 %v1448, %v1580
        %v1593 = vadd.f32 %v1449, %v1581
        %s1594 = sld [smem:[#allocation3 + $0x8]]
        %v1595 = vstv %s1594
        %v1596 = vmul.f32 %v394, %v1595
        %v1597 = vmul.f32 %v395, %v1595
        %v1598 = vmul.f32 %v396, %v1595
        %v1599 = vmul.f32 %v397, %v1595
        %v1600 = vmul.f32 %v398, %v1595
        %v1601 = vmul.f32 %v399, %v1595
        %v1602 = vmul.f32 %v400, %v1595
        %v1603 = vmul.f32 %v401, %v1595
        %v1604 = vmul.f32 %v402, %v1595
        %v1605 = vmul.f32 %v403, %v1595
        %v1606 = vmul.f32 %v404, %v1595
        %v1607 = vmul.f32 %v405, %v1595
        %s1608 = sld [smem:[#allocation5 + $0x8]]
        %v1609 = vstv %s1608
        %v1610 = vadd.f32 %v1596, %v1609
        %v1611 = vadd.f32 %v1597, %v1609
        %v1612 = vadd.f32 %v1598, %v1609
        %v1613 = vadd.f32 %v1599, %v1609
        %v1614 = vadd.f32 %v1600, %v1609
        %v1615 = vadd.f32 %v1601, %v1609
        %v1616 = vadd.f32 %v1602, %v1609
        %v1617 = vadd.f32 %v1603, %v1609
        %v1618 = vadd.f32 %v1604, %v1609
        %v1619 = vadd.f32 %v1605, %v1609
        %v1620 = vadd.f32 %v1606, %v1609
        %v1621 = vadd.f32 %v1607, %v1609
        %s1622 = sld [smem:[#allocation3 + $0x88]]
        %v1623 = vstv %s1622
        %v1624 = vmul.f32 %v406, %v1623
        %v1625 = vmul.f32 %v407, %v1623
        %v1626 = vmul.f32 %v408, %v1623
        %v1627 = vmul.f32 %v409, %v1623
        %v1628 = vmul.f32 %v410, %v1623
        %v1629 = vmul.f32 %v411, %v1623
        %v1630 = vmul.f32 %v412, %v1623
        %v1631 = vmul.f32 %v413, %v1623
        %v1632 = vmul.f32 %v414, %v1623
        %v1633 = vmul.f32 %v415, %v1623
        %v1634 = vmul.f32 %v416, %v1623
        %v1635 = vmul.f32 %v417, %v1623
        %v1636 = vadd.f32 %v1610, %v1624
        %v1637 = vadd.f32 %v1611, %v1625
        %v1638 = vadd.f32 %v1612, %v1626
        %v1639 = vadd.f32 %v1613, %v1627
        %v1640 = vadd.f32 %v1614, %v1628
        %v1641 = vadd.f32 %v1615, %v1629
        %v1642 = vadd.f32 %v1616, %v1630
        %v1643 = vadd.f32 %v1617, %v1631
        %v1644 = vadd.f32 %v1618, %v1632
        %v1645 = vadd.f32 %v1619, %v1633
        %v1646 = vadd.f32 %v1620, %v1634
        %v1647 = vadd.f32 %v1621, %v1635
        %s1648 = sld [smem:[#allocation3 + $0x108]]
        %v1649 = vstv %s1648
        %v1650 = vmul.f32 %v418, %v1649
        %v1651 = vmul.f32 %v419, %v1649
        %v1652 = vmul.f32 %v420, %v1649
        %v1653 = vmul.f32 %v421, %v1649
        %v1654 = vmul.f32 %v422, %v1649
        %v1655 = vmul.f32 %v423, %v1649
        %v1656 = vmul.f32 %v424, %v1649
        %v1657 = vmul.f32 %v425, %v1649
        %v1658 = vmul.f32 %v426, %v1649
        %v1659 = vmul.f32 %v427, %v1649
        %v1660 = vmul.f32 %v428, %v1649
        %v1661 = vmul.f32 %v429, %v1649
        %v1662 = vadd.f32 %v1636, %v1650
        %v1663 = vadd.f32 %v1637, %v1651
        %v1664 = vadd.f32 %v1638, %v1652
        %v1665 = vadd.f32 %v1639, %v1653
        %v1666 = vadd.f32 %v1640, %v1654
        %v1667 = vadd.f32 %v1641, %v1655
        %v1668 = vadd.f32 %v1642, %v1656
        %v1669 = vadd.f32 %v1643, %v1657
        %v1670 = vadd.f32 %v1644, %v1658
        %v1671 = vadd.f32 %v1645, %v1659
        %v1672 = vadd.f32 %v1646, %v1660
        %v1673 = vadd.f32 %v1647, %v1661
        %s1674 = sld [smem:[#allocation3 + $0x188]]
        %v1675 = vstv %s1674
        %v1676 = vmul.f32 %v430, %v1675
        %v1677 = vmul.f32 %v431, %v1675
        %v1678 = vmul.f32 %v432, %v1675
        %v1679 = vmul.f32 %v433, %v1675
        %v1680 = vmul.f32 %v434, %v1675
        %v1681 = vmul.f32 %v435, %v1675
        %v1682 = vmul.f32 %v436, %v1675
        %v1683 = vmul.f32 %v437, %v1675
        %v1684 = vmul.f32 %v438, %v1675
        %v1685 = vmul.f32 %v439, %v1675
        %v1686 = vmul.f32 %v440, %v1675
        %v1687 = vmul.f32 %v441, %v1675
        %v1688 = vadd.f32 %v1662, %v1676
        %v1689 = vadd.f32 %v1663, %v1677
        %v1690 = vadd.f32 %v1664, %v1678
        %v1691 = vadd.f32 %v1665, %v1679
        %v1692 = vadd.f32 %v1666, %v1680
        %v1693 = vadd.f32 %v1667, %v1681
        %v1694 = vadd.f32 %v1668, %v1682
        %v1695 = vadd.f32 %v1669, %v1683
        %v1696 = vadd.f32 %v1670, %v1684
        %v1697 = vadd.f32 %v1671, %v1685
        %v1698 = vadd.f32 %v1672, %v1686
        %v1699 = vadd.f32 %v1673, %v1687
        %v1700 = vmax.f32 %v1688, 0.0
        %v1701 = vmax.f32 %v1689, 0.0
        %v1702 = vmax.f32 %v1690, 0.0
        %v1703 = vmax.f32 %v1691, 0.0
        %v1704 = vmax.f32 %v1692, 0.0
        %v1705 = vmax.f32 %v1693, 0.0
        %v1706 = vmax.f32 %v1694, 0.0
        %v1707 = vmax.f32 %v1695, 0.0
        %v1708 = vmax.f32 %v1696, 0.0
        %v1709 = vmax.f32 %v1697, 0.0
        %v1710 = vmax.f32 %v1698, 0.0
        %v1711 = vmax.f32 %v1699, 0.0
        %s1712 = sld [smem:[#allocation7 + $0x8]]
        %v1713 = vstv %s1712
        %v1714 = vmul.f32 %v1700, %v1713
        %v1715 = vmul.f32 %v1701, %v1713
        %v1716 = vmul.f32 %v1702, %v1713
        %v1717 = vmul.f32 %v1703, %v1713
        %v1718 = vmul.f32 %v1704, %v1713
        %v1719 = vmul.f32 %v1705, %v1713
        %v1720 = vmul.f32 %v1706, %v1713
        %v1721 = vmul.f32 %v1707, %v1713
        %v1722 = vmul.f32 %v1708, %v1713
        %v1723 = vmul.f32 %v1709, %v1713
        %v1724 = vmul.f32 %v1710, %v1713
        %v1725 = vmul.f32 %v1711, %v1713
        %v1726 = vadd.f32 %v1582, %v1714
        %v1727 = vadd.f32 %v1583, %v1715
        %v1728 = vadd.f32 %v1584, %v1716
        %v1729 = vadd.f32 %v1585, %v1717
        %v1730 = vadd.f32 %v1586, %v1718
        %v1731 = vadd.f32 %v1587, %v1719
        %v1732 = vadd.f32 %v1588, %v1720
        %v1733 = vadd.f32 %v1589, %v1721
        %v1734 = vadd.f32 %v1590, %v1722
        %v1735 = vadd.f32 %v1591, %v1723
        %v1736 = vadd.f32 %v1592, %v1724
        %v1737 = vadd.f32 %v1593, %v1725
        %s1738 = sld [smem:[#allocation3 + $0x9]]
        %v1739 = vstv %s1738
        %v1740 = vmul.f32 %v394, %v1739
        %v1741 = vmul.f32 %v395, %v1739
        %v1742 = vmul.f32 %v396, %v1739
        %v1743 = vmul.f32 %v397, %v1739
        %v1744 = vmul.f32 %v398, %v1739
        %v1745 = vmul.f32 %v399, %v1739
        %v1746 = vmul.f32 %v400, %v1739
        %v1747 = vmul.f32 %v401, %v1739
        %v1748 = vmul.f32 %v402, %v1739
        %v1749 = vmul.f32 %v403, %v1739
        %v1750 = vmul.f32 %v404, %v1739
        %v1751 = vmul.f32 %v405, %v1739
        %s1752 = sld [smem:[#allocation5 + $0x9]]
        %v1753 = vstv %s1752
        %v1754 = vadd.f32 %v1740, %v1753
        %v1755 = vadd.f32 %v1741, %v1753
        %v1756 = vadd.f32 %v1742, %v1753
        %v1757 = vadd.f32 %v1743, %v1753
        %v1758 = vadd.f32 %v1744, %v1753
        %v1759 = vadd.f32 %v1745, %v1753
        %v1760 = vadd.f32 %v1746, %v1753
        %v1761 = vadd.f32 %v1747, %v1753
        %v1762 = vadd.f32 %v1748, %v1753
        %v1763 = vadd.f32 %v1749, %v1753
        %v1764 = vadd.f32 %v1750, %v1753
        %v1765 = vadd.f32 %v1751, %v1753
        %s1766 = sld [smem:[#allocation3 + $0x89]]
        %v1767 = vstv %s1766
        %v1768 = vmul.f32 %v406, %v1767
        %v1769 = vmul.f32 %v407, %v1767
        %v1770 = vmul.f32 %v408, %v1767
        %v1771 = vmul.f32 %v409, %v1767
        %v1772 = vmul.f32 %v410, %v1767
        %v1773 = vmul.f32 %v411, %v1767
        %v1774 = vmul.f32 %v412, %v1767
        %v1775 = vmul.f32 %v413, %v1767
        %v1776 = vmul.f32 %v414, %v1767
        %v1777 = vmul.f32 %v415, %v1767
        %v1778 = vmul.f32 %v416, %v1767
        %v1779 = vmul.f32 %v417, %v1767
        %v1780 = vadd.f32 %v1754, %v1768
        %v1781 = vadd.f32 %v1755, %v1769
        %v1782 = vadd.f32 %v1756, %v1770
        %v1783 = vadd.f32 %v1757, %v1771
        %v1784 = vadd.f32 %v1758, %v1772
        %v1785 = vadd.f32 %v1759, %v1773
        %v1786 = vadd.f32 %v1760, %v1774
        %v1787 = vadd.f32 %v1761, %v1775
        %v1788 = vadd.f32 %v1762, %v1776
        %v1789 = vadd.f32 %v1763, %v1777
        %v1790 = vadd.f32 %v1764, %v1778
        %v1791 = vadd.f32 %v1765, %v1779
        %s1792 = sld [smem:[#allocation3 + $0x109]]
        %v1793 = vstv %s1792
        %v1794 = vmul.f32 %v418, %v1793
        %v1795 = vmul.f32 %v419, %v1793
        %v1796 = vmul.f32 %v420, %v1793
        %v1797 = vmul.f32 %v421, %v1793
        %v1798 = vmul.f32 %v422, %v1793
        %v1799 = vmul.f32 %v423, %v1793
        %v1800 = vmul.f32 %v424, %v1793
        %v1801 = vmul.f32 %v425, %v1793
        %v1802 = vmul.f32 %v426, %v1793
        %v1803 = vmul.f32 %v427, %v1793
        %v1804 = vmul.f32 %v428, %v1793
        %v1805 = vmul.f32 %v429, %v1793
        %v1806 = vadd.f32 %v1780, %v1794
        %v1807 = vadd.f32 %v1781, %v1795
        %v1808 = vadd.f32 %v1782, %v1796
        %v1809 = vadd.f32 %v1783, %v1797
        %v1810 = vadd.f32 %v1784, %v1798
        %v1811 = vadd.f32 %v1785, %v1799
        %v1812 = vadd.f32 %v1786, %v1800
        %v1813 = vadd.f32 %v1787, %v1801
        %v1814 = vadd.f32 %v1788, %v1802
        %v1815 = vadd.f32 %v1789, %v1803
        %v1816 = vadd.f32 %v1790, %v1804
        %v1817 = vadd.f32 %v1791, %v1805
        %s1818 = sld [smem:[#allocation3 + $0x189]]
        %v1819 = vstv %s1818
        %v1820 = vmul.f32 %v430, %v1819
        %v1821 = vmul.f32 %v431, %v1819
        %v1822 = vmul.f32 %v432, %v1819
        %v1823 = vmul.f32 %v433, %v1819
        %v1824 = vmul.f32 %v434, %v1819
        %v1825 = vmul.f32 %v435, %v1819
        %v1826 = vmul.f32 %v436, %v1819
        %v1827 = vmul.f32 %v437, %v1819
        %v1828 = vmul.f32 %v438, %v1819
        %v1829 = vmul.f32 %v439, %v1819
        %v1830 = vmul.f32 %v440, %v1819
        %v1831 = vmul.f32 %v441, %v1819
        %v1832 = vadd.f32 %v1806, %v1820
        %v1833 = vadd.f32 %v1807, %v1821
        %v1834 = vadd.f32 %v1808, %v1822
        %v1835 = vadd.f32 %v1809, %v1823
        %v1836 = vadd.f32 %v1810, %v1824
        %v1837 = vadd.f32 %v1811, %v1825
        %v1838 = vadd.f32 %v1812, %v1826
        %v1839 = vadd.f32 %v1813, %v1827
        %v1840 = vadd.f32 %v1814, %v1828
        %v1841 = vadd.f32 %v1815, %v1829
        %v1842 = vadd.f32 %v1816, %v1830
        %v1843 = vadd.f32 %v1817, %v1831
        %v1844 = vmax.f32 %v1832, 0.0
        %v1845 = vmax.f32 %v1833, 0.0
        %v1846 = vmax.f32 %v1834, 0.0
        %v1847 = vmax.f32 %v1835, 0.0
        %v1848 = vmax.f32 %v1836, 0.0
        %v1849 = vmax.f32 %v1837, 0.0
        %v1850 = vmax.f32 %v1838, 0.0
        %v1851 = vmax.f32 %v1839, 0.0
        %v1852 = vmax.f32 %v1840, 0.0
        %v1853 = vmax.f32 %v1841, 0.0
        %v1854 = vmax.f32 %v1842, 0.0
        %v1855 = vmax.f32 %v1843, 0.0
        %s1856 = sld [smem:[#allocation7 + $0x9]]
        %v1857 = vstv %s1856
        %v1858 = vmul.f32 %v1844, %v1857
        %v1859 = vmul.f32 %v1845, %v1857
        %v1860 = vmul.f32 %v1846, %v1857
        %v1861 = vmul.f32 %v1847, %v1857
        %v1862 = vmul.f32 %v1848, %v1857
        %v1863 = vmul.f32 %v1849, %v1857
        %v1864 = vmul.f32 %v1850, %v1857
        %v1865 = vmul.f32 %v1851, %v1857
        %v1866 = vmul.f32 %v1852, %v1857
        %v1867 = vmul.f32 %v1853, %v1857
        %v1868 = vmul.f32 %v1854, %v1857
        %v1869 = vmul.f32 %v1855, %v1857
        %v1870 = vadd.f32 %v1726, %v1858
        %v1871 = vadd.f32 %v1727, %v1859
        %v1872 = vadd.f32 %v1728, %v1860
        %v1873 = vadd.f32 %v1729, %v1861
        %v1874 = vadd.f32 %v1730, %v1862
        %v1875 = vadd.f32 %v1731, %v1863
        %v1876 = vadd.f32 %v1732, %v1864
        %v1877 = vadd.f32 %v1733, %v1865
        %v1878 = vadd.f32 %v1734, %v1866
        %v1879 = vadd.f32 %v1735, %v1867
        %v1880 = vadd.f32 %v1736, %v1868
        %v1881 = vadd.f32 %v1737, %v1869
        %s1882 = sld [smem:[#allocation3 + $0xa]]
        %v1883 = vstv %s1882
        %v1884 = vmul.f32 %v394, %v1883
        %v1885 = vmul.f32 %v395, %v1883
        %v1886 = vmul.f32 %v396, %v1883
        %v1887 = vmul.f32 %v397, %v1883
        %v1888 = vmul.f32 %v398, %v1883
        %v1889 = vmul.f32 %v399, %v1883
        %v1890 = vmul.f32 %v400, %v1883
        %v1891 = vmul.f32 %v401, %v1883
        %v1892 = vmul.f32 %v402, %v1883
        %v1893 = vmul.f32 %v403, %v1883
        %v1894 = vmul.f32 %v404, %v1883
        %v1895 = vmul.f32 %v405, %v1883
        %s1896 = sld [smem:[#allocation5 + $0xa]]
        %v1897 = vstv %s1896
        %v1898 = vadd.f32 %v1884, %v1897
        %v1899 = vadd.f32 %v1885, %v1897
        %v1900 = vadd.f32 %v1886, %v1897
        %v1901 = vadd.f32 %v1887, %v1897
        %v1902 = vadd.f32 %v1888, %v1897
        %v1903 = vadd.f32 %v1889, %v1897
        %v1904 = vadd.f32 %v1890, %v1897
        %v1905 = vadd.f32 %v1891, %v1897
        %v1906 = vadd.f32 %v1892, %v1897
        %v1907 = vadd.f32 %v1893, %v1897
        %v1908 = vadd.f32 %v1894, %v1897
        %v1909 = vadd.f32 %v1895, %v1897
        %s1910 = sld [smem:[#allocation3 + $0x8a]]
        %v1911 = vstv %s1910
        %v1912 = vmul.f32 %v406, %v1911
        %v1913 = vmul.f32 %v407, %v1911
        %v1914 = vmul.f32 %v408, %v1911
        %v1915 = vmul.f32 %v409, %v1911
        %v1916 = vmul.f32 %v410, %v1911
        %v1917 = vmul.f32 %v411, %v1911
        %v1918 = vmul.f32 %v412, %v1911
        %v1919 = vmul.f32 %v413, %v1911
        %v1920 = vmul.f32 %v414, %v1911
        %v1921 = vmul.f32 %v415, %v1911
        %v1922 = vmul.f32 %v416, %v1911
        %v1923 = vmul.f32 %v417, %v1911
        %v1924 = vadd.f32 %v1898, %v1912
        %v1925 = vadd.f32 %v1899, %v1913
        %v1926 = vadd.f32 %v1900, %v1914
        %v1927 = vadd.f32 %v1901, %v1915
        %v1928 = vadd.f32 %v1902, %v1916
        %v1929 = vadd.f32 %v1903, %v1917
        %v1930 = vadd.f32 %v1904, %v1918
        %v1931 = vadd.f32 %v1905, %v1919
        %v1932 = vadd.f32 %v1906, %v1920
        %v1933 = vadd.f32 %v1907, %v1921
        %v1934 = vadd.f32 %v1908, %v1922
        %v1935 = vadd.f32 %v1909, %v1923
        %s1936 = sld [smem:[#allocation3 + $0x10a]]
        %v1937 = vstv %s1936
        %v1938 = vmul.f32 %v418, %v1937
        %v1939 = vmul.f32 %v419, %v1937
        %v1940 = vmul.f32 %v420, %v1937
        %v1941 = vmul.f32 %v421, %v1937
        %v1942 = vmul.f32 %v422, %v1937
        %v1943 = vmul.f32 %v423, %v1937
        %v1944 = vmul.f32 %v424, %v1937
        %v1945 = vmul.f32 %v425, %v1937
        %v1946 = vmul.f32 %v426, %v1937
        %v1947 = vmul.f32 %v427, %v1937
        %v1948 = vmul.f32 %v428, %v1937
        %v1949 = vmul.f32 %v429, %v1937
        %v1950 = vadd.f32 %v1924, %v1938
        %v1951 = vadd.f32 %v1925, %v1939
        %v1952 = vadd.f32 %v1926, %v1940
        %v1953 = vadd.f32 %v1927, %v1941
        %v1954 = vadd.f32 %v1928, %v1942
        %v1955 = vadd.f32 %v1929, %v1943
        %v1956 = vadd.f32 %v1930, %v1944
        %v1957 = vadd.f32 %v1931, %v1945
        %v1958 = vadd.f32 %v1932, %v1946
        %v1959 = vadd.f32 %v1933, %v1947
        %v1960 = vadd.f32 %v1934, %v1948
        %v1961 = vadd.f32 %v1935, %v1949
        %s1962 = sld [smem:[#allocation3 + $0x18a]]
        %v1963 = vstv %s1962
        %v1964 = vmul.f32 %v430, %v1963
        %v1965 = vmul.f32 %v431, %v1963
        %v1966 = vmul.f32 %v432, %v1963
        %v1967 = vmul.f32 %v433, %v1963
        %v1968 = vmul.f32 %v434, %v1963
        %v1969 = vmul.f32 %v435, %v1963
        %v1970 = vmul.f32 %v436, %v1963
        %v1971 = vmul.f32 %v437, %v1963
        %v1972 = vmul.f32 %v438, %v1963
        %v1973 = vmul.f32 %v439, %v1963
        %v1974 = vmul.f32 %v440, %v1963
        %v1975 = vmul.f32 %v441, %v1963
        %v1976 = vadd.f32 %v1950, %v1964
        %v1977 = vadd.f32 %v1951, %v1965
        %v1978 = vadd.f32 %v1952, %v1966
        %v1979 = vadd.f32 %v1953, %v1967
        %v1980 = vadd.f32 %v1954, %v1968
        %v1981 = vadd.f32 %v1955, %v1969
        %v1982 = vadd.f32 %v1956, %v1970
        %v1983 = vadd.f32 %v1957, %v1971
        %v1984 = vadd.f32 %v1958, %v1972
        %v1985 = vadd.f32 %v1959, %v1973
        %v1986 = vadd.f32 %v1960, %v1974
        %v1987 = vadd.f32 %v1961, %v1975
        %v1988 = vmax.f32 %v1976, 0.0
        %v1989 = vmax.f32 %v1977, 0.0
        %v1990 = vmax.f32 %v1978, 0.0
        %v1991 = vmax.f32 %v1979, 0.0
        %v1992 = vmax.f32 %v1980, 0.0
        %v1993 = vmax.f32 %v1981, 0.0
        %v1994 = vmax.f32 %v1982, 0.0
        %v1995 = vmax.f32 %v1983, 0.0
        %v1996 = vmax.f32 %v1984, 0.0
        %v1997 = vmax.f32 %v1985, 0.0
        %v1998 = vmax.f32 %v1986, 0.0
        %v1999 = vmax.f32 %v1987, 0.0
        %s2000 = sld [smem:[#allocation7 + $0xa]]
        %v2001 = vstv %s2000
        %v2002 = vmul.f32 %v1988, %v2001
        %v2003 = vmul.f32 %v1989, %v2001
        %v2004 = vmul.f32 %v1990, %v2001
        %v2005 = vmul.f32 %v1991, %v2001
        %v2006 = vmul.f32 %v1992, %v2001
        %v2007 = vmul.f32 %v1993, %v2001
        %v2008 = vmul.f32 %v1994, %v2001
        %v2009 = vmul.f32 %v1995, %v2001
        %v2010 = vmul.f32 %v1996, %v2001
        %v2011 = vmul.f32 %v1997, %v2001
        %v2012 = vmul.f32 %v1998, %v2001
        %v2013 = vmul.f32 %v1999, %v2001
        %v2014 = vadd.f32 %v1870, %v2002
        %v2015 = vadd.f32 %v1871, %v2003
        %v2016 = vadd.f32 %v1872, %v2004
        %v2017 = vadd.f32 %v1873, %v2005
        %v2018 = vadd.f32 %v1874, %v2006
        %v2019 = vadd.f32 %v1875, %v2007
        %v2020 = vadd.f32 %v1876, %v2008
        %v2021 = vadd.f32 %v1877, %v2009
        %v2022 = vadd.f32 %v1878, %v2010
        %v2023 = vadd.f32 %v1879, %v2011
        %v2024 = vadd.f32 %v1880, %v2012
        %v2025 = vadd.f32 %v1881, %v2013
        %s2026 = sld [smem:[#allocation3 + $0xb]]
        %v2027 = vstv %s2026
        %v2028 = vmul.f32 %v394, %v2027
        %v2029 = vmul.f32 %v395, %v2027
        %v2030 = vmul.f32 %v396, %v2027
        %v2031 = vmul.f32 %v397, %v2027
        %v2032 = vmul.f32 %v398, %v2027
        %v2033 = vmul.f32 %v399, %v2027
        %v2034 = vmul.f32 %v400, %v2027
        %v2035 = vmul.f32 %v401, %v2027
        %v2036 = vmul.f32 %v402, %v2027
        %v2037 = vmul.f32 %v403, %v2027
        %v2038 = vmul.f32 %v404, %v2027
        %v2039 = vmul.f32 %v405, %v2027
        %s2040 = sld [smem:[#allocation5 + $0xb]]
        %v2041 = vstv %s2040
        %v2042 = vadd.f32 %v2028, %v2041
        %v2043 = vadd.f32 %v2029, %v2041
        %v2044 = vadd.f32 %v2030, %v2041
        %v2045 = vadd.f32 %v2031, %v2041
        %v2046 = vadd.f32 %v2032, %v2041
        %v2047 = vadd.f32 %v2033, %v2041
        %v2048 = vadd.f32 %v2034, %v2041
        %v2049 = vadd.f32 %v2035, %v2041
        %v2050 = vadd.f32 %v2036, %v2041
        %v2051 = vadd.f32 %v2037, %v2041
        %v2052 = vadd.f32 %v2038, %v2041
        %v2053 = vadd.f32 %v2039, %v2041
        %s2054 = sld [smem:[#allocation3 + $0x8b]]
        %v2055 = vstv %s2054
        %v2056 = vmul.f32 %v406, %v2055
        %v2057 = vmul.f32 %v407, %v2055
        %v2058 = vmul.f32 %v408, %v2055
        %v2059 = vmul.f32 %v409, %v2055
        %v2060 = vmul.f32 %v410, %v2055
        %v2061 = vmul.f32 %v411, %v2055
        %v2062 = vmul.f32 %v412, %v2055
        %v2063 = vmul.f32 %v413, %v2055
        %v2064 = vmul.f32 %v414, %v2055
        %v2065 = vmul.f32 %v415, %v2055
        %v2066 = vmul.f32 %v416, %v2055
        %v2067 = vmul.f32 %v417, %v2055
        %v2068 = vadd.f32 %v2042, %v2056
        %v2069 = vadd.f32 %v2043, %v2057
        %v2070 = vadd.f32 %v2044, %v2058
        %v2071 = vadd.f32 %v2045, %v2059
        %v2072 = vadd.f32 %v2046, %v2060
        %v2073 = vadd.f32 %v2047, %v2061
        %v2074 = vadd.f32 %v2048, %v2062
        %v2075 = vadd.f32 %v2049, %v2063
        %v2076 = vadd.f32 %v2050, %v2064
        %v2077 = vadd.f32 %v2051, %v2065
        %v2078 = vadd.f32 %v2052, %v2066
        %v2079 = vadd.f32 %v2053, %v2067
        %s2080 = sld [smem:[#allocation3 + $0x10b]]
        %v2081 = vstv %s2080
        %v2082 = vmul.f32 %v418, %v2081
        %v2083 = vmul.f32 %v419, %v2081
        %v2084 = vmul.f32 %v420, %v2081
        %v2085 = vmul.f32 %v421, %v2081
        %v2086 = vmul.f32 %v422, %v2081
        %v2087 = vmul.f32 %v423, %v2081
        %v2088 = vmul.f32 %v424, %v2081
        %v2089 = vmul.f32 %v425, %v2081
        %v2090 = vmul.f32 %v426, %v2081
        %v2091 = vmul.f32 %v427, %v2081
        %v2092 = vmul.f32 %v428, %v2081
        %v2093 = vmul.f32 %v429, %v2081
        %v2094 = vadd.f32 %v2068, %v2082
        %v2095 = vadd.f32 %v2069, %v2083
        %v2096 = vadd.f32 %v2070, %v2084
        %v2097 = vadd.f32 %v2071, %v2085
        %v2098 = vadd.f32 %v2072, %v2086
        %v2099 = vadd.f32 %v2073, %v2087
        %v2100 = vadd.f32 %v2074, %v2088
        %v2101 = vadd.f32 %v2075, %v2089
        %v2102 = vadd.f32 %v2076, %v2090
        %v2103 = vadd.f32 %v2077, %v2091
        %v2104 = vadd.f32 %v2078, %v2092
        %v2105 = vadd.f32 %v2079, %v2093
        %s2106 = sld [smem:[#allocation3 + $0x18b]]
        %v2107 = vstv %s2106
        %v2108 = vmul.f32 %v430, %v2107
        %v2109 = vmul.f32 %v431, %v2107
        %v2110 = vmul.f32 %v432, %v2107
        %v2111 = vmul.f32 %v433, %v2107
        %v2112 = vmul.f32 %v434, %v2107
        %v2113 = vmul.f32 %v435, %v2107
        %v2114 = vmul.f32 %v436, %v2107
        %v2115 = vmul.f32 %v437, %v2107
        %v2116 = vmul.f32 %v438, %v2107
        %v2117 = vmul.f32 %v439, %v2107
        %v2118 = vmul.f32 %v440, %v2107
        %v2119 = vmul.f32 %v441, %v2107
        %v2120 = vadd.f32 %v2094, %v2108
        %v2121 = vadd.f32 %v2095, %v2109
        %v2122 = vadd.f32 %v2096, %v2110
        %v2123 = vadd.f32 %v2097, %v2111
        %v2124 = vadd.f32 %v2098, %v2112
        %v2125 = vadd.f32 %v2099, %v2113
        %v2126 = vadd.f32 %v2100, %v2114
        %v2127 = vadd.f32 %v2101, %v2115
        %v2128 = vadd.f32 %v2102, %v2116
        %v2129 = vadd.f32 %v2103, %v2117
        %v2130 = vadd.f32 %v2104, %v2118
        %v2131 = vadd.f32 %v2105, %v2119
        %v2132 = vmax.f32 %v2120, 0.0
        %v2133 = vmax.f32 %v2121, 0.0
        %v2134 = vmax.f32 %v2122, 0.0
        %v2135 = vmax.f32 %v2123, 0.0
        %v2136 = vmax.f32 %v2124, 0.0
        %v2137 = vmax.f32 %v2125, 0.0
        %v2138 = vmax.f32 %v2126, 0.0
        %v2139 = vmax.f32 %v2127, 0.0
        %v2140 = vmax.f32 %v2128, 0.0
        %v2141 = vmax.f32 %v2129, 0.0
        %v2142 = vmax.f32 %v2130, 0.0
        %v2143 = vmax.f32 %v2131, 0.0
        %s2144 = sld [smem:[#allocation7 + $0xb]]
        %v2145 = vstv %s2144
        %v2146 = vmul.f32 %v2132, %v2145
        %v2147 = vmul.f32 %v2133, %v2145
        %v2148 = vmul.f32 %v2134, %v2145
        %v2149 = vmul.f32 %v2135, %v2145
        %v2150 = vmul.f32 %v2136, %v2145
        %v2151 = vmul.f32 %v2137, %v2145
        %v2152 = vmul.f32 %v2138, %v2145
        %v2153 = vmul.f32 %v2139, %v2145
        %v2154 = vmul.f32 %v2140, %v2145
        %v2155 = vmul.f32 %v2141, %v2145
        %v2156 = vmul.f32 %v2142, %v2145
        %v2157 = vmul.f32 %v2143, %v2145
        %v2158 = vadd.f32 %v2014, %v2146
        %v2159 = vadd.f32 %v2015, %v2147
        %v2160 = vadd.f32 %v2016, %v2148
        %v2161 = vadd.f32 %v2017, %v2149
        %v2162 = vadd.f32 %v2018, %v2150
        %v2163 = vadd.f32 %v2019, %v2151
        %v2164 = vadd.f32 %v2020, %v2152
        %v2165 = vadd.f32 %v2021, %v2153
        %v2166 = vadd.f32 %v2022, %v2154
        %v2167 = vadd.f32 %v2023, %v2155
        %v2168 = vadd.f32 %v2024, %v2156
        %v2169 = vadd.f32 %v2025, %v2157
        %s2170 = sld [smem:[#allocation3 + $0xc]]
        %v2171 = vstv %s2170
        %v2172 = vmul.f32 %v394, %v2171
        %v2173 = vmul.f32 %v395, %v2171
        %v2174 = vmul.f32 %v396, %v2171
        %v2175 = vmul.f32 %v397, %v2171
        %v2176 = vmul.f32 %v398, %v2171
        %v2177 = vmul.f32 %v399, %v2171
        %v2178 = vmul.f32 %v400, %v2171
        %v2179 = vmul.f32 %v401, %v2171
        %v2180 = vmul.f32 %v402, %v2171
        %v2181 = vmul.f32 %v403, %v2171
        %v2182 = vmul.f32 %v404, %v2171
        %v2183 = vmul.f32 %v405, %v2171
        %s2184 = sld [smem:[#allocation5 + $0xc]]
        %v2185 = vstv %s2184
        %v2186 = vadd.f32 %v2172, %v2185
        %v2187 = vadd.f32 %v2173, %v2185
        %v2188 = vadd.f32 %v2174, %v2185
        %v2189 = vadd.f32 %v2175, %v2185
        %v2190 = vadd.f32 %v2176, %v2185
        %v2191 = vadd.f32 %v2177, %v2185
        %v2192 = vadd.f32 %v2178, %v2185
        %v2193 = vadd.f32 %v2179, %v2185
        %v2194 = vadd.f32 %v2180, %v2185
        %v2195 = vadd.f32 %v2181, %v2185
        %v2196 = vadd.f32 %v2182, %v2185
        %v2197 = vadd.f32 %v2183, %v2185
        %s2198 = sld [smem:[#allocation3 + $0x8c]]
        %v2199 = vstv %s2198
        %v2200 = vmul.f32 %v406, %v2199
        %v2201 = vmul.f32 %v407, %v2199
        %v2202 = vmul.f32 %v408, %v2199
        %v2203 = vmul.f32 %v409, %v2199
        %v2204 = vmul.f32 %v410, %v2199
        %v2205 = vmul.f32 %v411, %v2199
        %v2206 = vmul.f32 %v412, %v2199
        %v2207 = vmul.f32 %v413, %v2199
        %v2208 = vmul.f32 %v414, %v2199
        %v2209 = vmul.f32 %v415, %v2199
        %v2210 = vmul.f32 %v416, %v2199
        %v2211 = vmul.f32 %v417, %v2199
        %v2212 = vadd.f32 %v2186, %v2200
        %v2213 = vadd.f32 %v2187, %v2201
        %v2214 = vadd.f32 %v2188, %v2202
        %v2215 = vadd.f32 %v2189, %v2203
        %v2216 = vadd.f32 %v2190, %v2204
        %v2217 = vadd.f32 %v2191, %v2205
        %v2218 = vadd.f32 %v2192, %v2206
        %v2219 = vadd.f32 %v2193, %v2207
        %v2220 = vadd.f32 %v2194, %v2208
        %v2221 = vadd.f32 %v2195, %v2209
        %v2222 = vadd.f32 %v2196, %v2210
        %v2223 = vadd.f32 %v2197, %v2211
        %s2224 = sld [smem:[#allocation3 + $0x10c]]
        %v2225 = vstv %s2224
        %v2226 = vmul.f32 %v418, %v2225
        %v2227 = vmul.f32 %v419, %v2225
        %v2228 = vmul.f32 %v420, %v2225
        %v2229 = vmul.f32 %v421, %v2225
        %v2230 = vmul.f32 %v422, %v2225
        %v2231 = vmul.f32 %v423, %v2225
        %v2232 = vmul.f32 %v424, %v2225
        %v2233 = vmul.f32 %v425, %v2225
        %v2234 = vmul.f32 %v426, %v2225
        %v2235 = vmul.f32 %v427, %v2225
        %v2236 = vmul.f32 %v428, %v2225
        %v2237 = vmul.f32 %v429, %v2225
        %v2238 = vadd.f32 %v2212, %v2226
        %v2239 = vadd.f32 %v2213, %v2227
        %v2240 = vadd.f32 %v2214, %v2228
        %v2241 = vadd.f32 %v2215, %v2229
        %v2242 = vadd.f32 %v2216, %v2230
        %v2243 = vadd.f32 %v2217, %v2231
        %v2244 = vadd.f32 %v2218, %v2232
        %v2245 = vadd.f32 %v2219, %v2233
        %v2246 = vadd.f32 %v2220, %v2234
        %v2247 = vadd.f32 %v2221, %v2235
        %v2248 = vadd.f32 %v2222, %v2236
        %v2249 = vadd.f32 %v2223, %v2237
        %s2250 = sld [smem:[#allocation3 + $0x18c]]
        %v2251 = vstv %s2250
        %v2252 = vmul.f32 %v430, %v2251
        %v2253 = vmul.f32 %v431, %v2251
        %v2254 = vmul.f32 %v432, %v2251
        %v2255 = vmul.f32 %v433, %v2251
        %v2256 = vmul.f32 %v434, %v2251
        %v2257 = vmul.f32 %v435, %v2251
        %v2258 = vmul.f32 %v436, %v2251
        %v2259 = vmul.f32 %v437, %v2251
        %v2260 = vmul.f32 %v438, %v2251
        %v2261 = vmul.f32 %v439, %v2251
        %v2262 = vmul.f32 %v440, %v2251
        %v2263 = vmul.f32 %v441, %v2251
        %v2264 = vadd.f32 %v2238, %v2252
        %v2265 = vadd.f32 %v2239, %v2253
        %v2266 = vadd.f32 %v2240, %v2254
        %v2267 = vadd.f32 %v2241, %v2255
        %v2268 = vadd.f32 %v2242, %v2256
        %v2269 = vadd.f32 %v2243, %v2257
        %v2270 = vadd.f32 %v2244, %v2258
        %v2271 = vadd.f32 %v2245, %v2259
        %v2272 = vadd.f32 %v2246, %v2260
        %v2273 = vadd.f32 %v2247, %v2261
        %v2274 = vadd.f32 %v2248, %v2262
        %v2275 = vadd.f32 %v2249, %v2263
        %v2276 = vmax.f32 %v2264, 0.0
        %v2277 = vmax.f32 %v2265, 0.0
        %v2278 = vmax.f32 %v2266, 0.0
        %v2279 = vmax.f32 %v2267, 0.0
        %v2280 = vmax.f32 %v2268, 0.0
        %v2281 = vmax.f32 %v2269, 0.0
        %v2282 = vmax.f32 %v2270, 0.0
        %v2283 = vmax.f32 %v2271, 0.0
        %v2284 = vmax.f32 %v2272, 0.0
        %v2285 = vmax.f32 %v2273, 0.0
        %v2286 = vmax.f32 %v2274, 0.0
        %v2287 = vmax.f32 %v2275, 0.0
        %s2288 = sld [smem:[#allocation7 + $0xc]]
        %v2289 = vstv %s2288
        %v2290 = vmul.f32 %v2276, %v2289
        %v2291 = vmul.f32 %v2277, %v2289
        %v2292 = vmul.f32 %v2278, %v2289
        %v2293 = vmul.f32 %v2279, %v2289
        %v2294 = vmul.f32 %v2280, %v2289
        %v2295 = vmul.f32 %v2281, %v2289
        %v2296 = vmul.f32 %v2282, %v2289
        %v2297 = vmul.f32 %v2283, %v2289
        %v2298 = vmul.f32 %v2284, %v2289
        %v2299 = vmul.f32 %v2285, %v2289
        %v2300 = vmul.f32 %v2286, %v2289
        %v2301 = vmul.f32 %v2287, %v2289
        %v2302 = vadd.f32 %v2158, %v2290
        %v2303 = vadd.f32 %v2159, %v2291
        %v2304 = vadd.f32 %v2160, %v2292
        %v2305 = vadd.f32 %v2161, %v2293
        %v2306 = vadd.f32 %v2162, %v2294
        %v2307 = vadd.f32 %v2163, %v2295
        %v2308 = vadd.f32 %v2164, %v2296
        %v2309 = vadd.f32 %v2165, %v2297
        %v2310 = vadd.f32 %v2166, %v2298
        %v2311 = vadd.f32 %v2167, %v2299
        %v2312 = vadd.f32 %v2168, %v2300
        %v2313 = vadd.f32 %v2169, %v2301
        %s2314 = sld [smem:[#allocation3 + $0xd]]
        %v2315 = vstv %s2314
        %v2316 = vmul.f32 %v394, %v2315
        %v2317 = vmul.f32 %v395, %v2315
        %v2318 = vmul.f32 %v396, %v2315
        %v2319 = vmul.f32 %v397, %v2315
        %v2320 = vmul.f32 %v398, %v2315
        %v2321 = vmul.f32 %v399, %v2315
        %v2322 = vmul.f32 %v400, %v2315
        %v2323 = vmul.f32 %v401, %v2315
        %v2324 = vmul.f32 %v402, %v2315
        %v2325 = vmul.f32 %v403, %v2315
        %v2326 = vmul.f32 %v404, %v2315
        %v2327 = vmul.f32 %v405, %v2315
        %s2328 = sld [smem:[#allocation5 + $0xd]]
        %v2329 = vstv %s2328
        %v2330 = vadd.f32 %v2316, %v2329
        %v2331 = vadd.f32 %v2317, %v2329
        %v2332 = vadd.f32 %v2318, %v2329
        %v2333 = vadd.f32 %v2319, %v2329
        %v2334 = vadd.f32 %v2320, %v2329
        %v2335 = vadd.f32 %v2321, %v2329
        %v2336 = vadd.f32 %v2322, %v2329
        %v2337 = vadd.f32 %v2323, %v2329
        %v2338 = vadd.f32 %v2324, %v2329
        %v2339 = vadd.f32 %v2325, %v2329
        %v2340 = vadd.f32 %v2326, %v2329
        %v2341 = vadd.f32 %v2327, %v2329
        %s2342 = sld [smem:[#allocation3 + $0x8d]]
        %v2343 = vstv %s2342
        %v2344 = vmul.f32 %v406, %v2343
        %v2345 = vmul.f32 %v407, %v2343
        %v2346 = vmul.f32 %v408, %v2343
        %v2347 = vmul.f32 %v409, %v2343
        %v2348 = vmul.f32 %v410, %v2343
        %v2349 = vmul.f32 %v411, %v2343
        %v2350 = vmul.f32 %v412, %v2343
        %v2351 = vmul.f32 %v413, %v2343
        %v2352 = vmul.f32 %v414, %v2343
        %v2353 = vmul.f32 %v415, %v2343
        %v2354 = vmul.f32 %v416, %v2343
        %v2355 = vmul.f32 %v417, %v2343
        %v2356 = vadd.f32 %v2330, %v2344
        %v2357 = vadd.f32 %v2331, %v2345
        %v2358 = vadd.f32 %v2332, %v2346
        %v2359 = vadd.f32 %v2333, %v2347
        %v2360 = vadd.f32 %v2334, %v2348
        %v2361 = vadd.f32 %v2335, %v2349
        %v2362 = vadd.f32 %v2336, %v2350
        %v2363 = vadd.f32 %v2337, %v2351
        %v2364 = vadd.f32 %v2338, %v2352
        %v2365 = vadd.f32 %v2339, %v2353
        %v2366 = vadd.f32 %v2340, %v2354
        %v2367 = vadd.f32 %v2341, %v2355
        %s2368 = sld [smem:[#allocation3 + $0x10d]]
        %v2369 = vstv %s2368
        %v2370 = vmul.f32 %v418, %v2369
        %v2371 = vmul.f32 %v419, %v2369
        %v2372 = vmul.f32 %v420, %v2369
        %v2373 = vmul.f32 %v421, %v2369
        %v2374 = vmul.f32 %v422, %v2369
        %v2375 = vmul.f32 %v423, %v2369
        %v2376 = vmul.f32 %v424, %v2369
        %v2377 = vmul.f32 %v425, %v2369
        %v2378 = vmul.f32 %v426, %v2369
        %v2379 = vmul.f32 %v427, %v2369
        %v2380 = vmul.f32 %v428, %v2369
        %v2381 = vmul.f32 %v429, %v2369
        %v2382 = vadd.f32 %v2356, %v2370
        %v2383 = vadd.f32 %v2357, %v2371
        %v2384 = vadd.f32 %v2358, %v2372
        %v2385 = vadd.f32 %v2359, %v2373
        %v2386 = vadd.f32 %v2360, %v2374
        %v2387 = vadd.f32 %v2361, %v2375
        %v2388 = vadd.f32 %v2362, %v2376
        %v2389 = vadd.f32 %v2363, %v2377
        %v2390 = vadd.f32 %v2364, %v2378
        %v2391 = vadd.f32 %v2365, %v2379
        %v2392 = vadd.f32 %v2366, %v2380
        %v2393 = vadd.f32 %v2367, %v2381
        %s2394 = sld [smem:[#allocation3 + $0x18d]]
        %v2395 = vstv %s2394
        %v2396 = vmul.f32 %v430, %v2395
        %v2397 = vmul.f32 %v431, %v2395
        %v2398 = vmul.f32 %v432, %v2395
        %v2399 = vmul.f32 %v433, %v2395
        %v2400 = vmul.f32 %v434, %v2395
        %v2401 = vmul.f32 %v435, %v2395
        %v2402 = vmul.f32 %v436, %v2395
        %v2403 = vmul.f32 %v437, %v2395
        %v2404 = vmul.f32 %v438, %v2395
        %v2405 = vmul.f32 %v439, %v2395
        %v2406 = vmul.f32 %v440, %v2395
        %v2407 = vmul.f32 %v441, %v2395
        %v2408 = vadd.f32 %v2382, %v2396
        %v2409 = vadd.f32 %v2383, %v2397
        %v2410 = vadd.f32 %v2384, %v2398
        %v2411 = vadd.f32 %v2385, %v2399
        %v2412 = vadd.f32 %v2386, %v2400
        %v2413 = vadd.f32 %v2387, %v2401
        %v2414 = vadd.f32 %v2388, %v2402
        %v2415 = vadd.f32 %v2389, %v2403
        %v2416 = vadd.f32 %v2390, %v2404
        %v2417 = vadd.f32 %v2391, %v2405
        %v2418 = vadd.f32 %v2392, %v2406
        %v2419 = vadd.f32 %v2393, %v2407
        %v2420 = vmax.f32 %v2408, 0.0
        %v2421 = vmax.f32 %v2409, 0.0
        %v2422 = vmax.f32 %v2410, 0.0
        %v2423 = vmax.f32 %v2411, 0.0
        %v2424 = vmax.f32 %v2412, 0.0
        %v2425 = vmax.f32 %v2413, 0.0
        %v2426 = vmax.f32 %v2414, 0.0
        %v2427 = vmax.f32 %v2415, 0.0
        %v2428 = vmax.f32 %v2416, 0.0
        %v2429 = vmax.f32 %v2417, 0.0
        %v2430 = vmax.f32 %v2418, 0.0
        %v2431 = vmax.f32 %v2419, 0.0
        %s2432 = sld [smem:[#allocation7 + $0xd]]
        %v2433 = vstv %s2432
        %v2434 = vmul.f32 %v2420, %v2433
        %v2435 = vmul.f32 %v2421, %v2433
        %v2436 = vmul.f32 %v2422, %v2433
        %v2437 = vmul.f32 %v2423, %v2433
        %v2438 = vmul.f32 %v2424, %v2433
        %v2439 = vmul.f32 %v2425, %v2433
        %v2440 = vmul.f32 %v2426, %v2433
        %v2441 = vmul.f32 %v2427, %v2433
        %v2442 = vmul.f32 %v2428, %v2433
        %v2443 = vmul.f32 %v2429, %v2433
        %v2444 = vmul.f32 %v2430, %v2433
        %v2445 = vmul.f32 %v2431, %v2433
        %v2446 = vadd.f32 %v2302, %v2434
        %v2447 = vadd.f32 %v2303, %v2435
        %v2448 = vadd.f32 %v2304, %v2436
        %v2449 = vadd.f32 %v2305, %v2437
        %v2450 = vadd.f32 %v2306, %v2438
        %v2451 = vadd.f32 %v2307, %v2439
        %v2452 = vadd.f32 %v2308, %v2440
        %v2453 = vadd.f32 %v2309, %v2441
        %v2454 = vadd.f32 %v2310, %v2442
        %v2455 = vadd.f32 %v2311, %v2443
        %v2456 = vadd.f32 %v2312, %v2444
        %v2457 = vadd.f32 %v2313, %v2445
        %s2458 = sld [smem:[#allocation3 + $0xe]]
        %v2459 = vstv %s2458
        %v2460 = vmul.f32 %v394, %v2459
        %v2461 = vmul.f32 %v395, %v2459
        %v2462 = vmul.f32 %v396, %v2459
        %v2463 = vmul.f32 %v397, %v2459
        %v2464 = vmul.f32 %v398, %v2459
        %v2465 = vmul.f32 %v399, %v2459
        %v2466 = vmul.f32 %v400, %v2459
        %v2467 = vmul.f32 %v401, %v2459
        %v2468 = vmul.f32 %v402, %v2459
        %v2469 = vmul.f32 %v403, %v2459
        %v2470 = vmul.f32 %v404, %v2459
        %v2471 = vmul.f32 %v405, %v2459
        %s2472 = sld [smem:[#allocation5 + $0xe]]
        %v2473 = vstv %s2472
        %v2474 = vadd.f32 %v2460, %v2473
        %v2475 = vadd.f32 %v2461, %v2473
        %v2476 = vadd.f32 %v2462, %v2473
        %v2477 = vadd.f32 %v2463, %v2473
        %v2478 = vadd.f32 %v2464, %v2473
        %v2479 = vadd.f32 %v2465, %v2473
        %v2480 = vadd.f32 %v2466, %v2473
        %v2481 = vadd.f32 %v2467, %v2473
        %v2482 = vadd.f32 %v2468, %v2473
        %v2483 = vadd.f32 %v2469, %v2473
        %v2484 = vadd.f32 %v2470, %v2473
        %v2485 = vadd.f32 %v2471, %v2473
        %s2486 = sld [smem:[#allocation3 + $0x8e]]
        %v2487 = vstv %s2486
        %v2488 = vmul.f32 %v406, %v2487
        %v2489 = vmul.f32 %v407, %v2487
        %v2490 = vmul.f32 %v408, %v2487
        %v2491 = vmul.f32 %v409, %v2487
        %v2492 = vmul.f32 %v410, %v2487
        %v2493 = vmul.f32 %v411, %v2487
        %v2494 = vmul.f32 %v412, %v2487
        %v2495 = vmul.f32 %v413, %v2487
        %v2496 = vmul.f32 %v414, %v2487
        %v2497 = vmul.f32 %v415, %v2487
        %v2498 = vmul.f32 %v416, %v2487
        %v2499 = vmul.f32 %v417, %v2487
        %v2500 = vadd.f32 %v2474, %v2488
        %v2501 = vadd.f32 %v2475, %v2489
        %v2502 = vadd.f32 %v2476, %v2490
        %v2503 = vadd.f32 %v2477, %v2491
        %v2504 = vadd.f32 %v2478, %v2492
        %v2505 = vadd.f32 %v2479, %v2493
        %v2506 = vadd.f32 %v2480, %v2494
        %v2507 = vadd.f32 %v2481, %v2495
        %v2508 = vadd.f32 %v2482, %v2496
        %v2509 = vadd.f32 %v2483, %v2497
        %v2510 = vadd.f32 %v2484, %v2498
        %v2511 = vadd.f32 %v2485, %v2499
        %s2512 = sld [smem:[#allocation3 + $0x10e]]
        %v2513 = vstv %s2512
        %v2514 = vmul.f32 %v418, %v2513
        %v2515 = vmul.f32 %v419, %v2513
        %v2516 = vmul.f32 %v420, %v2513
        %v2517 = vmul.f32 %v421, %v2513
        %v2518 = vmul.f32 %v422, %v2513
        %v2519 = vmul.f32 %v423, %v2513
        %v2520 = vmul.f32 %v424, %v2513
        %v2521 = vmul.f32 %v425, %v2513
        %v2522 = vmul.f32 %v426, %v2513
        %v2523 = vmul.f32 %v427, %v2513
        %v2524 = vmul.f32 %v428, %v2513
        %v2525 = vmul.f32 %v429, %v2513
        %v2526 = vadd.f32 %v2500, %v2514
        %v2527 = vadd.f32 %v2501, %v2515
        %v2528 = vadd.f32 %v2502, %v2516
        %v2529 = vadd.f32 %v2503, %v2517
        %v2530 = vadd.f32 %v2504, %v2518
        %v2531 = vadd.f32 %v2505, %v2519
        %v2532 = vadd.f32 %v2506, %v2520
        %v2533 = vadd.f32 %v2507, %v2521
        %v2534 = vadd.f32 %v2508, %v2522
        %v2535 = vadd.f32 %v2509, %v2523
        %v2536 = vadd.f32 %v2510, %v2524
        %v2537 = vadd.f32 %v2511, %v2525
        %s2538 = sld [smem:[#allocation3 + $0x18e]]
        %v2539 = vstv %s2538
        %v2540 = vmul.f32 %v430, %v2539
        %v2541 = vmul.f32 %v431, %v2539
        %v2542 = vmul.f32 %v432, %v2539
        %v2543 = vmul.f32 %v433, %v2539
        %v2544 = vmul.f32 %v434, %v2539
        %v2545 = vmul.f32 %v435, %v2539
        %v2546 = vmul.f32 %v436, %v2539
        %v2547 = vmul.f32 %v437, %v2539
        %v2548 = vmul.f32 %v438, %v2539
        %v2549 = vmul.f32 %v439, %v2539
        %v2550 = vmul.f32 %v440, %v2539
        %v2551 = vmul.f32 %v441, %v2539
        %v2552 = vadd.f32 %v2526, %v2540
        %v2553 = vadd.f32 %v2527, %v2541
        %v2554 = vadd.f32 %v2528, %v2542
        %v2555 = vadd.f32 %v2529, %v2543
        %v2556 = vadd.f32 %v2530, %v2544
        %v2557 = vadd.f32 %v2531, %v2545
        %v2558 = vadd.f32 %v2532, %v2546
        %v2559 = vadd.f32 %v2533, %v2547
        %v2560 = vadd.f32 %v2534, %v2548
        %v2561 = vadd.f32 %v2535, %v2549
        %v2562 = vadd.f32 %v2536, %v2550
        %v2563 = vadd.f32 %v2537, %v2551
        %v2564 = vmax.f32 %v2552, 0.0
        %v2565 = vmax.f32 %v2553, 0.0
        %v2566 = vmax.f32 %v2554, 0.0
        %v2567 = vmax.f32 %v2555, 0.0
        %v2568 = vmax.f32 %v2556, 0.0
        %v2569 = vmax.f32 %v2557, 0.0
        %v2570 = vmax.f32 %v2558, 0.0
        %v2571 = vmax.f32 %v2559, 0.0
        %v2572 = vmax.f32 %v2560, 0.0
        %v2573 = vmax.f32 %v2561, 0.0
        %v2574 = vmax.f32 %v2562, 0.0
        %v2575 = vmax.f32 %v2563, 0.0
        %s2576 = sld [smem:[#allocation7 + $0xe]]
        %v2577 = vstv %s2576
        %v2578 = vmul.f32 %v2564, %v2577
        %v2579 = vmul.f32 %v2565, %v2577
        %v2580 = vmul.f32 %v2566, %v2577
        %v2581 = vmul.f32 %v2567, %v2577
        %v2582 = vmul.f32 %v2568, %v2577
        %v2583 = vmul.f32 %v2569, %v2577
        %v2584 = vmul.f32 %v2570, %v2577
        %v2585 = vmul.f32 %v2571, %v2577
        %v2586 = vmul.f32 %v2572, %v2577
        %v2587 = vmul.f32 %v2573, %v2577
        %v2588 = vmul.f32 %v2574, %v2577
        %v2589 = vmul.f32 %v2575, %v2577
        %v2590 = vadd.f32 %v2446, %v2578
        %v2591 = vadd.f32 %v2447, %v2579
        %v2592 = vadd.f32 %v2448, %v2580
        %v2593 = vadd.f32 %v2449, %v2581
        %v2594 = vadd.f32 %v2450, %v2582
        %v2595 = vadd.f32 %v2451, %v2583
        %v2596 = vadd.f32 %v2452, %v2584
        %v2597 = vadd.f32 %v2453, %v2585
        %v2598 = vadd.f32 %v2454, %v2586
        %v2599 = vadd.f32 %v2455, %v2587
        %v2600 = vadd.f32 %v2456, %v2588
        %v2601 = vadd.f32 %v2457, %v2589
        %s2602 = sld [smem:[#allocation3 + $0xf]]
        %v2603 = vstv %s2602
        %v2604 = vmul.f32 %v394, %v2603
        %v2605 = vmul.f32 %v395, %v2603
        %v2606 = vmul.f32 %v396, %v2603
        %v2607 = vmul.f32 %v397, %v2603
        %v2608 = vmul.f32 %v398, %v2603
        %v2609 = vmul.f32 %v399, %v2603
        %v2610 = vmul.f32 %v400, %v2603
        %v2611 = vmul.f32 %v401, %v2603
        %v2612 = vmul.f32 %v402, %v2603
        %v2613 = vmul.f32 %v403, %v2603
        %v2614 = vmul.f32 %v404, %v2603
        %v2615 = vmul.f32 %v405, %v2603
        %s2616 = sld [smem:[#allocation5 + $0xf]]
        %v2617 = vstv %s2616
        %v2618 = vadd.f32 %v2604, %v2617
        %v2619 = vadd.f32 %v2605, %v2617
        %v2620 = vadd.f32 %v2606, %v2617
        %v2621 = vadd.f32 %v2607, %v2617
        %v2622 = vadd.f32 %v2608, %v2617
        %v2623 = vadd.f32 %v2609, %v2617
        %v2624 = vadd.f32 %v2610, %v2617
        %v2625 = vadd.f32 %v2611, %v2617
        %v2626 = vadd.f32 %v2612, %v2617
        %v2627 = vadd.f32 %v2613, %v2617
        %v2628 = vadd.f32 %v2614, %v2617
        %v2629 = vadd.f32 %v2615, %v2617
        %s2630 = sld [smem:[#allocation3 + $0x8f]]
        %v2631 = vstv %s2630
        %v2632 = vmul.f32 %v406, %v2631
        %v2633 = vmul.f32 %v407, %v2631
        %v2634 = vmul.f32 %v408, %v2631
        %v2635 = vmul.f32 %v409, %v2631
        %v2636 = vmul.f32 %v410, %v2631
        %v2637 = vmul.f32 %v411, %v2631
        %v2638 = vmul.f32 %v412, %v2631
        %v2639 = vmul.f32 %v413, %v2631
        %v2640 = vmul.f32 %v414, %v2631
        %v2641 = vmul.f32 %v415, %v2631
        %v2642 = vmul.f32 %v416, %v2631
        %v2643 = vmul.f32 %v417, %v2631
        %v2644 = vadd.f32 %v2618, %v2632
        %v2645 = vadd.f32 %v2619, %v2633
        %v2646 = vadd.f32 %v2620, %v2634
        %v2647 = vadd.f32 %v2621, %v2635
        %v2648 = vadd.f32 %v2622, %v2636
        %v2649 = vadd.f32 %v2623, %v2637
        %v2650 = vadd.f32 %v2624, %v2638
        %v2651 = vadd.f32 %v2625, %v2639
        %v2652 = vadd.f32 %v2626, %v2640
        %v2653 = vadd.f32 %v2627, %v2641
        %v2654 = vadd.f32 %v2628, %v2642
        %v2655 = vadd.f32 %v2629, %v2643
        %s2656 = sld [smem:[#allocation3 + $0x10f]]
        %v2657 = vstv %s2656
        %v2658 = vmul.f32 %v418, %v2657
        %v2659 = vmul.f32 %v419, %v2657
        %v2660 = vmul.f32 %v420, %v2657
        %v2661 = vmul.f32 %v421, %v2657
        %v2662 = vmul.f32 %v422, %v2657
        %v2663 = vmul.f32 %v423, %v2657
        %v2664 = vmul.f32 %v424, %v2657
        %v2665 = vmul.f32 %v425, %v2657
        %v2666 = vmul.f32 %v426, %v2657
        %v2667 = vmul.f32 %v427, %v2657
        %v2668 = vmul.f32 %v428, %v2657
        %v2669 = vmul.f32 %v429, %v2657
        %v2670 = vadd.f32 %v2644, %v2658
        %v2671 = vadd.f32 %v2645, %v2659
        %v2672 = vadd.f32 %v2646, %v2660
        %v2673 = vadd.f32 %v2647, %v2661
        %v2674 = vadd.f32 %v2648, %v2662
        %v2675 = vadd.f32 %v2649, %v2663
        %v2676 = vadd.f32 %v2650, %v2664
        %v2677 = vadd.f32 %v2651, %v2665
        %v2678 = vadd.f32 %v2652, %v2666
        %v2679 = vadd.f32 %v2653, %v2667
        %v2680 = vadd.f32 %v2654, %v2668
        %v2681 = vadd.f32 %v2655, %v2669
        %s2682 = sld [smem:[#allocation3 + $0x18f]]
        %v2683 = vstv %s2682
        %v2684 = vmul.f32 %v430, %v2683
        %v2685 = vmul.f32 %v431, %v2683
        %v2686 = vmul.f32 %v432, %v2683
        %v2687 = vmul.f32 %v433, %v2683
        %v2688 = vmul.f32 %v434, %v2683
        %v2689 = vmul.f32 %v435, %v2683
        %v2690 = vmul.f32 %v436, %v2683
        %v2691 = vmul.f32 %v437, %v2683
        %v2692 = vmul.f32 %v438, %v2683
        %v2693 = vmul.f32 %v439, %v2683
        %v2694 = vmul.f32 %v440, %v2683
        %v2695 = vmul.f32 %v441, %v2683
        %v2696 = vadd.f32 %v2670, %v2684
        %v2697 = vadd.f32 %v2671, %v2685
        %v2698 = vadd.f32 %v2672, %v2686
        %v2699 = vadd.f32 %v2673, %v2687
        %v2700 = vadd.f32 %v2674, %v2688
        %v2701 = vadd.f32 %v2675, %v2689
        %v2702 = vadd.f32 %v2676, %v2690
        %v2703 = vadd.f32 %v2677, %v2691
        %v2704 = vadd.f32 %v2678, %v2692
        %v2705 = vadd.f32 %v2679, %v2693
        %v2706 = vadd.f32 %v2680, %v2694
        %v2707 = vadd.f32 %v2681, %v2695
        %v2708 = vmax.f32 %v2696, 0.0
        %v2709 = vmax.f32 %v2697, 0.0
        %v2710 = vmax.f32 %v2698, 0.0
        %v2711 = vmax.f32 %v2699, 0.0
        %v2712 = vmax.f32 %v2700, 0.0
        %v2713 = vmax.f32 %v2701, 0.0
        %v2714 = vmax.f32 %v2702, 0.0
        %v2715 = vmax.f32 %v2703, 0.0
        %v2716 = vmax.f32 %v2704, 0.0
        %v2717 = vmax.f32 %v2705, 0.0
        %v2718 = vmax.f32 %v2706, 0.0
        %v2719 = vmax.f32 %v2707, 0.0
        %s2720 = sld [smem:[#allocation7 + $0xf]]
        %v2721 = vstv %s2720
        %v2722 = vmul.f32 %v2708, %v2721
        %v2723 = vmul.f32 %v2709, %v2721
        %v2724 = vmul.f32 %v2710, %v2721
        %v2725 = vmul.f32 %v2711, %v2721
        %v2726 = vmul.f32 %v2712, %v2721
        %v2727 = vmul.f32 %v2713, %v2721
        %v2728 = vmul.f32 %v2714, %v2721
        %v2729 = vmul.f32 %v2715, %v2721
        %v2730 = vmul.f32 %v2716, %v2721
        %v2731 = vmul.f32 %v2717, %v2721
        %v2732 = vmul.f32 %v2718, %v2721
        %v2733 = vmul.f32 %v2719, %v2721
        %v2734 = vadd.f32 %v2590, %v2722
        %v2735 = vadd.f32 %v2591, %v2723
        %v2736 = vadd.f32 %v2592, %v2724
        %v2737 = vadd.f32 %v2593, %v2725
        %v2738 = vadd.f32 %v2594, %v2726
        %v2739 = vadd.f32 %v2595, %v2727
        %v2740 = vadd.f32 %v2596, %v2728
        %v2741 = vadd.f32 %v2597, %v2729
        %v2742 = vadd.f32 %v2598, %v2730
        %v2743 = vadd.f32 %v2599, %v2731
        %v2744 = vadd.f32 %v2600, %v2732
        %v2745 = vadd.f32 %v2601, %v2733
        %s2746 = sld [smem:[#allocation3 + $0x10]]
        %v2747 = vstv %s2746
        %v2748 = vmul.f32 %v394, %v2747
        %v2749 = vmul.f32 %v395, %v2747
        %v2750 = vmul.f32 %v396, %v2747
        %v2751 = vmul.f32 %v397, %v2747
        %v2752 = vmul.f32 %v398, %v2747
        %v2753 = vmul.f32 %v399, %v2747
        %v2754 = vmul.f32 %v400, %v2747
        %v2755 = vmul.f32 %v401, %v2747
        %v2756 = vmul.f32 %v402, %v2747
        %v2757 = vmul.f32 %v403, %v2747
        %v2758 = vmul.f32 %v404, %v2747
        %v2759 = vmul.f32 %v405, %v2747
        %s2760 = sld [smem:[#allocation5 + $0x10]]
        %v2761 = vstv %s2760
        %v2762 = vadd.f32 %v2748, %v2761
        %v2763 = vadd.f32 %v2749, %v2761
        %v2764 = vadd.f32 %v2750, %v2761
        %v2765 = vadd.f32 %v2751, %v2761
        %v2766 = vadd.f32 %v2752, %v2761
        %v2767 = vadd.f32 %v2753, %v2761
        %v2768 = vadd.f32 %v2754, %v2761
        %v2769 = vadd.f32 %v2755, %v2761
        %v2770 = vadd.f32 %v2756, %v2761
        %v2771 = vadd.f32 %v2757, %v2761
        %v2772 = vadd.f32 %v2758, %v2761
        %v2773 = vadd.f32 %v2759, %v2761
        %s2774 = sld [smem:[#allocation3 + $0x90]]
        %v2775 = vstv %s2774
        %v2776 = vmul.f32 %v406, %v2775
        %v2777 = vmul.f32 %v407, %v2775
        %v2778 = vmul.f32 %v408, %v2775
        %v2779 = vmul.f32 %v409, %v2775
        %v2780 = vmul.f32 %v410, %v2775
        %v2781 = vmul.f32 %v411, %v2775
        %v2782 = vmul.f32 %v412, %v2775
        %v2783 = vmul.f32 %v413, %v2775
        %v2784 = vmul.f32 %v414, %v2775
        %v2785 = vmul.f32 %v415, %v2775
        %v2786 = vmul.f32 %v416, %v2775
        %v2787 = vmul.f32 %v417, %v2775
        %v2788 = vadd.f32 %v2762, %v2776
        %v2789 = vadd.f32 %v2763, %v2777
        %v2790 = vadd.f32 %v2764, %v2778
        %v2791 = vadd.f32 %v2765, %v2779
        %v2792 = vadd.f32 %v2766, %v2780
        %v2793 = vadd.f32 %v2767, %v2781
        %v2794 = vadd.f32 %v2768, %v2782
        %v2795 = vadd.f32 %v2769, %v2783
        %v2796 = vadd.f32 %v2770, %v2784
        %v2797 = vadd.f32 %v2771, %v2785
        %v2798 = vadd.f32 %v2772, %v2786
        %v2799 = vadd.f32 %v2773, %v2787
        %s2800 = sld [smem:[#allocation3 + $0x110]]
        %v2801 = vstv %s2800
        %v2802 = vmul.f32 %v418, %v2801
        %v2803 = vmul.f32 %v419, %v2801
        %v2804 = vmul.f32 %v420, %v2801
        %v2805 = vmul.f32 %v421, %v2801
        %v2806 = vmul.f32 %v422, %v2801
        %v2807 = vmul.f32 %v423, %v2801
        %v2808 = vmul.f32 %v424, %v2801
        %v2809 = vmul.f32 %v425, %v2801
        %v2810 = vmul.f32 %v426, %v2801
        %v2811 = vmul.f32 %v427, %v2801
        %v2812 = vmul.f32 %v428, %v2801
        %v2813 = vmul.f32 %v429, %v2801
        %v2814 = vadd.f32 %v2788, %v2802
        %v2815 = vadd.f32 %v2789, %v2803
        %v2816 = vadd.f32 %v2790, %v2804
        %v2817 = vadd.f32 %v2791, %v2805
        %v2818 = vadd.f32 %v2792, %v2806
        %v2819 = vadd.f32 %v2793, %v2807
        %v2820 = vadd.f32 %v2794, %v2808
        %v2821 = vadd.f32 %v2795, %v2809
        %v2822 = vadd.f32 %v2796, %v2810
        %v2823 = vadd.f32 %v2797, %v2811
        %v2824 = vadd.f32 %v2798, %v2812
        %v2825 = vadd.f32 %v2799, %v2813
        %s2826 = sld [smem:[#allocation3 + $0x190]]
        %v2827 = vstv %s2826
        %v2828 = vmul.f32 %v430, %v2827
        %v2829 = vmul.f32 %v431, %v2827
        %v2830 = vmul.f32 %v432, %v2827
        %v2831 = vmul.f32 %v433, %v2827
        %v2832 = vmul.f32 %v434, %v2827
        %v2833 = vmul.f32 %v435, %v2827
        %v2834 = vmul.f32 %v436, %v2827
        %v2835 = vmul.f32 %v437, %v2827
        %v2836 = vmul.f32 %v438, %v2827
        %v2837 = vmul.f32 %v439, %v2827
        %v2838 = vmul.f32 %v440, %v2827
        %v2839 = vmul.f32 %v441, %v2827
        %v2840 = vadd.f32 %v2814, %v2828
        %v2841 = vadd.f32 %v2815, %v2829
        %v2842 = vadd.f32 %v2816, %v2830
        %v2843 = vadd.f32 %v2817, %v2831
        %v2844 = vadd.f32 %v2818, %v2832
        %v2845 = vadd.f32 %v2819, %v2833
        %v2846 = vadd.f32 %v2820, %v2834
        %v2847 = vadd.f32 %v2821, %v2835
        %v2848 = vadd.f32 %v2822, %v2836
        %v2849 = vadd.f32 %v2823, %v2837
        %v2850 = vadd.f32 %v2824, %v2838
        %v2851 = vadd.f32 %v2825, %v2839
        %v2852 = vmax.f32 %v2840, 0.0
        %v2853 = vmax.f32 %v2841, 0.0
        %v2854 = vmax.f32 %v2842, 0.0
        %v2855 = vmax.f32 %v2843, 0.0
        %v2856 = vmax.f32 %v2844, 0.0
        %v2857 = vmax.f32 %v2845, 0.0
        %v2858 = vmax.f32 %v2846, 0.0
        %v2859 = vmax.f32 %v2847, 0.0
        %v2860 = vmax.f32 %v2848, 0.0
        %v2861 = vmax.f32 %v2849, 0.0
        %v2862 = vmax.f32 %v2850, 0.0
        %v2863 = vmax.f32 %v2851, 0.0
        %s2864 = sld [smem:[#allocation7 + $0x10]]
        %v2865 = vstv %s2864
        %v2866 = vmul.f32 %v2852, %v2865
        %v2867 = vmul.f32 %v2853, %v2865
        %v2868 = vmul.f32 %v2854, %v2865
        %v2869 = vmul.f32 %v2855, %v2865
        %v2870 = vmul.f32 %v2856, %v2865
        %v2871 = vmul.f32 %v2857, %v2865
        %v2872 = vmul.f32 %v2858, %v2865
        %v2873 = vmul.f32 %v2859, %v2865
        %v2874 = vmul.f32 %v2860, %v2865
        %v2875 = vmul.f32 %v2861, %v2865
        %v2876 = vmul.f32 %v2862, %v2865
        %v2877 = vmul.f32 %v2863, %v2865
        %v2878 = vadd.f32 %v2734, %v2866
        %v2879 = vadd.f32 %v2735, %v2867
        %v2880 = vadd.f32 %v2736, %v2868
        %v2881 = vadd.f32 %v2737, %v2869
        %v2882 = vadd.f32 %v2738, %v2870
        %v2883 = vadd.f32 %v2739, %v2871
        %v2884 = vadd.f32 %v2740, %v2872
        %v2885 = vadd.f32 %v2741, %v2873
        %v2886 = vadd.f32 %v2742, %v2874
        %v2887 = vadd.f32 %v2743, %v2875
        %v2888 = vadd.f32 %v2744, %v2876
        %v2889 = vadd.f32 %v2745, %v2877
        %s2890 = sld [smem:[#allocation3 + $0x11]]
        %v2891 = vstv %s2890
        %v2892 = vmul.f32 %v394, %v2891
        %v2893 = vmul.f32 %v395, %v2891
        %v2894 = vmul.f32 %v396, %v2891
        %v2895 = vmul.f32 %v397, %v2891
        %v2896 = vmul.f32 %v398, %v2891
        %v2897 = vmul.f32 %v399, %v2891
        %v2898 = vmul.f32 %v400, %v2891
        %v2899 = vmul.f32 %v401, %v2891
        %v2900 = vmul.f32 %v402, %v2891
        %v2901 = vmul.f32 %v403, %v2891
        %v2902 = vmul.f32 %v404, %v2891
        %v2903 = vmul.f32 %v405, %v2891
        %s2904 = sld [smem:[#allocation5 + $0x11]]
        %v2905 = vstv %s2904
        %v2906 = vadd.f32 %v2892, %v2905
        %v2907 = vadd.f32 %v2893, %v2905
        %v2908 = vadd.f32 %v2894, %v2905
        %v2909 = vadd.f32 %v2895, %v2905
        %v2910 = vadd.f32 %v2896, %v2905
        %v2911 = vadd.f32 %v2897, %v2905
        %v2912 = vadd.f32 %v2898, %v2905
        %v2913 = vadd.f32 %v2899, %v2905
        %v2914 = vadd.f32 %v2900, %v2905
        %v2915 = vadd.f32 %v2901, %v2905
        %v2916 = vadd.f32 %v2902, %v2905
        %v2917 = vadd.f32 %v2903, %v2905
        %s2918 = sld [smem:[#allocation3 + $0x91]]
        %v2919 = vstv %s2918
        %v2920 = vmul.f32 %v406, %v2919
        %v2921 = vmul.f32 %v407, %v2919
        %v2922 = vmul.f32 %v408, %v2919
        %v2923 = vmul.f32 %v409, %v2919
        %v2924 = vmul.f32 %v410, %v2919
        %v2925 = vmul.f32 %v411, %v2919
        %v2926 = vmul.f32 %v412, %v2919
        %v2927 = vmul.f32 %v413, %v2919
        %v2928 = vmul.f32 %v414, %v2919
        %v2929 = vmul.f32 %v415, %v2919
        %v2930 = vmul.f32 %v416, %v2919
        %v2931 = vmul.f32 %v417, %v2919
        %v2932 = vadd.f32 %v2906, %v2920
        %v2933 = vadd.f32 %v2907, %v2921
        %v2934 = vadd.f32 %v2908, %v2922
        %v2935 = vadd.f32 %v2909, %v2923
        %v2936 = vadd.f32 %v2910, %v2924
        %v2937 = vadd.f32 %v2911, %v2925
        %v2938 = vadd.f32 %v2912, %v2926
        %v2939 = vadd.f32 %v2913, %v2927
        %v2940 = vadd.f32 %v2914, %v2928
        %v2941 = vadd.f32 %v2915, %v2929
        %v2942 = vadd.f32 %v2916, %v2930
        %v2943 = vadd.f32 %v2917, %v2931
        %s2944 = sld [smem:[#allocation3 + $0x111]]
        %v2945 = vstv %s2944
        %v2946 = vmul.f32 %v418, %v2945
        %v2947 = vmul.f32 %v419, %v2945
        %v2948 = vmul.f32 %v420, %v2945
        %v2949 = vmul.f32 %v421, %v2945
        %v2950 = vmul.f32 %v422, %v2945
        %v2951 = vmul.f32 %v423, %v2945
        %v2952 = vmul.f32 %v424, %v2945
        %v2953 = vmul.f32 %v425, %v2945
        %v2954 = vmul.f32 %v426, %v2945
        %v2955 = vmul.f32 %v427, %v2945
        %v2956 = vmul.f32 %v428, %v2945
        %v2957 = vmul.f32 %v429, %v2945
        %v2958 = vadd.f32 %v2932, %v2946
        %v2959 = vadd.f32 %v2933, %v2947
        %v2960 = vadd.f32 %v2934, %v2948
        %v2961 = vadd.f32 %v2935, %v2949
        %v2962 = vadd.f32 %v2936, %v2950
        %v2963 = vadd.f32 %v2937, %v2951
        %v2964 = vadd.f32 %v2938, %v2952
        %v2965 = vadd.f32 %v2939, %v2953
        %v2966 = vadd.f32 %v2940, %v2954
        %v2967 = vadd.f32 %v2941, %v2955
        %v2968 = vadd.f32 %v2942, %v2956
        %v2969 = vadd.f32 %v2943, %v2957
        %s2970 = sld [smem:[#allocation3 + $0x191]]
        %v2971 = vstv %s2970
        %v2972 = vmul.f32 %v430, %v2971
        %v2973 = vmul.f32 %v431, %v2971
        %v2974 = vmul.f32 %v432, %v2971
        %v2975 = vmul.f32 %v433, %v2971
        %v2976 = vmul.f32 %v434, %v2971
        %v2977 = vmul.f32 %v435, %v2971
        %v2978 = vmul.f32 %v436, %v2971
        %v2979 = vmul.f32 %v437, %v2971
        %v2980 = vmul.f32 %v438, %v2971
        %v2981 = vmul.f32 %v439, %v2971
        %v2982 = vmul.f32 %v440, %v2971
        %v2983 = vmul.f32 %v441, %v2971
        %v2984 = vadd.f32 %v2958, %v2972
        %v2985 = vadd.f32 %v2959, %v2973
        %v2986 = vadd.f32 %v2960, %v2974
        %v2987 = vadd.f32 %v2961, %v2975
        %v2988 = vadd.f32 %v2962, %v2976
        %v2989 = vadd.f32 %v2963, %v2977
        %v2990 = vadd.f32 %v2964, %v2978
        %v2991 = vadd.f32 %v2965, %v2979
        %v2992 = vadd.f32 %v2966, %v2980
        %v2993 = vadd.f32 %v2967, %v2981
        %v2994 = vadd.f32 %v2968, %v2982
        %v2995 = vadd.f32 %v2969, %v2983
        %v2996 = vmax.f32 %v2984, 0.0
        %v2997 = vmax.f32 %v2985, 0.0
        %v2998 = vmax.f32 %v2986, 0.0
        %v2999 = vmax.f32 %v2987, 0.0
        %v3000 = vmax.f32 %v2988, 0.0
        %v3001 = vmax.f32 %v2989, 0.0
        %v3002 = vmax.f32 %v2990, 0.0
        %v3003 = vmax.f32 %v2991, 0.0
        %v3004 = vmax.f32 %v2992, 0.0
        %v3005 = vmax.f32 %v2993, 0.0
        %v3006 = vmax.f32 %v2994, 0.0
        %v3007 = vmax.f32 %v2995, 0.0
        %s3008 = sld [smem:[#allocation7 + $0x11]]
        %v3009 = vstv %s3008
        %v3010 = vmul.f32 %v2996, %v3009
        %v3011 = vmul.f32 %v2997, %v3009
        %v3012 = vmul.f32 %v2998, %v3009
        %v3013 = vmul.f32 %v2999, %v3009
        %v3014 = vmul.f32 %v3000, %v3009
        %v3015 = vmul.f32 %v3001, %v3009
        %v3016 = vmul.f32 %v3002, %v3009
        %v3017 = vmul.f32 %v3003, %v3009
        %v3018 = vmul.f32 %v3004, %v3009
        %v3019 = vmul.f32 %v3005, %v3009
        %v3020 = vmul.f32 %v3006, %v3009
        %v3021 = vmul.f32 %v3007, %v3009
        %v3022 = vadd.f32 %v2878, %v3010
        %v3023 = vadd.f32 %v2879, %v3011
        %v3024 = vadd.f32 %v2880, %v3012
        %v3025 = vadd.f32 %v2881, %v3013
        %v3026 = vadd.f32 %v2882, %v3014
        %v3027 = vadd.f32 %v2883, %v3015
        %v3028 = vadd.f32 %v2884, %v3016
        %v3029 = vadd.f32 %v2885, %v3017
        %v3030 = vadd.f32 %v2886, %v3018
        %v3031 = vadd.f32 %v2887, %v3019
        %v3032 = vadd.f32 %v2888, %v3020
        %v3033 = vadd.f32 %v2889, %v3021
        %s3034 = sld [smem:[#allocation3 + $0x12]]
        %v3035 = vstv %s3034
        %v3036 = vmul.f32 %v394, %v3035
        %v3037 = vmul.f32 %v395, %v3035
        %v3038 = vmul.f32 %v396, %v3035
        %v3039 = vmul.f32 %v397, %v3035
        %v3040 = vmul.f32 %v398, %v3035
        %v3041 = vmul.f32 %v399, %v3035
        %v3042 = vmul.f32 %v400, %v3035
        %v3043 = vmul.f32 %v401, %v3035
        %v3044 = vmul.f32 %v402, %v3035
        %v3045 = vmul.f32 %v403, %v3035
        %v3046 = vmul.f32 %v404, %v3035
        %v3047 = vmul.f32 %v405, %v3035
        %s3048 = sld [smem:[#allocation5 + $0x12]]
        %v3049 = vstv %s3048
        %v3050 = vadd.f32 %v3036, %v3049
        %v3051 = vadd.f32 %v3037, %v3049
        %v3052 = vadd.f32 %v3038, %v3049
        %v3053 = vadd.f32 %v3039, %v3049
        %v3054 = vadd.f32 %v3040, %v3049
        %v3055 = vadd.f32 %v3041, %v3049
        %v3056 = vadd.f32 %v3042, %v3049
        %v3057 = vadd.f32 %v3043, %v3049
        %v3058 = vadd.f32 %v3044, %v3049
        %v3059 = vadd.f32 %v3045, %v3049
        %v3060 = vadd.f32 %v3046, %v3049
        %v3061 = vadd.f32 %v3047, %v3049
        %s3062 = sld [smem:[#allocation3 + $0x92]]
        %v3063 = vstv %s3062
        %v3064 = vmul.f32 %v406, %v3063
        %v3065 = vmul.f32 %v407, %v3063
        %v3066 = vmul.f32 %v408, %v3063
        %v3067 = vmul.f32 %v409, %v3063
        %v3068 = vmul.f32 %v410, %v3063
        %v3069 = vmul.f32 %v411, %v3063
        %v3070 = vmul.f32 %v412, %v3063
        %v3071 = vmul.f32 %v413, %v3063
        %v3072 = vmul.f32 %v414, %v3063
        %v3073 = vmul.f32 %v415, %v3063
        %v3074 = vmul.f32 %v416, %v3063
        %v3075 = vmul.f32 %v417, %v3063
        %v3076 = vadd.f32 %v3050, %v3064
        %v3077 = vadd.f32 %v3051, %v3065
        %v3078 = vadd.f32 %v3052, %v3066
        %v3079 = vadd.f32 %v3053, %v3067
        %v3080 = vadd.f32 %v3054, %v3068
        %v3081 = vadd.f32 %v3055, %v3069
        %v3082 = vadd.f32 %v3056, %v3070
        %v3083 = vadd.f32 %v3057, %v3071
        %v3084 = vadd.f32 %v3058, %v3072
        %v3085 = vadd.f32 %v3059, %v3073
        %v3086 = vadd.f32 %v3060, %v3074
        %v3087 = vadd.f32 %v3061, %v3075
        %s3088 = sld [smem:[#allocation3 + $0x112]]
        %v3089 = vstv %s3088
        %v3090 = vmul.f32 %v418, %v3089
        %v3091 = vmul.f32 %v419, %v3089
        %v3092 = vmul.f32 %v420, %v3089
        %v3093 = vmul.f32 %v421, %v3089
        %v3094 = vmul.f32 %v422, %v3089
        %v3095 = vmul.f32 %v423, %v3089
        %v3096 = vmul.f32 %v424, %v3089
        %v3097 = vmul.f32 %v425, %v3089
        %v3098 = vmul.f32 %v426, %v3089
        %v3099 = vmul.f32 %v427, %v3089
        %v3100 = vmul.f32 %v428, %v3089
        %v3101 = vmul.f32 %v429, %v3089
        %v3102 = vadd.f32 %v3076, %v3090
        %v3103 = vadd.f32 %v3077, %v3091
        %v3104 = vadd.f32 %v3078, %v3092
        %v3105 = vadd.f32 %v3079, %v3093
        %v3106 = vadd.f32 %v3080, %v3094
        %v3107 = vadd.f32 %v3081, %v3095
        %v3108 = vadd.f32 %v3082, %v3096
        %v3109 = vadd.f32 %v3083, %v3097
        %v3110 = vadd.f32 %v3084, %v3098
        %v3111 = vadd.f32 %v3085, %v3099
        %v3112 = vadd.f32 %v3086, %v3100
        %v3113 = vadd.f32 %v3087, %v3101
        %s3114 = sld [smem:[#allocation3 + $0x192]]
        %v3115 = vstv %s3114
        %v3116 = vmul.f32 %v430, %v3115
        %v3117 = vmul.f32 %v431, %v3115
        %v3118 = vmul.f32 %v432, %v3115
        %v3119 = vmul.f32 %v433, %v3115
        %v3120 = vmul.f32 %v434, %v3115
        %v3121 = vmul.f32 %v435, %v3115
        %v3122 = vmul.f32 %v436, %v3115
        %v3123 = vmul.f32 %v437, %v3115
        %v3124 = vmul.f32 %v438, %v3115
        %v3125 = vmul.f32 %v439, %v3115
        %v3126 = vmul.f32 %v440, %v3115
        %v3127 = vmul.f32 %v441, %v3115
        %v3128 = vadd.f32 %v3102, %v3116
        %v3129 = vadd.f32 %v3103, %v3117
        %v3130 = vadd.f32 %v3104, %v3118
        %v3131 = vadd.f32 %v3105, %v3119
        %v3132 = vadd.f32 %v3106, %v3120
        %v3133 = vadd.f32 %v3107, %v3121
        %v3134 = vadd.f32 %v3108, %v3122
        %v3135 = vadd.f32 %v3109, %v3123
        %v3136 = vadd.f32 %v3110, %v3124
        %v3137 = vadd.f32 %v3111, %v3125
        %v3138 = vadd.f32 %v3112, %v3126
        %v3139 = vadd.f32 %v3113, %v3127
        %v3140 = vmax.f32 %v3128, 0.0
        %v3141 = vmax.f32 %v3129, 0.0
        %v3142 = vmax.f32 %v3130, 0.0
        %v3143 = vmax.f32 %v3131, 0.0
        %v3144 = vmax.f32 %v3132, 0.0
        %v3145 = vmax.f32 %v3133, 0.0
        %v3146 = vmax.f32 %v3134, 0.0
        %v3147 = vmax.f32 %v3135, 0.0
        %v3148 = vmax.f32 %v3136, 0.0
        %v3149 = vmax.f32 %v3137, 0.0
        %v3150 = vmax.f32 %v3138, 0.0
        %v3151 = vmax.f32 %v3139, 0.0
        %s3152 = sld [smem:[#allocation7 + $0x12]]
        %v3153 = vstv %s3152
        %v3154 = vmul.f32 %v3140, %v3153
        %v3155 = vmul.f32 %v3141, %v3153
        %v3156 = vmul.f32 %v3142, %v3153
        %v3157 = vmul.f32 %v3143, %v3153
        %v3158 = vmul.f32 %v3144, %v3153
        %v3159 = vmul.f32 %v3145, %v3153
        %v3160 = vmul.f32 %v3146, %v3153
        %v3161 = vmul.f32 %v3147, %v3153
        %v3162 = vmul.f32 %v3148, %v3153
        %v3163 = vmul.f32 %v3149, %v3153
        %v3164 = vmul.f32 %v3150, %v3153
        %v3165 = vmul.f32 %v3151, %v3153
        %v3166 = vadd.f32 %v3022, %v3154
        %v3167 = vadd.f32 %v3023, %v3155
        %v3168 = vadd.f32 %v3024, %v3156
        %v3169 = vadd.f32 %v3025, %v3157
        %v3170 = vadd.f32 %v3026, %v3158
        %v3171 = vadd.f32 %v3027, %v3159
        %v3172 = vadd.f32 %v3028, %v3160
        %v3173 = vadd.f32 %v3029, %v3161
        %v3174 = vadd.f32 %v3030, %v3162
        %v3175 = vadd.f32 %v3031, %v3163
        %v3176 = vadd.f32 %v3032, %v3164
        %v3177 = vadd.f32 %v3033, %v3165
        %s3178 = sld [smem:[#allocation3 + $0x13]]
        %v3179 = vstv %s3178
        %v3180 = vmul.f32 %v394, %v3179
        %v3181 = vmul.f32 %v395, %v3179
        %v3182 = vmul.f32 %v396, %v3179
        %v3183 = vmul.f32 %v397, %v3179
        %v3184 = vmul.f32 %v398, %v3179
        %v3185 = vmul.f32 %v399, %v3179
        %v3186 = vmul.f32 %v400, %v3179
        %v3187 = vmul.f32 %v401, %v3179
        %v3188 = vmul.f32 %v402, %v3179
        %v3189 = vmul.f32 %v403, %v3179
        %v3190 = vmul.f32 %v404, %v3179
        %v3191 = vmul.f32 %v405, %v3179
        %s3192 = sld [smem:[#allocation5 + $0x13]]
        %v3193 = vstv %s3192
        %v3194 = vadd.f32 %v3180, %v3193
        %v3195 = vadd.f32 %v3181, %v3193
        %v3196 = vadd.f32 %v3182, %v3193
        %v3197 = vadd.f32 %v3183, %v3193
        %v3198 = vadd.f32 %v3184, %v3193
        %v3199 = vadd.f32 %v3185, %v3193
        %v3200 = vadd.f32 %v3186, %v3193
        %v3201 = vadd.f32 %v3187, %v3193
        %v3202 = vadd.f32 %v3188, %v3193
        %v3203 = vadd.f32 %v3189, %v3193
        %v3204 = vadd.f32 %v3190, %v3193
        %v3205 = vadd.f32 %v3191, %v3193
        %s3206 = sld [smem:[#allocation3 + $0x93]]
        %v3207 = vstv %s3206
        %v3208 = vmul.f32 %v406, %v3207
        %v3209 = vmul.f32 %v407, %v3207
        %v3210 = vmul.f32 %v408, %v3207
        %v3211 = vmul.f32 %v409, %v3207
        %v3212 = vmul.f32 %v410, %v3207
        %v3213 = vmul.f32 %v411, %v3207
        %v3214 = vmul.f32 %v412, %v3207
        %v3215 = vmul.f32 %v413, %v3207
        %v3216 = vmul.f32 %v414, %v3207
        %v3217 = vmul.f32 %v415, %v3207
        %v3218 = vmul.f32 %v416, %v3207
        %v3219 = vmul.f32 %v417, %v3207
        %v3220 = vadd.f32 %v3194, %v3208
        %v3221 = vadd.f32 %v3195, %v3209
        %v3222 = vadd.f32 %v3196, %v3210
        %v3223 = vadd.f32 %v3197, %v3211
        %v3224 = vadd.f32 %v3198, %v3212
        %v3225 = vadd.f32 %v3199, %v3213
        %v3226 = vadd.f32 %v3200, %v3214
        %v3227 = vadd.f32 %v3201, %v3215
        %v3228 = vadd.f32 %v3202, %v3216
        %v3229 = vadd.f32 %v3203, %v3217
        %v3230 = vadd.f32 %v3204, %v3218
        %v3231 = vadd.f32 %v3205, %v3219
        %s3232 = sld [smem:[#allocation3 + $0x113]]
        %v3233 = vstv %s3232
        %v3234 = vmul.f32 %v418, %v3233
        %v3235 = vmul.f32 %v419, %v3233
        %v3236 = vmul.f32 %v420, %v3233
        %v3237 = vmul.f32 %v421, %v3233
        %v3238 = vmul.f32 %v422, %v3233
        %v3239 = vmul.f32 %v423, %v3233
        %v3240 = vmul.f32 %v424, %v3233
        %v3241 = vmul.f32 %v425, %v3233
        %v3242 = vmul.f32 %v426, %v3233
        %v3243 = vmul.f32 %v427, %v3233
        %v3244 = vmul.f32 %v428, %v3233
        %v3245 = vmul.f32 %v429, %v3233
        %v3246 = vadd.f32 %v3220, %v3234
        %v3247 = vadd.f32 %v3221, %v3235
        %v3248 = vadd.f32 %v3222, %v3236
        %v3249 = vadd.f32 %v3223, %v3237
        %v3250 = vadd.f32 %v3224, %v3238
        %v3251 = vadd.f32 %v3225, %v3239
        %v3252 = vadd.f32 %v3226, %v3240
        %v3253 = vadd.f32 %v3227, %v3241
        %v3254 = vadd.f32 %v3228, %v3242
        %v3255 = vadd.f32 %v3229, %v3243
        %v3256 = vadd.f32 %v3230, %v3244
        %v3257 = vadd.f32 %v3231, %v3245
        %s3258 = sld [smem:[#allocation3 + $0x193]]
        %v3259 = vstv %s3258
        %v3260 = vmul.f32 %v430, %v3259
        %v3261 = vmul.f32 %v431, %v3259
        %v3262 = vmul.f32 %v432, %v3259
        %v3263 = vmul.f32 %v433, %v3259
        %v3264 = vmul.f32 %v434, %v3259
        %v3265 = vmul.f32 %v435, %v3259
        %v3266 = vmul.f32 %v436, %v3259
        %v3267 = vmul.f32 %v437, %v3259
        %v3268 = vmul.f32 %v438, %v3259
        %v3269 = vmul.f32 %v439, %v3259
        %v3270 = vmul.f32 %v440, %v3259
        %v3271 = vmul.f32 %v441, %v3259
        %v3272 = vadd.f32 %v3246, %v3260
        %v3273 = vadd.f32 %v3247, %v3261
        %v3274 = vadd.f32 %v3248, %v3262
        %v3275 = vadd.f32 %v3249, %v3263
        %v3276 = vadd.f32 %v3250, %v3264
        %v3277 = vadd.f32 %v3251, %v3265
        %v3278 = vadd.f32 %v3252, %v3266
        %v3279 = vadd.f32 %v3253, %v3267
        %v3280 = vadd.f32 %v3254, %v3268
        %v3281 = vadd.f32 %v3255, %v3269
        %v3282 = vadd.f32 %v3256, %v3270
        %v3283 = vadd.f32 %v3257, %v3271
        %v3284 = vmax.f32 %v3272, 0.0
        %v3285 = vmax.f32 %v3273, 0.0
        %v3286 = vmax.f32 %v3274, 0.0
        %v3287 = vmax.f32 %v3275, 0.0
        %v3288 = vmax.f32 %v3276, 0.0
        %v3289 = vmax.f32 %v3277, 0.0
        %v3290 = vmax.f32 %v3278, 0.0
        %v3291 = vmax.f32 %v3279, 0.0
        %v3292 = vmax.f32 %v3280, 0.0
        %v3293 = vmax.f32 %v3281, 0.0
        %v3294 = vmax.f32 %v3282, 0.0
        %v3295 = vmax.f32 %v3283, 0.0
        %s3296 = sld [smem:[#allocation7 + $0x13]]
        %v3297 = vstv %s3296
        %v3298 = vmul.f32 %v3284, %v3297
        %v3299 = vmul.f32 %v3285, %v3297
        %v3300 = vmul.f32 %v3286, %v3297
        %v3301 = vmul.f32 %v3287, %v3297
        %v3302 = vmul.f32 %v3288, %v3297
        %v3303 = vmul.f32 %v3289, %v3297
        %v3304 = vmul.f32 %v3290, %v3297
        %v3305 = vmul.f32 %v3291, %v3297
        %v3306 = vmul.f32 %v3292, %v3297
        %v3307 = vmul.f32 %v3293, %v3297
        %v3308 = vmul.f32 %v3294, %v3297
        %v3309 = vmul.f32 %v3295, %v3297
        %v3310 = vadd.f32 %v3166, %v3298
        %v3311 = vadd.f32 %v3167, %v3299
        %v3312 = vadd.f32 %v3168, %v3300
        %v3313 = vadd.f32 %v3169, %v3301
        %v3314 = vadd.f32 %v3170, %v3302
        %v3315 = vadd.f32 %v3171, %v3303
        %v3316 = vadd.f32 %v3172, %v3304
        %v3317 = vadd.f32 %v3173, %v3305
        %v3318 = vadd.f32 %v3174, %v3306
        %v3319 = vadd.f32 %v3175, %v3307
        %v3320 = vadd.f32 %v3176, %v3308
        %v3321 = vadd.f32 %v3177, %v3309
        %s3322 = sld [smem:[#allocation3 + $0x14]]
        %v3323 = vstv %s3322
        %v3324 = vmul.f32 %v394, %v3323
        %v3325 = vmul.f32 %v395, %v3323
        %v3326 = vmul.f32 %v396, %v3323
        %v3327 = vmul.f32 %v397, %v3323
        %v3328 = vmul.f32 %v398, %v3323
        %v3329 = vmul.f32 %v399, %v3323
        %v3330 = vmul.f32 %v400, %v3323
        %v3331 = vmul.f32 %v401, %v3323
        %v3332 = vmul.f32 %v402, %v3323
        %v3333 = vmul.f32 %v403, %v3323
        %v3334 = vmul.f32 %v404, %v3323
        %v3335 = vmul.f32 %v405, %v3323
        %s3336 = sld [smem:[#allocation5 + $0x14]]
        %v3337 = vstv %s3336
        %v3338 = vadd.f32 %v3324, %v3337
        %v3339 = vadd.f32 %v3325, %v3337
        %v3340 = vadd.f32 %v3326, %v3337
        %v3341 = vadd.f32 %v3327, %v3337
        %v3342 = vadd.f32 %v3328, %v3337
        %v3343 = vadd.f32 %v3329, %v3337
        %v3344 = vadd.f32 %v3330, %v3337
        %v3345 = vadd.f32 %v3331, %v3337
        %v3346 = vadd.f32 %v3332, %v3337
        %v3347 = vadd.f32 %v3333, %v3337
        %v3348 = vadd.f32 %v3334, %v3337
        %v3349 = vadd.f32 %v3335, %v3337
        %s3350 = sld [smem:[#allocation3 + $0x94]]
        %v3351 = vstv %s3350
        %v3352 = vmul.f32 %v406, %v3351
        %v3353 = vmul.f32 %v407, %v3351
        %v3354 = vmul.f32 %v408, %v3351
        %v3355 = vmul.f32 %v409, %v3351
        %v3356 = vmul.f32 %v410, %v3351
        %v3357 = vmul.f32 %v411, %v3351
        %v3358 = vmul.f32 %v412, %v3351
        %v3359 = vmul.f32 %v413, %v3351
        %v3360 = vmul.f32 %v414, %v3351
        %v3361 = vmul.f32 %v415, %v3351
        %v3362 = vmul.f32 %v416, %v3351
        %v3363 = vmul.f32 %v417, %v3351
        %v3364 = vadd.f32 %v3338, %v3352
        %v3365 = vadd.f32 %v3339, %v3353
        %v3366 = vadd.f32 %v3340, %v3354
        %v3367 = vadd.f32 %v3341, %v3355
        %v3368 = vadd.f32 %v3342, %v3356
        %v3369 = vadd.f32 %v3343, %v3357
        %v3370 = vadd.f32 %v3344, %v3358
        %v3371 = vadd.f32 %v3345, %v3359
        %v3372 = vadd.f32 %v3346, %v3360
        %v3373 = vadd.f32 %v3347, %v3361
        %v3374 = vadd.f32 %v3348, %v3362
        %v3375 = vadd.f32 %v3349, %v3363
        %s3376 = sld [smem:[#allocation3 + $0x114]]
        %v3377 = vstv %s3376
        %v3378 = vmul.f32 %v418, %v3377
        %v3379 = vmul.f32 %v419, %v3377
        %v3380 = vmul.f32 %v420, %v3377
        %v3381 = vmul.f32 %v421, %v3377
        %v3382 = vmul.f32 %v422, %v3377
        %v3383 = vmul.f32 %v423, %v3377
        %v3384 = vmul.f32 %v424, %v3377
        %v3385 = vmul.f32 %v425, %v3377
        %v3386 = vmul.f32 %v426, %v3377
        %v3387 = vmul.f32 %v427, %v3377
        %v3388 = vmul.f32 %v428, %v3377
        %v3389 = vmul.f32 %v429, %v3377
        %v3390 = vadd.f32 %v3364, %v3378
        %v3391 = vadd.f32 %v3365, %v3379
        %v3392 = vadd.f32 %v3366, %v3380
        %v3393 = vadd.f32 %v3367, %v3381
        %v3394 = vadd.f32 %v3368, %v3382
        %v3395 = vadd.f32 %v3369, %v3383
        %v3396 = vadd.f32 %v3370, %v3384
        %v3397 = vadd.f32 %v3371, %v3385
        %v3398 = vadd.f32 %v3372, %v3386
        %v3399 = vadd.f32 %v3373, %v3387
        %v3400 = vadd.f32 %v3374, %v3388
        %v3401 = vadd.f32 %v3375, %v3389
        %s3402 = sld [smem:[#allocation3 + $0x194]]
        %v3403 = vstv %s3402
        %v3404 = vmul.f32 %v430, %v3403
        %v3405 = vmul.f32 %v431, %v3403
        %v3406 = vmul.f32 %v432, %v3403
        %v3407 = vmul.f32 %v433, %v3403
        %v3408 = vmul.f32 %v434, %v3403
        %v3409 = vmul.f32 %v435, %v3403
        %v3410 = vmul.f32 %v436, %v3403
        %v3411 = vmul.f32 %v437, %v3403
        %v3412 = vmul.f32 %v438, %v3403
        %v3413 = vmul.f32 %v439, %v3403
        %v3414 = vmul.f32 %v440, %v3403
        %v3415 = vmul.f32 %v441, %v3403
        %v3416 = vadd.f32 %v3390, %v3404
        %v3417 = vadd.f32 %v3391, %v3405
        %v3418 = vadd.f32 %v3392, %v3406
        %v3419 = vadd.f32 %v3393, %v3407
        %v3420 = vadd.f32 %v3394, %v3408
        %v3421 = vadd.f32 %v3395, %v3409
        %v3422 = vadd.f32 %v3396, %v3410
        %v3423 = vadd.f32 %v3397, %v3411
        %v3424 = vadd.f32 %v3398, %v3412
        %v3425 = vadd.f32 %v3399, %v3413
        %v3426 = vadd.f32 %v3400, %v3414
        %v3427 = vadd.f32 %v3401, %v3415
        %v3428 = vmax.f32 %v3416, 0.0
        %v3429 = vmax.f32 %v3417, 0.0
        %v3430 = vmax.f32 %v3418, 0.0
        %v3431 = vmax.f32 %v3419, 0.0
        %v3432 = vmax.f32 %v3420, 0.0
        %v3433 = vmax.f32 %v3421, 0.0
        %v3434 = vmax.f32 %v3422, 0.0
        %v3435 = vmax.f32 %v3423, 0.0
        %v3436 = vmax.f32 %v3424, 0.0
        %v3437 = vmax.f32 %v3425, 0.0
        %v3438 = vmax.f32 %v3426, 0.0
        %v3439 = vmax.f32 %v3427, 0.0
        %s3440 = sld [smem:[#allocation7 + $0x14]]
        %v3441 = vstv %s3440
        %v3442 = vmul.f32 %v3428, %v3441
        %v3443 = vmul.f32 %v3429, %v3441
        %v3444 = vmul.f32 %v3430, %v3441
        %v3445 = vmul.f32 %v3431, %v3441
        %v3446 = vmul.f32 %v3432, %v3441
        %v3447 = vmul.f32 %v3433, %v3441
        %v3448 = vmul.f32 %v3434, %v3441
        %v3449 = vmul.f32 %v3435, %v3441
        %v3450 = vmul.f32 %v3436, %v3441
        %v3451 = vmul.f32 %v3437, %v3441
        %v3452 = vmul.f32 %v3438, %v3441
        %v3453 = vmul.f32 %v3439, %v3441
        %v3454 = vadd.f32 %v3310, %v3442
        %v3455 = vadd.f32 %v3311, %v3443
        %v3456 = vadd.f32 %v3312, %v3444
        %v3457 = vadd.f32 %v3313, %v3445
        %v3458 = vadd.f32 %v3314, %v3446
        %v3459 = vadd.f32 %v3315, %v3447
        %v3460 = vadd.f32 %v3316, %v3448
        %v3461 = vadd.f32 %v3317, %v3449
        %v3462 = vadd.f32 %v3318, %v3450
        %v3463 = vadd.f32 %v3319, %v3451
        %v3464 = vadd.f32 %v3320, %v3452
        %v3465 = vadd.f32 %v3321, %v3453
        %s3466 = sld [smem:[#allocation3 + $0x15]]
        %v3467 = vstv %s3466
        %v3468 = vmul.f32 %v394, %v3467
        %v3469 = vmul.f32 %v395, %v3467
        %v3470 = vmul.f32 %v396, %v3467
        %v3471 = vmul.f32 %v397, %v3467
        %v3472 = vmul.f32 %v398, %v3467
        %v3473 = vmul.f32 %v399, %v3467
        %v3474 = vmul.f32 %v400, %v3467
        %v3475 = vmul.f32 %v401, %v3467
        %v3476 = vmul.f32 %v402, %v3467
        %v3477 = vmul.f32 %v403, %v3467
        %v3478 = vmul.f32 %v404, %v3467
        %v3479 = vmul.f32 %v405, %v3467
        %s3480 = sld [smem:[#allocation5 + $0x15]]
        %v3481 = vstv %s3480
        %v3482 = vadd.f32 %v3468, %v3481
        %v3483 = vadd.f32 %v3469, %v3481
        %v3484 = vadd.f32 %v3470, %v3481
        %v3485 = vadd.f32 %v3471, %v3481
        %v3486 = vadd.f32 %v3472, %v3481
        %v3487 = vadd.f32 %v3473, %v3481
        %v3488 = vadd.f32 %v3474, %v3481
        %v3489 = vadd.f32 %v3475, %v3481
        %v3490 = vadd.f32 %v3476, %v3481
        %v3491 = vadd.f32 %v3477, %v3481
        %v3492 = vadd.f32 %v3478, %v3481
        %v3493 = vadd.f32 %v3479, %v3481
        %s3494 = sld [smem:[#allocation3 + $0x95]]
        %v3495 = vstv %s3494
        %v3496 = vmul.f32 %v406, %v3495
        %v3497 = vmul.f32 %v407, %v3495
        %v3498 = vmul.f32 %v408, %v3495
        %v3499 = vmul.f32 %v409, %v3495
        %v3500 = vmul.f32 %v410, %v3495
        %v3501 = vmul.f32 %v411, %v3495
        %v3502 = vmul.f32 %v412, %v3495
        %v3503 = vmul.f32 %v413, %v3495
        %v3504 = vmul.f32 %v414, %v3495
        %v3505 = vmul.f32 %v415, %v3495
        %v3506 = vmul.f32 %v416, %v3495
        %v3507 = vmul.f32 %v417, %v3495
        %v3508 = vadd.f32 %v3482, %v3496
        %v3509 = vadd.f32 %v3483, %v3497
        %v3510 = vadd.f32 %v3484, %v3498
        %v3511 = vadd.f32 %v3485, %v3499
        %v3512 = vadd.f32 %v3486, %v3500
        %v3513 = vadd.f32 %v3487, %v3501
        %v3514 = vadd.f32 %v3488, %v3502
        %v3515 = vadd.f32 %v3489, %v3503
        %v3516 = vadd.f32 %v3490, %v3504
        %v3517 = vadd.f32 %v3491, %v3505
        %v3518 = vadd.f32 %v3492, %v3506
        %v3519 = vadd.f32 %v3493, %v3507
        %s3520 = sld [smem:[#allocation3 + $0x115]]
        %v3521 = vstv %s3520
        %v3522 = vmul.f32 %v418, %v3521
        %v3523 = vmul.f32 %v419, %v3521
        %v3524 = vmul.f32 %v420, %v3521
        %v3525 = vmul.f32 %v421, %v3521
        %v3526 = vmul.f32 %v422, %v3521
        %v3527 = vmul.f32 %v423, %v3521
        %v3528 = vmul.f32 %v424, %v3521
        %v3529 = vmul.f32 %v425, %v3521
        %v3530 = vmul.f32 %v426, %v3521
        %v3531 = vmul.f32 %v427, %v3521
        %v3532 = vmul.f32 %v428, %v3521
        %v3533 = vmul.f32 %v429, %v3521
        %v3534 = vadd.f32 %v3508, %v3522
        %v3535 = vadd.f32 %v3509, %v3523
        %v3536 = vadd.f32 %v3510, %v3524
        %v3537 = vadd.f32 %v3511, %v3525
        %v3538 = vadd.f32 %v3512, %v3526
        %v3539 = vadd.f32 %v3513, %v3527
        %v3540 = vadd.f32 %v3514, %v3528
        %v3541 = vadd.f32 %v3515, %v3529
        %v3542 = vadd.f32 %v3516, %v3530
        %v3543 = vadd.f32 %v3517, %v3531
        %v3544 = vadd.f32 %v3518, %v3532
        %v3545 = vadd.f32 %v3519, %v3533
        %s3546 = sld [smem:[#allocation3 + $0x195]]
        %v3547 = vstv %s3546
        %v3548 = vmul.f32 %v430, %v3547
        %v3549 = vmul.f32 %v431, %v3547
        %v3550 = vmul.f32 %v432, %v3547
        %v3551 = vmul.f32 %v433, %v3547
        %v3552 = vmul.f32 %v434, %v3547
        %v3553 = vmul.f32 %v435, %v3547
        %v3554 = vmul.f32 %v436, %v3547
        %v3555 = vmul.f32 %v437, %v3547
        %v3556 = vmul.f32 %v438, %v3547
        %v3557 = vmul.f32 %v439, %v3547
        %v3558 = vmul.f32 %v440, %v3547
        %v3559 = vmul.f32 %v441, %v3547
        %v3560 = vadd.f32 %v3534, %v3548
        %v3561 = vadd.f32 %v3535, %v3549
        %v3562 = vadd.f32 %v3536, %v3550
        %v3563 = vadd.f32 %v3537, %v3551
        %v3564 = vadd.f32 %v3538, %v3552
        %v3565 = vadd.f32 %v3539, %v3553
        %v3566 = vadd.f32 %v3540, %v3554
        %v3567 = vadd.f32 %v3541, %v3555
        %v3568 = vadd.f32 %v3542, %v3556
        %v3569 = vadd.f32 %v3543, %v3557
        %v3570 = vadd.f32 %v3544, %v3558
        %v3571 = vadd.f32 %v3545, %v3559
        %v3572 = vmax.f32 %v3560, 0.0
        %v3573 = vmax.f32 %v3561, 0.0
        %v3574 = vmax.f32 %v3562, 0.0
        %v3575 = vmax.f32 %v3563, 0.0
        %v3576 = vmax.f32 %v3564, 0.0
        %v3577 = vmax.f32 %v3565, 0.0
        %v3578 = vmax.f32 %v3566, 0.0
        %v3579 = vmax.f32 %v3567, 0.0
        %v3580 = vmax.f32 %v3568, 0.0
        %v3581 = vmax.f32 %v3569, 0.0
        %v3582 = vmax.f32 %v3570, 0.0
        %v3583 = vmax.f32 %v3571, 0.0
        %s3584 = sld [smem:[#allocation7 + $0x15]]
        %v3585 = vstv %s3584
        %v3586 = vmul.f32 %v3572, %v3585
        %v3587 = vmul.f32 %v3573, %v3585
        %v3588 = vmul.f32 %v3574, %v3585
        %v3589 = vmul.f32 %v3575, %v3585
        %v3590 = vmul.f32 %v3576, %v3585
        %v3591 = vmul.f32 %v3577, %v3585
        %v3592 = vmul.f32 %v3578, %v3585
        %v3593 = vmul.f32 %v3579, %v3585
        %v3594 = vmul.f32 %v3580, %v3585
        %v3595 = vmul.f32 %v3581, %v3585
        %v3596 = vmul.f32 %v3582, %v3585
        %v3597 = vmul.f32 %v3583, %v3585
        %v3598 = vadd.f32 %v3454, %v3586
        %v3599 = vadd.f32 %v3455, %v3587
        %v3600 = vadd.f32 %v3456, %v3588
        %v3601 = vadd.f32 %v3457, %v3589
        %v3602 = vadd.f32 %v3458, %v3590
        %v3603 = vadd.f32 %v3459, %v3591
        %v3604 = vadd.f32 %v3460, %v3592
        %v3605 = vadd.f32 %v3461, %v3593
        %v3606 = vadd.f32 %v3462, %v3594
        %v3607 = vadd.f32 %v3463, %v3595
        %v3608 = vadd.f32 %v3464, %v3596
        %v3609 = vadd.f32 %v3465, %v3597
        %s3610 = sld [smem:[#allocation3 + $0x16]]
        %v3611 = vstv %s3610
        %v3612 = vmul.f32 %v394, %v3611
        %v3613 = vmul.f32 %v395, %v3611
        %v3614 = vmul.f32 %v396, %v3611
        %v3615 = vmul.f32 %v397, %v3611
        %v3616 = vmul.f32 %v398, %v3611
        %v3617 = vmul.f32 %v399, %v3611
        %v3618 = vmul.f32 %v400, %v3611
        %v3619 = vmul.f32 %v401, %v3611
        %v3620 = vmul.f32 %v402, %v3611
        %v3621 = vmul.f32 %v403, %v3611
        %v3622 = vmul.f32 %v404, %v3611
        %v3623 = vmul.f32 %v405, %v3611
        %s3624 = sld [smem:[#allocation5 + $0x16]]
        %v3625 = vstv %s3624
        %v3626 = vadd.f32 %v3612, %v3625
        %v3627 = vadd.f32 %v3613, %v3625
        %v3628 = vadd.f32 %v3614, %v3625
        %v3629 = vadd.f32 %v3615, %v3625
        %v3630 = vadd.f32 %v3616, %v3625
        %v3631 = vadd.f32 %v3617, %v3625
        %v3632 = vadd.f32 %v3618, %v3625
        %v3633 = vadd.f32 %v3619, %v3625
        %v3634 = vadd.f32 %v3620, %v3625
        %v3635 = vadd.f32 %v3621, %v3625
        %v3636 = vadd.f32 %v3622, %v3625
        %v3637 = vadd.f32 %v3623, %v3625
        %s3638 = sld [smem:[#allocation3 + $0x96]]
        %v3639 = vstv %s3638
        %v3640 = vmul.f32 %v406, %v3639
        %v3641 = vmul.f32 %v407, %v3639
        %v3642 = vmul.f32 %v408, %v3639
        %v3643 = vmul.f32 %v409, %v3639
        %v3644 = vmul.f32 %v410, %v3639
        %v3645 = vmul.f32 %v411, %v3639
        %v3646 = vmul.f32 %v412, %v3639
        %v3647 = vmul.f32 %v413, %v3639
        %v3648 = vmul.f32 %v414, %v3639
        %v3649 = vmul.f32 %v415, %v3639
        %v3650 = vmul.f32 %v416, %v3639
        %v3651 = vmul.f32 %v417, %v3639
        %v3652 = vadd.f32 %v3626, %v3640
        %v3653 = vadd.f32 %v3627, %v3641
        %v3654 = vadd.f32 %v3628, %v3642
        %v3655 = vadd.f32 %v3629, %v3643
        %v3656 = vadd.f32 %v3630, %v3644
        %v3657 = vadd.f32 %v3631, %v3645
        %v3658 = vadd.f32 %v3632, %v3646
        %v3659 = vadd.f32 %v3633, %v3647
        %v3660 = vadd.f32 %v3634, %v3648
        %v3661 = vadd.f32 %v3635, %v3649
        %v3662 = vadd.f32 %v3636, %v3650
        %v3663 = vadd.f32 %v3637, %v3651
        %s3664 = sld [smem:[#allocation3 + $0x116]]
        %v3665 = vstv %s3664
        %v3666 = vmul.f32 %v418, %v3665
        %v3667 = vmul.f32 %v419, %v3665
        %v3668 = vmul.f32 %v420, %v3665
        %v3669 = vmul.f32 %v421, %v3665
        %v3670 = vmul.f32 %v422, %v3665
        %v3671 = vmul.f32 %v423, %v3665
        %v3672 = vmul.f32 %v424, %v3665
        %v3673 = vmul.f32 %v425, %v3665
        %v3674 = vmul.f32 %v426, %v3665
        %v3675 = vmul.f32 %v427, %v3665
        %v3676 = vmul.f32 %v428, %v3665
        %v3677 = vmul.f32 %v429, %v3665
        %v3678 = vadd.f32 %v3652, %v3666
        %v3679 = vadd.f32 %v3653, %v3667
        %v3680 = vadd.f32 %v3654, %v3668
        %v3681 = vadd.f32 %v3655, %v3669
        %v3682 = vadd.f32 %v3656, %v3670
        %v3683 = vadd.f32 %v3657, %v3671
        %v3684 = vadd.f32 %v3658, %v3672
        %v3685 = vadd.f32 %v3659, %v3673
        %v3686 = vadd.f32 %v3660, %v3674
        %v3687 = vadd.f32 %v3661, %v3675
        %v3688 = vadd.f32 %v3662, %v3676
        %v3689 = vadd.f32 %v3663, %v3677
        %s3690 = sld [smem:[#allocation3 + $0x196]]
        %v3691 = vstv %s3690
        %v3692 = vmul.f32 %v430, %v3691
        %v3693 = vmul.f32 %v431, %v3691
        %v3694 = vmul.f32 %v432, %v3691
        %v3695 = vmul.f32 %v433, %v3691
        %v3696 = vmul.f32 %v434, %v3691
        %v3697 = vmul.f32 %v435, %v3691
        %v3698 = vmul.f32 %v436, %v3691
        %v3699 = vmul.f32 %v437, %v3691
        %v3700 = vmul.f32 %v438, %v3691
        %v3701 = vmul.f32 %v439, %v3691
        %v3702 = vmul.f32 %v440, %v3691
        %v3703 = vmul.f32 %v441, %v3691
        %v3704 = vadd.f32 %v3678, %v3692
        %v3705 = vadd.f32 %v3679, %v3693
        %v3706 = vadd.f32 %v3680, %v3694
        %v3707 = vadd.f32 %v3681, %v3695
        %v3708 = vadd.f32 %v3682, %v3696
        %v3709 = vadd.f32 %v3683, %v3697
        %v3710 = vadd.f32 %v3684, %v3698
        %v3711 = vadd.f32 %v3685, %v3699
        %v3712 = vadd.f32 %v3686, %v3700
        %v3713 = vadd.f32 %v3687, %v3701
        %v3714 = vadd.f32 %v3688, %v3702
        %v3715 = vadd.f32 %v3689, %v3703
        %v3716 = vmax.f32 %v3704, 0.0
        %v3717 = vmax.f32 %v3705, 0.0
        %v3718 = vmax.f32 %v3706, 0.0
        %v3719 = vmax.f32 %v3707, 0.0
        %v3720 = vmax.f32 %v3708, 0.0
        %v3721 = vmax.f32 %v3709, 0.0
        %v3722 = vmax.f32 %v3710, 0.0
        %v3723 = vmax.f32 %v3711, 0.0
        %v3724 = vmax.f32 %v3712, 0.0
        %v3725 = vmax.f32 %v3713, 0.0
        %v3726 = vmax.f32 %v3714, 0.0
        %v3727 = vmax.f32 %v3715, 0.0
        %s3728 = sld [smem:[#allocation7 + $0x16]]
        %v3729 = vstv %s3728
        %v3730 = vmul.f32 %v3716, %v3729
        %v3731 = vmul.f32 %v3717, %v3729
        %v3732 = vmul.f32 %v3718, %v3729
        %v3733 = vmul.f32 %v3719, %v3729
        %v3734 = vmul.f32 %v3720, %v3729
        %v3735 = vmul.f32 %v3721, %v3729
        %v3736 = vmul.f32 %v3722, %v3729
        %v3737 = vmul.f32 %v3723, %v3729
        %v3738 = vmul.f32 %v3724, %v3729
        %v3739 = vmul.f32 %v3725, %v3729
        %v3740 = vmul.f32 %v3726, %v3729
        %v3741 = vmul.f32 %v3727, %v3729
        %v3742 = vadd.f32 %v3598, %v3730
        %v3743 = vadd.f32 %v3599, %v3731
        %v3744 = vadd.f32 %v3600, %v3732
        %v3745 = vadd.f32 %v3601, %v3733
        %v3746 = vadd.f32 %v3602, %v3734
        %v3747 = vadd.f32 %v3603, %v3735
        %v3748 = vadd.f32 %v3604, %v3736
        %v3749 = vadd.f32 %v3605, %v3737
        %v3750 = vadd.f32 %v3606, %v3738
        %v3751 = vadd.f32 %v3607, %v3739
        %v3752 = vadd.f32 %v3608, %v3740
        %v3753 = vadd.f32 %v3609, %v3741
        %s3754 = sld [smem:[#allocation3 + $0x17]]
        %v3755 = vstv %s3754
        %v3756 = vmul.f32 %v394, %v3755
        %v3757 = vmul.f32 %v395, %v3755
        %v3758 = vmul.f32 %v396, %v3755
        %v3759 = vmul.f32 %v397, %v3755
        %v3760 = vmul.f32 %v398, %v3755
        %v3761 = vmul.f32 %v399, %v3755
        %v3762 = vmul.f32 %v400, %v3755
        %v3763 = vmul.f32 %v401, %v3755
        %v3764 = vmul.f32 %v402, %v3755
        %v3765 = vmul.f32 %v403, %v3755
        %v3766 = vmul.f32 %v404, %v3755
        %v3767 = vmul.f32 %v405, %v3755
        %s3768 = sld [smem:[#allocation5 + $0x17]]
        %v3769 = vstv %s3768
        %v3770 = vadd.f32 %v3756, %v3769
        %v3771 = vadd.f32 %v3757, %v3769
        %v3772 = vadd.f32 %v3758, %v3769
        %v3773 = vadd.f32 %v3759, %v3769
        %v3774 = vadd.f32 %v3760, %v3769
        %v3775 = vadd.f32 %v3761, %v3769
        %v3776 = vadd.f32 %v3762, %v3769
        %v3777 = vadd.f32 %v3763, %v3769
        %v3778 = vadd.f32 %v3764, %v3769
        %v3779 = vadd.f32 %v3765, %v3769
        %v3780 = vadd.f32 %v3766, %v3769
        %v3781 = vadd.f32 %v3767, %v3769
        %s3782 = sld [smem:[#allocation3 + $0x97]]
        %v3783 = vstv %s3782
        %v3784 = vmul.f32 %v406, %v3783
        %v3785 = vmul.f32 %v407, %v3783
        %v3786 = vmul.f32 %v408, %v3783
        %v3787 = vmul.f32 %v409, %v3783
        %v3788 = vmul.f32 %v410, %v3783
        %v3789 = vmul.f32 %v411, %v3783
        %v3790 = vmul.f32 %v412, %v3783
        %v3791 = vmul.f32 %v413, %v3783
        %v3792 = vmul.f32 %v414, %v3783
        %v3793 = vmul.f32 %v415, %v3783
        %v3794 = vmul.f32 %v416, %v3783
        %v3795 = vmul.f32 %v417, %v3783
        %v3796 = vadd.f32 %v3770, %v3784
        %v3797 = vadd.f32 %v3771, %v3785
        %v3798 = vadd.f32 %v3772, %v3786
        %v3799 = vadd.f32 %v3773, %v3787
        %v3800 = vadd.f32 %v3774, %v3788
        %v3801 = vadd.f32 %v3775, %v3789
        %v3802 = vadd.f32 %v3776, %v3790
        %v3803 = vadd.f32 %v3777, %v3791
        %v3804 = vadd.f32 %v3778, %v3792
        %v3805 = vadd.f32 %v3779, %v3793
        %v3806 = vadd.f32 %v3780, %v3794
        %v3807 = vadd.f32 %v3781, %v3795
        %s3808 = sld [smem:[#allocation3 + $0x117]]
        %v3809 = vstv %s3808
        %v3810 = vmul.f32 %v418, %v3809
        %v3811 = vmul.f32 %v419, %v3809
        %v3812 = vmul.f32 %v420, %v3809
        %v3813 = vmul.f32 %v421, %v3809
        %v3814 = vmul.f32 %v422, %v3809
        %v3815 = vmul.f32 %v423, %v3809
        %v3816 = vmul.f32 %v424, %v3809
        %v3817 = vmul.f32 %v425, %v3809
        %v3818 = vmul.f32 %v426, %v3809
        %v3819 = vmul.f32 %v427, %v3809
        %v3820 = vmul.f32 %v428, %v3809
        %v3821 = vmul.f32 %v429, %v3809
        %v3822 = vadd.f32 %v3796, %v3810
        %v3823 = vadd.f32 %v3797, %v3811
        %v3824 = vadd.f32 %v3798, %v3812
        %v3825 = vadd.f32 %v3799, %v3813
        %v3826 = vadd.f32 %v3800, %v3814
        %v3827 = vadd.f32 %v3801, %v3815
        %v3828 = vadd.f32 %v3802, %v3816
        %v3829 = vadd.f32 %v3803, %v3817
        %v3830 = vadd.f32 %v3804, %v3818
        %v3831 = vadd.f32 %v3805, %v3819
        %v3832 = vadd.f32 %v3806, %v3820
        %v3833 = vadd.f32 %v3807, %v3821
        %s3834 = sld [smem:[#allocation3 + $0x197]]
        %v3835 = vstv %s3834
        %v3836 = vmul.f32 %v430, %v3835
        %v3837 = vmul.f32 %v431, %v3835
        %v3838 = vmul.f32 %v432, %v3835
        %v3839 = vmul.f32 %v433, %v3835
        %v3840 = vmul.f32 %v434, %v3835
        %v3841 = vmul.f32 %v435, %v3835
        %v3842 = vmul.f32 %v436, %v3835
        %v3843 = vmul.f32 %v437, %v3835
        %v3844 = vmul.f32 %v438, %v3835
        %v3845 = vmul.f32 %v439, %v3835
        %v3846 = vmul.f32 %v440, %v3835
        %v3847 = vmul.f32 %v441, %v3835
        %v3848 = vadd.f32 %v3822, %v3836
        %v3849 = vadd.f32 %v3823, %v3837
        %v3850 = vadd.f32 %v3824, %v3838
        %v3851 = vadd.f32 %v3825, %v3839
        %v3852 = vadd.f32 %v3826, %v3840
        %v3853 = vadd.f32 %v3827, %v3841
        %v3854 = vadd.f32 %v3828, %v3842
        %v3855 = vadd.f32 %v3829, %v3843
        %v3856 = vadd.f32 %v3830, %v3844
        %v3857 = vadd.f32 %v3831, %v3845
        %v3858 = vadd.f32 %v3832, %v3846
        %v3859 = vadd.f32 %v3833, %v3847
        %v3860 = vmax.f32 %v3848, 0.0
        %v3861 = vmax.f32 %v3849, 0.0
        %v3862 = vmax.f32 %v3850, 0.0
        %v3863 = vmax.f32 %v3851, 0.0
        %v3864 = vmax.f32 %v3852, 0.0
        %v3865 = vmax.f32 %v3853, 0.0
        %v3866 = vmax.f32 %v3854, 0.0
        %v3867 = vmax.f32 %v3855, 0.0
        %v3868 = vmax.f32 %v3856, 0.0
        %v3869 = vmax.f32 %v3857, 0.0
        %v3870 = vmax.f32 %v3858, 0.0
        %v3871 = vmax.f32 %v3859, 0.0
        %s3872 = sld [smem:[#allocation7 + $0x17]]
        %v3873 = vstv %s3872
        %v3874 = vmul.f32 %v3860, %v3873
        %v3875 = vmul.f32 %v3861, %v3873
        %v3876 = vmul.f32 %v3862, %v3873
        %v3877 = vmul.f32 %v3863, %v3873
        %v3878 = vmul.f32 %v3864, %v3873
        %v3879 = vmul.f32 %v3865, %v3873
        %v3880 = vmul.f32 %v3866, %v3873
        %v3881 = vmul.f32 %v3867, %v3873
        %v3882 = vmul.f32 %v3868, %v3873
        %v3883 = vmul.f32 %v3869, %v3873
        %v3884 = vmul.f32 %v3870, %v3873
        %v3885 = vmul.f32 %v3871, %v3873
        %v3886 = vadd.f32 %v3742, %v3874
        %v3887 = vadd.f32 %v3743, %v3875
        %v3888 = vadd.f32 %v3744, %v3876
        %v3889 = vadd.f32 %v3745, %v3877
        %v3890 = vadd.f32 %v3746, %v3878
        %v3891 = vadd.f32 %v3747, %v3879
        %v3892 = vadd.f32 %v3748, %v3880
        %v3893 = vadd.f32 %v3749, %v3881
        %v3894 = vadd.f32 %v3750, %v3882
        %v3895 = vadd.f32 %v3751, %v3883
        %v3896 = vadd.f32 %v3752, %v3884
        %v3897 = vadd.f32 %v3753, %v3885
        %s3898 = sld [smem:[#allocation3 + $0x18]]
        %v3899 = vstv %s3898
        %v3900 = vmul.f32 %v394, %v3899
        %v3901 = vmul.f32 %v395, %v3899
        %v3902 = vmul.f32 %v396, %v3899
        %v3903 = vmul.f32 %v397, %v3899
        %v3904 = vmul.f32 %v398, %v3899
        %v3905 = vmul.f32 %v399, %v3899
        %v3906 = vmul.f32 %v400, %v3899
        %v3907 = vmul.f32 %v401, %v3899
        %v3908 = vmul.f32 %v402, %v3899
        %v3909 = vmul.f32 %v403, %v3899
        %v3910 = vmul.f32 %v404, %v3899
        %v3911 = vmul.f32 %v405, %v3899
        %s3912 = sld [smem:[#allocation5 + $0x18]]
        %v3913 = vstv %s3912
        %v3914 = vadd.f32 %v3900, %v3913
        %v3915 = vadd.f32 %v3901, %v3913
        %v3916 = vadd.f32 %v3902, %v3913
        %v3917 = vadd.f32 %v3903, %v3913
        %v3918 = vadd.f32 %v3904, %v3913
        %v3919 = vadd.f32 %v3905, %v3913
        %v3920 = vadd.f32 %v3906, %v3913
        %v3921 = vadd.f32 %v3907, %v3913
        %v3922 = vadd.f32 %v3908, %v3913
        %v3923 = vadd.f32 %v3909, %v3913
        %v3924 = vadd.f32 %v3910, %v3913
        %v3925 = vadd.f32 %v3911, %v3913
        %s3926 = sld [smem:[#allocation3 + $0x98]]
        %v3927 = vstv %s3926
        %v3928 = vmul.f32 %v406, %v3927
        %v3929 = vmul.f32 %v407, %v3927
        %v3930 = vmul.f32 %v408, %v3927
        %v3931 = vmul.f32 %v409, %v3927
        %v3932 = vmul.f32 %v410, %v3927
        %v3933 = vmul.f32 %v411, %v3927
        %v3934 = vmul.f32 %v412, %v3927
        %v3935 = vmul.f32 %v413, %v3927
        %v3936 = vmul.f32 %v414, %v3927
        %v3937 = vmul.f32 %v415, %v3927
        %v3938 = vmul.f32 %v416, %v3927
        %v3939 = vmul.f32 %v417, %v3927
        %v3940 = vadd.f32 %v3914, %v3928
        %v3941 = vadd.f32 %v3915, %v3929
        %v3942 = vadd.f32 %v3916, %v3930
        %v3943 = vadd.f32 %v3917, %v3931
        %v3944 = vadd.f32 %v3918, %v3932
        %v3945 = vadd.f32 %v3919, %v3933
        %v3946 = vadd.f32 %v3920, %v3934
        %v3947 = vadd.f32 %v3921, %v3935
        %v3948 = vadd.f32 %v3922, %v3936
        %v3949 = vadd.f32 %v3923, %v3937
        %v3950 = vadd.f32 %v3924, %v3938
        %v3951 = vadd.f32 %v3925, %v3939
        %s3952 = sld [smem:[#allocation3 + $0x118]]
        %v3953 = vstv %s3952
        %v3954 = vmul.f32 %v418, %v3953
        %v3955 = vmul.f32 %v419, %v3953
        %v3956 = vmul.f32 %v420, %v3953
        %v3957 = vmul.f32 %v421, %v3953
        %v3958 = vmul.f32 %v422, %v3953
        %v3959 = vmul.f32 %v423, %v3953
        %v3960 = vmul.f32 %v424, %v3953
        %v3961 = vmul.f32 %v425, %v3953
        %v3962 = vmul.f32 %v426, %v3953
        %v3963 = vmul.f32 %v427, %v3953
        %v3964 = vmul.f32 %v428, %v3953
        %v3965 = vmul.f32 %v429, %v3953
        %v3966 = vadd.f32 %v3940, %v3954
        %v3967 = vadd.f32 %v3941, %v3955
        %v3968 = vadd.f32 %v3942, %v3956
        %v3969 = vadd.f32 %v3943, %v3957
        %v3970 = vadd.f32 %v3944, %v3958
        %v3971 = vadd.f32 %v3945, %v3959
        %v3972 = vadd.f32 %v3946, %v3960
        %v3973 = vadd.f32 %v3947, %v3961
        %v3974 = vadd.f32 %v3948, %v3962
        %v3975 = vadd.f32 %v3949, %v3963
        %v3976 = vadd.f32 %v3950, %v3964
        %v3977 = vadd.f32 %v3951, %v3965
        %s3978 = sld [smem:[#allocation3 + $0x198]]
        %v3979 = vstv %s3978
        %v3980 = vmul.f32 %v430, %v3979
        %v3981 = vmul.f32 %v431, %v3979
        %v3982 = vmul.f32 %v432, %v3979
        %v3983 = vmul.f32 %v433, %v3979
        %v3984 = vmul.f32 %v434, %v3979
        %v3985 = vmul.f32 %v435, %v3979
        %v3986 = vmul.f32 %v436, %v3979
        %v3987 = vmul.f32 %v437, %v3979
        %v3988 = vmul.f32 %v438, %v3979
        %v3989 = vmul.f32 %v439, %v3979
        %v3990 = vmul.f32 %v440, %v3979
        %v3991 = vmul.f32 %v441, %v3979
        %v3992 = vadd.f32 %v3966, %v3980
        %v3993 = vadd.f32 %v3967, %v3981
        %v3994 = vadd.f32 %v3968, %v3982
        %v3995 = vadd.f32 %v3969, %v3983
        %v3996 = vadd.f32 %v3970, %v3984
        %v3997 = vadd.f32 %v3971, %v3985
        %v3998 = vadd.f32 %v3972, %v3986
        %v3999 = vadd.f32 %v3973, %v3987
        %v4000 = vadd.f32 %v3974, %v3988
        %v4001 = vadd.f32 %v3975, %v3989
        %v4002 = vadd.f32 %v3976, %v3990
        %v4003 = vadd.f32 %v3977, %v3991
        %v4004 = vmax.f32 %v3992, 0.0
        %v4005 = vmax.f32 %v3993, 0.0
        %v4006 = vmax.f32 %v3994, 0.0
        %v4007 = vmax.f32 %v3995, 0.0
        %v4008 = vmax.f32 %v3996, 0.0
        %v4009 = vmax.f32 %v3997, 0.0
        %v4010 = vmax.f32 %v3998, 0.0
        %v4011 = vmax.f32 %v3999, 0.0
        %v4012 = vmax.f32 %v4000, 0.0
        %v4013 = vmax.f32 %v4001, 0.0
        %v4014 = vmax.f32 %v4002, 0.0
        %v4015 = vmax.f32 %v4003, 0.0
        %s4016 = sld [smem:[#allocation7 + $0x18]]
        %v4017 = vstv %s4016
        %v4018 = vmul.f32 %v4004, %v4017
        %v4019 = vmul.f32 %v4005, %v4017
        %v4020 = vmul.f32 %v4006, %v4017
        %v4021 = vmul.f32 %v4007, %v4017
        %v4022 = vmul.f32 %v4008, %v4017
        %v4023 = vmul.f32 %v4009, %v4017
        %v4024 = vmul.f32 %v4010, %v4017
        %v4025 = vmul.f32 %v4011, %v4017
        %v4026 = vmul.f32 %v4012, %v4017
        %v4027 = vmul.f32 %v4013, %v4017
        %v4028 = vmul.f32 %v4014, %v4017
        %v4029 = vmul.f32 %v4015, %v4017
        %v4030 = vadd.f32 %v3886, %v4018
        %v4031 = vadd.f32 %v3887, %v4019
        %v4032 = vadd.f32 %v3888, %v4020
        %v4033 = vadd.f32 %v3889, %v4021
        %v4034 = vadd.f32 %v3890, %v4022
        %v4035 = vadd.f32 %v3891, %v4023
        %v4036 = vadd.f32 %v3892, %v4024
        %v4037 = vadd.f32 %v3893, %v4025
        %v4038 = vadd.f32 %v3894, %v4026
        %v4039 = vadd.f32 %v3895, %v4027
        %v4040 = vadd.f32 %v3896, %v4028
        %v4041 = vadd.f32 %v3897, %v4029
        %s4042 = sld [smem:[#allocation3 + $0x19]]
        %v4043 = vstv %s4042
        %v4044 = vmul.f32 %v394, %v4043
        %v4045 = vmul.f32 %v395, %v4043
        %v4046 = vmul.f32 %v396, %v4043
        %v4047 = vmul.f32 %v397, %v4043
        %v4048 = vmul.f32 %v398, %v4043
        %v4049 = vmul.f32 %v399, %v4043
        %v4050 = vmul.f32 %v400, %v4043
        %v4051 = vmul.f32 %v401, %v4043
        %v4052 = vmul.f32 %v402, %v4043
        %v4053 = vmul.f32 %v403, %v4043
        %v4054 = vmul.f32 %v404, %v4043
        %v4055 = vmul.f32 %v405, %v4043
        %s4056 = sld [smem:[#allocation5 + $0x19]]
        %v4057 = vstv %s4056
        %v4058 = vadd.f32 %v4044, %v4057
        %v4059 = vadd.f32 %v4045, %v4057
        %v4060 = vadd.f32 %v4046, %v4057
        %v4061 = vadd.f32 %v4047, %v4057
        %v4062 = vadd.f32 %v4048, %v4057
        %v4063 = vadd.f32 %v4049, %v4057
        %v4064 = vadd.f32 %v4050, %v4057
        %v4065 = vadd.f32 %v4051, %v4057
        %v4066 = vadd.f32 %v4052, %v4057
        %v4067 = vadd.f32 %v4053, %v4057
        %v4068 = vadd.f32 %v4054, %v4057
        %v4069 = vadd.f32 %v4055, %v4057
        %s4070 = sld [smem:[#allocation3 + $0x99]]
        %v4071 = vstv %s4070
        %v4072 = vmul.f32 %v406, %v4071
        %v4073 = vmul.f32 %v407, %v4071
        %v4074 = vmul.f32 %v408, %v4071
        %v4075 = vmul.f32 %v409, %v4071
        %v4076 = vmul.f32 %v410, %v4071
        %v4077 = vmul.f32 %v411, %v4071
        %v4078 = vmul.f32 %v412, %v4071
        %v4079 = vmul.f32 %v413, %v4071
        %v4080 = vmul.f32 %v414, %v4071
        %v4081 = vmul.f32 %v415, %v4071
        %v4082 = vmul.f32 %v416, %v4071
        %v4083 = vmul.f32 %v417, %v4071
        %v4084 = vadd.f32 %v4058, %v4072
        %v4085 = vadd.f32 %v4059, %v4073
        %v4086 = vadd.f32 %v4060, %v4074
        %v4087 = vadd.f32 %v4061, %v4075
        %v4088 = vadd.f32 %v4062, %v4076
        %v4089 = vadd.f32 %v4063, %v4077
        %v4090 = vadd.f32 %v4064, %v4078
        %v4091 = vadd.f32 %v4065, %v4079
        %v4092 = vadd.f32 %v4066, %v4080
        %v4093 = vadd.f32 %v4067, %v4081
        %v4094 = vadd.f32 %v4068, %v4082
        %v4095 = vadd.f32 %v4069, %v4083
        %s4096 = sld [smem:[#allocation3 + $0x119]]
        %v4097 = vstv %s4096
        %v4098 = vmul.f32 %v418, %v4097
        %v4099 = vmul.f32 %v419, %v4097
        %v4100 = vmul.f32 %v420, %v4097
        %v4101 = vmul.f32 %v421, %v4097
        %v4102 = vmul.f32 %v422, %v4097
        %v4103 = vmul.f32 %v423, %v4097
        %v4104 = vmul.f32 %v424, %v4097
        %v4105 = vmul.f32 %v425, %v4097
        %v4106 = vmul.f32 %v426, %v4097
        %v4107 = vmul.f32 %v427, %v4097
        %v4108 = vmul.f32 %v428, %v4097
        %v4109 = vmul.f32 %v429, %v4097
        %v4110 = vadd.f32 %v4084, %v4098
        %v4111 = vadd.f32 %v4085, %v4099
        %v4112 = vadd.f32 %v4086, %v4100
        %v4113 = vadd.f32 %v4087, %v4101
        %v4114 = vadd.f32 %v4088, %v4102
        %v4115 = vadd.f32 %v4089, %v4103
        %v4116 = vadd.f32 %v4090, %v4104
        %v4117 = vadd.f32 %v4091, %v4105
        %v4118 = vadd.f32 %v4092, %v4106
        %v4119 = vadd.f32 %v4093, %v4107
        %v4120 = vadd.f32 %v4094, %v4108
        %v4121 = vadd.f32 %v4095, %v4109
        %s4122 = sld [smem:[#allocation3 + $0x199]]
        %v4123 = vstv %s4122
        %v4124 = vmul.f32 %v430, %v4123
        %v4125 = vmul.f32 %v431, %v4123
        %v4126 = vmul.f32 %v432, %v4123
        %v4127 = vmul.f32 %v433, %v4123
        %v4128 = vmul.f32 %v434, %v4123
        %v4129 = vmul.f32 %v435, %v4123
        %v4130 = vmul.f32 %v436, %v4123
        %v4131 = vmul.f32 %v437, %v4123
        %v4132 = vmul.f32 %v438, %v4123
        %v4133 = vmul.f32 %v439, %v4123
        %v4134 = vmul.f32 %v440, %v4123
        %v4135 = vmul.f32 %v441, %v4123
        %v4136 = vadd.f32 %v4110, %v4124
        %v4137 = vadd.f32 %v4111, %v4125
        %v4138 = vadd.f32 %v4112, %v4126
        %v4139 = vadd.f32 %v4113, %v4127
        %v4140 = vadd.f32 %v4114, %v4128
        %v4141 = vadd.f32 %v4115, %v4129
        %v4142 = vadd.f32 %v4116, %v4130
        %v4143 = vadd.f32 %v4117, %v4131
        %v4144 = vadd.f32 %v4118, %v4132
        %v4145 = vadd.f32 %v4119, %v4133
        %v4146 = vadd.f32 %v4120, %v4134
        %v4147 = vadd.f32 %v4121, %v4135
        %v4148 = vmax.f32 %v4136, 0.0
        %v4149 = vmax.f32 %v4137, 0.0
        %v4150 = vmax.f32 %v4138, 0.0
        %v4151 = vmax.f32 %v4139, 0.0
        %v4152 = vmax.f32 %v4140, 0.0
        %v4153 = vmax.f32 %v4141, 0.0
        %v4154 = vmax.f32 %v4142, 0.0
        %v4155 = vmax.f32 %v4143, 0.0
        %v4156 = vmax.f32 %v4144, 0.0
        %v4157 = vmax.f32 %v4145, 0.0
        %v4158 = vmax.f32 %v4146, 0.0
        %v4159 = vmax.f32 %v4147, 0.0
        %s4160 = sld [smem:[#allocation7 + $0x19]]
        %v4161 = vstv %s4160
        %v4162 = vmul.f32 %v4148, %v4161
        %v4163 = vmul.f32 %v4149, %v4161
        %v4164 = vmul.f32 %v4150, %v4161
        %v4165 = vmul.f32 %v4151, %v4161
        %v4166 = vmul.f32 %v4152, %v4161
        %v4167 = vmul.f32 %v4153, %v4161
        %v4168 = vmul.f32 %v4154, %v4161
        %v4169 = vmul.f32 %v4155, %v4161
        %v4170 = vmul.f32 %v4156, %v4161
        %v4171 = vmul.f32 %v4157, %v4161
        %v4172 = vmul.f32 %v4158, %v4161
        %v4173 = vmul.f32 %v4159, %v4161
        %v4174 = vadd.f32 %v4030, %v4162
        %v4175 = vadd.f32 %v4031, %v4163
        %v4176 = vadd.f32 %v4032, %v4164
        %v4177 = vadd.f32 %v4033, %v4165
        %v4178 = vadd.f32 %v4034, %v4166
        %v4179 = vadd.f32 %v4035, %v4167
        %v4180 = vadd.f32 %v4036, %v4168
        %v4181 = vadd.f32 %v4037, %v4169
        %v4182 = vadd.f32 %v4038, %v4170
        %v4183 = vadd.f32 %v4039, %v4171
        %v4184 = vadd.f32 %v4040, %v4172
        %v4185 = vadd.f32 %v4041, %v4173
        %s4186 = sld [smem:[#allocation3 + $0x1a]]
        %v4187 = vstv %s4186
        %v4188 = vmul.f32 %v394, %v4187
        %v4189 = vmul.f32 %v395, %v4187
        %v4190 = vmul.f32 %v396, %v4187
        %v4191 = vmul.f32 %v397, %v4187
        %v4192 = vmul.f32 %v398, %v4187
        %v4193 = vmul.f32 %v399, %v4187
        %v4194 = vmul.f32 %v400, %v4187
        %v4195 = vmul.f32 %v401, %v4187
        %v4196 = vmul.f32 %v402, %v4187
        %v4197 = vmul.f32 %v403, %v4187
        %v4198 = vmul.f32 %v404, %v4187
        %v4199 = vmul.f32 %v405, %v4187
        %s4200 = sld [smem:[#allocation5 + $0x1a]]
        %v4201 = vstv %s4200
        %v4202 = vadd.f32 %v4188, %v4201
        %v4203 = vadd.f32 %v4189, %v4201
        %v4204 = vadd.f32 %v4190, %v4201
        %v4205 = vadd.f32 %v4191, %v4201
        %v4206 = vadd.f32 %v4192, %v4201
        %v4207 = vadd.f32 %v4193, %v4201
        %v4208 = vadd.f32 %v4194, %v4201
        %v4209 = vadd.f32 %v4195, %v4201
        %v4210 = vadd.f32 %v4196, %v4201
        %v4211 = vadd.f32 %v4197, %v4201
        %v4212 = vadd.f32 %v4198, %v4201
        %v4213 = vadd.f32 %v4199, %v4201
        %s4214 = sld [smem:[#allocation3 + $0x9a]]
        %v4215 = vstv %s4214
        %v4216 = vmul.f32 %v406, %v4215
        %v4217 = vmul.f32 %v407, %v4215
        %v4218 = vmul.f32 %v408, %v4215
        %v4219 = vmul.f32 %v409, %v4215
        %v4220 = vmul.f32 %v410, %v4215
        %v4221 = vmul.f32 %v411, %v4215
        %v4222 = vmul.f32 %v412, %v4215
        %v4223 = vmul.f32 %v413, %v4215
        %v4224 = vmul.f32 %v414, %v4215
        %v4225 = vmul.f32 %v415, %v4215
        %v4226 = vmul.f32 %v416, %v4215
        %v4227 = vmul.f32 %v417, %v4215
        %v4228 = vadd.f32 %v4202, %v4216
        %v4229 = vadd.f32 %v4203, %v4217
        %v4230 = vadd.f32 %v4204, %v4218
        %v4231 = vadd.f32 %v4205, %v4219
        %v4232 = vadd.f32 %v4206, %v4220
        %v4233 = vadd.f32 %v4207, %v4221
        %v4234 = vadd.f32 %v4208, %v4222
        %v4235 = vadd.f32 %v4209, %v4223
        %v4236 = vadd.f32 %v4210, %v4224
        %v4237 = vadd.f32 %v4211, %v4225
        %v4238 = vadd.f32 %v4212, %v4226
        %v4239 = vadd.f32 %v4213, %v4227
        %s4240 = sld [smem:[#allocation3 + $0x11a]]
        %v4241 = vstv %s4240
        %v4242 = vmul.f32 %v418, %v4241
        %v4243 = vmul.f32 %v419, %v4241
        %v4244 = vmul.f32 %v420, %v4241
        %v4245 = vmul.f32 %v421, %v4241
        %v4246 = vmul.f32 %v422, %v4241
        %v4247 = vmul.f32 %v423, %v4241
        %v4248 = vmul.f32 %v424, %v4241
        %v4249 = vmul.f32 %v425, %v4241
        %v4250 = vmul.f32 %v426, %v4241
        %v4251 = vmul.f32 %v427, %v4241
        %v4252 = vmul.f32 %v428, %v4241
        %v4253 = vmul.f32 %v429, %v4241
        %v4254 = vadd.f32 %v4228, %v4242
        %v4255 = vadd.f32 %v4229, %v4243
        %v4256 = vadd.f32 %v4230, %v4244
        %v4257 = vadd.f32 %v4231, %v4245
        %v4258 = vadd.f32 %v4232, %v4246
        %v4259 = vadd.f32 %v4233, %v4247
        %v4260 = vadd.f32 %v4234, %v4248
        %v4261 = vadd.f32 %v4235, %v4249
        %v4262 = vadd.f32 %v4236, %v4250
        %v4263 = vadd.f32 %v4237, %v4251
        %v4264 = vadd.f32 %v4238, %v4252
        %v4265 = vadd.f32 %v4239, %v4253
        %s4266 = sld [smem:[#allocation3 + $0x19a]]
        %v4267 = vstv %s4266
        %v4268 = vmul.f32 %v430, %v4267
        %v4269 = vmul.f32 %v431, %v4267
        %v4270 = vmul.f32 %v432, %v4267
        %v4271 = vmul.f32 %v433, %v4267
        %v4272 = vmul.f32 %v434, %v4267
        %v4273 = vmul.f32 %v435, %v4267
        %v4274 = vmul.f32 %v436, %v4267
        %v4275 = vmul.f32 %v437, %v4267
        %v4276 = vmul.f32 %v438, %v4267
        %v4277 = vmul.f32 %v439, %v4267
        %v4278 = vmul.f32 %v440, %v4267
        %v4279 = vmul.f32 %v441, %v4267
        %v4280 = vadd.f32 %v4254, %v4268
        %v4281 = vadd.f32 %v4255, %v4269
        %v4282 = vadd.f32 %v4256, %v4270
        %v4283 = vadd.f32 %v4257, %v4271
        %v4284 = vadd.f32 %v4258, %v4272
        %v4285 = vadd.f32 %v4259, %v4273
        %v4286 = vadd.f32 %v4260, %v4274
        %v4287 = vadd.f32 %v4261, %v4275
        %v4288 = vadd.f32 %v4262, %v4276
        %v4289 = vadd.f32 %v4263, %v4277
        %v4290 = vadd.f32 %v4264, %v4278
        %v4291 = vadd.f32 %v4265, %v4279
        %v4292 = vmax.f32 %v4280, 0.0
        %v4293 = vmax.f32 %v4281, 0.0
        %v4294 = vmax.f32 %v4282, 0.0
        %v4295 = vmax.f32 %v4283, 0.0
        %v4296 = vmax.f32 %v4284, 0.0
        %v4297 = vmax.f32 %v4285, 0.0
        %v4298 = vmax.f32 %v4286, 0.0
        %v4299 = vmax.f32 %v4287, 0.0
        %v4300 = vmax.f32 %v4288, 0.0
        %v4301 = vmax.f32 %v4289, 0.0
        %v4302 = vmax.f32 %v4290, 0.0
        %v4303 = vmax.f32 %v4291, 0.0
        %s4304 = sld [smem:[#allocation7 + $0x1a]]
        %v4305 = vstv %s4304
        %v4306 = vmul.f32 %v4292, %v4305
        %v4307 = vmul.f32 %v4293, %v4305
        %v4308 = vmul.f32 %v4294, %v4305
        %v4309 = vmul.f32 %v4295, %v4305
        %v4310 = vmul.f32 %v4296, %v4305
        %v4311 = vmul.f32 %v4297, %v4305
        %v4312 = vmul.f32 %v4298, %v4305
        %v4313 = vmul.f32 %v4299, %v4305
        %v4314 = vmul.f32 %v4300, %v4305
        %v4315 = vmul.f32 %v4301, %v4305
        %v4316 = vmul.f32 %v4302, %v4305
        %v4317 = vmul.f32 %v4303, %v4305
        %v4318 = vadd.f32 %v4174, %v4306
        %v4319 = vadd.f32 %v4175, %v4307
        %v4320 = vadd.f32 %v4176, %v4308
        %v4321 = vadd.f32 %v4177, %v4309
        %v4322 = vadd.f32 %v4178, %v4310
        %v4323 = vadd.f32 %v4179, %v4311
        %v4324 = vadd.f32 %v4180, %v4312
        %v4325 = vadd.f32 %v4181, %v4313
        %v4326 = vadd.f32 %v4182, %v4314
        %v4327 = vadd.f32 %v4183, %v4315
        %v4328 = vadd.f32 %v4184, %v4316
        %v4329 = vadd.f32 %v4185, %v4317
        %s4330 = sld [smem:[#allocation3 + $0x1b]]
        %v4331 = vstv %s4330
        %v4332 = vmul.f32 %v394, %v4331
        %v4333 = vmul.f32 %v395, %v4331
        %v4334 = vmul.f32 %v396, %v4331
        %v4335 = vmul.f32 %v397, %v4331
        %v4336 = vmul.f32 %v398, %v4331
        %v4337 = vmul.f32 %v399, %v4331
        %v4338 = vmul.f32 %v400, %v4331
        %v4339 = vmul.f32 %v401, %v4331
        %v4340 = vmul.f32 %v402, %v4331
        %v4341 = vmul.f32 %v403, %v4331
        %v4342 = vmul.f32 %v404, %v4331
        %v4343 = vmul.f32 %v405, %v4331
        %s4344 = sld [smem:[#allocation5 + $0x1b]]
        %v4345 = vstv %s4344
        %v4346 = vadd.f32 %v4332, %v4345
        %v4347 = vadd.f32 %v4333, %v4345
        %v4348 = vadd.f32 %v4334, %v4345
        %v4349 = vadd.f32 %v4335, %v4345
        %v4350 = vadd.f32 %v4336, %v4345
        %v4351 = vadd.f32 %v4337, %v4345
        %v4352 = vadd.f32 %v4338, %v4345
        %v4353 = vadd.f32 %v4339, %v4345
        %v4354 = vadd.f32 %v4340, %v4345
        %v4355 = vadd.f32 %v4341, %v4345
        %v4356 = vadd.f32 %v4342, %v4345
        %v4357 = vadd.f32 %v4343, %v4345
        %s4358 = sld [smem:[#allocation3 + $0x9b]]
        %v4359 = vstv %s4358
        %v4360 = vmul.f32 %v406, %v4359
        %v4361 = vmul.f32 %v407, %v4359
        %v4362 = vmul.f32 %v408, %v4359
        %v4363 = vmul.f32 %v409, %v4359
        %v4364 = vmul.f32 %v410, %v4359
        %v4365 = vmul.f32 %v411, %v4359
        %v4366 = vmul.f32 %v412, %v4359
        %v4367 = vmul.f32 %v413, %v4359
        %v4368 = vmul.f32 %v414, %v4359
        %v4369 = vmul.f32 %v415, %v4359
        %v4370 = vmul.f32 %v416, %v4359
        %v4371 = vmul.f32 %v417, %v4359
        %v4372 = vadd.f32 %v4346, %v4360
        %v4373 = vadd.f32 %v4347, %v4361
        %v4374 = vadd.f32 %v4348, %v4362
        %v4375 = vadd.f32 %v4349, %v4363
        %v4376 = vadd.f32 %v4350, %v4364
        %v4377 = vadd.f32 %v4351, %v4365
        %v4378 = vadd.f32 %v4352, %v4366
        %v4379 = vadd.f32 %v4353, %v4367
        %v4380 = vadd.f32 %v4354, %v4368
        %v4381 = vadd.f32 %v4355, %v4369
        %v4382 = vadd.f32 %v4356, %v4370
        %v4383 = vadd.f32 %v4357, %v4371
        %s4384 = sld [smem:[#allocation3 + $0x11b]]
        %v4385 = vstv %s4384
        %v4386 = vmul.f32 %v418, %v4385
        %v4387 = vmul.f32 %v419, %v4385
        %v4388 = vmul.f32 %v420, %v4385
        %v4389 = vmul.f32 %v421, %v4385
        %v4390 = vmul.f32 %v422, %v4385
        %v4391 = vmul.f32 %v423, %v4385
        %v4392 = vmul.f32 %v424, %v4385
        %v4393 = vmul.f32 %v425, %v4385
        %v4394 = vmul.f32 %v426, %v4385
        %v4395 = vmul.f32 %v427, %v4385
        %v4396 = vmul.f32 %v428, %v4385
        %v4397 = vmul.f32 %v429, %v4385
        %v4398 = vadd.f32 %v4372, %v4386
        %v4399 = vadd.f32 %v4373, %v4387
        %v4400 = vadd.f32 %v4374, %v4388
        %v4401 = vadd.f32 %v4375, %v4389
        %v4402 = vadd.f32 %v4376, %v4390
        %v4403 = vadd.f32 %v4377, %v4391
        %v4404 = vadd.f32 %v4378, %v4392
        %v4405 = vadd.f32 %v4379, %v4393
        %v4406 = vadd.f32 %v4380, %v4394
        %v4407 = vadd.f32 %v4381, %v4395
        %v4408 = vadd.f32 %v4382, %v4396
        %v4409 = vadd.f32 %v4383, %v4397
        %s4410 = sld [smem:[#allocation3 + $0x19b]]
        %v4411 = vstv %s4410
        %v4412 = vmul.f32 %v430, %v4411
        %v4413 = vmul.f32 %v431, %v4411
        %v4414 = vmul.f32 %v432, %v4411
        %v4415 = vmul.f32 %v433, %v4411
        %v4416 = vmul.f32 %v434, %v4411
        %v4417 = vmul.f32 %v435, %v4411
        %v4418 = vmul.f32 %v436, %v4411
        %v4419 = vmul.f32 %v437, %v4411
        %v4420 = vmul.f32 %v438, %v4411
        %v4421 = vmul.f32 %v439, %v4411
        %v4422 = vmul.f32 %v440, %v4411
        %v4423 = vmul.f32 %v441, %v4411
        %v4424 = vadd.f32 %v4398, %v4412
        %v4425 = vadd.f32 %v4399, %v4413
        %v4426 = vadd.f32 %v4400, %v4414
        %v4427 = vadd.f32 %v4401, %v4415
        %v4428 = vadd.f32 %v4402, %v4416
        %v4429 = vadd.f32 %v4403, %v4417
        %v4430 = vadd.f32 %v4404, %v4418
        %v4431 = vadd.f32 %v4405, %v4419
        %v4432 = vadd.f32 %v4406, %v4420
        %v4433 = vadd.f32 %v4407, %v4421
        %v4434 = vadd.f32 %v4408, %v4422
        %v4435 = vadd.f32 %v4409, %v4423
        %v4436 = vmax.f32 %v4424, 0.0
        %v4437 = vmax.f32 %v4425, 0.0
        %v4438 = vmax.f32 %v4426, 0.0
        %v4439 = vmax.f32 %v4427, 0.0
        %v4440 = vmax.f32 %v4428, 0.0
        %v4441 = vmax.f32 %v4429, 0.0
        %v4442 = vmax.f32 %v4430, 0.0
        %v4443 = vmax.f32 %v4431, 0.0
        %v4444 = vmax.f32 %v4432, 0.0
        %v4445 = vmax.f32 %v4433, 0.0
        %v4446 = vmax.f32 %v4434, 0.0
        %v4447 = vmax.f32 %v4435, 0.0
        %s4448 = sld [smem:[#allocation7 + $0x1b]]
        %v4449 = vstv %s4448
        %v4450 = vmul.f32 %v4436, %v4449
        %v4451 = vmul.f32 %v4437, %v4449
        %v4452 = vmul.f32 %v4438, %v4449
        %v4453 = vmul.f32 %v4439, %v4449
        %v4454 = vmul.f32 %v4440, %v4449
        %v4455 = vmul.f32 %v4441, %v4449
        %v4456 = vmul.f32 %v4442, %v4449
        %v4457 = vmul.f32 %v4443, %v4449
        %v4458 = vmul.f32 %v4444, %v4449
        %v4459 = vmul.f32 %v4445, %v4449
        %v4460 = vmul.f32 %v4446, %v4449
        %v4461 = vmul.f32 %v4447, %v4449
        %v4462 = vadd.f32 %v4318, %v4450
        %v4463 = vadd.f32 %v4319, %v4451
        %v4464 = vadd.f32 %v4320, %v4452
        %v4465 = vadd.f32 %v4321, %v4453
        %v4466 = vadd.f32 %v4322, %v4454
        %v4467 = vadd.f32 %v4323, %v4455
        %v4468 = vadd.f32 %v4324, %v4456
        %v4469 = vadd.f32 %v4325, %v4457
        %v4470 = vadd.f32 %v4326, %v4458
        %v4471 = vadd.f32 %v4327, %v4459
        %v4472 = vadd.f32 %v4328, %v4460
        %v4473 = vadd.f32 %v4329, %v4461
        %s4474 = sld [smem:[#allocation3 + $0x1c]]
        %v4475 = vstv %s4474
        %v4476 = vmul.f32 %v394, %v4475
        %v4477 = vmul.f32 %v395, %v4475
        %v4478 = vmul.f32 %v396, %v4475
        %v4479 = vmul.f32 %v397, %v4475
        %v4480 = vmul.f32 %v398, %v4475
        %v4481 = vmul.f32 %v399, %v4475
        %v4482 = vmul.f32 %v400, %v4475
        %v4483 = vmul.f32 %v401, %v4475
        %v4484 = vmul.f32 %v402, %v4475
        %v4485 = vmul.f32 %v403, %v4475
        %v4486 = vmul.f32 %v404, %v4475
        %v4487 = vmul.f32 %v405, %v4475
        %s4488 = sld [smem:[#allocation5 + $0x1c]]
        %v4489 = vstv %s4488
        %v4490 = vadd.f32 %v4476, %v4489
        %v4491 = vadd.f32 %v4477, %v4489
        %v4492 = vadd.f32 %v4478, %v4489
        %v4493 = vadd.f32 %v4479, %v4489
        %v4494 = vadd.f32 %v4480, %v4489
        %v4495 = vadd.f32 %v4481, %v4489
        %v4496 = vadd.f32 %v4482, %v4489
        %v4497 = vadd.f32 %v4483, %v4489
        %v4498 = vadd.f32 %v4484, %v4489
        %v4499 = vadd.f32 %v4485, %v4489
        %v4500 = vadd.f32 %v4486, %v4489
        %v4501 = vadd.f32 %v4487, %v4489
        %s4502 = sld [smem:[#allocation3 + $0x9c]]
        %v4503 = vstv %s4502
        %v4504 = vmul.f32 %v406, %v4503
        %v4505 = vmul.f32 %v407, %v4503
        %v4506 = vmul.f32 %v408, %v4503
        %v4507 = vmul.f32 %v409, %v4503
        %v4508 = vmul.f32 %v410, %v4503
        %v4509 = vmul.f32 %v411, %v4503
        %v4510 = vmul.f32 %v412, %v4503
        %v4511 = vmul.f32 %v413, %v4503
        %v4512 = vmul.f32 %v414, %v4503
        %v4513 = vmul.f32 %v415, %v4503
        %v4514 = vmul.f32 %v416, %v4503
        %v4515 = vmul.f32 %v417, %v4503
        %v4516 = vadd.f32 %v4490, %v4504
        %v4517 = vadd.f32 %v4491, %v4505
        %v4518 = vadd.f32 %v4492, %v4506
        %v4519 = vadd.f32 %v4493, %v4507
        %v4520 = vadd.f32 %v4494, %v4508
        %v4521 = vadd.f32 %v4495, %v4509
        %v4522 = vadd.f32 %v4496, %v4510
        %v4523 = vadd.f32 %v4497, %v4511
        %v4524 = vadd.f32 %v4498, %v4512
        %v4525 = vadd.f32 %v4499, %v4513
        %v4526 = vadd.f32 %v4500, %v4514
        %v4527 = vadd.f32 %v4501, %v4515
        %s4528 = sld [smem:[#allocation3 + $0x11c]]
        %v4529 = vstv %s4528
        %v4530 = vmul.f32 %v418, %v4529
        %v4531 = vmul.f32 %v419, %v4529
        %v4532 = vmul.f32 %v420, %v4529
        %v4533 = vmul.f32 %v421, %v4529
        %v4534 = vmul.f32 %v422, %v4529
        %v4535 = vmul.f32 %v423, %v4529
        %v4536 = vmul.f32 %v424, %v4529
        %v4537 = vmul.f32 %v425, %v4529
        %v4538 = vmul.f32 %v426, %v4529
        %v4539 = vmul.f32 %v427, %v4529
        %v4540 = vmul.f32 %v428, %v4529
        %v4541 = vmul.f32 %v429, %v4529
        %v4542 = vadd.f32 %v4516, %v4530
        %v4543 = vadd.f32 %v4517, %v4531
        %v4544 = vadd.f32 %v4518, %v4532
        %v4545 = vadd.f32 %v4519, %v4533
        %v4546 = vadd.f32 %v4520, %v4534
        %v4547 = vadd.f32 %v4521, %v4535
        %v4548 = vadd.f32 %v4522, %v4536
        %v4549 = vadd.f32 %v4523, %v4537
        %v4550 = vadd.f32 %v4524, %v4538
        %v4551 = vadd.f32 %v4525, %v4539
        %v4552 = vadd.f32 %v4526, %v4540
        %v4553 = vadd.f32 %v4527, %v4541
        %s4554 = sld [smem:[#allocation3 + $0x19c]]
        %v4555 = vstv %s4554
        %v4556 = vmul.f32 %v430, %v4555
        %v4557 = vmul.f32 %v431, %v4555
        %v4558 = vmul.f32 %v432, %v4555
        %v4559 = vmul.f32 %v433, %v4555
        %v4560 = vmul.f32 %v434, %v4555
        %v4561 = vmul.f32 %v435, %v4555
        %v4562 = vmul.f32 %v436, %v4555
        %v4563 = vmul.f32 %v437, %v4555
        %v4564 = vmul.f32 %v438, %v4555
        %v4565 = vmul.f32 %v439, %v4555
        %v4566 = vmul.f32 %v440, %v4555
        %v4567 = vmul.f32 %v441, %v4555
        %v4568 = vadd.f32 %v4542, %v4556
        %v4569 = vadd.f32 %v4543, %v4557
        %v4570 = vadd.f32 %v4544, %v4558
        %v4571 = vadd.f32 %v4545, %v4559
        %v4572 = vadd.f32 %v4546, %v4560
        %v4573 = vadd.f32 %v4547, %v4561
        %v4574 = vadd.f32 %v4548, %v4562
        %v4575 = vadd.f32 %v4549, %v4563
        %v4576 = vadd.f32 %v4550, %v4564
        %v4577 = vadd.f32 %v4551, %v4565
        %v4578 = vadd.f32 %v4552, %v4566
        %v4579 = vadd.f32 %v4553, %v4567
        %v4580 = vmax.f32 %v4568, 0.0
        %v4581 = vmax.f32 %v4569, 0.0
        %v4582 = vmax.f32 %v4570, 0.0
        %v4583 = vmax.f32 %v4571, 0.0
        %v4584 = vmax.f32 %v4572, 0.0
        %v4585 = vmax.f32 %v4573, 0.0
        %v4586 = vmax.f32 %v4574, 0.0
        %v4587 = vmax.f32 %v4575, 0.0
        %v4588 = vmax.f32 %v4576, 0.0
        %v4589 = vmax.f32 %v4577, 0.0
        %v4590 = vmax.f32 %v4578, 0.0
        %v4591 = vmax.f32 %v4579, 0.0
        %s4592 = sld [smem:[#allocation7 + $0x1c]]
        %v4593 = vstv %s4592
        %v4594 = vmul.f32 %v4580, %v4593
        %v4595 = vmul.f32 %v4581, %v4593
        %v4596 = vmul.f32 %v4582, %v4593
        %v4597 = vmul.f32 %v4583, %v4593
        %v4598 = vmul.f32 %v4584, %v4593
        %v4599 = vmul.f32 %v4585, %v4593
        %v4600 = vmul.f32 %v4586, %v4593
        %v4601 = vmul.f32 %v4587, %v4593
        %v4602 = vmul.f32 %v4588, %v4593
        %v4603 = vmul.f32 %v4589, %v4593
        %v4604 = vmul.f32 %v4590, %v4593
        %v4605 = vmul.f32 %v4591, %v4593
        %v4606 = vadd.f32 %v4462, %v4594
        %v4607 = vadd.f32 %v4463, %v4595
        %v4608 = vadd.f32 %v4464, %v4596
        %v4609 = vadd.f32 %v4465, %v4597
        %v4610 = vadd.f32 %v4466, %v4598
        %v4611 = vadd.f32 %v4467, %v4599
        %v4612 = vadd.f32 %v4468, %v4600
        %v4613 = vadd.f32 %v4469, %v4601
        %v4614 = vadd.f32 %v4470, %v4602
        %v4615 = vadd.f32 %v4471, %v4603
        %v4616 = vadd.f32 %v4472, %v4604
        %v4617 = vadd.f32 %v4473, %v4605
        %s4618 = sld [smem:[#allocation3 + $0x1d]]
        %v4619 = vstv %s4618
        %v4620 = vmul.f32 %v394, %v4619
        %v4621 = vmul.f32 %v395, %v4619
        %v4622 = vmul.f32 %v396, %v4619
        %v4623 = vmul.f32 %v397, %v4619
        %v4624 = vmul.f32 %v398, %v4619
        %v4625 = vmul.f32 %v399, %v4619
        %v4626 = vmul.f32 %v400, %v4619
        %v4627 = vmul.f32 %v401, %v4619
        %v4628 = vmul.f32 %v402, %v4619
        %v4629 = vmul.f32 %v403, %v4619
        %v4630 = vmul.f32 %v404, %v4619
        %v4631 = vmul.f32 %v405, %v4619
        %s4632 = sld [smem:[#allocation5 + $0x1d]]
        %v4633 = vstv %s4632
        %v4634 = vadd.f32 %v4620, %v4633
        %v4635 = vadd.f32 %v4621, %v4633
        %v4636 = vadd.f32 %v4622, %v4633
        %v4637 = vadd.f32 %v4623, %v4633
        %v4638 = vadd.f32 %v4624, %v4633
        %v4639 = vadd.f32 %v4625, %v4633
        %v4640 = vadd.f32 %v4626, %v4633
        %v4641 = vadd.f32 %v4627, %v4633
        %v4642 = vadd.f32 %v4628, %v4633
        %v4643 = vadd.f32 %v4629, %v4633
        %v4644 = vadd.f32 %v4630, %v4633
        %v4645 = vadd.f32 %v4631, %v4633
        %s4646 = sld [smem:[#allocation3 + $0x9d]]
        %v4647 = vstv %s4646
        %v4648 = vmul.f32 %v406, %v4647
        %v4649 = vmul.f32 %v407, %v4647
        %v4650 = vmul.f32 %v408, %v4647
        %v4651 = vmul.f32 %v409, %v4647
        %v4652 = vmul.f32 %v410, %v4647
        %v4653 = vmul.f32 %v411, %v4647
        %v4654 = vmul.f32 %v412, %v4647
        %v4655 = vmul.f32 %v413, %v4647
        %v4656 = vmul.f32 %v414, %v4647
        %v4657 = vmul.f32 %v415, %v4647
        %v4658 = vmul.f32 %v416, %v4647
        %v4659 = vmul.f32 %v417, %v4647
        %v4660 = vadd.f32 %v4634, %v4648
        %v4661 = vadd.f32 %v4635, %v4649
        %v4662 = vadd.f32 %v4636, %v4650
        %v4663 = vadd.f32 %v4637, %v4651
        %v4664 = vadd.f32 %v4638, %v4652
        %v4665 = vadd.f32 %v4639, %v4653
        %v4666 = vadd.f32 %v4640, %v4654
        %v4667 = vadd.f32 %v4641, %v4655
        %v4668 = vadd.f32 %v4642, %v4656
        %v4669 = vadd.f32 %v4643, %v4657
        %v4670 = vadd.f32 %v4644, %v4658
        %v4671 = vadd.f32 %v4645, %v4659
        %s4672 = sld [smem:[#allocation3 + $0x11d]]
        %v4673 = vstv %s4672
        %v4674 = vmul.f32 %v418, %v4673
        %v4675 = vmul.f32 %v419, %v4673
        %v4676 = vmul.f32 %v420, %v4673
        %v4677 = vmul.f32 %v421, %v4673
        %v4678 = vmul.f32 %v422, %v4673
        %v4679 = vmul.f32 %v423, %v4673
        %v4680 = vmul.f32 %v424, %v4673
        %v4681 = vmul.f32 %v425, %v4673
        %v4682 = vmul.f32 %v426, %v4673
        %v4683 = vmul.f32 %v427, %v4673
        %v4684 = vmul.f32 %v428, %v4673
        %v4685 = vmul.f32 %v429, %v4673
        %v4686 = vadd.f32 %v4660, %v4674
        %v4687 = vadd.f32 %v4661, %v4675
        %v4688 = vadd.f32 %v4662, %v4676
        %v4689 = vadd.f32 %v4663, %v4677
        %v4690 = vadd.f32 %v4664, %v4678
        %v4691 = vadd.f32 %v4665, %v4679
        %v4692 = vadd.f32 %v4666, %v4680
        %v4693 = vadd.f32 %v4667, %v4681
        %v4694 = vadd.f32 %v4668, %v4682
        %v4695 = vadd.f32 %v4669, %v4683
        %v4696 = vadd.f32 %v4670, %v4684
        %v4697 = vadd.f32 %v4671, %v4685
        %s4698 = sld [smem:[#allocation3 + $0x19d]]
        %v4699 = vstv %s4698
        %v4700 = vmul.f32 %v430, %v4699
        %v4701 = vmul.f32 %v431, %v4699
        %v4702 = vmul.f32 %v432, %v4699
        %v4703 = vmul.f32 %v433, %v4699
        %v4704 = vmul.f32 %v434, %v4699
        %v4705 = vmul.f32 %v435, %v4699
        %v4706 = vmul.f32 %v436, %v4699
        %v4707 = vmul.f32 %v437, %v4699
        %v4708 = vmul.f32 %v438, %v4699
        %v4709 = vmul.f32 %v439, %v4699
        %v4710 = vmul.f32 %v440, %v4699
        %v4711 = vmul.f32 %v441, %v4699
        %v4712 = vadd.f32 %v4686, %v4700
        %v4713 = vadd.f32 %v4687, %v4701
        %v4714 = vadd.f32 %v4688, %v4702
        %v4715 = vadd.f32 %v4689, %v4703
        %v4716 = vadd.f32 %v4690, %v4704
        %v4717 = vadd.f32 %v4691, %v4705
        %v4718 = vadd.f32 %v4692, %v4706
        %v4719 = vadd.f32 %v4693, %v4707
        %v4720 = vadd.f32 %v4694, %v4708
        %v4721 = vadd.f32 %v4695, %v4709
        %v4722 = vadd.f32 %v4696, %v4710
        %v4723 = vadd.f32 %v4697, %v4711
        %v4724 = vmax.f32 %v4712, 0.0
        %v4725 = vmax.f32 %v4713, 0.0
        %v4726 = vmax.f32 %v4714, 0.0
        %v4727 = vmax.f32 %v4715, 0.0
        %v4728 = vmax.f32 %v4716, 0.0
        %v4729 = vmax.f32 %v4717, 0.0
        %v4730 = vmax.f32 %v4718, 0.0
        %v4731 = vmax.f32 %v4719, 0.0
        %v4732 = vmax.f32 %v4720, 0.0
        %v4733 = vmax.f32 %v4721, 0.0
        %v4734 = vmax.f32 %v4722, 0.0
        %v4735 = vmax.f32 %v4723, 0.0
        %s4736 = sld [smem:[#allocation7 + $0x1d]]
        %v4737 = vstv %s4736
        %v4738 = vmul.f32 %v4724, %v4737
        %v4739 = vmul.f32 %v4725, %v4737
        %v4740 = vmul.f32 %v4726, %v4737
        %v4741 = vmul.f32 %v4727, %v4737
        %v4742 = vmul.f32 %v4728, %v4737
        %v4743 = vmul.f32 %v4729, %v4737
        %v4744 = vmul.f32 %v4730, %v4737
        %v4745 = vmul.f32 %v4731, %v4737
        %v4746 = vmul.f32 %v4732, %v4737
        %v4747 = vmul.f32 %v4733, %v4737
        %v4748 = vmul.f32 %v4734, %v4737
        %v4749 = vmul.f32 %v4735, %v4737
        %v4750 = vadd.f32 %v4606, %v4738
        %v4751 = vadd.f32 %v4607, %v4739
        %v4752 = vadd.f32 %v4608, %v4740
        %v4753 = vadd.f32 %v4609, %v4741
        %v4754 = vadd.f32 %v4610, %v4742
        %v4755 = vadd.f32 %v4611, %v4743
        %v4756 = vadd.f32 %v4612, %v4744
        %v4757 = vadd.f32 %v4613, %v4745
        %v4758 = vadd.f32 %v4614, %v4746
        %v4759 = vadd.f32 %v4615, %v4747
        %v4760 = vadd.f32 %v4616, %v4748
        %v4761 = vadd.f32 %v4617, %v4749
        %s4762 = sld [smem:[#allocation3 + $0x1e]]
        %v4763 = vstv %s4762
        %v4764 = vmul.f32 %v394, %v4763
        %v4765 = vmul.f32 %v395, %v4763
        %v4766 = vmul.f32 %v396, %v4763
        %v4767 = vmul.f32 %v397, %v4763
        %v4768 = vmul.f32 %v398, %v4763
        %v4769 = vmul.f32 %v399, %v4763
        %v4770 = vmul.f32 %v400, %v4763
        %v4771 = vmul.f32 %v401, %v4763
        %v4772 = vmul.f32 %v402, %v4763
        %v4773 = vmul.f32 %v403, %v4763
        %v4774 = vmul.f32 %v404, %v4763
        %v4775 = vmul.f32 %v405, %v4763
        %s4776 = sld [smem:[#allocation5 + $0x1e]]
        %v4777 = vstv %s4776
        %v4778 = vadd.f32 %v4764, %v4777
        %v4779 = vadd.f32 %v4765, %v4777
        %v4780 = vadd.f32 %v4766, %v4777
        %v4781 = vadd.f32 %v4767, %v4777
        %v4782 = vadd.f32 %v4768, %v4777
        %v4783 = vadd.f32 %v4769, %v4777
        %v4784 = vadd.f32 %v4770, %v4777
        %v4785 = vadd.f32 %v4771, %v4777
        %v4786 = vadd.f32 %v4772, %v4777
        %v4787 = vadd.f32 %v4773, %v4777
        %v4788 = vadd.f32 %v4774, %v4777
        %v4789 = vadd.f32 %v4775, %v4777
        %s4790 = sld [smem:[#allocation3 + $0x9e]]
        %v4791 = vstv %s4790
        %v4792 = vmul.f32 %v406, %v4791
        %v4793 = vmul.f32 %v407, %v4791
        %v4794 = vmul.f32 %v408, %v4791
        %v4795 = vmul.f32 %v409, %v4791
        %v4796 = vmul.f32 %v410, %v4791
        %v4797 = vmul.f32 %v411, %v4791
        %v4798 = vmul.f32 %v412, %v4791
        %v4799 = vmul.f32 %v413, %v4791
        %v4800 = vmul.f32 %v414, %v4791
        %v4801 = vmul.f32 %v415, %v4791
        %v4802 = vmul.f32 %v416, %v4791
        %v4803 = vmul.f32 %v417, %v4791
        %v4804 = vadd.f32 %v4778, %v4792
        %v4805 = vadd.f32 %v4779, %v4793
        %v4806 = vadd.f32 %v4780, %v4794
        %v4807 = vadd.f32 %v4781, %v4795
        %v4808 = vadd.f32 %v4782, %v4796
        %v4809 = vadd.f32 %v4783, %v4797
        %v4810 = vadd.f32 %v4784, %v4798
        %v4811 = vadd.f32 %v4785, %v4799
        %v4812 = vadd.f32 %v4786, %v4800
        %v4813 = vadd.f32 %v4787, %v4801
        %v4814 = vadd.f32 %v4788, %v4802
        %v4815 = vadd.f32 %v4789, %v4803
        %s4816 = sld [smem:[#allocation3 + $0x11e]]
        %v4817 = vstv %s4816
        %v4818 = vmul.f32 %v418, %v4817
        %v4819 = vmul.f32 %v419, %v4817
        %v4820 = vmul.f32 %v420, %v4817
        %v4821 = vmul.f32 %v421, %v4817
        %v4822 = vmul.f32 %v422, %v4817
        %v4823 = vmul.f32 %v423, %v4817
        %v4824 = vmul.f32 %v424, %v4817
        %v4825 = vmul.f32 %v425, %v4817
        %v4826 = vmul.f32 %v426, %v4817
        %v4827 = vmul.f32 %v427, %v4817
        %v4828 = vmul.f32 %v428, %v4817
        %v4829 = vmul.f32 %v429, %v4817
        %v4830 = vadd.f32 %v4804, %v4818
        %v4831 = vadd.f32 %v4805, %v4819
        %v4832 = vadd.f32 %v4806, %v4820
        %v4833 = vadd.f32 %v4807, %v4821
        %v4834 = vadd.f32 %v4808, %v4822
        %v4835 = vadd.f32 %v4809, %v4823
        %v4836 = vadd.f32 %v4810, %v4824
        %v4837 = vadd.f32 %v4811, %v4825
        %v4838 = vadd.f32 %v4812, %v4826
        %v4839 = vadd.f32 %v4813, %v4827
        %v4840 = vadd.f32 %v4814, %v4828
        %v4841 = vadd.f32 %v4815, %v4829
        %s4842 = sld [smem:[#allocation3 + $0x19e]]
        %v4843 = vstv %s4842
        %v4844 = vmul.f32 %v430, %v4843
        %v4845 = vmul.f32 %v431, %v4843
        %v4846 = vmul.f32 %v432, %v4843
        %v4847 = vmul.f32 %v433, %v4843
        %v4848 = vmul.f32 %v434, %v4843
        %v4849 = vmul.f32 %v435, %v4843
        %v4850 = vmul.f32 %v436, %v4843
        %v4851 = vmul.f32 %v437, %v4843
        %v4852 = vmul.f32 %v438, %v4843
        %v4853 = vmul.f32 %v439, %v4843
        %v4854 = vmul.f32 %v440, %v4843
        %v4855 = vmul.f32 %v441, %v4843
        %v4856 = vadd.f32 %v4830, %v4844
        %v4857 = vadd.f32 %v4831, %v4845
        %v4858 = vadd.f32 %v4832, %v4846
        %v4859 = vadd.f32 %v4833, %v4847
        %v4860 = vadd.f32 %v4834, %v4848
        %v4861 = vadd.f32 %v4835, %v4849
        %v4862 = vadd.f32 %v4836, %v4850
        %v4863 = vadd.f32 %v4837, %v4851
        %v4864 = vadd.f32 %v4838, %v4852
        %v4865 = vadd.f32 %v4839, %v4853
        %v4866 = vadd.f32 %v4840, %v4854
        %v4867 = vadd.f32 %v4841, %v4855
        %v4868 = vmax.f32 %v4856, 0.0
        %v4869 = vmax.f32 %v4857, 0.0
        %v4870 = vmax.f32 %v4858, 0.0
        %v4871 = vmax.f32 %v4859, 0.0
        %v4872 = vmax.f32 %v4860, 0.0
        %v4873 = vmax.f32 %v4861, 0.0
        %v4874 = vmax.f32 %v4862, 0.0
        %v4875 = vmax.f32 %v4863, 0.0
        %v4876 = vmax.f32 %v4864, 0.0
        %v4877 = vmax.f32 %v4865, 0.0
        %v4878 = vmax.f32 %v4866, 0.0
        %v4879 = vmax.f32 %v4867, 0.0
        %s4880 = sld [smem:[#allocation7 + $0x1e]]
        %v4881 = vstv %s4880
        %v4882 = vmul.f32 %v4868, %v4881
        %v4883 = vmul.f32 %v4869, %v4881
        %v4884 = vmul.f32 %v4870, %v4881
        %v4885 = vmul.f32 %v4871, %v4881
        %v4886 = vmul.f32 %v4872, %v4881
        %v4887 = vmul.f32 %v4873, %v4881
        %v4888 = vmul.f32 %v4874, %v4881
        %v4889 = vmul.f32 %v4875, %v4881
        %v4890 = vmul.f32 %v4876, %v4881
        %v4891 = vmul.f32 %v4877, %v4881
        %v4892 = vmul.f32 %v4878, %v4881
        %v4893 = vmul.f32 %v4879, %v4881
        %v4894 = vadd.f32 %v4750, %v4882
        %v4895 = vadd.f32 %v4751, %v4883
        %v4896 = vadd.f32 %v4752, %v4884
        %v4897 = vadd.f32 %v4753, %v4885
        %v4898 = vadd.f32 %v4754, %v4886
        %v4899 = vadd.f32 %v4755, %v4887
        %v4900 = vadd.f32 %v4756, %v4888
        %v4901 = vadd.f32 %v4757, %v4889
        %v4902 = vadd.f32 %v4758, %v4890
        %v4903 = vadd.f32 %v4759, %v4891
        %v4904 = vadd.f32 %v4760, %v4892
        %v4905 = vadd.f32 %v4761, %v4893
        %s4906 = sld [smem:[#allocation3 + $0x1f]]
        %v4907 = vstv %s4906
        %v4908 = vmul.f32 %v394, %v4907
        %v4909 = vmul.f32 %v395, %v4907
        %v4910 = vmul.f32 %v396, %v4907
        %v4911 = vmul.f32 %v397, %v4907
        %v4912 = vmul.f32 %v398, %v4907
        %v4913 = vmul.f32 %v399, %v4907
        %v4914 = vmul.f32 %v400, %v4907
        %v4915 = vmul.f32 %v401, %v4907
        %v4916 = vmul.f32 %v402, %v4907
        %v4917 = vmul.f32 %v403, %v4907
        %v4918 = vmul.f32 %v404, %v4907
        %v4919 = vmul.f32 %v405, %v4907
        %s4920 = sld [smem:[#allocation5 + $0x1f]]
        %v4921 = vstv %s4920
        %v4922 = vadd.f32 %v4908, %v4921
        %v4923 = vadd.f32 %v4909, %v4921
        %v4924 = vadd.f32 %v4910, %v4921
        %v4925 = vadd.f32 %v4911, %v4921
        %v4926 = vadd.f32 %v4912, %v4921
        %v4927 = vadd.f32 %v4913, %v4921
        %v4928 = vadd.f32 %v4914, %v4921
        %v4929 = vadd.f32 %v4915, %v4921
        %v4930 = vadd.f32 %v4916, %v4921
        %v4931 = vadd.f32 %v4917, %v4921
        %v4932 = vadd.f32 %v4918, %v4921
        %v4933 = vadd.f32 %v4919, %v4921
        %s4934 = sld [smem:[#allocation3 + $0x9f]]
        %v4935 = vstv %s4934
        %v4936 = vmul.f32 %v406, %v4935
        %v4937 = vmul.f32 %v407, %v4935
        %v4938 = vmul.f32 %v408, %v4935
        %v4939 = vmul.f32 %v409, %v4935
        %v4940 = vmul.f32 %v410, %v4935
        %v4941 = vmul.f32 %v411, %v4935
        %v4942 = vmul.f32 %v412, %v4935
        %v4943 = vmul.f32 %v413, %v4935
        %v4944 = vmul.f32 %v414, %v4935
        %v4945 = vmul.f32 %v415, %v4935
        %v4946 = vmul.f32 %v416, %v4935
        %v4947 = vmul.f32 %v417, %v4935
        %v4948 = vadd.f32 %v4922, %v4936
        %v4949 = vadd.f32 %v4923, %v4937
        %v4950 = vadd.f32 %v4924, %v4938
        %v4951 = vadd.f32 %v4925, %v4939
        %v4952 = vadd.f32 %v4926, %v4940
        %v4953 = vadd.f32 %v4927, %v4941
        %v4954 = vadd.f32 %v4928, %v4942
        %v4955 = vadd.f32 %v4929, %v4943
        %v4956 = vadd.f32 %v4930, %v4944
        %v4957 = vadd.f32 %v4931, %v4945
        %v4958 = vadd.f32 %v4932, %v4946
        %v4959 = vadd.f32 %v4933, %v4947
        %s4960 = sld [smem:[#allocation3 + $0x11f]]
        %v4961 = vstv %s4960
        %v4962 = vmul.f32 %v418, %v4961
        %v4963 = vmul.f32 %v419, %v4961
        %v4964 = vmul.f32 %v420, %v4961
        %v4965 = vmul.f32 %v421, %v4961
        %v4966 = vmul.f32 %v422, %v4961
        %v4967 = vmul.f32 %v423, %v4961
        %v4968 = vmul.f32 %v424, %v4961
        %v4969 = vmul.f32 %v425, %v4961
        %v4970 = vmul.f32 %v426, %v4961
        %v4971 = vmul.f32 %v427, %v4961
        %v4972 = vmul.f32 %v428, %v4961
        %v4973 = vmul.f32 %v429, %v4961
        %v4974 = vadd.f32 %v4948, %v4962
        %v4975 = vadd.f32 %v4949, %v4963
        %v4976 = vadd.f32 %v4950, %v4964
        %v4977 = vadd.f32 %v4951, %v4965
        %v4978 = vadd.f32 %v4952, %v4966
        %v4979 = vadd.f32 %v4953, %v4967
        %v4980 = vadd.f32 %v4954, %v4968
        %v4981 = vadd.f32 %v4955, %v4969
        %v4982 = vadd.f32 %v4956, %v4970
        %v4983 = vadd.f32 %v4957, %v4971
        %v4984 = vadd.f32 %v4958, %v4972
        %v4985 = vadd.f32 %v4959, %v4973
        %s4986 = sld [smem:[#allocation3 + $0x19f]]
        %v4987 = vstv %s4986
        %v4988 = vmul.f32 %v430, %v4987
        %v4989 = vmul.f32 %v431, %v4987
        %v4990 = vmul.f32 %v432, %v4987
        %v4991 = vmul.f32 %v433, %v4987
        %v4992 = vmul.f32 %v434, %v4987
        %v4993 = vmul.f32 %v435, %v4987
        %v4994 = vmul.f32 %v436, %v4987
        %v4995 = vmul.f32 %v437, %v4987
        %v4996 = vmul.f32 %v438, %v4987
        %v4997 = vmul.f32 %v439, %v4987
        %v4998 = vmul.f32 %v440, %v4987
        %v4999 = vmul.f32 %v441, %v4987
        %v5000 = vadd.f32 %v4974, %v4988
        %v5001 = vadd.f32 %v4975, %v4989
        %v5002 = vadd.f32 %v4976, %v4990
        %v5003 = vadd.f32 %v4977, %v4991
        %v5004 = vadd.f32 %v4978, %v4992
        %v5005 = vadd.f32 %v4979, %v4993
        %v5006 = vadd.f32 %v4980, %v4994
        %v5007 = vadd.f32 %v4981, %v4995
        %v5008 = vadd.f32 %v4982, %v4996
        %v5009 = vadd.f32 %v4983, %v4997
        %v5010 = vadd.f32 %v4984, %v4998
        %v5011 = vadd.f32 %v4985, %v4999
        %v5012 = vmax.f32 %v5000, 0.0
        %v5013 = vmax.f32 %v5001, 0.0
        %v5014 = vmax.f32 %v5002, 0.0
        %v5015 = vmax.f32 %v5003, 0.0
        %v5016 = vmax.f32 %v5004, 0.0
        %v5017 = vmax.f32 %v5005, 0.0
        %v5018 = vmax.f32 %v5006, 0.0
        %v5019 = vmax.f32 %v5007, 0.0
        %v5020 = vmax.f32 %v5008, 0.0
        %v5021 = vmax.f32 %v5009, 0.0
        %v5022 = vmax.f32 %v5010, 0.0
        %v5023 = vmax.f32 %v5011, 0.0
        %s5024 = sld [smem:[#allocation7 + $0x1f]]
        %v5025 = vstv %s5024
        %v5026 = vmul.f32 %v5012, %v5025
        %v5027 = vmul.f32 %v5013, %v5025
        %v5028 = vmul.f32 %v5014, %v5025
        %v5029 = vmul.f32 %v5015, %v5025
        %v5030 = vmul.f32 %v5016, %v5025
        %v5031 = vmul.f32 %v5017, %v5025
        %v5032 = vmul.f32 %v5018, %v5025
        %v5033 = vmul.f32 %v5019, %v5025
        %v5034 = vmul.f32 %v5020, %v5025
        %v5035 = vmul.f32 %v5021, %v5025
        %v5036 = vmul.f32 %v5022, %v5025
        %v5037 = vmul.f32 %v5023, %v5025
        %v5038 = vadd.f32 %v4894, %v5026
        %v5039 = vadd.f32 %v4895, %v5027
        %v5040 = vadd.f32 %v4896, %v5028
        %v5041 = vadd.f32 %v4897, %v5029
        %v5042 = vadd.f32 %v4898, %v5030
        %v5043 = vadd.f32 %v4899, %v5031
        %v5044 = vadd.f32 %v4900, %v5032
        %v5045 = vadd.f32 %v4901, %v5033
        %v5046 = vadd.f32 %v4902, %v5034
        %v5047 = vadd.f32 %v4903, %v5035
        %v5048 = vadd.f32 %v4904, %v5036
        %v5049 = vadd.f32 %v4905, %v5037
        %s5050 = sld [smem:[#allocation2]]
        %v5051 = vstv %s5050
        %v5052 = vadd.f32 %v5038, %v5051
        %v5053 = vadd.f32 %v5039, %v5051
        %v5054 = vadd.f32 %v5040, %v5051
        %v5055 = vadd.f32 %v5041, %v5051
        %v5056 = vadd.f32 %v5042, %v5051
        %v5057 = vadd.f32 %v5043, %v5051
        %v5058 = vadd.f32 %v5044, %v5051
        %v5059 = vadd.f32 %v5045, %v5051
        %v5060 = vadd.f32 %v5046, %v5051
        %v5061 = vadd.f32 %v5047, %v5051
        %v5062 = vadd.f32 %v5048, %v5051
        %v5063 = vadd.f32 %v5049, %v5051
        %v5064 = vxor.u32 %v5052, 2147483648
        %v5065 = vxor.u32 %v5053, 2147483648
        %v5066 = vxor.u32 %v5054, 2147483648
        %v5067 = vxor.u32 %v5055, 2147483648
        %v5068 = vxor.u32 %v5056, 2147483648
        %v5069 = vxor.u32 %v5057, 2147483648
        %v5070 = vxor.u32 %v5058, 2147483648
        %v5071 = vxor.u32 %v5059, 2147483648
        %v5072 = vxor.u32 %v5060, 2147483648
        %v5073 = vxor.u32 %v5061, 2147483648
        %v5074 = vxor.u32 %v5062, 2147483648
        %v5075 = vxor.u32 %v5063, 2147483648
        %v5076 = vmul.f32 %v5064, 1.442695
        %v5077 = vpow.pop %v5076
        %v5078 = vmul.f32 %v5065, 1.442695
        %v5079 = vpow.pop %v5078
        %v5080 = vmul.f32 %v5066, 1.442695
        %v5081 = vpow.pop %v5080
        %v5082 = vmul.f32 %v5067, 1.442695
        %v5083 = vpow.pop %v5082
        %v5084 = vmul.f32 %v5068, 1.442695
        %v5085 = vpow.pop %v5084
        %v5086 = vmul.f32 %v5069, 1.442695
        %v5087 = vpow.pop %v5086
        %v5088 = vmul.f32 %v5070, 1.442695
        %v5089 = vpow.pop %v5088
        %v5090 = vmul.f32 %v5071, 1.442695
        %v5091 = vpow.pop %v5090
        %v5092 = vmul.f32 %v5072, 1.442695
        %v5093 = vpow.pop %v5092
        %v5094 = vmul.f32 %v5073, 1.442695
        %v5095 = vpow.pop %v5094
        %v5096 = vmul.f32 %v5074, 1.442695
        %v5097 = vpow.pop %v5096
        %v5098 = vmul.f32 %v5075, 1.442695
        %v5099 = vpow.pop %v5098
        %v5100 = vadd.f32 %v5077, 1.0
        %v5101 = vadd.f32 %v5079, 1.0
        %v5102 = vadd.f32 %v5081, 1.0
        %v5103 = vadd.f32 %v5083, 1.0
        %v5104 = vadd.f32 %v5085, 1.0
        %v5105 = vadd.f32 %v5087, 1.0
        %v5106 = vadd.f32 %v5089, 1.0
        %v5107 = vadd.f32 %v5091, 1.0
        %v5108 = vadd.f32 %v5093, 1.0
        %v5109 = vadd.f32 %v5095, 1.0
        %v5110 = vadd.f32 %v5097, 1.0
        %v5111 = vadd.f32 %v5099, 1.0
        %v5112 = vrcp.pop %v5100
        %v5113 = vmul.f32 1.0, %v5112
        %v5114 = vrcp.pop %v5101
        %v5115 = vmul.f32 1.0, %v5114
        %v5116 = vrcp.pop %v5102
        %v5117 = vmul.f32 1.0, %v5116
        %v5118 = vrcp.pop %v5103
        %v5119 = vmul.f32 1.0, %v5118
        %v5120 = vrcp.pop %v5104
        %v5121 = vmul.f32 1.0, %v5120
        %v5122 = vrcp.pop %v5105
        %v5123 = vmul.f32 1.0, %v5122
        %v5124 = vrcp.pop %v5106
        %v5125 = vmul.f32 1.0, %v5124
        %v5126 = vrcp.pop %v5107
        %v5127 = vmul.f32 1.0, %v5126
        %v5128 = vrcp.pop %v5108
        %v5129 = vmul.f32 1.0, %v5128
        %v5130 = vrcp.pop %v5109
        %v5131 = vmul.f32 1.0, %v5130
        %v5132 = vrcp.pop %v5110
        %v5133 = vmul.f32 1.0, %v5132
        %v5134 = vrcp.pop %v5111
        %v5135 = vmul.f32 1.0, %v5134
        %5136 = vst [vmem:[%s375] sm:$0xff] %v5113
        %5137 = vst [vmem:[%s375 + $0x8] sm:$0xff] %v5115
        %5138 = vst [vmem:[%s375 + $0x10] sm:$0xff] %v5117
        %5139 = vst [vmem:[%s375 + $0x18] sm:$0xff] %v5119
        %5140 = vst [vmem:[%s375 + $0x20] sm:$0xff] %v5121
        %5141 = vst [vmem:[%s375 + $0x28] sm:$0xff] %v5123
        %5142 = vst [vmem:[%s375 + $0x30] sm:$0xff] %v5125
        %5143 = vst [vmem:[%s375 + $0x38] sm:$0xff] %v5127
        %5144 = vst [vmem:[%s375 + $0x40] sm:$0xff] %v5129
        %5145 = vst [vmem:[%s375 + $0x48] sm:$0xff] %v5131
        %5146 = vst [vmem:[%s375 + $0x50] sm:$0xff] %v5133
        %5147 = vst [vmem:[%s375 + $0x58] sm:$0xff] %v5135
        %vm5148 = vcmp.gt.f32.partialorder %v5113, 0.3
        %vm5149 = vcmp.gt.f32.partialorder %v5115, 0.3
        %vm5150 = vcmp.gt.f32.partialorder %v5117, 0.3
        %vm5151 = vcmp.gt.f32.partialorder %v5119, 0.3
        %vm5152 = vcmp.gt.f32.partialorder %v5121, 0.3
        %vm5153 = vcmp.gt.f32.partialorder %v5123, 0.3
        %vm5154 = vcmp.gt.f32.partialorder %v5125, 0.3
        %vm5155 = vcmp.gt.f32.partialorder %v5127, 0.3
        %vm5156 = vcmp.gt.f32.partialorder %v5129, 0.3
        %vm5157 = vcmp.gt.f32.partialorder %v5131, 0.3
        %vm5158 = vcmp.gt.f32.partialorder %v5133, 0.3
        %vm5159 = vcmp.gt.f32.partialorder %v5135, 0.3
        %v5160 = vsel %vm5148, 255, 0
        %v5161 = vsel %vm5149, 255, 0
        %v5162 = vsel %vm5150, 255, 0
        %v5163 = vsel %vm5151, 255, 0
        %v5164 = vsel %vm5152, 255, 0
        %v5165 = vsel %vm5153, 255, 0
        %v5166 = vsel %vm5154, 255, 0
        %v5167 = vsel %vm5155, 255, 0
        %v5168 = vsel %vm5156, 255, 0
        %v5169 = vsel %vm5157, 255, 0
        %v5170 = vsel %vm5158, 255, 0
        %v5171 = vsel %vm5159, 255, 0
        %v5172 = vpack.c.b16 %v5160, %v5160
        %v5173 = vpack.c.b8 %v5172, %v5172
        %v5174 = vpack.c.b16 %v5161, %v5161
        %v5175 = vpack.c.b8 %v5174, %v5174
        %v5176 = vpack.c.b16 %v5162, %v5162
        %v5177 = vpack.c.b8 %v5176, %v5176
        %v5178 = vpack.c.b16 %v5163, %v5163
        %v5179 = vpack.c.b8 %v5178, %v5178
        %v5180 = vpack.c.b16 %v5164, %v5164
        %v5181 = vpack.c.b8 %v5180, %v5180
        %v5182 = vpack.c.b16 %v5165, %v5165
        %v5183 = vpack.c.b8 %v5182, %v5182
        %v5184 = vpack.c.b16 %v5166, %v5166
        %v5185 = vpack.c.b8 %v5184, %v5184
        %v5186 = vpack.c.b16 %v5167, %v5167
        %v5187 = vpack.c.b8 %v5186, %v5186
        %v5188 = vpack.c.b16 %v5168, %v5168
        %v5189 = vpack.c.b8 %v5188, %v5188
        %v5190 = vpack.c.b16 %v5169, %v5169
        %v5191 = vpack.c.b8 %v5190, %v5190
        %v5192 = vpack.c.b16 %v5170, %v5170
        %v5193 = vpack.c.b8 %v5192, %v5192
        %v5194 = vpack.c.b16 %v5171, %v5171
        %v5195 = vpack.c.b8 %v5194, %v5194
        %5196 = vst [vmem:[%s385] sm:$0x3] %v5173
        %5197 = vst [vmem:[%s385 + $0x2] sm:$0x3] %v5175
        %5198 = vst [vmem:[%s385 + $0x4] sm:$0x3] %v5177
        %5199 = vst [vmem:[%s385 + $0x6] sm:$0x3] %v5179
        %5200 = vst [vmem:[%s385 + $0x8] sm:$0x3] %v5181
        %5201 = vst [vmem:[%s385 + $0xa] sm:$0x3] %v5183
        %5202 = vst [vmem:[%s385 + $0xc] sm:$0x3] %v5185
        %5203 = vst [vmem:[%s385 + $0xe] sm:$0x3] %v5187
        %5204 = vst [vmem:[%s385 + $0x10] sm:$0x3] %v5189
        %5205 = vst [vmem:[%s385 + $0x12] sm:$0x3] %v5191
        %5206 = vst [vmem:[%s385 + $0x14] sm:$0x3] %v5193
        %5207 = vst [vmem:[%s385 + $0x16] sm:$0x3] %v5195
        %s5208 = smul.u32 %s27, 96
        %v5209 = vlaneseq
        %v5210 = vshrl.u32 %v5209, 7
        %v5211 = vadd.s32 %v5210, 8
        %v5212 = vadd.s32 %v5210, 16
        %v5213 = vadd.s32 %v5210, 24
        %v5214 = vadd.s32 %v5210, 32
        %v5215 = vadd.s32 %v5210, 40
        %v5216 = vadd.s32 %v5210, 48
        %v5217 = vadd.s32 %v5210, 56
        %v5218 = vadd.s32 %v5210, 64
        %v5219 = vadd.s32 %v5210, 72
        %v5220 = vadd.s32 %v5210, 80
        %v5221 = vadd.s32 %v5210, 88
        %v5222 = vstv %s5208
        %v5223 = vadd.s32 %v5222, %v5210
        %v5224 = vadd.s32 %v5222, %v5211
        %v5225 = vadd.s32 %v5222, %v5212
        %v5226 = vadd.s32 %v5222, %v5213
        %v5227 = vadd.s32 %v5222, %v5214
        %v5228 = vadd.s32 %v5222, %v5215
        %v5229 = vadd.s32 %v5222, %v5216
        %v5230 = vadd.s32 %v5222, %v5217
        %v5231 = vadd.s32 %v5222, %v5218
        %v5232 = vadd.s32 %v5222, %v5219
        %v5233 = vadd.s32 %v5222, %v5220
        %v5234 = vadd.s32 %v5222, %v5221
        %vm5235 = vcmp.lt.s32.totalorder %v5223, 72
        %vm5236 = vcmp.lt.s32.totalorder %v5224, 72
        %vm5237 = vcmp.lt.s32.totalorder %v5225, 72
        %vm5238 = vcmp.lt.s32.totalorder %v5226, 72
        %vm5239 = vcmp.lt.s32.totalorder %v5227, 72
        %vm5240 = vcmp.lt.s32.totalorder %v5228, 72
        %vm5241 = vcmp.lt.s32.totalorder %v5229, 72
        %vm5242 = vcmp.lt.s32.totalorder %v5230, 72
        %vm5243 = vcmp.lt.s32.totalorder %v5231, 72
        %vm5244 = vcmp.lt.s32.totalorder %v5232, 72
        %vm5245 = vcmp.lt.s32.totalorder %v5233, 72
        %vm5246 = vcmp.lt.s32.totalorder %v5234, 72
        %v5247 = vsel %vm5235, %v5113, 0.0
        %v5248 = vsel %vm5236, %v5115, 0.0
        %v5249 = vsel %vm5237, %v5117, 0.0
        %v5250 = vsel %vm5238, %v5119, 0.0
        %v5251 = vsel %vm5239, %v5121, 0.0
        %v5252 = vsel %vm5240, %v5123, 0.0
        %v5253 = vsel %vm5241, %v5125, 0.0
        %v5254 = vsel %vm5242, %v5127, 0.0
        %v5255 = vsel %vm5243, %v5129, 0.0
        %v5256 = vsel %vm5244, %v5131, 0.0
        %v5257 = vsel %vm5245, %v5133, 0.0
        %v5258 = vsel %vm5246, %v5135, 0.0
        %v5259 = vadd.f32 %v5247, %v5248
        %v5260 = vadd.f32 %v5259, %v5249
        %v5261 = vadd.f32 %v5260, %v5250
        %v5262 = vadd.f32 %v5261, %v5251
        %v5263 = vadd.f32 %v5262, %v5252
        %v5264 = vadd.f32 %v5263, %v5253
        %v5265 = vadd.f32 %v5264, %v5254
        %v5266 = vadd.f32 %v5265, %v5255
        %v5267 = vadd.f32 %v5266, %v5256
        %v5268 = vadd.f32 %v5267, %v5257
        %v5269 = vadd.f32 %v5268, %v5258
        %5270 = vst [vmem:[%s393] sm:$0xff] %v5269
        %s5271 = smul.u32 12, %s27
        %p5272 = scmp.lt.s32.totalorder %s26, 1
        %s5273 = scalar_select %p5272, %s26, 1
        %p5274 = scmp.lt.s32.totalorder %s5271, 11
        %s5275 = scalar_select %p5274, %s5271, 11
        %s5276 = smul.addr %s5273, 12
        %s5277 = sadd.s32 %s5275, %s5276
        %s5278 = smul.addr %s5277, 8
        %s5279 = scalar_lea.vmem %s5, %s5278
        %s5280 = smul.u32 12, %s27
        %p5281 = scmp.lt.s32.totalorder %s26, 1
        %s5282 = scalar_select %p5281, %s26, 1
        %p5283 = scmp.lt.s32.totalorder %s5280, 11
        %s5284 = scalar_select %p5283, %s5280, 11
        %s5285 = smul.addr %s5282, 12
        %s5286 = sadd.s32 %s5284, %s5285
        %s5287 = smul.addr %s5286, 2
        %s5288 = scalar_lea.vmem %s6, %s5287
        %p5289 = scmp.lt.s32.totalorder %s26, 1
        %s5290 = scalar_select %p5289, %s26, 1
        %p5291 = scmp.lt.s32.totalorder %s27, 0
        %s5292 = scalar_select %p5291, %s27, 0
        %s5293 = sadd.s32 %s5292, %s5290
        %s5294 = smul.addr %s5293, 8
        %s5295 = scalar_lea.vmem %s7, %s5294
        // Predicated region
        $region53: #{ocr_predictor_forward.2} parent=39 // pred_check
          %p5296 = pneg %p166
        $region54: #{ocr_predictor_forward.2} parent=39 // pred_check_branch
          %5298 = sbr.rel (%p5296) target = $region56
        $region55: #{ocr_predictor_forward.2} parent=39 // pred_region
          %s5299 = smul.u32 12, %s27
        $region56: #{ocr_predictor_forward.2} parent=39 // pred_fallthru
          _
        // Predicated region
        $region57: #{ocr_predictor_forward.2} parent=39 // pred_check
          %p5300 = pneg %p194
        $region58: #{ocr_predictor_forward.2} parent=39 // pred_check_branch
          %5302 = sbr.rel (%p5300) target = $region60
        $region59: #{ocr_predictor_forward.2} parent=39 // pred_region
          %s5303 = smul.u32 12, %s27
        $region60: #{ocr_predictor_forward.2} parent=39 // pred_fallthru
          _
        // Predicated region
        $region61: #{ocr_predictor_forward.2} parent=39 // pred_check
          %p5304 = pneg %p222
        $region62: #{ocr_predictor_forward.2} parent=39 // pred_check_branch
          %5306 = sbr.rel (%p5304) target = $region64
        $region63: #{ocr_predictor_forward.2} parent=39 // pred_region
          _
        $region64: #{ocr_predictor_forward.2} parent=39 // pred_fallthru
          _
      $region40: #{ocr_predictor_forward.2} parent=5 // pred_fallthru
        _
      %p5307 = scmp.le.s32.totalorder 2, %s17
      // Predicated region
      $region65: #{ocr_predictor_forward.2} parent=5 // pred_check
        %p5308 = pneg %p5307
      $region66: #{ocr_predictor_forward.2} parent=5 // pred_check_branch
        %5310 = sbr.rel (%p5308) target = $region68
      $region67: #{ocr_predictor_forward.2} parent=5 // pred_region
        %s5311 = ssub.s32 %s17, 2
        // Predicated region
        $region69: #{ocr_predictor_forward.2} parent=67 // pred_check
          %p5312 = pneg %p172
        $region70: #{ocr_predictor_forward.2} parent=67 // pred_check_branch
          %5314 = sbr.rel (%p5312) target = $region72
        $region71: #{ocr_predictor_forward.2} parent=67 // pred_region
          %s5315 = smul.u32 12, %s29
          %p5316 = scmp.lt.s32.totalorder %s28, 1
          %s5317 = scalar_select %p5316, %s28, 1
          %p5318 = scmp.lt.s32.totalorder %s5315, 11
          %s5319 = scalar_select %p5318, %s5315, 11
          %s5320 = smul.addr %s5317, 12
          %s5321 = sadd.s32 %s5319, %s5320
          %s5322 = smul.addr %s5321, 8
          %s5323 = scalar_lea.vmem %s5, %s5322
        $region72: #{ocr_predictor_forward.2} parent=67 // pred_fallthru
          _
        // Predicated region
        $region73: #{ocr_predictor_forward.2} parent=67 // pred_check
          %p5324 = pneg %p200
        $region74: #{ocr_predictor_forward.2} parent=67 // pred_check_branch
          %5326 = sbr.rel (%p5324) target = $region76
        $region75: #{ocr_predictor_forward.2} parent=67 // pred_region
          %s5327 = smul.u32 12, %s29
          %p5328 = scmp.lt.s32.totalorder %s28, 1
          %s5329 = scalar_select %p5328, %s28, 1
          %p5330 = scmp.lt.s32.totalorder %s5327, 11
          %s5331 = scalar_select %p5330, %s5327, 11
          %s5332 = smul.addr %s5329, 12
          %s5333 = sadd.s32 %s5331, %s5332
          %s5334 = smul.addr %s5333, 2
          %s5335 = scalar_lea.vmem %s6, %s5334
        $region76: #{ocr_predictor_forward.2} parent=67 // pred_fallthru
          _
        // Predicated region
        $region77: #{ocr_predictor_forward.2} parent=67 // pred_check
          %p5336 = pneg %p228
        $region78: #{ocr_predictor_forward.2} parent=67 // pred_check_branch
          %5338 = sbr.rel (%p5336) target = $region80
        $region79: #{ocr_predictor_forward.2} parent=67 // pred_region
          %p5339 = scmp.lt.s32.totalorder %s28, 1
          %s5340 = scalar_select %p5339, %s28, 1
          %p5341 = scmp.lt.s32.totalorder %s29, 0
          %s5342 = scalar_select %p5341, %s29, 0
          %s5343 = sadd.s32 %s5342, %s5340
          %s5344 = smul.addr %s5343, 8
          %s5345 = scalar_lea.vmem %s7, %s5344
        $region80: #{ocr_predictor_forward.2} parent=67 // pred_fallthru
          _
      $region68: #{ocr_predictor_forward.2} parent=5 // pred_fallthru
        _
    $region6: #{ocr_predictor_forward.2} parent=1 // loop_footer
      %s21 = sadd.s32 1, %s17
    $region7: #{ocr_predictor_forward.2} parent=1 // loop_footer_branch
      %16 = sbr.rel target = $region3
    $region8: #{ocr_predictor_forward.2} parent=1 // loop_exit
      _
    %5346 = vsyncpa [#allocation4], 1
    %s5347 = scalar_lea.sflag [#allocation4], 1
    %5348 = vsyncpa %s5347, 1
    %5349 = vsyncpa [#allocation6], 1

// kernel: ocr_predictor_forward.3
$region0: #{ocr_predictor_forward.3}
  #allocation0 [shape = 'u32[]', space=smem, size = 0x4, offset = 0x4, fixed_abs, tag = 'smem constant byte address 0x4 - core index']
  #allocation1 [shape = 'u32[144,128]{1,0:T(1,128)}', space=vmem, size = 0x12000, scoped, tag = 'internal scratch']
  %s0 = inlined_call_operand.vmem [shape: bf16[64,2048], index: 0, kind: input, shape index: {}]
  %s1 = inlined_call_operand.vmem [shape: bf16[128,64], index: 1, kind: input, shape index: {}]
  %s2 = inlined_call_operand.vmem [shape: f32[128,1], index: 2, kind: input, shape index: {}]
  %s3 = inlined_call_operand.vmem [shape: s32[1,2048], index: 3, kind: output, shape index: {0}]
  %s4 = inlined_call_operand.vmem [shape: f32[1,2048], index: 4, kind: output, shape index: {1}]
  %5 = xla_tuple %s3, %s4
  %s6 = sld [smem:[#allocation0]]
  $region76: #{ocr_predictor_forward.3} parent=0
    _
  %s8 = ssub.s32 1, %s6
  %s9 = scalar_select 0, %s8, %s6
  $region1: #{ocr_predictor_forward.3} parent=0
    #allocation2 [shape = 'u8[262144]{0}', space=vmem, size = 0x40000, scoped, tag = 'input window, operand 0']
    loop: start=0, step=1, limit=4
    $region2: #{ocr_predictor_forward.3} parent=1 // loop_pre_header
      _
    $region3: #{ocr_predictor_forward.3} parent=1 // loop_header
      %s11 = sphi 0, %s15
      %p12 = scmp.ge.s32.totalorder %s11, 4
      %s21 = sphi 0, %s23
      %s24 = sphi 0, %s21
      %s25 = sphi 0, %s24
      %s41 = sphi 0, %s25
      %s45 = sphi 0, %s45
      %s47 = sphi 0, %s45
      %s48 = sphi 0, %s47
      %s62 = sphi 0, %s48
      %s66 = sphi 0, %s66
      %s68 = sphi 0, %s66
      %s69 = sphi 0, %s68
      %s83 = sphi 0, %s69
      %s89 = sphi 0, %s91
      %s92 = sphi 0, %s89
      %s93 = sphi 0, %s92
      %s109 = sphi 0, %s93
      %s115 = sphi 0, %s117
      %s118 = sphi 0, %s115
      %s119 = sphi 0, %s118
      %s135 = sphi 0, %s119
    $region4: #{ocr_predictor_forward.3} parent=1 // loop_header_branch
      %14 = sbr.rel (%p12) target = $region8
    $region5: #{ocr_predictor_forward.3} parent=1 // loop_body
      %s16 = ssub.s32 %s11, 1
      %s17 = ssub.s32 %s11, 2
      %s18 = sadd.s32 %s11, 1
      %s19 = ssub.s32 %s11, %s18
      %p20 = scmp.eq.s32.totalorder %s19, 0
      %s22 = sadd.s32 %s21, 1
      %s23 = scalar_select %p20, %s21, %s22
      %p26 = pneg %p20
      %p27 = scmp.eq.s32.totalorder %s11, 1
      %p28 = por %p26, %p27
      %p29 = scmp.ne.s32.totalorder %s21, %s24
      %p30 = scmp.eq.s32.totalorder %s11, 0
      %p31 = por %p29, %p30
      %p32 = scmp.ne.s32.totalorder %s21, %s24
      %p33 = scmp.eq.s32.totalorder %s16, 1
      %p34 = por %p32, %p33
      %p35 = scmp.ne.s32.totalorder %s24, %s25
      %p36 = scmp.eq.s32.totalorder %s16, 0
      %p37 = por %p35, %p36
      %p38 = scmp.ne.s32.totalorder %s24, %s25
      %p39 = scmp.eq.s32.totalorder %s17, 1
      %p40 = por %p38, %p39
      %p42 = scmp.ne.s32.totalorder %s25, %s41
      %p43 = scmp.eq.s32.totalorder %s17, 0
      %p44 = por %p42, %p43
      %s46 = sadd.s32 %s45, 1
      %p49 = scmp.eq.s32.totalorder %s11, 1
      %p50 = scmp.ne.s32.totalorder %s45, %s47
      %p51 = scmp.eq.s32.totalorder %s11, 0
      %p52 = por %p50, %p51
      %p53 = scmp.ne.s32.totalorder %s45, %s47
      %p54 = scmp.eq.s32.totalorder %s16, 1
      %p55 = por %p53, %p54
      %p56 = scmp.ne.s32.totalorder %s47, %s48
      %p57 = scmp.eq.s32.totalorder %s16, 0
      %p58 = por %p56, %p57
      %p59 = scmp.ne.s32.totalorder %s47, %s48
      %p60 = scmp.eq.s32.totalorder %s17, 1
      %p61 = por %p59, %p60
      %p63 = scmp.ne.s32.totalorder %s48, %s62
      %p64 = scmp.eq.s32.totalorder %s17, 0
      %p65 = por %p63, %p64
      %s67 = sadd.s32 %s66, 1
      %p70 = scmp.eq.s32.totalorder %s11, 1
      %p71 = scmp.ne.s32.totalorder %s66, %s68
      %p72 = scmp.eq.s32.totalorder %s11, 0
      %p73 = por %p71, %p72
      %p74 = scmp.ne.s32.totalorder %s66, %s68
      %p75 = scmp.eq.s32.totalorder %s16, 1
      %p76 = por %p74, %p75
      %p77 = scmp.ne.s32.totalorder %s68, %s69
      %p78 = scmp.eq.s32.totalorder %s16, 0
      %p79 = por %p77, %p78
      %p80 = scmp.ne.s32.totalorder %s68, %s69
      %p81 = scmp.eq.s32.totalorder %s17, 1
      %p82 = por %p80, %p81
      %p84 = scmp.ne.s32.totalorder %s69, %s83
      %p85 = scmp.eq.s32.totalorder %s17, 0
      %p86 = por %p84, %p85
      %s87 = ssub.s32 %s11, %s18
      %p88 = scmp.eq.s32.totalorder %s87, 0
      %s90 = sadd.s32 %s89, 1
      %s91 = scalar_select %p88, %s89, %s90
      %p94 = pneg %p88
      %p95 = scmp.eq.s32.totalorder %s11, 1
      %p96 = por %p94, %p95
      %p97 = scmp.ne.s32.totalorder %s89, %s92
      %p98 = scmp.eq.s32.totalorder %s11, 0
      %p99 = por %p97, %p98
      %p100 = scmp.ne.s32.totalorder %s89, %s92
      %p101 = scmp.eq.s32.totalorder %s16, 1
      %p102 = por %p100, %p101
      %p103 = scmp.ne.s32.totalorder %s92, %s93
      %p104 = scmp.eq.s32.totalorder %s16, 0
      %p105 = por %p103, %p104
      %p106 = scmp.ne.s32.totalorder %s92, %s93
      %p107 = scmp.eq.s32.totalorder %s17, 1
      %p108 = por %p106, %p107
      %p110 = scmp.ne.s32.totalorder %s93, %s109
      %p111 = scmp.eq.s32.totalorder %s17, 0
      %p112 = por %p110, %p111
      %s113 = ssub.s32 %s11, %s18
      %p114 = scmp.eq.s32.totalorder %s113, 0
      %s116 = sadd.s32 %s115, 1
      %s117 = scalar_select %p114, %s115, %s116
      %p120 = pneg %p114
      %p121 = scmp.eq.s32.totalorder %s11, 1
      %p122 = por %p120, %p121
      %p123 = scmp.ne.s32.totalorder %s115, %s118
      %p124 = scmp.eq.s32.totalorder %s11, 0
      %p125 = por %p123, %p124
      %p126 = scmp.ne.s32.totalorder %s115, %s118
      %p127 = scmp.eq.s32.totalorder %s16, 1
      %p128 = por %p126, %p127
      %p129 = scmp.ne.s32.totalorder %s118, %s119
      %p130 = scmp.eq.s32.totalorder %s16, 0
      %p131 = por %p129, %p130
      %p132 = scmp.ne.s32.totalorder %s118, %s119
      %p133 = scmp.eq.s32.totalorder %s17, 1
      %p134 = por %p132, %p133
      %p136 = scmp.ne.s32.totalorder %s119, %s135
      %p137 = scmp.eq.s32.totalorder %s17, 0
      %p138 = por %p136, %p137
      %p139 = scmp.le.s32.totalorder 1, %s11
      %p140 = scmp.lt.s32.totalorder %s11, 3
      %p141 = pnand %p139, %p140
      %p142 = pneg %p141
      // Predicated region
      $region9: #{ocr_predictor_forward.3} parent=5 // pred_check
        _
      $region10: #{ocr_predictor_forward.3} parent=5 // pred_check_branch
        %144 = sbr.rel (%p141) target = $region12
      $region11: #{ocr_predictor_forward.3} parent=5 // pred_region
        %s145 = ssub.s32 %s11, 1
        // Predicated region
        $region13: #{ocr_predictor_forward.3} parent=11 // pred_check
          %p146 = pneg %p58
        $region14: #{ocr_predictor_forward.3} parent=11 // pred_check_branch
          %148 = sbr.rel (%p146) target = $region16
        $region15: #{ocr_predictor_forward.3} parent=11 // pred_region
          _
        $region16: #{ocr_predictor_forward.3} parent=11 // pred_fallthru
          _
        // Predicated region
        $region17: #{ocr_predictor_forward.3} parent=11 // pred_check
          %p149 = pneg %p79
        $region18: #{ocr_predictor_forward.3} parent=11 // pred_check_branch
          %151 = sbr.rel (%p149) target = $region20
        $region19: #{ocr_predictor_forward.3} parent=11 // pred_region
          _
        $region20: #{ocr_predictor_forward.3} parent=11 // pred_fallthru
          _
      $region12: #{ocr_predictor_forward.3} parent=5 // pred_fallthru
        _
      %p152 = scmp.lt.s32.totalorder %s11, 2
      // Predicated region
      $region21: #{ocr_predictor_forward.3} parent=5 // pred_check
        %p153 = pneg %p152
      $region22: #{ocr_predictor_forward.3} parent=5 // pred_check_branch
        %155 = sbr.rel (%p153) target = $region24
      $region23: #{ocr_predictor_forward.3} parent=5 // pred_region
        // Predicated region
        $region25: #{ocr_predictor_forward.3} parent=23 // pred_check
          %p156 = pneg %p31
        $region26: #{ocr_predictor_forward.3} parent=23 // pred_check_branch
          %158 = sbr.rel (%p156) target = $region28
        $region27: #{ocr_predictor_forward.3} parent=23 // pred_region
          %s159 = sand.u32 %s21, 1
          %s160 = sand.u32 %s21, 1
          %s161 = smul.addr %s160, 256
          %s162 = scalar_lea.vmem [#allocation2], %s161
          %s163 = smul.u32 8, %s11
          %s164 = smul.addr %s163, 4
          %s165 = scalar_lea.vmem %s0, %s164
          // Predicated region
          $region29: #{ocr_predictor_forward.3} parent=27 // pred_check
            _
          $region30: #{ocr_predictor_forward.3} parent=27 // pred_check_branch
            %167 = sbr.rel (0) target = $region32
          $region31: #{ocr_predictor_forward.3} parent=27 // pred_region
            // Predicated region
            $region33: #{ocr_predictor_forward.3} parent=31 // pred_check
              _
            $region34: #{ocr_predictor_forward.3} parent=31 // pred_check_branch
              %169 = sbr.rel (0) target = $region36
            $region35: #{ocr_predictor_forward.3} parent=31 // pred_region
              loop: start=0, step=1, limit=1
              $region37: #{ocr_predictor_forward.3} parent=35 // loop_pre_header
                _
              $region38: #{ocr_predictor_forward.3} parent=35 // loop_header
                %s171 = sphi 0, %s175
                %p172 = scmp.ge.s32.totalorder %s171, 1
                %s176 = sphi %s165, %s165
                %s177 = sphi %s162, %s162
              $region39: #{ocr_predictor_forward.3} parent=35 // loop_header_branch
                %174 = sbr.rel (%p172) target = $region43
              $region40: #{ocr_predictor_forward.3} parent=35 // loop_body
                %v178 = vld [vmem:[%s176] sm:$0xff]
                %179 = vst [vmem:[%s177] sm:$0xff] %v178
                %v180 = vld [vmem:[%s176 + $0x8] sm:$0xff]
                %181 = vst [vmem:[%s177 + $0x8] sm:$0xff] %v180
                %v182 = vld [vmem:[%s176 + $0x10] sm:$0xff]
                %183 = vst [vmem:[%s177 + $0x10] sm:$0xff] %v182
                %v184 = vld [vmem:[%s176 + $0x18] sm:$0xff]
                %185 = vst [vmem:[%s177 + $0x18] sm:$0xff] %v184
                %v186 = vld [vmem:[%s176 + $0x40] sm:$0xff]
                %187 = vst [vmem:[%s177 + $0x20] sm:$0xff] %v186
                %v188 = vld [vmem:[%s176 + $0x48] sm:$0xff]
                %189 = vst [vmem:[%s177 + $0x28] sm:$0xff] %v188
                %v190 = vld [vmem:[%s176 + $0x50] sm:$0xff]
                %191 = vst [vmem:[%s177 + $0x30] sm:$0xff] %v190
                %v192 = vld [vmem:[%s176 + $0x58] sm:$0xff]
                %193 = vst [vmem:[%s177 + $0x38] sm:$0xff] %v192
                %v194 = vld [vmem:[%s176 + $0x80] sm:$0xff]
                %195 = vst [vmem:[%s177 + $0x40] sm:$0xff] %v194
                %v196 = vld [vmem:[%s176 + $0x88] sm:$0xff]
                %197 = vst [vmem:[%s177 + $0x48] sm:$0xff] %v196
                %v198 = vld [vmem:[%s176 + $0x90] sm:$0xff]
                %199 = vst [vmem:[%s177 + $0x50] sm:$0xff] %v198
                %v200 = vld [vmem:[%s176 + $0x98] sm:$0xff]
                %201 = vst [vmem:[%s177 + $0x58] sm:$0xff] %v200
                %v202 = vld [vmem:[%s176 + $0xc0] sm:$0xff]
                %203 = vst [vmem:[%s177 + $0x60] sm:$0xff] %v202
                %v204 = vld [vmem:[%s176 + $0xc8] sm:$0xff]
                %205 = vst [vmem:[%s177 + $0x68] sm:$0xff] %v204
                %v206 = vld [vmem:[%s176 + $0xd0] sm:$0xff]
                %207 = vst [vmem:[%s177 + $0x70] sm:$0xff] %v206
                %v208 = vld [vmem:[%s176 + $0xd8] sm:$0xff]
                %209 = vst [vmem:[%s177 + $0x78] sm:$0xff] %v208
                %v210 = vld [vmem:[%s176 + $0x100] sm:$0xff]
                %211 = vst [vmem:[%s177 + $0x80] sm:$0xff] %v210
                %v212 = vld [vmem:[%s176 + $0x108] sm:$0xff]
                %213 = vst [vmem:[%s177 + $0x88] sm:$0xff] %v212
                %v214 = vld [vmem:[%s176 + $0x110] sm:$0xff]
                %215 = vst [vmem:[%s177 + $0x90] sm:$0xff] %v214
                %v216 = vld [vmem:[%s176 + $0x118] sm:$0xff]
                %217 = vst [vmem:[%s177 + $0x98] sm:$0xff] %v216
                %v218 = vld [vmem:[%s176 + $0x140] sm:$0xff]
                %219 = vst [vmem:[%s177 + $0xa0] sm:$0xff] %v218
                %v220 = vld [vmem:[%s176 + $0x148] sm:$0xff]
                %221 = vst [vmem:[%s177 + $0xa8] sm:$0xff] %v220
                %v222 = vld [vmem:[%s176 + $0x150] sm:$0xff]
                %223 = vst [vmem:[%s177 + $0xb0] sm:$0xff] %v222
                %v224 = vld [vmem:[%s176 + $0x158] sm:$0xff]
                %225 = vst [vmem:[%s177 + $0xb8] sm:$0xff] %v224
                %v226 = vld [vmem:[%s176 + $0x180] sm:$0xff]
                %227 = vst [vmem:[%s177 + $0xc0] sm:$0xff] %v226
                %v228 = vld [vmem:[%s176 + $0x188] sm:$0xff]
                %229 = vst [vmem:[%s177 + $0xc8] sm:$0xff] %v228
                %v230 = vld [vmem:[%s176 + $0x190] sm:$0xff]
                %231 = vst [vmem:[%s177 + $0xd0] sm:$0xff] %v230
                %v232 = vld [vmem:[%s176 + $0x198] sm:$0xff]
                %233 = vst [vmem:[%s177 + $0xd8] sm:$0xff] %v232
                %v234 = vld [vmem:[%s176 + $0x1c0] sm:$0xff]
                %235 = vst [vmem:[%s177 + $0xe0] sm:$0xff] %v234
                %v236 = vld [vmem:[%s176 + $0x1c8] sm:$0xff]
                %237 = vst [vmem:[%s177 + $0xe8] sm:$0xff] %v236
                %v238 = vld [vmem:[%s176 + $0x1d0] sm:$0xff]
                %239 = vst [vmem:[%s177 + $0xf0] sm:$0xff] %v238
                %v240 = vld [vmem:[%s176 + $0x1d8] sm:$0xff]
                %241 = vst [vmem:[%s177 + $0xf8] sm:$0xff] %v240
              $region41: #{ocr_predictor_forward.3} parent=35 // loop_footer
                %s175 = sadd.s32 1, %s171
              $region42: #{ocr_predictor_forward.3} parent=35 // loop_footer_branch
                %170 = sbr.rel target = $region38
              $region43: #{ocr_predictor_forward.3} parent=35 // loop_exit
                _
            $region36: #{ocr_predictor_forward.3} parent=31 // pred_fallthru
              _
            // Predicated region
            $region44: #{ocr_predictor_forward.3} parent=31 // pred_check
              _
            $region45: #{ocr_predictor_forward.3} parent=31 // pred_check_branch
              %243 = sbr.rel target = $region47
            $region46: #{ocr_predictor_forward.3} parent=31 // pred_region
              _
            $region47: #{ocr_predictor_forward.3} parent=31 // pred_fallthru
              _
          $region32: #{ocr_predictor_forward.3} parent=27 // pred_fallthru
            _
          %244 = vnop
        $region28: #{ocr_predictor_forward.3} parent=23 // pred_fallthru
          _
      $region24: #{ocr_predictor_forward.3} parent=5 // pred_fallthru
        _
      %p245 = scmp.le.s32.totalorder 1, %s11
      %p246 = scmp.lt.s32.totalorder %s11, 3
      %p247 = pnand %p245, %p246
      %p248 = pneg %p247
      // Predicated region
      $region48: #{ocr_predictor_forward.3} parent=5 // pred_check
        _
      $region49: #{ocr_predictor_forward.3} parent=5 // pred_check_branch
        %250 = sbr.rel (%p247) target = $region51
      $region50: #{ocr_predictor_forward.3} parent=5 // pred_region
        %s251 = ssub.s32 %s11, 1
        %s252 = sand.u32 %s24, 1
        %s253 = sand.u32 %s24, 1
        %s254 = smul.addr %s253, 256
        %s255 = scalar_lea.vmem [#allocation2], %s254
        // Predicated region
        $region52: #{ocr_predictor_forward.3} parent=50 // pred_check
          %p256 = pneg %p37
        $region53: #{ocr_predictor_forward.3} parent=50 // pred_check_branch
          %258 = sbr.rel (%p256) target = $region55
        $region54: #{ocr_predictor_forward.3} parent=50 // pred_region
          _
        $region55: #{ocr_predictor_forward.3} parent=50 // pred_fallthru
          _
        %s259 = sand.u32 %s24, 1
        %s260 = sand.u32 %s24, 1
        %s261 = smul.addr %s260, 256
        %s262 = scalar_lea.vmem [#allocation2], %s261
        %p263 = pneg %p37
        %p264 = pneg %p34
        %p265 = pneg %p58
        %p266 = pneg %p55
        %p267 = pneg %p79
        %p268 = pneg %p76
        %p269 = pneg %p105
        %p270 = pneg %p102
        %s271 = smul.u32 8, %s16
        %p272 = scmp.lt.s32.totalorder %s271, 15
        %s273 = scalar_select %p272, %s271, 15
        %s274 = scalar_lea.vmem %s3, %s273
        %p275 = pneg %p131
        %p276 = pneg %p128
        %s277 = smul.u32 8, %s16
        %p278 = scmp.lt.s32.totalorder %s277, 15
        %s279 = scalar_select %p278, %s277, 15
        %s280 = scalar_lea.vmem %s4, %s279
        %s281 = smul.u32 8, %s16
        %s282 = smul.u32 8, %s16
        %p283 = scmp.lt.s32.totalorder %s282, 15
        %s284 = scalar_select %p283, %s282, 15
        %s285 = scalar_lea.vmem %s3, %s284
        %s286 = smul.u32 8, %s16
        %s287 = smul.u32 8, %s16
        %p288 = scmp.lt.s32.totalorder %s287, 15
        %s289 = scalar_select %p288, %s287, 15
        %s290 = scalar_lea.vmem %s4, %s289
        %s291 = smul.u32 8, %s16
        %v293 = vld [vmem:[%s1] sm:$0xf]
        %v294 = vld [vmem:[%s1 + $0x4] sm:$0xf]
        %v295 = vld [vmem:[%s1 + $0x8] sm:$0xf]
        %v296 = vld [vmem:[%s1 + $0xc] sm:$0xf]
        %v297 = vld [vmem:[%s1 + $0x10] sm:$0xf]
        %v298 = vld [vmem:[%s1 + $0x14] sm:$0xf]
        %v299 = vld [vmem:[%s1 + $0x18] sm:$0xf]
        %v300 = vld [vmem:[%s1 + $0x1c] sm:$0xf]
        %v301 = vld [vmem:[%s1 + $0x20] sm:$0xf]
        %v302 = vld [vmem:[%s1 + $0x24] sm:$0xf]
        %v303 = vld [vmem:[%s1 + $0x28] sm:$0xf]
        %v304 = vld [vmem:[%s1 + $0x2c] sm:$0xf]
        %v305 = vld [vmem:[%s1 + $0x30] sm:$0xf]
        %v306 = vld [vmem:[%s1 + $0x34] sm:$0xf]
        %v307 = vld [vmem:[%s1 + $0x38] sm:$0xf]
        %v308 = vld [vmem:[%s1 + $0x3c] sm:$0xf]
        %v309 = vld [vmem:[%s255] sm:$0xff]
        %v310 = vld [vmem:[%s255 + $0x8] sm:$0xff]
        %v311 = vld [vmem:[%s255 + $0x10] sm:$0xff]
        %v312 = vld [vmem:[%s255 + $0x18] sm:$0xff]
        %v313 = vld [vmem:[%s255 + $0x20] sm:$0xff]
        %v314 = vld [vmem:[%s255 + $0x28] sm:$0xff]
        %v315 = vld [vmem:[%s255 + $0x30] sm:$0xff]
        %v316 = vld [vmem:[%s255 + $0x38] sm:$0xff]
        %v317 = vld [vmem:[%s255 + $0x40] sm:$0xff]
        %v318 = vld [vmem:[%s255 + $0x48] sm:$0xff]
        %v319 = vld [vmem:[%s255 + $0x50] sm:$0xff]
        %v320 = vld [vmem:[%s255 + $0x58] sm:$0xff]
        %v321 = vld [vmem:[%s255 + $0x60] sm:$0xff]
        %v322 = vld [vmem:[%s255 + $0x68] sm:$0xff]
        %v323 = vld [vmem:[%s255 + $0x70] sm:$0xff]
        %v324 = vld [vmem:[%s255 + $0x78] sm:$0xff]
        %v325 = vld [vmem:[%s255 + $0x80] sm:$0xff]
        %v326 = vld [vmem:[%s255 + $0x88] sm:$0xff]
        %v327 = vld [vmem:[%s255 + $0x90] sm:$0xff]
        %v328 = vld [vmem:[%s255 + $0x98] sm:$0xff]
        %v329 = vld [vmem:[%s255 + $0xa0] sm:$0xff]
        %v330 = vld [vmem:[%s255 + $0xa8] sm:$0xff]
        %v331 = vld [vmem:[%s255 + $0xb0] sm:$0xff]
        %v332 = vld [vmem:[%s255 + $0xb8] sm:$0xff]
        %v333 = vld [vmem:[%s255 + $0xc0] sm:$0xff]
        %v334 = vld [vmem:[%s255 + $0xc8] sm:$0xff]
        %v335 = vld [vmem:[%s255 + $0xd0] sm:$0xff]
        %v336 = vld [vmem:[%s255 + $0xd8] sm:$0xff]
        %v337 = vld [vmem:[%s255 + $0xe0] sm:$0xff]
        %v338 = vld [vmem:[%s255 + $0xe8] sm:$0xff]
        %v339 = vld [vmem:[%s255 + $0xf0] sm:$0xff]
        %v340 = vld [vmem:[%s255 + $0xf8] sm:$0xff]
        %v341 = vld [vmem:[%s2] sm:$0xff]
        %v342 = vld [vmem:[%s2 + $0x8] sm:$0xff]
        %v343 = vld [vmem:[%s2 + $0x10] sm:$0xff]
        %v344 = vld [vmem:[%s2 + $0x18] sm:$0xff]
        %v345 = vld [vmem:[%s2 + $0x20] sm:$0xff]
        %v346 = vld [vmem:[%s2 + $0x28] sm:$0xff]
        %v347 = vld [vmem:[%s2 + $0x30] sm:$0xff]
        %v348 = vld [vmem:[%s2 + $0x38] sm:$0xff]
        %v349 = vld [vmem:[%s2 + $0x40] sm:$0xff]
        %v350 = vld [vmem:[%s2 + $0x48] sm:$0xff]
        %v351 = vld [vmem:[%s2 + $0x50] sm:$0xff]
        %v352 = vld [vmem:[%s2 + $0x58] sm:$0xff]
        %v353 = vld [vmem:[%s2 + $0x60] sm:$0xff]
        %v354 = vld [vmem:[%s2 + $0x68] sm:$0xff]
        %v355 = vld [vmem:[%s2 + $0x70] sm:$0xff]
        %v356 = vld [vmem:[%s2 + $0x78] sm:$0xff]
        %358 = vset.pattern.permute.xlu0 0
        %359 = vperm.xlu0 %358, %v341
        %v360 = vpop.permute.xlu0 %359
        %363 = vset.pattern.permute.xlu0 0
        %364 = vperm.xlu0 %363, %v342
        %v365 = vpop.permute.xlu0 %364
        %368 = vset.pattern.permute.xlu0 0
        %369 = vperm.xlu0 %368, %v343
        %v370 = vpop.permute.xlu0 %369
        %373 = vset.pattern.permute.xlu0 0
        %374 = vperm.xlu0 %373, %v344
        %v375 = vpop.permute.xlu0 %374
        %378 = vset.pattern.permute.xlu0 0
        %379 = vperm.xlu0 %378, %v345
        %v380 = vpop.permute.xlu0 %379
        %383 = vset.pattern.permute.xlu0 0
        %384 = vperm.xlu0 %383, %v346
        %v385 = vpop.permute.xlu0 %384
        %388 = vset.pattern.permute.xlu0 0
        %389 = vperm.xlu0 %388, %v347
        %v390 = vpop.permute.xlu0 %389
        %393 = vset.pattern.permute.xlu0 0
        %394 = vperm.xlu0 %393, %v348
        %v395 = vpop.permute.xlu0 %394
        %398 = vset.pattern.permute.xlu0 0
        %399 = vperm.xlu0 %398, %v349
        %v400 = vpop.permute.xlu0 %399
        %403 = vset.pattern.permute.xlu0 0
        %404 = vperm.xlu0 %403, %v350
        %v405 = vpop.permute.xlu0 %404
        %408 = vset.pattern.permute.xlu0 0
        %409 = vperm.xlu0 %408, %v351
        %v410 = vpop.permute.xlu0 %409
        %413 = vset.pattern.permute.xlu0 0
        %414 = vperm.xlu0 %413, %v352
        %v415 = vpop.permute.xlu0 %414
        %418 = vset.pattern.permute.xlu0 0
        %419 = vperm.xlu0 %418, %v353
        %v420 = vpop.permute.xlu0 %419
        %423 = vset.pattern.permute.xlu0 0
        %424 = vperm.xlu0 %423, %v354
        %v425 = vpop.permute.xlu0 %424
        %428 = vset.pattern.permute.xlu0 0
        %429 = vperm.xlu0 %428, %v355
        %v430 = vpop.permute.xlu0 %429
        %433 = vset.pattern.permute.xlu0 0
        %434 = vperm.xlu0 %433, %v356
        %v435 = vpop.permute.xlu0 %434
        %v453 = vunpack.c.l.b16 %v293
        %v454 = vunpack.c.l.b16 %v294
        %v455 = vunpack.c.l.b16 %v295
        %v456 = vunpack.c.l.b16 %v296
        %v457 = vunpack.c.l.b16 %v297
        %v458 = vunpack.c.l.b16 %v298
        %v459 = vunpack.c.l.b16 %v299
        %v460 = vunpack.c.l.b16 %v300
        %v461 = vunpack.c.l.b16 %v301
        %v462 = vunpack.c.l.b16 %v302
        %v463 = vunpack.c.l.b16 %v303
        %v464 = vunpack.c.l.b16 %v304
        %v465 = vunpack.c.l.b16 %v305
        %v466 = vunpack.c.l.b16 %v306
        %v467 = vunpack.c.l.b16 %v307
        %v468 = vunpack.c.l.b16 %v308
        %v469 = vpack.c.b16 %v454, %v453
        %v470 = vpack.c.b16 %v456, %v455
        %v471 = vpack.c.b16 %v458, %v457
        %v472 = vpack.c.b16 %v460, %v459
        %v473 = vpack.c.b16 %v462, %v461
        %v474 = vpack.c.b16 %v464, %v463
        %v475 = vpack.c.b16 %v466, %v465
        %v476 = vpack.c.b16 %v468, %v467
        %v509 = vunpack.c.l.b16 %v309
        %v510 = vunpack.c.h.b16 %v309
        %v511 = vunpack.c.l.b16 %v310
        %v512 = vunpack.c.h.b16 %v310
        %v513 = vunpack.c.l.b16 %v311
        %v514 = vunpack.c.h.b16 %v311
        %v515 = vunpack.c.l.b16 %v312
        %v516 = vunpack.c.h.b16 %v312
        %v517 = vunpack.c.l.b16 %v313
        %v518 = vunpack.c.h.b16 %v313
        %v519 = vunpack.c.l.b16 %v314
        %v520 = vunpack.c.h.b16 %v314
        %v521 = vunpack.c.l.b16 %v315
        %v522 = vunpack.c.h.b16 %v315
        %v523 = vunpack.c.l.b16 %v316
        %v524 = vunpack.c.h.b16 %v316
        %v525 = vunpack.c.l.b16 %v317
        %v526 = vunpack.c.h.b16 %v317
        %v527 = vunpack.c.l.b16 %v318
        %v528 = vunpack.c.h.b16 %v318
        %v529 = vunpack.c.l.b16 %v319
        %v530 = vunpack.c.h.b16 %v319
        %v531 = vunpack.c.l.b16 %v320
        %v532 = vunpack.c.h.b16 %v320
        %v533 = vunpack.c.l.b16 %v321
        %v534 = vunpack.c.h.b16 %v321
        %v535 = vunpack.c.l.b16 %v322
        %v536 = vunpack.c.h.b16 %v322
        %v537 = vunpack.c.l.b16 %v323
        %v538 = vunpack.c.h.b16 %v323
        %v539 = vunpack.c.l.b16 %v324
        %v540 = vunpack.c.h.b16 %v324
        %v541 = vunpack.c.l.b16 %v325
        %v542 = vunpack.c.h.b16 %v325
        %v543 = vunpack.c.l.b16 %v326
        %v544 = vunpack.c.h.b16 %v326
        %v545 = vunpack.c.l.b16 %v327
        %v546 = vunpack.c.h.b16 %v327
        %v547 = vunpack.c.l.b16 %v328
        %v548 = vunpack.c.h.b16 %v328
        %v549 = vunpack.c.l.b16 %v329
        %v550 = vunpack.c.h.b16 %v329
        %v551 = vunpack.c.l.b16 %v330
        %v552 = vunpack.c.h.b16 %v330
        %v553 = vunpack.c.l.b16 %v331
        %v554 = vunpack.c.h.b16 %v331
        %v555 = vunpack.c.l.b16 %v332
        %v556 = vunpack.c.h.b16 %v332
        %v557 = vunpack.c.l.b16 %v333
        %v558 = vunpack.c.h.b16 %v333
        %v559 = vunpack.c.l.b16 %v334
        %v560 = vunpack.c.h.b16 %v334
        %v561 = vunpack.c.l.b16 %v335
        %v562 = vunpack.c.h.b16 %v335
        %v563 = vunpack.c.l.b16 %v336
        %v564 = vunpack.c.h.b16 %v336
        %v565 = vunpack.c.l.b16 %v337
        %v566 = vunpack.c.h.b16 %v337
        %v567 = vunpack.c.l.b16 %v338
        %v568 = vunpack.c.h.b16 %v338
        %v569 = vunpack.c.l.b16 %v339
        %v570 = vunpack.c.h.b16 %v339
        %v571 = vunpack.c.l.b16 %v340
        %v572 = vunpack.c.h.b16 %v340
        %v573 = vpack.c.b16 %v517, %v509
        %v574 = vpack.c.b16 %v518, %v510
        %v575 = vpack.c.b16 %v519, %v511
        %v576 = vpack.c.b16 %v520, %v512
        %v577 = vpack.c.b16 %v521, %v513
        %v578 = vpack.c.b16 %v522, %v514
        %v579 = vpack.c.b16 %v523, %v515
        %v580 = vpack.c.b16 %v524, %v516
        %v581 = vpack.c.b16 %v533, %v525
        %v582 = vpack.c.b16 %v534, %v526
        %v583 = vpack.c.b16 %v535, %v527
        %v584 = vpack.c.b16 %v536, %v528
        %v585 = vpack.c.b16 %v537, %v529
        %v586 = vpack.c.b16 %v538, %v530
        %v587 = vpack.c.b16 %v539, %v531
        %v588 = vpack.c.b16 %v540, %v532
        %v589 = vpack.c.b16 %v549, %v541
        %v590 = vpack.c.b16 %v550, %v542
        %v591 = vpack.c.b16 %v551, %v543
        %v592 = vpack.c.b16 %v552, %v544
        %v593 = vpack.c.b16 %v553, %v545
        %v594 = vpack.c.b16 %v554, %v546
        %v595 = vpack.c.b16 %v555, %v547
        %v596 = vpack.c.b16 %v556, %v548
        %v597 = vpack.c.b16 %v565, %v557
        %v598 = vpack.c.b16 %v566, %v558
        %v599 = vpack.c.b16 %v567, %v559
        %v600 = vpack.c.b16 %v568, %v560
        %v601 = vpack.c.b16 %v569, %v561
        %v602 = vpack.c.b16 %v570, %v562
        %v603 = vpack.c.b16 %v571, %v563
        %v604 = vpack.c.b16 %v572, %v564
        %vm637 = vcmask 523264
        %v639 = vsel %vm637, %v469, 0
        %v642 = vsel %vm637, %v470, 0
        %v645 = vsel %vm637, %v471, 0
        %v648 = vsel %vm637, %v472, 0
        %v651 = vsel %vm637, %v473, 0
        %v654 = vsel %vm637, %v474, 0
        %v657 = vsel %vm637, %v475, 0
        %v660 = vsel %vm637, %v476, 0
        %662 = vmatprep.subr.bf16.mxu0 0
        %663 = vmatpush1.bf16.msra.mxu0 0
        %664 = vmatprep.subr.bf16.mxu0 0
        %665 = vmatpush1.bf16.msra.mxu0 0
        %666 = vmatprep.subr.bf16.mxu0 0
        %667 = vmatpush1.bf16.msra.mxu0 0
        %668 = vmatprep.subr.bf16.mxu0 0
        %669 = vmatpush1.bf16.msra.mxu0 0
        %670 = vmatprep.subr.bf16.mxu0 %v598
        %671 = vmatpush1.bf16.msra.mxu0 %v597
        %672 = vmatprep.subr.bf16.mxu0 %v590
        %673 = vmatpush1.bf16.msra.mxu0 %v589
        %674 = vmatprep.subr.bf16.mxu0 %v582
        %675 = vmatpush1.bf16.msra.mxu0 %v581
        %676 = vmatprep.subr.bf16.mxu0 %v574
        %677 = vmatpush1.bf16.msra.mxu0 %v573
        %678 = vmatprep.subr.bf16.mxu0 0
        %679 = vmatpush2.bf16.msra.mxu0 0
        %680 = vmatprep.subr.bf16.mxu0 0
        %681 = vmatpush2.bf16.msra.mxu0 0
        %682 = vmatprep.subr.bf16.mxu0 0
        %683 = vmatpush2.bf16.msra.mxu0 0
        %684 = vmatprep.subr.bf16.mxu0 0
        %685 = vmatpush2.bf16.msra.mxu0 0
        %686 = vmatprep.subr.bf16.mxu0 0
        %687 = vmatpush2.bf16.msra.mxu0 0
        %688 = vmatprep.subr.bf16.mxu0 0
        %689 = vmatpush2.bf16.msra.mxu0 0
        %690 = vmatprep.subr.bf16.mxu0 0
        %691 = vmatpush2.bf16.msra.mxu0 0
        %692 = vmatprep.subr.bf16.mxu0 0
        %693 = vmatpush2.bf16.msra.mxu0 0
        %694 = vmatprep.mubr.bf16.mxu0 0
        %695 = vmatmul.mubr.bf16.gmra.mxu0 %v639
        %v696 = vpop.f32.mrf.mxu0
        %v697 = vadd.f32 %v360, %v696
        %v698 = vpop.f32.mrf.mxu0
        %v699 = vadd.f32 %v360, %v698
        %v700 = vpop.f32.mrf.mxu0
        %v701 = vadd.f32 %v365, %v700
        %v702 = vpop.f32.mrf.mxu0
        %v703 = vadd.f32 %v365, %v702
        %704 = vmatprep.mubr.bf16.mxu0 0
        %705 = vmatmul.mubr.bf16.gmra.mxu0 %v642
        %v706 = vpop.f32.mrf.mxu0
        %v707 = vadd.f32 %v370, %v706
        %v708 = vpop.f32.mrf.mxu0
        %v709 = vadd.f32 %v370, %v708
        %v710 = vpop.f32.mrf.mxu0
        %v711 = vadd.f32 %v375, %v710
        %v712 = vpop.f32.mrf.mxu0
        %v713 = vadd.f32 %v375, %v712
        %714 = vmatprep.mubr.bf16.mxu0 0
        %715 = vmatmul.mubr.bf16.gmra.mxu0 %v645
        %v716 = vpop.f32.mrf.mxu0
        %v717 = vadd.f32 %v380, %v716
        %v718 = vpop.f32.mrf.mxu0
        %v719 = vadd.f32 %v380, %v718
        %v720 = vpop.f32.mrf.mxu0
        %v721 = vadd.f32 %v385, %v720
        %v722 = vpop.f32.mrf.mxu0
        %v723 = vadd.f32 %v385, %v722
        %724 = vmatprep.mubr.bf16.mxu0 0
        %725 = vmatmul.mubr.bf16.gmra.mxu0 %v648
        %v726 = vpop.f32.mrf.mxu0
        %v727 = vadd.f32 %v390, %v726
        %v728 = vpop.f32.mrf.mxu0
        %v729 = vadd.f32 %v390, %v728
        %v730 = vpop.f32.mrf.mxu0
        %v731 = vadd.f32 %v395, %v730
        %v732 = vpop.f32.mrf.mxu0
        %v733 = vadd.f32 %v395, %v732
        %734 = vmatprep.mubr.bf16.mxu0 0
        %735 = vmatmul.mubr.bf16.gmra.mxu0 %v651
        %v736 = vpop.f32.mrf.mxu0
        %v737 = vadd.f32 %v400, %v736
        %v738 = vpop.f32.mrf.mxu0
        %v739 = vadd.f32 %v400, %v738
        %v740 = vpop.f32.mrf.mxu0
        %v741 = vadd.f32 %v405, %v740
        %v742 = vpop.f32.mrf.mxu0
        %v743 = vadd.f32 %v405, %v742
        %744 = vmatprep.mubr.bf16.mxu0 0
        %745 = vmatmul.mubr.bf16.gmra.mxu0 %v654
        %v746 = vpop.f32.mrf.mxu0
        %v747 = vadd.f32 %v410, %v746
        %v748 = vpop.f32.mrf.mxu0
        %v749 = vadd.f32 %v410, %v748
        %v750 = vpop.f32.mrf.mxu0
        %v751 = vadd.f32 %v415, %v750
        %v752 = vpop.f32.mrf.mxu0
        %v753 = vadd.f32 %v415, %v752
        %754 = vmatprep.mubr.bf16.mxu0 0
        %755 = vmatmul.mubr.bf16.gmra.mxu0 %v657
        %v756 = vpop.f32.mrf.mxu0
        %v757 = vadd.f32 %v420, %v756
        %v758 = vpop.f32.mrf.mxu0
        %v759 = vadd.f32 %v420, %v758
        %v760 = vpop.f32.mrf.mxu0
        %v761 = vadd.f32 %v425, %v760
        %v762 = vpop.f32.mrf.mxu0
        %v763 = vadd.f32 %v425, %v762
        %764 = vmatprep.mubr.bf16.mxu0 0
        %765 = vmatmul.mubr.bf16.gmra.mxu0 %v660
        %v766 = vpop.f32.mrf.mxu0
        %v767 = vadd.f32 %v430, %v766
        %v768 = vpop.f32.mrf.mxu0
        %v769 = vadd.f32 %v430, %v768
        %v770 = vpop.f32.mrf.mxu0
        %v771 = vadd.f32 %v435, %v770
        %v772 = vpop.f32.mrf.mxu0
        %v773 = vadd.f32 %v435, %v772
        %774 = vdwg.mxu0
        %775 = vmatprep.subr.bf16.mxu0 0
        %776 = vmatpush1.bf16.msra.mxu0 0
        %777 = vmatprep.subr.bf16.mxu0 0
        %778 = vmatpush1.bf16.msra.mxu0 0
        %779 = vmatprep.subr.bf16.mxu0 0
        %780 = vmatpush1.bf16.msra.mxu0 0
        %781 = vmatprep.subr.bf16.mxu0 0
        %782 = vmatpush1.bf16.msra.mxu0 0
        %783 = vmatprep.subr.bf16.mxu0 %v600
        %784 = vmatpush1.bf16.msra.mxu0 %v599
        %785 = vmatprep.subr.bf16.mxu0 %v592
        %786 = vmatpush1.bf16.msra.mxu0 %v591
        %787 = vmatprep.subr.bf16.mxu0 %v584
        %788 = vmatpush1.bf16.msra.mxu0 %v583
        %789 = vmatprep.subr.bf16.mxu0 %v576
        %790 = vmatpush1.bf16.msra.mxu0 %v575
        %791 = vmatprep.subr.bf16.mxu0 0
        %792 = vmatpush2.bf16.msra.mxu0 0
        %793 = vmatprep.subr.bf16.mxu0 0
        %794 = vmatpush2.bf16.msra.mxu0 0
        %795 = vmatprep.subr.bf16.mxu0 0
        %796 = vmatpush2.bf16.msra.mxu0 0
        %797 = vmatprep.subr.bf16.mxu0 0
        %798 = vmatpush2.bf16.msra.mxu0 0
        %799 = vmatprep.subr.bf16.mxu0 0
        %800 = vmatpush2.bf16.msra.mxu0 0
        %801 = vmatprep.subr.bf16.mxu0 0
        %802 = vmatpush2.bf16.msra.mxu0 0
        %803 = vmatprep.subr.bf16.mxu0 0
        %804 = vmatpush2.bf16.msra.mxu0 0
        %805 = vmatprep.subr.bf16.mxu0 0
        %806 = vmatpush2.bf16.msra.mxu0 0
        %807 = vmatprep.mubr.bf16.mxu0 0
        %808 = vmatmul.mubr.bf16.gmra.mxu0 %v639
        %v809 = vpop.f32.mrf.mxu0
        %v810 = vadd.f32 %v360, %v809
        %v811 = vpop.f32.mrf.mxu0
        %v812 = vadd.f32 %v360, %v811
        %v813 = vpop.f32.mrf.mxu0
        %v814 = vadd.f32 %v365, %v813
        %v815 = vpop.f32.mrf.mxu0
        %v816 = vadd.f32 %v365, %v815
        %817 = vmatprep.mubr.bf16.mxu0 0
        %818 = vmatmul.mubr.bf16.gmra.mxu0 %v642
        %v819 = vpop.f32.mrf.mxu0
        %v820 = vadd.f32 %v370, %v819
        %v821 = vpop.f32.mrf.mxu0
        %v822 = vadd.f32 %v370, %v821
        %v823 = vpop.f32.mrf.mxu0
        %v824 = vadd.f32 %v375, %v823
        %v825 = vpop.f32.mrf.mxu0
        %v826 = vadd.f32 %v375, %v825
        %827 = vmatprep.mubr.bf16.mxu0 0
        %828 = vmatmul.mubr.bf16.gmra.mxu0 %v645
        %v829 = vpop.f32.mrf.mxu0
        %v830 = vadd.f32 %v380, %v829
        %v831 = vpop.f32.mrf.mxu0
        %v832 = vadd.f32 %v380, %v831
        %v833 = vpop.f32.mrf.mxu0
        %v834 = vadd.f32 %v385, %v833
        %v835 = vpop.f32.mrf.mxu0
        %v836 = vadd.f32 %v385, %v835
        %837 = vmatprep.mubr.bf16.mxu0 0
        %838 = vmatmul.mubr.bf16.gmra.mxu0 %v648
        %v839 = vpop.f32.mrf.mxu0
        %v840 = vadd.f32 %v390, %v839
        %v841 = vpop.f32.mrf.mxu0
        %v842 = vadd.f32 %v390, %v841
        %v843 = vpop.f32.mrf.mxu0
        %v844 = vadd.f32 %v395, %v843
        %v845 = vpop.f32.mrf.mxu0
        %v846 = vadd.f32 %v395, %v845
        %847 = vmatprep.mubr.bf16.mxu0 0
        %848 = vmatmul.mubr.bf16.gmra.mxu0 %v651
        %v849 = vpop.f32.mrf.mxu0
        %v850 = vadd.f32 %v400, %v849
        %v851 = vpop.f32.mrf.mxu0
        %v852 = vadd.f32 %v400, %v851
        %v853 = vpop.f32.mrf.mxu0
        %v854 = vadd.f32 %v405, %v853
        %v855 = vpop.f32.mrf.mxu0
        %v856 = vadd.f32 %v405, %v855
        %857 = vmatprep.mubr.bf16.mxu0 0
        %858 = vmatmul.mubr.bf16.gmra.mxu0 %v654
        %v859 = vpop.f32.mrf.mxu0
        %v860 = vadd.f32 %v410, %v859
        %v861 = vpop.f32.mrf.mxu0
        %v862 = vadd.f32 %v410, %v861
        %v863 = vpop.f32.mrf.mxu0
        %v864 = vadd.f32 %v415, %v863
        %v865 = vpop.f32.mrf.mxu0
        %v866 = vadd.f32 %v415, %v865
        %867 = vmatprep.mubr.bf16.mxu0 0
        %868 = vmatmul.mubr.bf16.gmra.mxu0 %v657
        %v869 = vpop.f32.mrf.mxu0
        %v870 = vadd.f32 %v420, %v869
        %v871 = vpop.f32.mrf.mxu0
        %v872 = vadd.f32 %v420, %v871
        %v873 = vpop.f32.mrf.mxu0
        %v874 = vadd.f32 %v425, %v873
        %v875 = vpop.f32.mrf.mxu0
        %v876 = vadd.f32 %v425, %v875
        %877 = vmatprep.mubr.bf16.mxu0 0
        %878 = vmatmul.mubr.bf16.gmra.mxu0 %v660
        %v879 = vpop.f32.mrf.mxu0
        %v880 = vadd.f32 %v430, %v879
        %v881 = vpop.f32.mrf.mxu0
        %v882 = vadd.f32 %v430, %v881
        %v883 = vpop.f32.mrf.mxu0
        %v884 = vadd.f32 %v435, %v883
        %v885 = vpop.f32.mrf.mxu0
        %v886 = vadd.f32 %v435, %v885
        %887 = vdwg.mxu0
        %888 = vmatprep.subr.bf16.mxu0 0
        %889 = vmatpush1.bf16.msra.mxu0 0
        %890 = vmatprep.subr.bf16.mxu0 0
        %891 = vmatpush1.bf16.msra.mxu0 0
        %892 = vmatprep.subr.bf16.mxu0 0
        %893 = vmatpush1.bf16.msra.mxu0 0
        %894 = vmatprep.subr.bf16.mxu0 0
        %895 = vmatpush1.bf16.msra.mxu0 0
        %896 = vmatprep.subr.bf16.mxu0 %v602
        %897 = vmatpush1.bf16.msra.mxu0 %v601
        %898 = vmatprep.subr.bf16.mxu0 %v594
        %899 = vmatpush1.bf16.msra.mxu0 %v593
        %900 = vmatprep.subr.bf16.mxu0 %v586
        %901 = vmatpush1.bf16.msra.mxu0 %v585
        %902 = vmatprep.subr.bf16.mxu0 %v578
        %903 = vmatpush1.bf16.msra.mxu0 %v577
        %904 = vmatprep.subr.bf16.mxu0 0
        %905 = vmatpush2.bf16.msra.mxu0 0
        %906 = vmatprep.subr.bf16.mxu0 0
        %907 = vmatpush2.bf16.msra.mxu0 0
        %908 = vmatprep.subr.bf16.mxu0 0
        %909 = vmatpush2.bf16.msra.mxu0 0
        %910 = vmatprep.subr.bf16.mxu0 0
        %911 = vmatpush2.bf16.msra.mxu0 0
        %912 = vmatprep.subr.bf16.mxu0 0
        %913 = vmatpush2.bf16.msra.mxu0 0
        %914 = vmatprep.subr.bf16.mxu0 0
        %915 = vmatpush2.bf16.msra.mxu0 0
        %916 = vmatprep.subr.bf16.mxu0 0
        %917 = vmatpush2.bf16.msra.mxu0 0
        %918 = vmatprep.subr.bf16.mxu0 0
        %919 = vmatpush2.bf16.msra.mxu0 0
        %920 = vmatprep.mubr.bf16.mxu0 0
        %921 = vmatmul.mubr.bf16.gmra.mxu0 %v639
        %v922 = vpop.f32.mrf.mxu0
        %v923 = vadd.f32 %v360, %v922
        %v924 = vpop.f32.mrf.mxu0
        %v925 = vadd.f32 %v360, %v924
        %v926 = vpop.f32.mrf.mxu0
        %v927 = vadd.f32 %v365, %v926
        %v928 = vpop.f32.mrf.mxu0
        %v929 = vadd.f32 %v365, %v928
        %930 = vmatprep.mubr.bf16.mxu0 0
        %931 = vmatmul.mubr.bf16.gmra.mxu0 %v642
        %v932 = vpop.f32.mrf.mxu0
        %v933 = vadd.f32 %v370, %v932
        %v934 = vpop.f32.mrf.mxu0
        %v935 = vadd.f32 %v370, %v934
        %v936 = vpop.f32.mrf.mxu0
        %v937 = vadd.f32 %v375, %v936
        %v938 = vpop.f32.mrf.mxu0
        %v939 = vadd.f32 %v375, %v938
        %940 = vmatprep.mubr.bf16.mxu0 0
        %941 = vmatmul.mubr.bf16.gmra.mxu0 %v645
        %v942 = vpop.f32.mrf.mxu0
        %v943 = vadd.f32 %v380, %v942
        %v944 = vpop.f32.mrf.mxu0
        %v945 = vadd.f32 %v380, %v944
        %v946 = vpop.f32.mrf.mxu0
        %v947 = vadd.f32 %v385, %v946
        %v948 = vpop.f32.mrf.mxu0
        %v949 = vadd.f32 %v385, %v948
        %950 = vmatprep.mubr.bf16.mxu0 0
        %951 = vmatmul.mubr.bf16.gmra.mxu0 %v648
        %v952 = vpop.f32.mrf.mxu0
        %v953 = vadd.f32 %v390, %v952
        %v954 = vpop.f32.mrf.mxu0
        %v955 = vadd.f32 %v390, %v954
        %v956 = vpop.f32.mrf.mxu0
        %v957 = vadd.f32 %v395, %v956
        %v958 = vpop.f32.mrf.mxu0
        %v959 = vadd.f32 %v395, %v958
        %960 = vmatprep.mubr.bf16.mxu0 0
        %961 = vmatmul.mubr.bf16.gmra.mxu0 %v651
        %v962 = vpop.f32.mrf.mxu0
        %v963 = vadd.f32 %v400, %v962
        %v964 = vpop.f32.mrf.mxu0
        %v965 = vadd.f32 %v400, %v964
        %v966 = vpop.f32.mrf.mxu0
        %v967 = vadd.f32 %v405, %v966
        %v968 = vpop.f32.mrf.mxu0
        %v969 = vadd.f32 %v405, %v968
        %970 = vmatprep.mubr.bf16.mxu0 0
        %971 = vmatmul.mubr.bf16.gmra.mxu0 %v654
        %v972 = vpop.f32.mrf.mxu0
        %v973 = vadd.f32 %v410, %v972
        %v974 = vpop.f32.mrf.mxu0
        %v975 = vadd.f32 %v410, %v974
        %v976 = vpop.f32.mrf.mxu0
        %v977 = vadd.f32 %v415, %v976
        %v978 = vpop.f32.mrf.mxu0
        %v979 = vadd.f32 %v415, %v978
        %980 = vmatprep.mubr.bf16.mxu0 0
        %981 = vmatmul.mubr.bf16.gmra.mxu0 %v657
        %v982 = vpop.f32.mrf.mxu0
        %v983 = vadd.f32 %v420, %v982
        %v984 = vpop.f32.mrf.mxu0
        %v985 = vadd.f32 %v420, %v984
        %v986 = vpop.f32.mrf.mxu0
        %v987 = vadd.f32 %v425, %v986
        %v988 = vpop.f32.mrf.mxu0
        %v989 = vadd.f32 %v425, %v988
        %990 = vmatprep.mubr.bf16.mxu0 0
        %991 = vmatmul.mubr.bf16.gmra.mxu0 %v660
        %v992 = vpop.f32.mrf.mxu0
        %v993 = vadd.f32 %v430, %v992
        %v994 = vpop.f32.mrf.mxu0
        %v995 = vadd.f32 %v430, %v994
        %v996 = vpop.f32.mrf.mxu0
        %v997 = vadd.f32 %v435, %v996
        %v998 = vpop.f32.mrf.mxu0
        %v999 = vadd.f32 %v435, %v998
        %1000 = vdwg.mxu0
        %1001 = vmatprep.subr.bf16.mxu0 0
        %1002 = vmatpush1.bf16.msra.mxu0 0
        %1003 = vmatprep.subr.bf16.mxu0 0
        %1004 = vmatpush1.bf16.msra.mxu0 0
        %1005 = vmatprep.subr.bf16.mxu0 0
        %1006 = vmatpush1.bf16.msra.mxu0 0
        %1007 = vmatprep.subr.bf16.mxu0 0
        %1008 = vmatpush1.bf16.msra.mxu0 0
        %1009 = vmatprep.subr.bf16.mxu0 %v604
        %1010 = vmatpush1.bf16.msra.mxu0 %v603
        %1011 = vmatprep.subr.bf16.mxu0 %v596
        %1012 = vmatpush1.bf16.msra.mxu0 %v595
        %1013 = vmatprep.subr.bf16.mxu0 %v588
        %1014 = vmatpush1.bf16.msra.mxu0 %v587
        %1015 = vmatprep.subr.bf16.mxu0 %v580
        %1016 = vmatpush1.bf16.msra.mxu0 %v579
        %1017 = vmatprep.subr.bf16.mxu0 0
        %1018 = vmatpush2.bf16.msra.mxu0 0
        %1019 = vmatprep.subr.bf16.mxu0 0
        %1020 = vmatpush2.bf16.msra.mxu0 0
        %1021 = vmatprep.subr.bf16.mxu0 0
        %1022 = vmatpush2.bf16.msra.mxu0 0
        %1023 = vmatprep.subr.bf16.mxu0 0
        %1024 = vmatpush2.bf16.msra.mxu0 0
        %1025 = vmatprep.subr.bf16.mxu0 0
        %1026 = vmatpush2.bf16.msra.mxu0 0
        %1027 = vmatprep.subr.bf16.mxu0 0
        %1028 = vmatpush2.bf16.msra.mxu0 0
        %1029 = vmatprep.subr.bf16.mxu0 0
        %1030 = vmatpush2.bf16.msra.mxu0 0
        %1031 = vmatprep.subr.bf16.mxu0 0
        %1032 = vmatpush2.bf16.msra.mxu0 0
        %1033 = vmatprep.mubr.bf16.mxu0 0
        %1034 = vmatmul.mubr.bf16.gmra.mxu0 %v639
        %v1035 = vpop.f32.mrf.mxu0
        %v1036 = vadd.f32 %v360, %v1035
        %v1037 = vpop.f32.mrf.mxu0
        %v1038 = vadd.f32 %v360, %v1037
        %v1039 = vpop.f32.mrf.mxu0
        %v1040 = vadd.f32 %v365, %v1039
        %v1041 = vpop.f32.mrf.mxu0
        %v1042 = vadd.f32 %v365, %v1041
        %1043 = vmatprep.mubr.bf16.mxu0 0
        %1044 = vmatmul.mubr.bf16.gmra.mxu0 %v642
        %v1045 = vpop.f32.mrf.mxu0
        %v1046 = vadd.f32 %v370, %v1045
        %v1047 = vpop.f32.mrf.mxu0
        %v1048 = vadd.f32 %v370, %v1047
        %v1049 = vpop.f32.mrf.mxu0
        %v1050 = vadd.f32 %v375, %v1049
        %v1051 = vpop.f32.mrf.mxu0
        %v1052 = vadd.f32 %v375, %v1051
        %1053 = vmatprep.mubr.bf16.mxu0 0
        %1054 = vmatmul.mubr.bf16.gmra.mxu0 %v645
        %v1055 = vpop.f32.mrf.mxu0
        %v1056 = vadd.f32 %v380, %v1055
        %v1057 = vpop.f32.mrf.mxu0
        %v1058 = vadd.f32 %v380, %v1057
        %v1059 = vpop.f32.mrf.mxu0
        %v1060 = vadd.f32 %v385, %v1059
        %v1061 = vpop.f32.mrf.mxu0
        %v1062 = vadd.f32 %v385, %v1061
        %1063 = vmatprep.mubr.bf16.mxu0 0
        %1064 = vmatmul.mubr.bf16.gmra.mxu0 %v648
        %v1065 = vpop.f32.mrf.mxu0
        %v1066 = vadd.f32 %v390, %v1065
        %v1067 = vpop.f32.mrf.mxu0
        %v1068 = vadd.f32 %v390, %v1067
        %v1069 = vpop.f32.mrf.mxu0
        %v1070 = vadd.f32 %v395, %v1069
        %v1071 = vpop.f32.mrf.mxu0
        %v1072 = vadd.f32 %v395, %v1071
        %1073 = vmatprep.mubr.bf16.mxu0 0
        %1074 = vmatmul.mubr.bf16.gmra.mxu0 %v651
        %v1075 = vpop.f32.mrf.mxu0
        %v1076 = vadd.f32 %v400, %v1075
        %v1077 = vpop.f32.mrf.mxu0
        %v1078 = vadd.f32 %v400, %v1077
        %v1079 = vpop.f32.mrf.mxu0
        %v1080 = vadd.f32 %v405, %v1079
        %v1081 = vpop.f32.mrf.mxu0
        %v1082 = vadd.f32 %v405, %v1081
        %1083 = vmatprep.mubr.bf16.mxu0 0
        %1084 = vmatmul.mubr.bf16.gmra.mxu0 %v654
        %v1085 = vpop.f32.mrf.mxu0
        %v1086 = vadd.f32 %v410, %v1085
        %v1087 = vpop.f32.mrf.mxu0
        %v1088 = vadd.f32 %v410, %v1087
        %v1089 = vpop.f32.mrf.mxu0
        %v1090 = vadd.f32 %v415, %v1089
        %v1091 = vpop.f32.mrf.mxu0
        %v1092 = vadd.f32 %v415, %v1091
        %1093 = vmatprep.mubr.bf16.mxu0 0
        %1094 = vmatmul.mubr.bf16.gmra.mxu0 %v657
        %v1095 = vpop.f32.mrf.mxu0
        %v1096 = vadd.f32 %v420, %v1095
        %v1097 = vpop.f32.mrf.mxu0
        %v1098 = vadd.f32 %v420, %v1097
        %v1099 = vpop.f32.mrf.mxu0
        %v1100 = vadd.f32 %v425, %v1099
        %v1101 = vpop.f32.mrf.mxu0
        %v1102 = vadd.f32 %v425, %v1101
        %1103 = vmatprep.mubr.bf16.mxu0 0
        %1104 = vmatmul.mubr.bf16.gmra.mxu0 %v660
        %v1105 = vpop.f32.mrf.mxu0
        %v1106 = vadd.f32 %v430, %v1105
        %v1107 = vpop.f32.mrf.mxu0
        %v1108 = vadd.f32 %v430, %v1107
        %v1109 = vpop.f32.mrf.mxu0
        %v1110 = vadd.f32 %v435, %v1109
        %v1111 = vpop.f32.mrf.mxu0
        %v1112 = vadd.f32 %v435, %v1111
        %1113 = vdwg.mxu0
        %v1114 = vmax.f32 %v697, %v701
        %v1115 = vmax.f32 %v1114, %v707
        %v1116 = vmax.f32 %v1115, %v711
        %v1117 = vmax.f32 %v1116, %v717
        %v1118 = vmax.f32 %v1117, %v721
        %v1119 = vmax.f32 %v1118, %v727
        %v1120 = vmax.f32 %v1119, %v731
        %v1121 = vmax.f32 %v1120, %v737
        %v1122 = vmax.f32 %v1121, %v741
        %v1123 = vmax.f32 %v1122, %v747
        %v1124 = vmax.f32 %v1123, %v751
        %v1125 = vmax.f32 %v1124, %v757
        %v1126 = vmax.f32 %v1125, %v761
        %v1127 = vmax.f32 %v1126, %v767
        %v1128 = vmax.f32 %v1127, %v771
        %v1129 = vrot.slane %v1128, 4
        %v1130 = vmax.f32 %v1128, %v1129
        %v1131 = vrot.slane %v1130, 2
        %v1132 = vmax.f32 %v1130, %v1131
        %v1133 = vrot.slane %v1132, 1
        %v1134 = vmax.f32 %v1132, %v1133
        %v1135 = vmax.f32 %v699, %v703
        %v1136 = vmax.f32 %v1135, %v709
        %v1137 = vmax.f32 %v1136, %v713
        %v1138 = vmax.f32 %v1137, %v719
        %v1139 = vmax.f32 %v1138, %v723
        %v1140 = vmax.f32 %v1139, %v729
        %v1141 = vmax.f32 %v1140, %v733
        %v1142 = vmax.f32 %v1141, %v739
        %v1143 = vmax.f32 %v1142, %v743
        %v1144 = vmax.f32 %v1143, %v749
        %v1145 = vmax.f32 %v1144, %v753
        %v1146 = vmax.f32 %v1145, %v759
        %v1147 = vmax.f32 %v1146, %v763
        %v1148 = vmax.f32 %v1147, %v769
        %v1149 = vmax.f32 %v1148, %v773
        %v1150 = vrot.slane %v1149, 4
        %v1151 = vmax.f32 %v1149, %v1150
        %v1152 = vrot.slane %v1151, 2
        %v1153 = vmax.f32 %v1151, %v1152
        %v1154 = vrot.slane %v1153, 1
        %v1155 = vmax.f32 %v1153, %v1154
        %v1156 = vmax.f32 %v810, %v814
        %v1157 = vmax.f32 %v1156, %v820
        %v1158 = vmax.f32 %v1157, %v824
        %v1159 = vmax.f32 %v1158, %v830
        %v1160 = vmax.f32 %v1159, %v834
        %v1161 = vmax.f32 %v1160, %v840
        %v1162 = vmax.f32 %v1161, %v844
        %v1163 = vmax.f32 %v1162, %v850
        %v1164 = vmax.f32 %v1163, %v854
        %v1165 = vmax.f32 %v1164, %v860
        %v1166 = vmax.f32 %v1165, %v864
        %v1167 = vmax.f32 %v1166, %v870
        %v1168 = vmax.f32 %v1167, %v874
        %v1169 = vmax.f32 %v1168, %v880
        %v1170 = vmax.f32 %v1169, %v884
        %v1171 = vrot.slane %v1170, 4
        %v1172 = vmax.f32 %v1170, %v1171
        %v1173 = vrot.slane %v1172, 2
        %v1174 = vmax.f32 %v1172, %v1173
        %v1175 = vrot.slane %v1174, 1
        %v1176 = vmax.f32 %v1174, %v1175
        %v1177 = vmax.f32 %v812, %v816
        %v1178 = vmax.f32 %v1177, %v822
        %v1179 = vmax.f32 %v1178, %v826
        %v1180 = vmax.f32 %v1179, %v832
        %v1181 = vmax.f32 %v1180, %v836
        %v1182 = vmax.f32 %v1181, %v842
        %v1183 = vmax.f32 %v1182, %v846
        %v1184 = vmax.f32 %v1183, %v852
        %v1185 = vmax.f32 %v1184, %v856
        %v1186 = vmax.f32 %v1185, %v862
        %v1187 = vmax.f32 %v1186, %v866
        %v1188 = vmax.f32 %v1187, %v872
        %v1189 = vmax.f32 %v1188, %v876
        %v1190 = vmax.f32 %v1189, %v882
        %v1191 = vmax.f32 %v1190, %v886
        %v1192 = vrot.slane %v1191, 4
        %v1193 = vmax.f32 %v1191, %v1192
        %v1194 = vrot.slane %v1193, 2
        %v1195 = vmax.f32 %v1193, %v1194
        %v1196 = vrot.slane %v1195, 1
        %v1197 = vmax.f32 %v1195, %v1196
        %v1198 = vmax.f32 %v923, %v927
        %v1199 = vmax.f32 %v1198, %v933
        %v1200 = vmax.f32 %v1199, %v937
        %v1201 = vmax.f32 %v1200, %v943
        %v1202 = vmax.f32 %v1201, %v947
        %v1203 = vmax.f32 %v1202, %v953
        %v1204 = vmax.f32 %v1203, %v957
        %v1205 = vmax.f32 %v1204, %v963
        %v1206 = vmax.f32 %v1205, %v967
        %v1207 = vmax.f32 %v1206, %v973
        %v1208 = vmax.f32 %v1207, %v977
        %v1209 = vmax.f32 %v1208, %v983
        %v1210 = vmax.f32 %v1209, %v987
        %v1211 = vmax.f32 %v1210, %v993
        %v1212 = vmax.f32 %v1211, %v997
        %v1213 = vrot.slane %v1212, 4
        %v1214 = vmax.f32 %v1212, %v1213
        %v1215 = vrot.slane %v1214, 2
        %v1216 = vmax.f32 %v1214, %v1215
        %v1217 = vrot.slane %v1216, 1
        %v1218 = vmax.f32 %v1216, %v1217
        %v1219 = vmax.f32 %v925, %v929
        %v1220 = vmax.f32 %v1219, %v935
        %v1221 = vmax.f32 %v1220, %v939
        %v1222 = vmax.f32 %v1221, %v945
        %v1223 = vmax.f32 %v1222, %v949
        %v1224 = vmax.f32 %v1223, %v955
        %v1225 = vmax.f32 %v1224, %v959
        %v1226 = vmax.f32 %v1225, %v965
        %v1227 = vmax.f32 %v1226, %v969
        %v1228 = vmax.f32 %v1227, %v975
        %v1229 = vmax.f32 %v1228, %v979
        %v1230 = vmax.f32 %v1229, %v985
        %v1231 = vmax.f32 %v1230, %v989
        %v1232 = vmax.f32 %v1231, %v995
        %v1233 = vmax.f32 %v1232, %v999
        %v1234 = vrot.slane %v1233, 4
        %v1235 = vmax.f32 %v1233, %v1234
        %v1236 = vrot.slane %v1235, 2
        %v1237 = vmax.f32 %v1235, %v1236
        %v1238 = vrot.slane %v1237, 1
        %v1239 = vmax.f32 %v1237, %v1238
        %v1240 = vmax.f32 %v1036, %v1040
        %v1241 = vmax.f32 %v1240, %v1046
        %v1242 = vmax.f32 %v1241, %v1050
        %v1243 = vmax.f32 %v1242, %v1056
        %v1244 = vmax.f32 %v1243, %v1060
        %v1245 = vmax.f32 %v1244, %v1066
        %v1246 = vmax.f32 %v1245, %v1070
        %v1247 = vmax.f32 %v1246, %v1076
        %v1248 = vmax.f32 %v1247, %v1080
        %v1249 = vmax.f32 %v1248, %v1086
        %v1250 = vmax.f32 %v1249, %v1090
        %v1251 = vmax.f32 %v1250, %v1096
        %v1252 = vmax.f32 %v1251, %v1100
        %v1253 = vmax.f32 %v1252, %v1106
        %v1254 = vmax.f32 %v1253, %v1110
        %v1255 = vrot.slane %v1254, 4
        %v1256 = vmax.f32 %v1254, %v1255
        %v1257 = vrot.slane %v1256, 2
        %v1258 = vmax.f32 %v1256, %v1257
        %v1259 = vrot.slane %v1258, 1
        %v1260 = vmax.f32 %v1258, %v1259
        %v1261 = vmax.f32 %v1038, %v1042
        %v1262 = vmax.f32 %v1261, %v1048
        %v1263 = vmax.f32 %v1262, %v1052
        %v1264 = vmax.f32 %v1263, %v1058
        %v1265 = vmax.f32 %v1264, %v1062
        %v1266 = vmax.f32 %v1265, %v1068
        %v1267 = vmax.f32 %v1266, %v1072
        %v1268 = vmax.f32 %v1267, %v1078
        %v1269 = vmax.f32 %v1268, %v1082
        %v1270 = vmax.f32 %v1269, %v1088
        %v1271 = vmax.f32 %v1270, %v1092
        %v1272 = vmax.f32 %v1271, %v1098
        %v1273 = vmax.f32 %v1272, %v1102
        %v1274 = vmax.f32 %v1273, %v1108
        %v1275 = vmax.f32 %v1274, %v1112
        %v1276 = vrot.slane %v1275, 4
        %v1277 = vmax.f32 %v1275, %v1276
        %v1278 = vrot.slane %v1277, 2
        %v1279 = vmax.f32 %v1277, %v1278
        %v1280 = vrot.slane %v1279, 1
        %v1281 = vmax.f32 %v1279, %v1280
        %v1282 = vlaneseq
        %v1283 = vshrl.u32 %v1282, 7
        %v1284 = vadd.s32 %v1283, 8
        %v1285 = vadd.s32 %v1283, 16
        %v1286 = vadd.s32 %v1283, 24
        %v1287 = vadd.s32 %v1283, 32
        %v1288 = vadd.s32 %v1283, 40
        %v1289 = vadd.s32 %v1283, 48
        %v1290 = vadd.s32 %v1283, 56
        %v1291 = vadd.s32 %v1283, 64
        %v1292 = vadd.s32 %v1283, 72
        %v1293 = vadd.s32 %v1283, 80
        %v1294 = vadd.s32 %v1283, 88
        %v1295 = vadd.s32 %v1283, 96
        %v1296 = vadd.s32 %v1283, 104
        %v1297 = vadd.s32 %v1283, 112
        %v1298 = vadd.s32 %v1283, 120
        %vm1299 = vcmp.eq.f32.partialorder %v697, %v1134
        %vm1300 = vcmp.eq.f32.partialorder %v699, %v1155
        %vm1301 = vcmp.eq.f32.partialorder %v810, %v1176
        %vm1302 = vcmp.eq.f32.partialorder %v812, %v1197
        %vm1303 = vcmp.eq.f32.partialorder %v923, %v1218
        %vm1304 = vcmp.eq.f32.partialorder %v925, %v1239
        %vm1305 = vcmp.eq.f32.partialorder %v1036, %v1260
        %vm1306 = vcmp.eq.f32.partialorder %v1038, %v1281
        %vm1307 = vcmp.eq.f32.partialorder %v701, %v1134
        %vm1308 = vcmp.eq.f32.partialorder %v703, %v1155
        %vm1309 = vcmp.eq.f32.partialorder %v814, %v1176
        %vm1310 = vcmp.eq.f32.partialorder %v816, %v1197
        %vm1311 = vcmp.eq.f32.partialorder %v927, %v1218
        %vm1312 = vcmp.eq.f32.partialorder %v929, %v1239
        %vm1313 = vcmp.eq.f32.partialorder %v1040, %v1260
        %vm1314 = vcmp.eq.f32.partialorder %v1042, %v1281
        %vm1315 = vcmp.eq.f32.partialorder %v707, %v1134
        %vm1316 = vcmp.eq.f32.partialorder %v709, %v1155
        %vm1317 = vcmp.eq.f32.partialorder %v820, %v1176
        %vm1318 = vcmp.eq.f32.partialorder %v822, %v1197
        %vm1319 = vcmp.eq.f32.partialorder %v933, %v1218
        %vm1320 = vcmp.eq.f32.partialorder %v935, %v1239
        %vm1321 = vcmp.eq.f32.partialorder %v1046, %v1260
        %vm1322 = vcmp.eq.f32.partialorder %v1048, %v1281
        %vm1323 = vcmp.eq.f32.partialorder %v711, %v1134
        %vm1324 = vcmp.eq.f32.partialorder %v713, %v1155
        %vm1325 = vcmp.eq.f32.partialorder %v824, %v1176
        %vm1326 = vcmp.eq.f32.partialorder %v826, %v1197
        %vm1327 = vcmp.eq.f32.partialorder %v937, %v1218
        %vm1328 = vcmp.eq.f32.partialorder %v939, %v1239
        %vm1329 = vcmp.eq.f32.partialorder %v1050, %v1260
        %vm1330 = vcmp.eq.f32.partialorder %v1052, %v1281
        %vm1331 = vcmp.eq.f32.partialorder %v717, %v1134
        %vm1332 = vcmp.eq.f32.partialorder %v719, %v1155
        %vm1333 = vcmp.eq.f32.partialorder %v830, %v1176
        %vm1334 = vcmp.eq.f32.partialorder %v832, %v1197
        %vm1335 = vcmp.eq.f32.partialorder %v943, %v1218
        %vm1336 = vcmp.eq.f32.partialorder %v945, %v1239
        %vm1337 = vcmp.eq.f32.partialorder %v1056, %v1260
        %vm1338 = vcmp.eq.f32.partialorder %v1058, %v1281
        %vm1339 = vcmp.eq.f32.partialorder %v721, %v1134
        %vm1340 = vcmp.eq.f32.partialorder %v723, %v1155
        %vm1341 = vcmp.eq.f32.partialorder %v834, %v1176
        %vm1342 = vcmp.eq.f32.partialorder %v836, %v1197
        %vm1343 = vcmp.eq.f32.partialorder %v947, %v1218
        %vm1344 = vcmp.eq.f32.partialorder %v949, %v1239
        %vm1345 = vcmp.eq.f32.partialorder %v1060, %v1260
        %vm1346 = vcmp.eq.f32.partialorder %v1062, %v1281
        %vm1347 = vcmp.eq.f32.partialorder %v727, %v1134
        %vm1348 = vcmp.eq.f32.partialorder %v729, %v1155
        %vm1349 = vcmp.eq.f32.partialorder %v840, %v1176
        %vm1350 = vcmp.eq.f32.partialorder %v842, %v1197
        %vm1351 = vcmp.eq.f32.partialorder %v953, %v1218
        %vm1352 = vcmp.eq.f32.partialorder %v955, %v1239
        %vm1353 = vcmp.eq.f32.partialorder %v1066, %v1260
        %vm1354 = vcmp.eq.f32.partialorder %v1068, %v1281
        %vm1355 = vcmp.eq.f32.partialorder %v731, %v1134
        %vm1356 = vcmp.eq.f32.partialorder %v733, %v1155
        %vm1357 = vcmp.eq.f32.partialorder %v844, %v1176
        %vm1358 = vcmp.eq.f32.partialorder %v846, %v1197
        %vm1359 = vcmp.eq.f32.partialorder %v957, %v1218
        %vm1360 = vcmp.eq.f32.partialorder %v959, %v1239
        %vm1361 = vcmp.eq.f32.partialorder %v1070, %v1260
        %vm1362 = vcmp.eq.f32.partialorder %v1072, %v1281
        %vm1363 = vcmp.eq.f32.partialorder %v737, %v1134
        %vm1364 = vcmp.eq.f32.partialorder %v739, %v1155
        %vm1365 = vcmp.eq.f32.partialorder %v850, %v1176
        %vm1366 = vcmp.eq.f32.partialorder %v852, %v1197
        %vm1367 = vcmp.eq.f32.partialorder %v963, %v1218
        %vm1368 = vcmp.eq.f32.partialorder %v965, %v1239
        %vm1369 = vcmp.eq.f32.partialorder %v1076, %v1260
        %vm1370 = vcmp.eq.f32.partialorder %v1078, %v1281
        %vm1371 = vcmp.eq.f32.partialorder %v741, %v1134
        %vm1372 = vcmp.eq.f32.partialorder %v743, %v1155
        %vm1373 = vcmp.eq.f32.partialorder %v854, %v1176
        %vm1374 = vcmp.eq.f32.partialorder %v856, %v1197
        %vm1375 = vcmp.eq.f32.partialorder %v967, %v1218
        %vm1376 = vcmp.eq.f32.partialorder %v969, %v1239
        %vm1377 = vcmp.eq.f32.partialorder %v1080, %v1260
        %vm1378 = vcmp.eq.f32.partialorder %v1082, %v1281
        %vm1379 = vcmp.eq.f32.partialorder %v747, %v1134
        %vm1380 = vcmp.eq.f32.partialorder %v749, %v1155
        %vm1381 = vcmp.eq.f32.partialorder %v860, %v1176
        %vm1382 = vcmp.eq.f32.partialorder %v862, %v1197
        %vm1383 = vcmp.eq.f32.partialorder %v973, %v1218
        %vm1384 = vcmp.eq.f32.partialorder %v975, %v1239
        %vm1385 = vcmp.eq.f32.partialorder %v1086, %v1260
        %vm1386 = vcmp.eq.f32.partialorder %v1088, %v1281
        %vm1387 = vcmp.eq.f32.partialorder %v751, %v1134
        %vm1388 = vcmp.eq.f32.partialorder %v753, %v1155
        %vm1389 = vcmp.eq.f32.partialorder %v864, %v1176
        %vm1390 = vcmp.eq.f32.partialorder %v866, %v1197
        %vm1391 = vcmp.eq.f32.partialorder %v977, %v1218
        %vm1392 = vcmp.eq.f32.partialorder %v979, %v1239
        %vm1393 = vcmp.eq.f32.partialorder %v1090, %v1260
        %vm1394 = vcmp.eq.f32.partialorder %v1092, %v1281
        %vm1395 = vcmp.eq.f32.partialorder %v757, %v1134
        %vm1396 = vcmp.eq.f32.partialorder %v759, %v1155
        %vm1397 = vcmp.eq.f32.partialorder %v870, %v1176
        %vm1398 = vcmp.eq.f32.partialorder %v872, %v1197
        %vm1399 = vcmp.eq.f32.partialorder %v983, %v1218
        %vm1400 = vcmp.eq.f32.partialorder %v985, %v1239
        %vm1401 = vcmp.eq.f32.partialorder %v1096, %v1260
        %vm1402 = vcmp.eq.f32.partialorder %v1098, %v1281
        %vm1403 = vcmp.eq.f32.partialorder %v761, %v1134
        %vm1404 = vcmp.eq.f32.partialorder %v763, %v1155
        %vm1405 = vcmp.eq.f32.partialorder %v874, %v1176
        %vm1406 = vcmp.eq.f32.partialorder %v876, %v1197
        %vm1407 = vcmp.eq.f32.partialorder %v987, %v1218
        %vm1408 = vcmp.eq.f32.partialorder %v989, %v1239
        %vm1409 = vcmp.eq.f32.partialorder %v1100, %v1260
        %vm1410 = vcmp.eq.f32.partialorder %v1102, %v1281
        %vm1411 = vcmp.eq.f32.partialorder %v767, %v1134
        %vm1412 = vcmp.eq.f32.partialorder %v769, %v1155
        %vm1413 = vcmp.eq.f32.partialorder %v880, %v1176
        %vm1414 = vcmp.eq.f32.partialorder %v882, %v1197
        %vm1415 = vcmp.eq.f32.partialorder %v993, %v1218
        %vm1416 = vcmp.eq.f32.partialorder %v995, %v1239
        %vm1417 = vcmp.eq.f32.partialorder %v1106, %v1260
        %vm1418 = vcmp.eq.f32.partialorder %v1108, %v1281
        %vm1419 = vcmp.eq.f32.partialorder %v771, %v1134
        %vm1420 = vcmp.eq.f32.partialorder %v773, %v1155
        %vm1421 = vcmp.eq.f32.partialorder %v884, %v1176
        %vm1422 = vcmp.eq.f32.partialorder %v886, %v1197
        %vm1423 = vcmp.eq.f32.partialorder %v997, %v1218
        %vm1424 = vcmp.eq.f32.partialorder %v999, %v1239
        %vm1425 = vcmp.eq.f32.partialorder %v1110, %v1260
        %vm1426 = vcmp.eq.f32.partialorder %v1112, %v1281
        %v1427 = vsel %vm1299, %v1283, 128
        %v1428 = vsel %vm1300, %v1283, 128
        %v1429 = vsel %vm1301, %v1283, 128
        %v1430 = vsel %vm1302, %v1283, 128
        %v1431 = vsel %vm1303, %v1283, 128
        %v1432 = vsel %vm1304, %v1283, 128
        %v1433 = vsel %vm1305, %v1283, 128
        %v1434 = vsel %vm1306, %v1283, 128
        %v1435 = vsel %vm1307, %v1284, 128
        %v1436 = vsel %vm1308, %v1284, 128
        %v1437 = vsel %vm1309, %v1284, 128
        %v1438 = vsel %vm1310, %v1284, 128
        %v1439 = vsel %vm1311, %v1284, 128
        %v1440 = vsel %vm1312, %v1284, 128
        %v1441 = vsel %vm1313, %v1284, 128
        %v1442 = vsel %vm1314, %v1284, 128
        %v1443 = vsel %vm1315, %v1285, 128
        %v1444 = vsel %vm1316, %v1285, 128
        %v1445 = vsel %vm1317, %v1285, 128
        %v1446 = vsel %vm1318, %v1285, 128
        %v1447 = vsel %vm1319, %v1285, 128
        %v1448 = vsel %vm1320, %v1285, 128
        %v1449 = vsel %vm1321, %v1285, 128
        %v1450 = vsel %vm1322, %v1285, 128
        %v1451 = vsel %vm1323, %v1286, 128
        %v1452 = vsel %vm1324, %v1286, 128
        %v1453 = vsel %vm1325, %v1286, 128
        %v1454 = vsel %vm1326, %v1286, 128
        %v1455 = vsel %vm1327, %v1286, 128
        %v1456 = vsel %vm1328, %v1286, 128
        %v1457 = vsel %vm1329, %v1286, 128
        %v1458 = vsel %vm1330, %v1286, 128
        %v1459 = vsel %vm1331, %v1287, 128
        %v1460 = vsel %vm1332, %v1287, 128
        %v1461 = vsel %vm1333, %v1287, 128
        %v1462 = vsel %vm1334, %v1287, 128
        %v1463 = vsel %vm1335, %v1287, 128
        %v1464 = vsel %vm1336, %v1287, 128
        %v1465 = vsel %vm1337, %v1287, 128
        %v1466 = vsel %vm1338, %v1287, 128
        %v1467 = vsel %vm1339, %v1288, 128
        %v1468 = vsel %vm1340, %v1288, 128
        %v1469 = vsel %vm1341, %v1288, 128
        %v1470 = vsel %vm1342, %v1288, 128
        %v1471 = vsel %vm1343, %v1288, 128
        %v1472 = vsel %vm1344, %v1288, 128
        %v1473 = vsel %vm1345, %v1288, 128
        %v1474 = vsel %vm1346, %v1288, 128
        %v1475 = vsel %vm1347, %v1289, 128
        %v1476 = vsel %vm1348, %v1289, 128
        %v1477 = vsel %vm1349, %v1289, 128
        %v1478 = vsel %vm1350, %v1289, 128
        %v1479 = vsel %vm1351, %v1289, 128
        %v1480 = vsel %vm1352, %v1289, 128
        %v1481 = vsel %vm1353, %v1289, 128
        %v1482 = vsel %vm1354, %v1289, 128
        %v1483 = vsel %vm1355, %v1290, 128
        %v1484 = vsel %vm1356, %v1290, 128
        %v1485 = vsel %vm1357, %v1290, 128
        %v1486 = vsel %vm1358, %v1290, 128
        %v1487 = vsel %vm1359, %v1290, 128
        %v1488 = vsel %vm1360, %v1290, 128
        %v1489 = vsel %vm1361, %v1290, 128
        %v1490 = vsel %vm1362, %v1290, 128
        %v1491 = vsel %vm1363, %v1291, 128
        %v1492 = vsel %vm1364, %v1291, 128
        %v1493 = vsel %vm1365, %v1291, 128
        %v1494 = vsel %vm1366, %v1291, 128
        %v1495 = vsel %vm1367, %v1291, 128
        %v1496 = vsel %vm1368, %v1291, 128
        %v1497 = vsel %vm1369, %v1291, 128
        %v1498 = vsel %vm1370, %v1291, 128
        %v1499 = vsel %vm1371, %v1292, 128
        %v1500 = vsel %vm1372, %v1292, 128
        %v1501 = vsel %vm1373, %v1292, 128
        %v1502 = vsel %vm1374, %v1292, 128
        %v1503 = vsel %vm1375, %v1292, 128
        %v1504 = vsel %vm1376, %v1292, 128
        %v1505 = vsel %vm1377, %v1292, 128
        %v1506 = vsel %vm1378, %v1292, 128
        %v1507 = vsel %vm1379, %v1293, 128
        %v1508 = vsel %vm1380, %v1293, 128
        %v1509 = vsel %vm1381, %v1293, 128
        %v1510 = vsel %vm1382, %v1293, 128
        %v1511 = vsel %vm1383, %v1293, 128
        %v1512 = vsel %vm1384, %v1293, 128
        %v1513 = vsel %vm1385, %v1293, 128
        %v1514 = vsel %vm1386, %v1293, 128
        %v1515 = vsel %vm1387, %v1294, 128
        %v1516 = vsel %vm1388, %v1294, 128
        %v1517 = vsel %vm1389, %v1294, 128
        %v1518 = vsel %vm1390, %v1294, 128
        %v1519 = vsel %vm1391, %v1294, 128
        %v1520 = vsel %vm1392, %v1294, 128
        %v1521 = vsel %vm1393, %v1294, 128
        %v1522 = vsel %vm1394, %v1294, 128
        %v1523 = vsel %vm1395, %v1295, 128
        %v1524 = vsel %vm1396, %v1295, 128
        %v1525 = vsel %vm1397, %v1295, 128
        %v1526 = vsel %vm1398, %v1295, 128
        %v1527 = vsel %vm1399, %v1295, 128
        %v1528 = vsel %vm1400, %v1295, 128
        %v1529 = vsel %vm1401, %v1295, 128
        %v1530 = vsel %vm1402, %v1295, 128
        %v1531 = vsel %vm1403, %v1296, 128
        %v1532 = vsel %vm1404, %v1296, 128
        %v1533 = vsel %vm1405, %v1296, 128
        %v1534 = vsel %vm1406, %v1296, 128
        %v1535 = vsel %vm1407, %v1296, 128
        %v1536 = vsel %vm1408, %v1296, 128
        %v1537 = vsel %vm1409, %v1296, 128
        %v1538 = vsel %vm1410, %v1296, 128
        %v1539 = vsel %vm1411, %v1297, 128
        %v1540 = vsel %vm1412, %v1297, 128
        %v1541 = vsel %vm1413, %v1297, 128
        %v1542 = vsel %vm1414, %v1297, 128
        %v1543 = vsel %vm1415, %v1297, 128
        %v1544 = vsel %vm1416, %v1297, 128
        %v1545 = vsel %vm1417, %v1297, 128
        %v1546 = vsel %vm1418, %v1297, 128
        %v1547 = vsel %vm1419, %v1298, 128
        %v1548 = vsel %vm1420, %v1298, 128
        %v1549 = vsel %vm1421, %v1298, 128
        %v1550 = vsel %vm1422, %v1298, 128
        %v1551 = vsel %vm1423, %v1298, 128
        %v1552 = vsel %vm1424, %v1298, 128
        %v1553 = vsel %vm1425, %v1298, 128
        %v1554 = vsel %vm1426, %v1298, 128
        %vm1555 = vcmp.lt.s32.totalorder %v1427, %v1435
        %v1556 = vsel %vm1555, %v1427, %v1435
        %vm1557 = vcmp.lt.s32.totalorder %v1556, %v1443
        %v1558 = vsel %vm1557, %v1556, %v1443
        %vm1559 = vcmp.lt.s32.totalorder %v1558, %v1451
        %v1560 = vsel %vm1559, %v1558, %v1451
        %vm1561 = vcmp.lt.s32.totalorder %v1560, %v1459
        %v1562 = vsel %vm1561, %v1560, %v1459
        %vm1563 = vcmp.lt.s32.totalorder %v1562, %v1467
        %v1564 = vsel %vm1563, %v1562, %v1467
        %vm1565 = vcmp.lt.s32.totalorder %v1564, %v1475
        %v1566 = vsel %vm1565, %v1564, %v1475
        %vm1567 = vcmp.lt.s32.totalorder %v1566, %v1483
        %v1568 = vsel %vm1567, %v1566, %v1483
        %vm1569 = vcmp.lt.s32.totalorder %v1568, %v1491
        %v1570 = vsel %vm1569, %v1568, %v1491
        %vm1571 = vcmp.lt.s32.totalorder %v1570, %v1499
        %v1572 = vsel %vm1571, %v1570, %v1499
        %vm1573 = vcmp.lt.s32.totalorder %v1572, %v1507
        %v1574 = vsel %vm1573, %v1572, %v1507
        %vm1575 = vcmp.lt.s32.totalorder %v1574, %v1515
        %v1576 = vsel %vm1575, %v1574, %v1515
        %vm1577 = vcmp.lt.s32.totalorder %v1576, %v1523
        %v1578 = vsel %vm1577, %v1576, %v1523
        %vm1579 = vcmp.lt.s32.totalorder %v1578, %v1531
        %v1580 = vsel %vm1579, %v1578, %v1531
        %vm1581 = vcmp.lt.s32.totalorder %v1580, %v1539
        %v1582 = vsel %vm1581, %v1580, %v1539
        %vm1583 = vcmp.lt.s32.totalorder %v1582, %v1547
        %v1584 = vsel %vm1583, %v1582, %v1547
        %v1585 = vrot.slane %v1584, 4
        %vm1586 = vcmp.lt.s32.totalorder %v1584, %v1585
        %v1587 = vsel %vm1586, %v1584, %v1585
        %v1588 = vrot.slane %v1587, 2
        %vm1589 = vcmp.lt.s32.totalorder %v1587, %v1588
        %v1590 = vsel %vm1589, %v1587, %v1588
        %v1591 = vrot.slane %v1590, 1
        %vm1592 = vcmp.lt.s32.totalorder %v1590, %v1591
        %v1593 = vsel %vm1592, %v1590, %v1591
        %vm1594 = vcmp.lt.s32.totalorder %v1428, %v1436
        %v1595 = vsel %vm1594, %v1428, %v1436
        %vm1596 = vcmp.lt.s32.totalorder %v1595, %v1444
        %v1597 = vsel %vm1596, %v1595, %v1444
        %vm1598 = vcmp.lt.s32.totalorder %v1597, %v1452
        %v1599 = vsel %vm1598, %v1597, %v1452
        %vm1600 = vcmp.lt.s32.totalorder %v1599, %v1460
        %v1601 = vsel %vm1600, %v1599, %v1460
        %vm1602 = vcmp.lt.s32.totalorder %v1601, %v1468
        %v1603 = vsel %vm1602, %v1601, %v1468
        %vm1604 = vcmp.lt.s32.totalorder %v1603, %v1476
        %v1605 = vsel %vm1604, %v1603, %v1476
        %vm1606 = vcmp.lt.s32.totalorder %v1605, %v1484
        %v1607 = vsel %vm1606, %v1605, %v1484
        %vm1608 = vcmp.lt.s32.totalorder %v1607, %v1492
        %v1609 = vsel %vm1608, %v1607, %v1492
        %vm1610 = vcmp.lt.s32.totalorder %v1609, %v1500
        %v1611 = vsel %vm1610, %v1609, %v1500
        %vm1612 = vcmp.lt.s32.totalorder %v1611, %v1508
        %v1613 = vsel %vm1612, %v1611, %v1508
        %vm1614 = vcmp.lt.s32.totalorder %v1613, %v1516
        %v1615 = vsel %vm1614, %v1613, %v1516
        %vm1616 = vcmp.lt.s32.totalorder %v1615, %v1524
        %v1617 = vsel %vm1616, %v1615, %v1524
        %vm1618 = vcmp.lt.s32.totalorder %v1617, %v1532
        %v1619 = vsel %vm1618, %v1617, %v1532
        %vm1620 = vcmp.lt.s32.totalorder %v1619, %v1540
        %v1621 = vsel %vm1620, %v1619, %v1540
        %vm1622 = vcmp.lt.s32.totalorder %v1621, %v1548
        %v1623 = vsel %vm1622, %v1621, %v1548
        %v1624 = vrot.slane %v1623, 4
        %vm1625 = vcmp.lt.s32.totalorder %v1623, %v1624
        %v1626 = vsel %vm1625, %v1623, %v1624
        %v1627 = vrot.slane %v1626, 2
        %vm1628 = vcmp.lt.s32.totalorder %v1626, %v1627
        %v1629 = vsel %vm1628, %v1626, %v1627
        %v1630 = vrot.slane %v1629, 1
        %vm1631 = vcmp.lt.s32.totalorder %v1629, %v1630
        %v1632 = vsel %vm1631, %v1629, %v1630
        %vm1633 = vcmp.lt.s32.totalorder %v1429, %v1437
        %v1634 = vsel %vm1633, %v1429, %v1437
        %vm1635 = vcmp.lt.s32.totalorder %v1634, %v1445
        %v1636 = vsel %vm1635, %v1634, %v1445
        %vm1637 = vcmp.lt.s32.totalorder %v1636, %v1453
        %v1638 = vsel %vm1637, %v1636, %v1453
        %vm1639 = vcmp.lt.s32.totalorder %v1638, %v1461
        %v1640 = vsel %vm1639, %v1638, %v1461
        %vm1641 = vcmp.lt.s32.totalorder %v1640, %v1469
        %v1642 = vsel %vm1641, %v1640, %v1469
        %vm1643 = vcmp.lt.s32.totalorder %v1642, %v1477
        %v1644 = vsel %vm1643, %v1642, %v1477
        %vm1645 = vcmp.lt.s32.totalorder %v1644, %v1485
        %v1646 = vsel %vm1645, %v1644, %v1485
        %vm1647 = vcmp.lt.s32.totalorder %v1646, %v1493
        %v1648 = vsel %vm1647, %v1646, %v1493
        %vm1649 = vcmp.lt.s32.totalorder %v1648, %v1501
        %v1650 = vsel %vm1649, %v1648, %v1501
        %vm1651 = vcmp.lt.s32.totalorder %v1650, %v1509
        %v1652 = vsel %vm1651, %v1650, %v1509
        %vm1653 = vcmp.lt.s32.totalorder %v1652, %v1517
        %v1654 = vsel %vm1653, %v1652, %v1517
        %vm1655 = vcmp.lt.s32.totalorder %v1654, %v1525
        %v1656 = vsel %vm1655, %v1654, %v1525
        %vm1657 = vcmp.lt.s32.totalorder %v1656, %v1533
        %v1658 = vsel %vm1657, %v1656, %v1533
        %vm1659 = vcmp.lt.s32.totalorder %v1658, %v1541
        %v1660 = vsel %vm1659, %v1658, %v1541
        %vm1661 = vcmp.lt.s32.totalorder %v1660, %v1549
        %v1662 = vsel %vm1661, %v1660, %v1549
        %v1663 = vrot.slane %v1662, 4
        %vm1664 = vcmp.lt.s32.totalorder %v1662, %v1663
        %v1665 = vsel %vm1664, %v1662, %v1663
        %v1666 = vrot.slane %v1665, 2
        %vm1667 = vcmp.lt.s32.totalorder %v1665, %v1666
        %v1668 = vsel %vm1667, %v1665, %v1666
        %v1669 = vrot.slane %v1668, 1
        %vm1670 = vcmp.lt.s32.totalorder %v1668, %v1669
        %v1671 = vsel %vm1670, %v1668, %v1669
        %vm1672 = vcmp.lt.s32.totalorder %v1430, %v1438
        %v1673 = vsel %vm1672, %v1430, %v1438
        %vm1674 = vcmp.lt.s32.totalorder %v1673, %v1446
        %v1675 = vsel %vm1674, %v1673, %v1446
        %vm1676 = vcmp.lt.s32.totalorder %v1675, %v1454
        %v1677 = vsel %vm1676, %v1675, %v1454
        %vm1678 = vcmp.lt.s32.totalorder %v1677, %v1462
        %v1679 = vsel %vm1678, %v1677, %v1462
        %vm1680 = vcmp.lt.s32.totalorder %v1679, %v1470
        %v1681 = vsel %vm1680, %v1679, %v1470
        %vm1682 = vcmp.lt.s32.totalorder %v1681, %v1478
        %v1683 = vsel %vm1682, %v1681, %v1478
        %vm1684 = vcmp.lt.s32.totalorder %v1683, %v1486
        %v1685 = vsel %vm1684, %v1683, %v1486
        %vm1686 = vcmp.lt.s32.totalorder %v1685, %v1494
        %v1687 = vsel %vm1686, %v1685, %v1494
        %vm1688 = vcmp.lt.s32.totalorder %v1687, %v1502
        %v1689 = vsel %vm1688, %v1687, %v1502
        %vm1690 = vcmp.lt.s32.totalorder %v1689, %v1510
        %v1691 = vsel %vm1690, %v1689, %v1510
        %vm1692 = vcmp.lt.s32.totalorder %v1691, %v1518
        %v1693 = vsel %vm1692, %v1691, %v1518
        %vm1694 = vcmp.lt.s32.totalorder %v1693, %v1526
        %v1695 = vsel %vm1694, %v1693, %v1526
        %vm1696 = vcmp.lt.s32.totalorder %v1695, %v1534
        %v1697 = vsel %vm1696, %v1695, %v1534
        %vm1698 = vcmp.lt.s32.totalorder %v1697, %v1542
        %v1699 = vsel %vm1698, %v1697, %v1542
        %vm1700 = vcmp.lt.s32.totalorder %v1699, %v1550
        %v1701 = vsel %vm1700, %v1699, %v1550
        %v1702 = vrot.slane %v1701, 4
        %vm1703 = vcmp.lt.s32.totalorder %v1701, %v1702
        %v1704 = vsel %vm1703, %v1701, %v1702
        %v1705 = vrot.slane %v1704, 2
        %vm1706 = vcmp.lt.s32.totalorder %v1704, %v1705
        %v1707 = vsel %vm1706, %v1704, %v1705
        %v1708 = vrot.slane %v1707, 1
        %vm1709 = vcmp.lt.s32.totalorder %v1707, %v1708
        %v1710 = vsel %vm1709, %v1707, %v1708
        %vm1711 = vcmp.lt.s32.totalorder %v1431, %v1439
        %v1712 = vsel %vm1711, %v1431, %v1439
        %vm1713 = vcmp.lt.s32.totalorder %v1712, %v1447
        %v1714 = vsel %vm1713, %v1712, %v1447
        %vm1715 = vcmp.lt.s32.totalorder %v1714, %v1455
        %v1716 = vsel %vm1715, %v1714, %v1455
        %vm1717 = vcmp.lt.s32.totalorder %v1716, %v1463
        %v1718 = vsel %vm1717, %v1716, %v1463
        %vm1719 = vcmp.lt.s32.totalorder %v1718, %v1471
        %v1720 = vsel %vm1719, %v1718, %v1471
        %vm1721 = vcmp.lt.s32.totalorder %v1720, %v1479
        %v1722 = vsel %vm1721, %v1720, %v1479
        %vm1723 = vcmp.lt.s32.totalorder %v1722, %v1487
        %v1724 = vsel %vm1723, %v1722, %v1487
        %vm1725 = vcmp.lt.s32.totalorder %v1724, %v1495
        %v1726 = vsel %vm1725, %v1724, %v1495
        %vm1727 = vcmp.lt.s32.totalorder %v1726, %v1503
        %v1728 = vsel %vm1727, %v1726, %v1503
        %vm1729 = vcmp.lt.s32.totalorder %v1728, %v1511
        %v1730 = vsel %vm1729, %v1728, %v1511
        %vm1731 = vcmp.lt.s32.totalorder %v1730, %v1519
        %v1732 = vsel %vm1731, %v1730, %v1519
        %vm1733 = vcmp.lt.s32.totalorder %v1732, %v1527
        %v1734 = vsel %vm1733, %v1732, %v1527
        %vm1735 = vcmp.lt.s32.totalorder %v1734, %v1535
        %v1736 = vsel %vm1735, %v1734, %v1535
        %vm1737 = vcmp.lt.s32.totalorder %v1736, %v1543
        %v1738 = vsel %vm1737, %v1736, %v1543
        %vm1739 = vcmp.lt.s32.totalorder %v1738, %v1551
        %v1740 = vsel %vm1739, %v1738, %v1551
        %v1741 = vrot.slane %v1740, 4
        %vm1742 = vcmp.lt.s32.totalorder %v1740, %v1741
        %v1743 = vsel %vm1742, %v1740, %v1741
        %v1744 = vrot.slane %v1743, 2
        %vm1745 = vcmp.lt.s32.totalorder %v1743, %v1744
        %v1746 = vsel %vm1745, %v1743, %v1744
        %v1747 = vrot.slane %v1746, 1
        %vm1748 = vcmp.lt.s32.totalorder %v1746, %v1747
        %v1749 = vsel %vm1748, %v1746, %v1747
        %vm1750 = vcmp.lt.s32.totalorder %v1432, %v1440
        %v1751 = vsel %vm1750, %v1432, %v1440
        %vm1752 = vcmp.lt.s32.totalorder %v1751, %v1448
        %v1753 = vsel %vm1752, %v1751, %v1448
        %vm1754 = vcmp.lt.s32.totalorder %v1753, %v1456
        %v1755 = vsel %vm1754, %v1753, %v1456
        %vm1756 = vcmp.lt.s32.totalorder %v1755, %v1464
        %v1757 = vsel %vm1756, %v1755, %v1464
        %vm1758 = vcmp.lt.s32.totalorder %v1757, %v1472
        %v1759 = vsel %vm1758, %v1757, %v1472
        %vm1760 = vcmp.lt.s32.totalorder %v1759, %v1480
        %v1761 = vsel %vm1760, %v1759, %v1480
        %vm1762 = vcmp.lt.s32.totalorder %v1761, %v1488
        %v1763 = vsel %vm1762, %v1761, %v1488
        %vm1764 = vcmp.lt.s32.totalorder %v1763, %v1496
        %v1765 = vsel %vm1764, %v1763, %v1496
        %vm1766 = vcmp.lt.s32.totalorder %v1765, %v1504
        %v1767 = vsel %vm1766, %v1765, %v1504
        %vm1768 = vcmp.lt.s32.totalorder %v1767, %v1512
        %v1769 = vsel %vm1768, %v1767, %v1512
        %vm1770 = vcmp.lt.s32.totalorder %v1769, %v1520
        %v1771 = vsel %vm1770, %v1769, %v1520
        %vm1772 = vcmp.lt.s32.totalorder %v1771, %v1528
        %v1773 = vsel %vm1772, %v1771, %v1528
        %vm1774 = vcmp.lt.s32.totalorder %v1773, %v1536
        %v1775 = vsel %vm1774, %v1773, %v1536
        %vm1776 = vcmp.lt.s32.totalorder %v1775, %v1544
        %v1777 = vsel %vm1776, %v1775, %v1544
        %vm1778 = vcmp.lt.s32.totalorder %v1777, %v1552
        %v1779 = vsel %vm1778, %v1777, %v1552
        %v1780 = vrot.slane %v1779, 4
        %vm1781 = vcmp.lt.s32.totalorder %v1779, %v1780
        %v1782 = vsel %vm1781, %v1779, %v1780
        %v1783 = vrot.slane %v1782, 2
        %vm1784 = vcmp.lt.s32.totalorder %v1782, %v1783
        %v1785 = vsel %vm1784, %v1782, %v1783
        %v1786 = vrot.slane %v1785, 1
        %vm1787 = vcmp.lt.s32.totalorder %v1785, %v1786
        %v1788 = vsel %vm1787, %v1785, %v1786
        %vm1789 = vcmp.lt.s32.totalorder %v1433, %v1441
        %v1790 = vsel %vm1789, %v1433, %v1441
        %vm1791 = vcmp.lt.s32.totalorder %v1790, %v1449
        %v1792 = vsel %vm1791, %v1790, %v1449
        %vm1793 = vcmp.lt.s32.totalorder %v1792, %v1457
        %v1794 = vsel %vm1793, %v1792, %v1457
        %vm1795 = vcmp.lt.s32.totalorder %v1794, %v1465
        %v1796 = vsel %vm1795, %v1794, %v1465
        %vm1797 = vcmp.lt.s32.totalorder %v1796, %v1473
        %v1798 = vsel %vm1797, %v1796, %v1473
        %vm1799 = vcmp.lt.s32.totalorder %v1798, %v1481
        %v1800 = vsel %vm1799, %v1798, %v1481
        %vm1801 = vcmp.lt.s32.totalorder %v1800, %v1489
        %v1802 = vsel %vm1801, %v1800, %v1489
        %vm1803 = vcmp.lt.s32.totalorder %v1802, %v1497
        %v1804 = vsel %vm1803, %v1802, %v1497
        %vm1805 = vcmp.lt.s32.totalorder %v1804, %v1505
        %v1806 = vsel %vm1805, %v1804, %v1505
        %vm1807 = vcmp.lt.s32.totalorder %v1806, %v1513
        %v1808 = vsel %vm1807, %v1806, %v1513
        %vm1809 = vcmp.lt.s32.totalorder %v1808, %v1521
        %v1810 = vsel %vm1809, %v1808, %v1521
        %vm1811 = vcmp.lt.s32.totalorder %v1810, %v1529
        %v1812 = vsel %vm1811, %v1810, %v1529
        %vm1813 = vcmp.lt.s32.totalorder %v1812, %v1537
        %v1814 = vsel %vm1813, %v1812, %v1537
        %vm1815 = vcmp.lt.s32.totalorder %v1814, %v1545
        %v1816 = vsel %vm1815, %v1814, %v1545
        %vm1817 = vcmp.lt.s32.totalorder %v1816, %v1553
        %v1818 = vsel %vm1817, %v1816, %v1553
        %v1819 = vrot.slane %v1818, 4
        %vm1820 = vcmp.lt.s32.totalorder %v1818, %v1819
        %v1821 = vsel %vm1820, %v1818, %v1819
        %v1822 = vrot.slane %v1821, 2
        %vm1823 = vcmp.lt.s32.totalorder %v1821, %v1822
        %v1824 = vsel %vm1823, %v1821, %v1822
        %v1825 = vrot.slane %v1824, 1
        %vm1826 = vcmp.lt.s32.totalorder %v1824, %v1825
        %v1827 = vsel %vm1826, %v1824, %v1825
        %vm1828 = vcmp.lt.s32.totalorder %v1434, %v1442
        %v1829 = vsel %vm1828, %v1434, %v1442
        %vm1830 = vcmp.lt.s32.totalorder %v1829, %v1450
        %v1831 = vsel %vm1830, %v1829, %v1450
        %vm1832 = vcmp.lt.s32.totalorder %v1831, %v1458
        %v1833 = vsel %vm1832, %v1831, %v1458
        %vm1834 = vcmp.lt.s32.totalorder %v1833, %v1466
        %v1835 = vsel %vm1834, %v1833, %v1466
        %vm1836 = vcmp.lt.s32.totalorder %v1835, %v1474
        %v1837 = vsel %vm1836, %v1835, %v1474
        %vm1838 = vcmp.lt.s32.totalorder %v1837, %v1482
        %v1839 = vsel %vm1838, %v1837, %v1482
        %vm1840 = vcmp.lt.s32.totalorder %v1839, %v1490
        %v1841 = vsel %vm1840, %v1839, %v1490
        %vm1842 = vcmp.lt.s32.totalorder %v1841, %v1498
        %v1843 = vsel %vm1842, %v1841, %v1498
        %vm1844 = vcmp.lt.s32.totalorder %v1843, %v1506
        %v1845 = vsel %vm1844, %v1843, %v1506
        %vm1846 = vcmp.lt.s32.totalorder %v1845, %v1514
        %v1847 = vsel %vm1846, %v1845, %v1514
        %vm1848 = vcmp.lt.s32.totalorder %v1847, %v1522
        %v1849 = vsel %vm1848, %v1847, %v1522
        %vm1850 = vcmp.lt.s32.totalorder %v1849, %v1530
        %v1851 = vsel %vm1850, %v1849, %v1530
        %vm1852 = vcmp.lt.s32.totalorder %v1851, %v1538
        %v1853 = vsel %vm1852, %v1851, %v1538
        %vm1854 = vcmp.lt.s32.totalorder %v1853, %v1546
        %v1855 = vsel %vm1854, %v1853, %v1546
        %vm1856 = vcmp.lt.s32.totalorder %v1855, %v1554
        %v1857 = vsel %vm1856, %v1855, %v1554
        %v1858 = vrot.slane %v1857, 4
        %vm1859 = vcmp.lt.s32.totalorder %v1857, %v1858
        %v1860 = vsel %vm1859, %v1857, %v1858
        %v1861 = vrot.slane %v1860, 2
        %vm1862 = vcmp.lt.s32.totalorder %v1860, %v1861
        %v1863 = vsel %vm1862, %v1860, %v1861
        %v1864 = vrot.slane %v1863, 1
        %vm1865 = vcmp.lt.s32.totalorder %v1863, %v1864
        %v1866 = vsel %vm1865, %v1863, %v1864
        %v1867 = vcombine.low %v1593, %v1632
        %v1868 = vcombine.low %v1671, %v1710
        %v1869 = vcombine.low %v1749, %v1788
        %v1870 = vcombine.low %v1827, %v1866
        %v1872 = vunpack.c.l.s4 1966171168
        %v1873 = vunpack.c.0.s8 %v1872
        %v1874 = vlaneseq
        %v1875 = vshrl.u32 %v1874, 7
        %v1876 = vsub.s32 %v1873, %v1875
        %v1877 = vrot.slane %v1867, %v1876
        %v1879 = vunpack.c.l.s4 1966171168
        %v1880 = vunpack.c.0.s8 %v1879
        %v1881 = vlaneseq
        %v1882 = vshrl.u32 %v1881, 7
        %v1883 = vsub.s32 %v1880, %v1882
        %v1884 = vrot.slane %v1868, %v1883
        %v1886 = vunpack.c.l.s4 1966171168
        %v1887 = vunpack.c.0.s8 %v1886
        %v1888 = vlaneseq
        %v1889 = vshrl.u32 %v1888, 7
        %v1890 = vsub.s32 %v1887, %v1889
        %v1891 = vrot.slane %v1869, %v1890
        %v1893 = vunpack.c.l.s4 1966171168
        %v1894 = vunpack.c.0.s8 %v1893
        %v1895 = vlaneseq
        %v1896 = vshrl.u32 %v1895, 7
        %v1897 = vsub.s32 %v1894, %v1896
        %v1898 = vrot.slane %v1870, %v1897
        %v1899 = vcombine.low %v1877, %v1884
        %v1900 = vcombine.low %v1891, %v1898
        %v1902 = vunpack.c.l.s4 1966171168
        %v1903 = vunpack.c.0.s8 %v1902
        %v1904 = vlaneseq
        %v1905 = vshrl.u32 %v1904, 7
        %v1906 = vsub.s32 %v1903, %v1905
        %v1907 = vrot.slane %v1899, %v1906
        %v1909 = vunpack.c.l.s4 1966171168
        %v1910 = vunpack.c.0.s8 %v1909
        %v1911 = vlaneseq
        %v1912 = vshrl.u32 %v1911, 7
        %v1913 = vsub.s32 %v1910, %v1912
        %v1914 = vrot.slane %v1900, %v1913
        %v1915 = vcombine.low %v1907, %v1914
        %1916 = vst [vmem:[%s285] sm:$0xff] %v1915
        %v1917 = vsub.f32 %v697, %v1134
        %v1918 = vsub.f32 %v699, %v1155
        %v1919 = vsub.f32 %v810, %v1176
        %v1920 = vsub.f32 %v812, %v1197
        %v1921 = vsub.f32 %v923, %v1218
        %v1922 = vsub.f32 %v925, %v1239
        %v1923 = vsub.f32 %v1036, %v1260
        %v1924 = vsub.f32 %v1038, %v1281
        %v1925 = vsub.f32 %v701, %v1134
        %v1926 = vsub.f32 %v703, %v1155
        %v1927 = vsub.f32 %v814, %v1176
        %v1928 = vsub.f32 %v816, %v1197
        %v1929 = vsub.f32 %v927, %v1218
        %v1930 = vsub.f32 %v929, %v1239
        %v1931 = vsub.f32 %v1040, %v1260
        %v1932 = vsub.f32 %v1042, %v1281
        %v1933 = vsub.f32 %v707, %v1134
        %v1934 = vsub.f32 %v709, %v1155
        %v1935 = vsub.f32 %v820, %v1176
        %v1936 = vsub.f32 %v822, %v1197
        %v1937 = vsub.f32 %v933, %v1218
        %v1938 = vsub.f32 %v935, %v1239
        %v1939 = vsub.f32 %v1046, %v1260
        %v1940 = vsub.f32 %v1048, %v1281
        %v1941 = vsub.f32 %v711, %v1134
        %v1942 = vsub.f32 %v713, %v1155
        %v1943 = vsub.f32 %v824, %v1176
        %v1944 = vsub.f32 %v826, %v1197
        %v1945 = vsub.f32 %v937, %v1218
        %v1946 = vsub.f32 %v939, %v1239
        %v1947 = vsub.f32 %v1050, %v1260
        %v1948 = vsub.f32 %v1052, %v1281
        %v1949 = vsub.f32 %v717, %v1134
        %v1950 = vsub.f32 %v719, %v1155
        %v1951 = vsub.f32 %v830, %v1176
        %v1952 = vsub.f32 %v832, %v1197
        %v1953 = vsub.f32 %v943, %v1218
        %v1954 = vsub.f32 %v945, %v1239
        %v1955 = vsub.f32 %v1056, %v1260
        %v1956 = vsub.f32 %v1058, %v1281
        %v1957 = vsub.f32 %v721, %v1134
        %v1958 = vsub.f32 %v723, %v1155
        %v1959 = vsub.f32 %v834, %v1176
        %v1960 = vsub.f32 %v836, %v1197
        %v1961 = vsub.f32 %v947, %v1218
        %v1962 = vsub.f32 %v949, %v1239
        %v1963 = vsub.f32 %v1060, %v1260
        %v1964 = vsub.f32 %v1062, %v1281
        %v1965 = vsub.f32 %v727, %v1134
        %v1966 = vsub.f32 %v729, %v1155
        %v1967 = vsub.f32 %v840, %v1176
        %v1968 = vsub.f32 %v842, %v1197
        %v1969 = vsub.f32 %v953, %v1218
        %v1970 = vsub.f32 %v955, %v1239
        %v1971 = vsub.f32 %v1066, %v1260
        %v1972 = vsub.f32 %v1068, %v1281
        %v1973 = vsub.f32 %v731, %v1134
        %v1974 = vsub.f32 %v733, %v1155
        %v1975 = vsub.f32 %v844, %v1176
        %v1976 = vsub.f32 %v846, %v1197
        %v1977 = vsub.f32 %v957, %v1218
        %v1978 = vsub.f32 %v959, %v1239
        %v1979 = vsub.f32 %v1070, %v1260
        %v1980 = vsub.f32 %v1072, %v1281
        %v1981 = vsub.f32 %v737, %v1134
        %v1982 = vsub.f32 %v739, %v1155
        %v1983 = vsub.f32 %v850, %v1176
        %v1984 = vsub.f32 %v852, %v1197
        %v1985 = vsub.f32 %v963, %v1218
        %v1986 = vsub.f32 %v965, %v1239
        %v1987 = vsub.f32 %v1076, %v1260
        %v1988 = vsub.f32 %v1078, %v1281
        %v1989 = vsub.f32 %v741, %v1134
        %v1990 = vsub.f32 %v743, %v1155
        %v1991 = vsub.f32 %v854, %v1176
        %v1992 = vsub.f32 %v856, %v1197
        %v1993 = vsub.f32 %v967, %v1218
        %v1994 = vsub.f32 %v969, %v1239
        %v1995 = vsub.f32 %v1080, %v1260
        %v1996 = vsub.f32 %v1082, %v1281
        %v1997 = vsub.f32 %v747, %v1134
        %v1998 = vsub.f32 %v749, %v1155
        %v1999 = vsub.f32 %v860, %v1176
        %v2000 = vsub.f32 %v862, %v1197
        %v2001 = vsub.f32 %v973, %v1218
        %v2002 = vsub.f32 %v975, %v1239
        %v2003 = vsub.f32 %v1086, %v1260
        %v2004 = vsub.f32 %v1088, %v1281
        %v2005 = vsub.f32 %v751, %v1134
        %v2006 = vsub.f32 %v753, %v1155
        %v2007 = vsub.f32 %v864, %v1176
        %v2008 = vsub.f32 %v866, %v1197
        %v2009 = vsub.f32 %v977, %v1218
        %v2010 = vsub.f32 %v979, %v1239
        %v2011 = vsub.f32 %v1090, %v1260
        %v2012 = vsub.f32 %v1092, %v1281
        %v2013 = vsub.f32 %v757, %v1134
        %v2014 = vsub.f32 %v759, %v1155
        %v2015 = vsub.f32 %v870, %v1176
        %v2016 = vsub.f32 %v872, %v1197
        %v2017 = vsub.f32 %v983, %v1218
        %v2018 = vsub.f32 %v985, %v1239
        %v2019 = vsub.f32 %v1096, %v1260
        %v2020 = vsub.f32 %v1098, %v1281
        %v2021 = vsub.f32 %v761, %v1134
        %v2022 = vsub.f32 %v763, %v1155
        %v2023 = vsub.f32 %v874, %v1176
        %v2024 = vsub.f32 %v876, %v1197
        %v2025 = vsub.f32 %v987, %v1218
        %v2026 = vsub.f32 %v989, %v1239
        %v2027 = vsub.f32 %v1100, %v1260
        %v2028 = vsub.f32 %v1102, %v1281
        %v2029 = vsub.f32 %v767, %v1134
        %v2030 = vsub.f32 %v769, %v1155
        %v2031 = vsub.f32 %v880, %v1176
        %v2032 = vsub.f32 %v882, %v1197
        %v2033 = vsub.f32 %v993, %v1218
        %v2034 = vsub.f32 %v995, %v1239
        %v2035 = vsub.f32 %v1106, %v1260
        %v2036 = vsub.f32 %v1108, %v1281
        %v2037 = vsub.f32 %v771, %v1134
        %v2038 = vsub.f32 %v773, %v1155
        %v2039 = vsub.f32 %v884, %v1176
        %v2040 = vsub.f32 %v886, %v1197
        %v2041 = vsub.f32 %v997, %v1218
        %v2042 = vsub.f32 %v999, %v1239
        %v2043 = vsub.f32 %v1110, %v1260
        %v2044 = vsub.f32 %v1112, %v1281
        %v2045 = vmul.f32 %v1917, 1.442695
        %v2046 = vpow.pop %v2045
        %v2047 = vmul.f32 %v1918, 1.442695
        %v2048 = vpow.pop %v2047
        %v2049 = vmul.f32 %v1919, 1.442695
        %v2050 = vpow.pop %v2049
        %v2051 = vmul.f32 %v1920, 1.442695
        %v2052 = vpow.pop %v2051
        %v2053 = vmul.f32 %v1921, 1.442695
        %v2054 = vpow.pop %v2053
        %v2055 = vmul.f32 %v1922, 1.442695
        %v2056 = vpow.pop %v2055
        %v2057 = vmul.f32 %v1923, 1.442695
        %v2058 = vpow.pop %v2057
        %v2059 = vmul.f32 %v1924, 1.442695
        %v2060 = vpow.pop %v2059
        %v2061 = vmul.f32 %v1925, 1.442695
        %v2062 = vpow.pop %v2061
        %v2063 = vmul.f32 %v1926, 1.442695
        %v2064 = vpow.pop %v2063
        %v2065 = vmul.f32 %v1927, 1.442695
        %v2066 = vpow.pop %v2065
        %v2067 = vmul.f32 %v1928, 1.442695
        %v2068 = vpow.pop %v2067
        %v2069 = vmul.f32 %v1929, 1.442695
        %v2070 = vpow.pop %v2069
        %v2071 = vmul.f32 %v1930, 1.442695
        %v2072 = vpow.pop %v2071
        %v2073 = vmul.f32 %v1931, 1.442695
        %v2074 = vpow.pop %v2073
        %v2075 = vmul.f32 %v1932, 1.442695
        %v2076 = vpow.pop %v2075
        %v2077 = vmul.f32 %v1933, 1.442695
        %v2078 = vpow.pop %v2077
        %v2079 = vmul.f32 %v1934, 1.442695
        %v2080 = vpow.pop %v2079
        %v2081 = vmul.f32 %v1935, 1.442695
        %v2082 = vpow.pop %v2081
        %v2083 = vmul.f32 %v1936, 1.442695
        %v2084 = vpow.pop %v2083
        %v2085 = vmul.f32 %v1937, 1.442695
        %v2086 = vpow.pop %v2085
        %v2087 = vmul.f32 %v1938, 1.442695
        %v2088 = vpow.pop %v2087
        %v2089 = vmul.f32 %v1939, 1.442695
        %v2090 = vpow.pop %v2089
        %v2091 = vmul.f32 %v1940, 1.442695
        %v2092 = vpow.pop %v2091
        %v2093 = vmul.f32 %v1941, 1.442695
        %v2094 = vpow.pop %v2093
        %v2095 = vmul.f32 %v1942, 1.442695
        %v2096 = vpow.pop %v2095
        %v2097 = vmul.f32 %v1943, 1.442695
        %v2098 = vpow.pop %v2097
        %v2099 = vmul.f32 %v1944, 1.442695
        %v2100 = vpow.pop %v2099
        %v2101 = vmul.f32 %v1945, 1.442695
        %v2102 = vpow.pop %v2101
        %v2103 = vmul.f32 %v1946, 1.442695
        %v2104 = vpow.pop %v2103
        %v2105 = vmul.f32 %v1947, 1.442695
        %v2106 = vpow.pop %v2105
        %v2107 = vmul.f32 %v1948, 1.442695
        %v2108 = vpow.pop %v2107
        %v2109 = vmul.f32 %v1949, 1.442695
        %v2110 = vpow.pop %v2109
        %v2111 = vmul.f32 %v1950, 1.442695
        %v2112 = vpow.pop %v2111
        %v2113 = vmul.f32 %v1951, 1.442695
        %v2114 = vpow.pop %v2113
        %v2115 = vmul.f32 %v1952, 1.442695
        %v2116 = vpow.pop %v2115
        %v2117 = vmul.f32 %v1953, 1.442695
        %v2118 = vpow.pop %v2117
        %v2119 = vmul.f32 %v1954, 1.442695
        %v2120 = vpow.pop %v2119
        %v2121 = vmul.f32 %v1955, 1.442695
        %v2122 = vpow.pop %v2121
        %v2123 = vmul.f32 %v1956, 1.442695
        %v2124 = vpow.pop %v2123
        %v2125 = vmul.f32 %v1957, 1.442695
        %v2126 = vpow.pop %v2125
        %v2127 = vmul.f32 %v1958, 1.442695
        %v2128 = vpow.pop %v2127
        %v2129 = vmul.f32 %v1959, 1.442695
        %v2130 = vpow.pop %v2129
        %v2131 = vmul.f32 %v1960, 1.442695
        %v2132 = vpow.pop %v2131
        %v2133 = vmul.f32 %v1961, 1.442695
        %v2134 = vpow.pop %v2133
        %v2135 = vmul.f32 %v1962, 1.442695
        %v2136 = vpow.pop %v2135
        %v2137 = vmul.f32 %v1963, 1.442695
        %v2138 = vpow.pop %v2137
        %v2139 = vmul.f32 %v1964, 1.442695
        %v2140 = vpow.pop %v2139
        %v2141 = vmul.f32 %v1965, 1.442695
        %v2142 = vpow.pop %v2141
        %v2143 = vmul.f32 %v1966, 1.442695
        %v2144 = vpow.pop %v2143
        %v2145 = vmul.f32 %v1967, 1.442695
        %v2146 = vpow.pop %v2145
        %v2147 = vmul.f32 %v1968, 1.442695
        %v2148 = vpow.pop %v2147
        %v2149 = vmul.f32 %v1969, 1.442695
        %v2150 = vpow.pop %v2149
        %v2151 = vmul.f32 %v1970, 1.442695
        %v2152 = vpow.pop %v2151
        %v2153 = vmul.f32 %v1971, 1.442695
        %v2154 = vpow.pop %v2153
        %v2155 = vmul.f32 %v1972, 1.442695
        %v2156 = vpow.pop %v2155
        %v2157 = vmul.f32 %v1973, 1.442695
        %v2158 = vpow.pop %v2157
        %v2159 = vmul.f32 %v1974, 1.442695
        %v2160 = vpow.pop %v2159
        %v2161 = vmul.f32 %v1975, 1.442695
        %v2162 = vpow.pop %v2161
        %v2163 = vmul.f32 %v1976, 1.442695
        %v2164 = vpow.pop %v2163
        %v2165 = vmul.f32 %v1977, 1.442695
        %v2166 = vpow.pop %v2165
        %v2167 = vmul.f32 %v1978, 1.442695
        %v2168 = vpow.pop %v2167
        %v2169 = vmul.f32 %v1979, 1.442695
        %v2170 = vpow.pop %v2169
        %v2171 = vmul.f32 %v1980, 1.442695
        %v2172 = vpow.pop %v2171
        %v2173 = vmul.f32 %v1981, 1.442695
        %v2174 = vpow.pop %v2173
        %v2175 = vmul.f32 %v1982, 1.442695
        %v2176 = vpow.pop %v2175
        %v2177 = vmul.f32 %v1983, 1.442695
        %v2178 = vpow.pop %v2177
        %v2179 = vmul.f32 %v1984, 1.442695
        %v2180 = vpow.pop %v2179
        %v2181 = vmul.f32 %v1985, 1.442695
        %v2182 = vpow.pop %v2181
        %v2183 = vmul.f32 %v1986, 1.442695
        %v2184 = vpow.pop %v2183
        %v2185 = vmul.f32 %v1987, 1.442695
        %v2186 = vpow.pop %v2185
        %v2187 = vmul.f32 %v1988, 1.442695
        %v2188 = vpow.pop %v2187
        %v2189 = vmul.f32 %v1989, 1.442695
        %v2190 = vpow.pop %v2189
        %v2191 = vmul.f32 %v1990, 1.442695
        %v2192 = vpow.pop %v2191
        %v2193 = vmul.f32 %v1991, 1.442695
        %v2194 = vpow.pop %v2193
        %v2195 = vmul.f32 %v1992, 1.442695
        %v2196 = vpow.pop %v2195
        %v2197 = vmul.f32 %v1993, 1.442695
        %v2198 = vpow.pop %v2197
        %v2199 = vmul.f32 %v1994, 1.442695
        %v2200 = vpow.pop %v2199
        %v2201 = vmul.f32 %v1995, 1.442695
        %v2202 = vpow.pop %v2201
        %v2203 = vmul.f32 %v1996, 1.442695
        %v2204 = vpow.pop %v2203
        %v2205 = vmul.f32 %v1997, 1.442695
        %v2206 = vpow.pop %v2205
        %v2207 = vmul.f32 %v1998, 1.442695
        %v2208 = vpow.pop %v2207
        %v2209 = vmul.f32 %v1999, 1.442695
        %v2210 = vpow.pop %v2209
        %v2211 = vmul.f32 %v2000, 1.442695
        %v2212 = vpow.pop %v2211
        %v2213 = vmul.f32 %v2001, 1.442695
        %v2214 = vpow.pop %v2213
        %v2215 = vmul.f32 %v2002, 1.442695
        %v2216 = vpow.pop %v2215
        %v2217 = vmul.f32 %v2003, 1.442695
        %v2218 = vpow.pop %v2217
        %v2219 = vmul.f32 %v2004, 1.442695
        %v2220 = vpow.pop %v2219
        %v2221 = vmul.f32 %v2005, 1.442695
        %v2222 = vpow.pop %v2221
        %v2223 = vmul.f32 %v2006, 1.442695
        %v2224 = vpow.pop %v2223
        %v2225 = vmul.f32 %v2007, 1.442695
        %v2226 = vpow.pop %v2225
        %v2227 = vmul.f32 %v2008, 1.442695
        %v2228 = vpow.pop %v2227
        %v2229 = vmul.f32 %v2009, 1.442695
        %v2230 = vpow.pop %v2229
        %v2231 = vmul.f32 %v2010, 1.442695
        %v2232 = vpow.pop %v2231
        %v2233 = vmul.f32 %v2011, 1.442695
        %v2234 = vpow.pop %v2233
        %v2235 = vmul.f32 %v2012, 1.442695
        %v2236 = vpow.pop %v2235
        %v2237 = vmul.f32 %v2013, 1.442695
        %v2238 = vpow.pop %v2237
        %v2239 = vmul.f32 %v2014, 1.442695
        %v2240 = vpow.pop %v2239
        %v2241 = vmul.f32 %v2015, 1.442695
        %v2242 = vpow.pop %v2241
        %v2243 = vmul.f32 %v2016, 1.442695
        %v2244 = vpow.pop %v2243
        %v2245 = vmul.f32 %v2017, 1.442695
        %v2246 = vpow.pop %v2245
        %v2247 = vmul.f32 %v2018, 1.442695
        %v2248 = vpow.pop %v2247
        %v2249 = vmul.f32 %v2019, 1.442695
        %v2250 = vpow.pop %v2249
        %v2251 = vmul.f32 %v2020, 1.442695
        %v2252 = vpow.pop %v2251
        %v2253 = vmul.f32 %v2021, 1.442695
        %v2254 = vpow.pop %v2253
        %v2255 = vmul.f32 %v2022, 1.442695
        %v2256 = vpow.pop %v2255
        %v2257 = vmul.f32 %v2023, 1.442695
        %v2258 = vpow.pop %v2257
        %v2259 = vmul.f32 %v2024, 1.442695
        %v2260 = vpow.pop %v2259
        %v2261 = vmul.f32 %v2025, 1.442695
        %v2262 = vpow.pop %v2261
        %v2263 = vmul.f32 %v2026, 1.442695
        %v2264 = vpow.pop %v2263
        %v2265 = vmul.f32 %v2027, 1.442695
        %v2266 = vpow.pop %v2265
        %v2267 = vmul.f32 %v2028, 1.442695
        %v2268 = vpow.pop %v2267
        %v2269 = vmul.f32 %v2029, 1.442695
        %v2270 = vpow.pop %v2269
        %v2271 = vmul.f32 %v2030, 1.442695
        %v2272 = vpow.pop %v2271
        %v2273 = vmul.f32 %v2031, 1.442695
        %v2274 = vpow.pop %v2273
        %v2275 = vmul.f32 %v2032, 1.442695
        %v2276 = vpow.pop %v2275
        %v2277 = vmul.f32 %v2033, 1.442695
        %v2278 = vpow.pop %v2277
        %v2279 = vmul.f32 %v2034, 1.442695
        %v2280 = vpow.pop %v2279
        %v2281 = vmul.f32 %v2035, 1.442695
        %v2282 = vpow.pop %v2281
        %v2283 = vmul.f32 %v2036, 1.442695
        %v2284 = vpow.pop %v2283
        %v2285 = vmul.f32 %v2037, 1.442695
        %v2286 = vpow.pop %v2285
        %v2287 = vmul.f32 %v2038, 1.442695
        %v2288 = vpow.pop %v2287
        %v2289 = vmul.f32 %v2039, 1.442695
        %v2290 = vpow.pop %v2289
        %v2291 = vmul.f32 %v2040, 1.442695
        %v2292 = vpow.pop %v2291
        %v2293 = vmul.f32 %v2041, 1.442695
        %v2294 = vpow.pop %v2293
        %v2295 = vmul.f32 %v2042, 1.442695
        %v2296 = vpow.pop %v2295
        %v2297 = vmul.f32 %v2043, 1.442695
        %v2298 = vpow.pop %v2297
        %v2299 = vmul.f32 %v2044, 1.442695
        %v2300 = vpow.pop %v2299
        %v2301 = vadd.f32 %v2046, %v2062
        %v2302 = vadd.f32 %v2301, %v2078
        %v2303 = vadd.f32 %v2302, %v2094
        %v2304 = vadd.f32 %v2303, %v2110
        %v2305 = vadd.f32 %v2304, %v2126
        %v2306 = vadd.f32 %v2305, %v2142
        %v2307 = vadd.f32 %v2306, %v2158
        %v2308 = vadd.f32 %v2307, %v2174
        %v2309 = vadd.f32 %v2308, %v2190
        %v2310 = vadd.f32 %v2309, %v2206
        %v2311 = vadd.f32 %v2310, %v2222
        %v2312 = vadd.f32 %v2311, %v2238
        %v2313 = vadd.f32 %v2312, %v2254
        %v2314 = vadd.f32 %v2313, %v2270
        %v2315 = vadd.f32 %v2314, %v2286
        %v2316 = vrot.slane %v2315, 4
        %v2317 = vadd.f32 %v2315, %v2316
        %v2318 = vrot.slane %v2317, 2
        %v2319 = vadd.f32 %v2317, %v2318
        %v2320 = vrot.slane %v2319, 1
        %v2321 = vadd.f32 %v2319, %v2320
        %v2322 = vadd.f32 %v2048, %v2064
        %v2323 = vadd.f32 %v2322, %v2080
        %v2324 = vadd.f32 %v2323, %v2096
        %v2325 = vadd.f32 %v2324, %v2112
        %v2326 = vadd.f32 %v2325, %v2128
        %v2327 = vadd.f32 %v2326, %v2144
        %v2328 = vadd.f32 %v2327, %v2160
        %v2329 = vadd.f32 %v2328, %v2176
        %v2330 = vadd.f32 %v2329, %v2192
        %v2331 = vadd.f32 %v2330, %v2208
        %v2332 = vadd.f32 %v2331, %v2224
        %v2333 = vadd.f32 %v2332, %v2240
        %v2334 = vadd.f32 %v2333, %v2256
        %v2335 = vadd.f32 %v2334, %v2272
        %v2336 = vadd.f32 %v2335, %v2288
        %v2337 = vrot.slane %v2336, 4
        %v2338 = vadd.f32 %v2336, %v2337
        %v2339 = vrot.slane %v2338, 2
        %v2340 = vadd.f32 %v2338, %v2339
        %v2341 = vrot.slane %v2340, 1
        %v2342 = vadd.f32 %v2340, %v2341
        %v2343 = vadd.f32 %v2050, %v2066
        %v2344 = vadd.f32 %v2343, %v2082
        %v2345 = vadd.f32 %v2344, %v2098
        %v2346 = vadd.f32 %v2345, %v2114
        %v2347 = vadd.f32 %v2346, %v2130
        %v2348 = vadd.f32 %v2347, %v2146
        %v2349 = vadd.f32 %v2348, %v2162
        %v2350 = vadd.f32 %v2349, %v2178
        %v2351 = vadd.f32 %v2350, %v2194
        %v2352 = vadd.f32 %v2351, %v2210
        %v2353 = vadd.f32 %v2352, %v2226
        %v2354 = vadd.f32 %v2353, %v2242
        %v2355 = vadd.f32 %v2354, %v2258
        %v2356 = vadd.f32 %v2355, %v2274
        %v2357 = vadd.f32 %v2356, %v2290
        %v2358 = vrot.slane %v2357, 4
        %v2359 = vadd.f32 %v2357, %v2358
        %v2360 = vrot.slane %v2359, 2
        %v2361 = vadd.f32 %v2359, %v2360
        %v2362 = vrot.slane %v2361, 1
        %v2363 = vadd.f32 %v2361, %v2362
        %v2364 = vadd.f32 %v2052, %v2068
        %v2365 = vadd.f32 %v2364, %v2084
        %v2366 = vadd.f32 %v2365, %v2100
        %v2367 = vadd.f32 %v2366, %v2116
        %v2368 = vadd.f32 %v2367, %v2132
        %v2369 = vadd.f32 %v2368, %v2148
        %v2370 = vadd.f32 %v2369, %v2164
        %v2371 = vadd.f32 %v2370, %v2180
        %v2372 = vadd.f32 %v2371, %v2196
        %v2373 = vadd.f32 %v2372, %v2212
        %v2374 = vadd.f32 %v2373, %v2228
        %v2375 = vadd.f32 %v2374, %v2244
        %v2376 = vadd.f32 %v2375, %v2260
        %v2377 = vadd.f32 %v2376, %v2276
        %v2378 = vadd.f32 %v2377, %v2292
        %v2379 = vrot.slane %v2378, 4
        %v2380 = vadd.f32 %v2378, %v2379
        %v2381 = vrot.slane %v2380, 2
        %v2382 = vadd.f32 %v2380, %v2381
        %v2383 = vrot.slane %v2382, 1
        %v2384 = vadd.f32 %v2382, %v2383
        %v2385 = vadd.f32 %v2054, %v2070
        %v2386 = vadd.f32 %v2385, %v2086
        %v2387 = vadd.f32 %v2386, %v2102
        %v2388 = vadd.f32 %v2387, %v2118
        %v2389 = vadd.f32 %v2388, %v2134
        %v2390 = vadd.f32 %v2389, %v2150
        %v2391 = vadd.f32 %v2390, %v2166
        %v2392 = vadd.f32 %v2391, %v2182
        %v2393 = vadd.f32 %v2392, %v2198
        %v2394 = vadd.f32 %v2393, %v2214
        %v2395 = vadd.f32 %v2394, %v2230
        %v2396 = vadd.f32 %v2395, %v2246
        %v2397 = vadd.f32 %v2396, %v2262
        %v2398 = vadd.f32 %v2397, %v2278
        %v2399 = vadd.f32 %v2398, %v2294
        %v2400 = vrot.slane %v2399, 4
        %v2401 = vadd.f32 %v2399, %v2400
        %v2402 = vrot.slane %v2401, 2
        %v2403 = vadd.f32 %v2401, %v2402
        %v2404 = vrot.slane %v2403, 1
        %v2405 = vadd.f32 %v2403, %v2404
        %v2406 = vadd.f32 %v2056, %v2072
        %v2407 = vadd.f32 %v2406, %v2088
        %v2408 = vadd.f32 %v2407, %v2104
        %v2409 = vadd.f32 %v2408, %v2120
        %v2410 = vadd.f32 %v2409, %v2136
        %v2411 = vadd.f32 %v2410, %v2152
        %v2412 = vadd.f32 %v2411, %v2168
        %v2413 = vadd.f32 %v2412, %v2184
        %v2414 = vadd.f32 %v2413, %v2200
        %v2415 = vadd.f32 %v2414, %v2216
        %v2416 = vadd.f32 %v2415, %v2232
        %v2417 = vadd.f32 %v2416, %v2248
        %v2418 = vadd.f32 %v2417, %v2264
        %v2419 = vadd.f32 %v2418, %v2280
        %v2420 = vadd.f32 %v2419, %v2296
        %v2421 = vrot.slane %v2420, 4
        %v2422 = vadd.f32 %v2420, %v2421
        %v2423 = vrot.slane %v2422, 2
        %v2424 = vadd.f32 %v2422, %v2423
        %v2425 = vrot.slane %v2424, 1
        %v2426 = vadd.f32 %v2424, %v2425
        %v2427 = vadd.f32 %v2058, %v2074
        %v2428 = vadd.f32 %v2427, %v2090
        %v2429 = vadd.f32 %v2428, %v2106
        %v2430 = vadd.f32 %v2429, %v2122
        %v2431 = vadd.f32 %v2430, %v2138
        %v2432 = vadd.f32 %v2431, %v2154
        %v2433 = vadd.f32 %v2432, %v2170
        %v2434 = vadd.f32 %v2433, %v2186
        %v2435 = vadd.f32 %v2434, %v2202
        %v2436 = vadd.f32 %v2435, %v2218
        %v2437 = vadd.f32 %v2436, %v2234
        %v2438 = vadd.f32 %v2437, %v2250
        %v2439 = vadd.f32 %v2438, %v2266
        %v2440 = vadd.f32 %v2439, %v2282
        %v2441 = vadd.f32 %v2440, %v2298
        %v2442 = vrot.slane %v2441, 4
        %v2443 = vadd.f32 %v2441, %v2442
        %v2444 = vrot.slane %v2443, 2
        %v2445 = vadd.f32 %v2443, %v2444
        %v2446 = vrot.slane %v2445, 1
        %v2447 = vadd.f32 %v2445, %v2446
        %v2448 = vadd.f32 %v2060, %v2076
        %v2449 = vadd.f32 %v2448, %v2092
        %v2450 = vadd.f32 %v2449, %v2108
        %v2451 = vadd.f32 %v2450, %v2124
        %v2452 = vadd.f32 %v2451, %v2140
        %v2453 = vadd.f32 %v2452, %v2156
        %v2454 = vadd.f32 %v2453, %v2172
        %v2455 = vadd.f32 %v2454, %v2188
        %v2456 = vadd.f32 %v2455, %v2204
        %v2457 = vadd.f32 %v2456, %v2220
        %v2458 = vadd.f32 %v2457, %v2236
        %v2459 = vadd.f32 %v2458, %v2252
        %v2460 = vadd.f32 %v2459, %v2268
        %v2461 = vadd.f32 %v2460, %v2284
        %v2462 = vadd.f32 %v2461, %v2300
        %v2463 = vrot.slane %v2462, 4
        %v2464 = vadd.f32 %v2462, %v2463
        %v2465 = vrot.slane %v2464, 2
        %v2466 = vadd.f32 %v2464, %v2465
        %v2467 = vrot.slane %v2466, 1
        %v2468 = vadd.f32 %v2466, %v2467
        %v2469 = vrcp.pop %v2321
        %v2470 = vrcp.pop %v2342
        %v2471 = vrcp.pop %v2363
        %v2472 = vrcp.pop %v2384
        %v2473 = vrcp.pop %v2405
        %v2474 = vrcp.pop %v2426
        %v2475 = vrcp.pop %v2447
        %v2476 = vrcp.pop %v2468
        %v2485 = vcombine.low %v2469, %v2470
        %v2486 = vcombine.low %v2471, %v2472
        %v2487 = vcombine.low %v2473, %v2474
        %v2488 = vcombine.low %v2475, %v2476
        %v2490 = vunpack.c.l.s4 1966171168
        %v2491 = vunpack.c.0.s8 %v2490
        %v2492 = vlaneseq
        %v2493 = vshrl.u32 %v2492, 7
        %v2494 = vsub.s32 %v2491, %v2493
        %v2495 = vrot.slane %v2485, %v2494
        %v2497 = vunpack.c.l.s4 1966171168
        %v2498 = vunpack.c.0.s8 %v2497
        %v2499 = vlaneseq
        %v2500 = vshrl.u32 %v2499, 7
        %v2501 = vsub.s32 %v2498, %v2500
        %v2502 = vrot.slane %v2486, %v2501
        %v2504 = vunpack.c.l.s4 1966171168
        %v2505 = vunpack.c.0.s8 %v2504
        %v2506 = vlaneseq
        %v2507 = vshrl.u32 %v2506, 7
        %v2508 = vsub.s32 %v2505, %v2507
        %v2509 = vrot.slane %v2487, %v2508
        %v2511 = vunpack.c.l.s4 1966171168
        %v2512 = vunpack.c.0.s8 %v2511
        %v2513 = vlaneseq
        %v2514 = vshrl.u32 %v2513, 7
        %v2515 = vsub.s32 %v2512, %v2514
        %v2516 = vrot.slane %v2488, %v2515
        %v2517 = vcombine.low %v2495, %v2502
        %v2518 = vcombine.low %v2509, %v2516
        %v2520 = vunpack.c.l.s4 1966171168
        %v2521 = vunpack.c.0.s8 %v2520
        %v2522 = vlaneseq
        %v2523 = vshrl.u32 %v2522, 7
        %v2524 = vsub.s32 %v2521, %v2523
        %v2525 = vrot.slane %v2517, %v2524
        %v2527 = vunpack.c.l.s4 1966171168
        %v2528 = vunpack.c.0.s8 %v2527
        %v2529 = vlaneseq
        %v2530 = vshrl.u32 %v2529, 7
        %v2531 = vsub.s32 %v2528, %v2530
        %v2532 = vrot.slane %v2518, %v2531
        %v2533 = vcombine.low %v2525, %v2532
        %2535 = vst [vmem:[%s290] sm:$0xff] %v2533
        %s2536 = smul.u32 8, %s16
        %p2537 = scmp.lt.s32.totalorder %s2536, 15
        %s2538 = scalar_select %p2537, %s2536, 15
        %s2539 = scalar_lea.vmem %s3, %s2538
        %s2540 = smul.u32 8, %s16
        %p2541 = scmp.lt.s32.totalorder %s2540, 15
        %s2542 = scalar_select %p2541, %s2540, 15
        %s2543 = scalar_lea.vmem %s4, %s2542
        // Predicated region
        $region56: #{ocr_predictor_forward.3} parent=50 // pred_check
          %p2544 = pneg %p102
        $region57: #{ocr_predictor_forward.3} parent=50 // pred_check_branch
          %2546 = sbr.rel (%p2544) target = $region59
        $region58: #{ocr_predictor_forward.3} parent=50 // pred_region
          %s2547 = smul.u32 8, %s16
        $region59: #{ocr_predictor_forward.3} parent=50 // pred_fallthru
          _
        // Predicated region
        $region60: #{ocr_predictor_forward.3} parent=50 // pred_check
          %p2548 = pneg %p128
        $region61: #{ocr_predictor_forward.3} parent=50 // pred_check_branch
          %2550 = sbr.rel (%p2548) target = $region63
        $region62: #{ocr_predictor_forward.3} parent=50 // pred_region
          %s2551 = smul.u32 8, %s16
        $region63: #{ocr_predictor_forward.3} parent=50 // pred_fallthru
          _
      $region51: #{ocr_predictor_forward.3} parent=5 // pred_fallthru
        _
      %p2552 = scmp.le.s32.totalorder 2, %s11
      // Predicated region
      $region64: #{ocr_predictor_forward.3} parent=5 // pred_check
        %p2553 = pneg %p2552
      $region65: #{ocr_predictor_forward.3} parent=5 // pred_check_branch
        %2555 = sbr.rel (%p2553) target = $region67
      $region66: #{ocr_predictor_forward.3} parent=5 // pred_region
        %s2556 = ssub.s32 %s11, 2
        // Predicated region
        $region68: #{ocr_predictor_forward.3} parent=66 // pred_check
          %p2557 = pneg %p108
        $region69: #{ocr_predictor_forward.3} parent=66 // pred_check_branch
          %2559 = sbr.rel (%p2557) target = $region71
        $region70: #{ocr_predictor_forward.3} parent=66 // pred_region
          %s2560 = smul.u32 8, %s17
          %p2561 = scmp.lt.s32.totalorder %s2560, 15
          %s2562 = scalar_select %p2561, %s2560, 15
          %s2563 = scalar_lea.vmem %s3, %s2562
        $region71: #{ocr_predictor_forward.3} parent=66 // pred_fallthru
          _
        // Predicated region
        $region72: #{ocr_predictor_forward.3} parent=66 // pred_check
          %p2564 = pneg %p134
        $region73: #{ocr_predictor_forward.3} parent=66 // pred_check_branch
          %2566 = sbr.rel (%p2564) target = $region75
        $region74: #{ocr_predictor_forward.3} parent=66 // pred_region
          %s2567 = smul.u32 8, %s17
          %p2568 = scmp.lt.s32.totalorder %s2567, 15
          %s2569 = scalar_select %p2568, %s2567, 15
          %s2570 = scalar_lea.vmem %s4, %s2569
        $region75: #{ocr_predictor_forward.3} parent=66 // pred_fallthru
          _
      $region67: #{ocr_predictor_forward.3} parent=5 // pred_fallthru
        _
    $region6: #{ocr_predictor_forward.3} parent=1 // loop_footer
      %s15 = sadd.s32 1, %s11
    $region7: #{ocr_predictor_forward.3} parent=1 // loop_footer_branch
      %10 = sbr.rel target = $region3
    $region8: #{ocr_predictor_forward.3} parent=1 // loop_exit
      _

// kernel: squeeze.2
$region0: #{squeeze.2}
  %s0 = inlined_call_operand.vmem [shape: s32[1152], index: 0, kind: input, shape index: {}]
  %s1 = inlined_call_operand.hbm [shape: s32[2,576], index: 1, kind: output, shape index: {}]
  $region1: #{squeeze.2} parent=0
    #allocation0 [shape = 'u8[5120]{0}', space=vmem, size = 0x1400, scoped, tag = 'operand span for operand 1']
    #allocation1 [shape = 's32[1]{0}', space=sflag, size = 0x4, scoped, tag = 'scoped memory for squeeze.2']
    #allocation2 [shape = 'u8[20480]{0}', space=vmem, size = 0x5000, scoped, tag = 'scoped mem for output reshape']
    %2 = vsyncpa [#allocation1], 0
    %s3 = scalar_lea.vmem %s0, 4
    %v4 = vld [vmem:[%s3] sm:$0x1]
    %vm5 = vcmask 523264
    %s6 = scalar_lea.vmem [#allocation2], 32
    %7 = vst.msk [vmem:[%s6] sm:$0x1] %vm5, %v4
    %v8 = vld [vmem:[%s0] sm:$0xf]
    %9 = vst [vmem:[#allocation2] ss:$8 sm:$0xf] %v8
    %s10 = scalar_lea.vmem %s0, 4
    %v11 = vld [vmem:[%s10] sm:$0x1f]
    %s12 = scalar_lea.vmem %s0, 5
    %v13 = vld [vmem:[%s12] sm:$0xf]
    %vm14 = vcmask 523264
    %v15 = vsel %vm14, %v13, %v11
    %16 = vrot.lane.b32.xlu0 %v15, 64
    %v17 = vpop.permute.xlu0 %16
    %vm18 = vcmask 523264
    %s19 = scalar_lea.vmem [#allocation2], 1
    %20 = vst.msk [vmem:[%s19] ss:$8 sm:$0xf] %vm18, %v17
    %s21 = scalar_lea.vmem [#allocation2], 29
    %22 = vst.msk [vmem:[%s21] sm:$0x10] %vm18, %v17
    %vm23 = vcmask 1048064
    %s24 = scalar_lea.vmem [#allocation2], 1
    %25 = vst.msk [vmem:[%s24] ss:$8 sm:$0xf] %vm23, %v17
    %s27 = sshll.u32 1, 2
    %s28 = ssub.s32 %s27, 1
    %v30 = vld [vmem:[#allocation2] sm:%s28]
    %s31 = sshll.u32 1, 2
    %s32 = ssub.s32 %s31, 1
    %33 = vst [vmem:[#allocation0] sm:%s32] %v30
    %s34 = scalar_lea.vmem [#allocation2], 8
    %v35 = vld [vmem:[%s34] sm:%s28]
    %s36 = sshll.u32 1, 2
    %s37 = ssub.s32 %s36, 1
    %s38 = scalar_lea.vmem [#allocation0], 2
    %39 = vst [vmem:[%s38] sm:%s37] %v35
    %s40 = scalar_lea.vmem [#allocation2], 16
    %v41 = vld [vmem:[%s40] sm:%s28]
    %s42 = sshll.u32 1, 2
    %s43 = ssub.s32 %s42, 1
    %s44 = smul.addr 2, 2
    %s45 = scalar_lea.vmem [#allocation0], %s44
    %46 = vst [vmem:[%s45] sm:%s43] %v41
    %s47 = scalar_lea.vmem [#allocation2], 24
    %v48 = vld [vmem:[%s47] sm:%s28]
    %s49 = sshll.u32 1, 2
    %s50 = ssub.s32 %s49, 1
    %s51 = smul.addr 2, 3
    %s52 = scalar_lea.vmem [#allocation0], %s51
    %53 = vst [vmem:[%s52] sm:%s50] %v48
    %s54 = scalar_lea.vmem [#allocation2], 32
    %v55 = vld [vmem:[%s54] sm:%s28]
    %s56 = sshll.u32 1, 2
    %s57 = ssub.s32 %s56, 1
    %s58 = smul.addr 2, 4
    %s59 = scalar_lea.vmem [#allocation0], %s58
    %60 = vst [vmem:[%s59] sm:%s57] %v55
    %s62 = ssub.s32 160, 160
    %63 = vsyncadd [#allocation1], %s62
    %s65 = sshll.u32 [#allocation0], 4
    %s66 = int_to_ptr.vmem [resolvable:$true] %s65
    %68 = dma.vmem_to_hbm [thread:$0]  %s66, 160, %s1, [#allocation1]
    %69 = dma.done [#allocation1], 160
    %70 = vsyncpa [#allocation1], 1

// kernel: squeeze.3
$region0: #{squeeze.3}
  %s0 = inlined_call_operand.vmem [shape: f32[1152], index: 0, kind: input, shape index: {}]
  %s1 = inlined_call_operand.hbm [shape: f32[2,576], index: 1, kind: output, shape index: {}]
  $region1: #{squeeze.3} parent=0
    #allocation0 [shape = 'u8[5120]{0}', space=vmem, size = 0x1400, scoped, tag = 'operand span for operand 1']
    #allocation1 [shape = 's32[1]{0}', space=sflag, size = 0x4, scoped, tag = 'scoped memory for squeeze.3']
    #allocation2 [shape = 'u8[20480]{0}', space=vmem, size = 0x5000, scoped, tag = 'scoped mem for output reshape']
    %2 = vsyncpa [#allocation1], 0
    %s3 = scalar_lea.vmem %s0, 4
    %v4 = vld [vmem:[%s3] sm:$0x1]
    %vm5 = vcmask 523264
    %s6 = scalar_lea.vmem [#allocation2], 32
    %7 = vst.msk [vmem:[%s6] sm:$0x1] %vm5, %v4
    %v8 = vld [vmem:[%s0] sm:$0xf]
    %9 = vst [vmem:[#allocation2] ss:$8 sm:$0xf] %v8
    %s10 = scalar_lea.vmem %s0, 4
    %v11 = vld [vmem:[%s10] sm:$0x1f]
    %s12 = scalar_lea.vmem %s0, 5
    %v13 = vld [vmem:[%s12] sm:$0xf]
    %vm14 = vcmask 523264
    %v15 = vsel %vm14, %v13, %v11
    %16 = vrot.lane.b32.xlu0 %v15, 64
    %v17 = vpop.permute.xlu0 %16
    %vm18 = vcmask 523264
    %s19 = scalar_lea.vmem [#allocation2], 1
    %20 = vst.msk [vmem:[%s19] ss:$8 sm:$0xf] %vm18, %v17
    %s21 = scalar_lea.vmem [#allocation2], 29
    %22 = vst.msk [vmem:[%s21] sm:$0x10] %vm18, %v17
    %vm23 = vcmask 1048064
    %s24 = scalar_lea.vmem [#allocation2], 1
    %25 = vst.msk [vmem:[%s24] ss:$8 sm:$0xf] %vm23, %v17
    %s27 = sshll.u32 1, 2
    %s28 = ssub.s32 %s27, 1
    %v30 = vld [vmem:[#allocation2] sm:%s28]
    %s31 = sshll.u32 1, 2
    %s32 = ssub.s32 %s31, 1
    %33 = vst [vmem:[#allocation0] sm:%s32] %v30
    %s34 = scalar_lea.vmem [#allocation2], 8
    %v35 = vld [vmem:[%s34] sm:%s28]
    %s36 = sshll.u32 1, 2
    %s37 = ssub.s32 %s36, 1
    %s38 = scalar_lea.vmem [#allocation0], 2
    %39 = vst [vmem:[%s38] sm:%s37] %v35
    %s40 = scalar_lea.vmem [#allocation2], 16
    %v41 = vld [vmem:[%s40] sm:%s28]
    %s42 = sshll.u32 1, 2
    %s43 = ssub.s32 %s42, 1
    %s44 = smul.addr 2, 2
    %s45 = scalar_lea.vmem [#allocation0], %s44
    %46 = vst [vmem:[%s45] sm:%s43] %v41
    %s47 = scalar_lea.vmem [#allocation2], 24
    %v48 = vld [vmem:[%s47] sm:%s28]
    %s49 = sshll.u32 1, 2
    %s50 = ssub.s32 %s49, 1
    %s51 = smul.addr 2, 3
    %s52 = scalar_lea.vmem [#allocation0], %s51
    %53 = vst [vmem:[%s52] sm:%s50] %v48
    %s54 = scalar_lea.vmem [#allocation2], 32
    %v55 = vld [vmem:[%s54] sm:%s28]
    %s56 = sshll.u32 1, 2
    %s57 = ssub.s32 %s56, 1
    %s58 = smul.addr 2, 4
    %s59 = scalar_lea.vmem [#allocation0], %s58
    %60 = vst [vmem:[%s59] sm:%s57] %v55
    %s62 = ssub.s32 160, 160
    %63 = vsyncadd [#allocation1], %s62
    %s65 = sshll.u32 [#allocation0], 4
    %s66 = int_to_ptr.vmem [resolvable:$true] %s65
    %68 = dma.vmem_to_hbm [thread:$0]  %s66, 160, %s1, [#allocation1]
    %69 = dma.done [#allocation1], 160
    %70 = vsyncpa [#allocation1], 1

</llo_original>
